<compile_context>
chip_gen: v7x
topology: tpu7x:2x2x1
jax: 0.10.0
libtpu: 0.0.40
codegen_flags: <defaults>
</compile_context>

<pallas_src>
import functools

import jax
import jax.numpy as jnp
from jax import lax
from jax.experimental import pallas as pl
from jax.experimental.pallas import tpu as pltpu


# ----------------------------------------------------------------------------
# Kernel
# ----------------------------------------------------------------------------
def _slstm_recurrent_kernel(gx_ref, wh_ref, h_out, c_out, n_out,
                            h_s, c_s, n_s, m_s, *, tc, hid, unroll, exact):
    """One (batch_chunk, time_chunk) grid step of the sLSTM recurrence.

    gx_ref:  (TC, BB, 4Hp) bf16/f32  precomputed x@Wx + b for this chunk
    wh_ref:  (Hp, 4Hp)     bf16/f32  resident recurrent weights
    h_out/c_out/n_out: (TC, BB, Hp) f32  per-step outputs (direct stores)
    h_s/c_s/n_s/m_s:   (BB, Hp)     f32  recurrent state (persists over time)
    """
    # New batch chunk => reset recurrent state (zero initial hidden state).
    @pl.when(pl.program_id(1) == 0)
    def _():
        h_s[...] = jnp.zeros_like(h_s)
        c_s[...] = jnp.zeros_like(c_s)
        n_s[...] = jnp.zeros_like(n_s)
        m_s[...] = jnp.zeros_like(m_s)

    mm_dtype = wh_ref.dtype

    def step(i, carry):
        # Only the recurrent half of the projection runs per step
        # (bf16 MXU inputs, f32 accumulation). Bias is folded into gx.
        gates = gx_ref[i].astype(jnp.float32) + jnp.dot(
            h_s[...].astype(mm_dtype), wh_ref[...],
            preferred_element_type=jnp.float32)            # (BB, 4Hp)

        z_tilda = gates[:, 0 * hid:1 * hid]
        i_tilda = gates[:, 1 * hid:2 * hid]
        f_tilda = gates[:, 2 * hid:3 * hid]
        o_tilda = gates[:, 3 * hid:4 * hid]

        z_t = jnp.tanh(z_tilda)
        f_t = jax.nn.sigmoid(f_tilda)
        o_t = jax.nn.sigmoid(o_tilda)

        # log(exp(i)) == i and log(sigmoid(f)) == log_sigmoid(f):
        # drop the redundant exp/log pairs (less EUP work, no overflow).
        m_t = jnp.maximum(jax.nn.log_sigmoid(f_tilda) + m_s[...], i_tilda)
        i_prime = jnp.exp(i_tilda - m_t)

        c_t = f_t * c_s[...] + i_prime * z_t
        n_t = f_t * n_s[...] + i_prime           # n_t >= i_prime > 0
        if exact:
            h_t = o_t * (c_t / n_t)
        else:
            h_t = o_t * (c_t * pl.reciprocal(n_t, approx=True))

        h_s[...] = h_t
        c_s[...] = c_t
        n_s[...] = n_t
        m_s[...] = m_t

        # Direct slice stores (lane-dense, no concatenate / extra vreg copies).
        h_out[i] = h_t
        c_out[i] = c_t
        n_out[i] = n_t
        return carry

    lax.fori_loop(0, tc, step, 0, unroll=unroll)


# ----------------------------------------------------------------------------
# Helpers
# ----------------------------------------------------------------------------
def _pad_gate_cols(w, hid, hid_p):
    """Pad (..., 4H) -> (..., 4Hp) so each gate sits in a 128-lane block."""
    if hid_p == hid:
        return w
    parts = jnp.split(w, 4, axis=-1)
    pad = [(0, 0)] * (w.ndim - 1) + [(0, hid_p - hid)]
    return jnp.concatenate([jnp.pad(p, pad) for p in parts], axis=-1)


def _vmem_capacity_bytes():
    """Physical VMEM on this chip; conservative fallback (v7x = 64 MiB)."""
    try:
        info = pltpu.get_tpu_info()
        cap = getattr(info, "vmem_capacity_bytes", None)
        if cap:
            return int(cap)
    except Exception:
        pass
    return 64 * 1024 * 1024


def _num_tensorcores():
    """Best-effort detection of a 2-TensorCore (v7x) chip."""
    try:
        kind = jax.devices()[0].device_kind.lower()
        if "v7" in kind:
            return 2
    except Exception:
        pass
    return 1


def _make_wh_spec(hid_p, h4p, single_buffer):
    index_map = lambda bi, ti: (0, 0)
    if single_buffer:
        try:
            # Constant index_map => never re-DMA'd; single buffer halves
            # its VMEM residency (important on v7x's 64 MiB VMEM).
            return pl.BlockSpec((hid_p, h4p), index_map,
                                pipeline_mode=pl.Buffered(1))
        except TypeError:
            pass
    return pl.BlockSpec((hid_p, h4p), index_map)


# ----------------------------------------------------------------------------
# Layer wrapper
# ----------------------------------------------------------------------------
def slstm_layer(x_seq, wx, wh, b, *, time_chunk=32, use_bf16=True,
                single_buffer_wh=True):
    """Run one sLSTM layer over the whole sequence.

    x_seq: (T, B, Din) f32;  wx: (Din, 4H);  wh: (H, 4H);  b: (4H,)
    returns h_seq, c_seq, n_seq each (T, B, H) f32
    """
    T, B, Din = x_seq.shape
    H4 = wx.shape[1]
    H = H4 // 4
    # Lane padding: every gate (and output) occupies a 128-lane multiple.
    Hp = H if H % 128 == 0 else ((H + 127) // 128) * 128
    H4p = 4 * Hp

    wx_p = _pad_gate_cols(wx, H, Hp)
    b_p = _pad_gate_cols(b, H, Hp)
    wh_p = _pad_gate_cols(wh, H, Hp)
    if Hp != H:
        wh_p = jnp.pad(wh_p, ((0, Hp - H), (0, 0)))   # zero rows: padded h lanes never contaminate

    gx_dtype = jnp.bfloat16 if use_bf16 else jnp.float32
    wh_dtype = jnp.bfloat16 if use_bf16 else jnp.float32

    # --- Hoisted input projection: one MXU-shaped matmul + bias fold (XLA).
    # Stored in bf16 to halve the kernel's dominant HBM read stream.
    gx = jnp.dot(x_seq.reshape(T * B, Din), wx_p,
                 preferred_element_type=jnp.float32) + b_p
    gx = gx.reshape(T, B, H4p).astype(gx_dtype)

    # --- Batch split only when there are 2 TensorCores AND the per-core batch
    # is large enough that the per-step matmul actually scales with M.
    nb = 1
    if (_num_tensorcores() >= 2 and B >= 128 and B % 2 == 0
            and (B // 2) % 8 == 0):
        nb = 2
    bb = B // nb

    # --- VMEM-budget-aware time chunk (amortize ~0.35 us/grid-step overhead).
    cap = int(_vmem_capacity_bytes() * 0.8)
    gx_item = jnp.dtype(gx_dtype).itemsize
    wh_item = jnp.dtype(wh_dtype).itemsize
    wh_bufs = 1 if single_buffer_wh else 2
    fixed = wh_bufs * Hp * H4p * wh_item + 4 * bb * Hp * 4          # Wh + state
    per_t = bb * (2 * H4p * gx_item + 2 * 3 * Hp * 4)               # gx + 3 outs (dbl-buffered)
    tc = max(1, min(time_chunk, T))
    while tc > 4 and fixed + tc * per_t > cap:
        tc //= 2
    t_pad = pl.cdiv(T, tc) * tc
    if t_pad != T:
        gx = jnp.pad(gx, ((0, t_pad - T), (0, 0), (0, 0)))

    vmem_limit = max(32 * 1024 * 1024, min(cap, int(1.5 * (fixed + tc * per_t))))

    # Partial unroll for big chunks keeps LLO visibility without vreg spills.
    unroll = True if tc <= 8 else 4

    wh_dev = wh_p.astype(wh_dtype)
    out_sds = jax.ShapeDtypeStruct((t_pad, B, Hp), jnp.float32)
    out_spec = pl.BlockSpec((tc, bb, Hp), lambda bi, ti: (ti, bi, 0))

    f = pl.pallas_call(
        functools.partial(_slstm_recurrent_kernel, tc=tc, hid=Hp,
                          unroll=unroll, exact=not use_bf16),
        out_shape=(out_sds, out_sds, out_sds),
        grid_spec=pltpu.PrefetchScalarGridSpec(
            num_scalar_prefetch=0,
            grid=(nb, t_pad // tc),
            in_specs=[
                pl.BlockSpec((tc, bb, H4p), lambda bi, ti: (ti, bi, 0)),  # gx
                _make_wh_spec(Hp, H4p, single_buffer_wh),                 # Wh
            ],
            out_specs=[out_spec, out_spec, out_spec],
            scratch_shapes=[pltpu.VMEM((bb, Hp), jnp.float32)] * 4,  # h,c,n,m
        ),
        compiler_params=pltpu.CompilerParams(
            dimension_semantics=("parallel", "arbitrary"),
            vmem_limit_bytes=vmem_limit),
    )
    h_seq, c_seq, n_seq = f(gx, wh_dev)

    # Padding removal only when padding was actually applied (no extra HBM
    # passes in the aligned common case).
    if t_pad != T:
        h_seq, c_seq, n_seq = h_seq[:T], c_seq[:T], n_seq[:T]
    if Hp != H:
        h_seq, c_seq, n_seq = h_seq[..., :H], c_seq[..., :H], n_seq[..., :H]
    return h_seq, c_seq, n_seq


# ----------------------------------------------------------------------------
# Full forward (matches the PyTorch sLSTM module, batch_first=False)
# ----------------------------------------------------------------------------
@functools.partial(jax.jit,
                   static_argnames=("num_layers", "use_bf16",
                                    "single_buffer_wh"))
def slstm_forward(x, params, num_layers, use_bf16=True, single_buffer_wh=True):
    """x: (T, B, input_size);  params: list of (wx, wh, b) per layer.

    Returns (H_last, (H, C, N, M)) matching the PyTorch module:
      H stacks h_t, C stacks h_t (module quirk), N stacks c_t, M stacks n_t.
    """
    h_layers, c_layers, n_layers = [], [], []
    inp = x
    for layer in range(num_layers):
        wx, wh, b = params[layer]
        h_seq, c_seq, n_seq = slstm_layer(
            inp, wx, wh, b, use_bf16=use_bf16,
            single_buffer_wh=single_buffer_wh)
        h_layers.append(h_seq)
        c_layers.append(c_seq)
        n_layers.append(n_seq)
        inp = h_seq

    H = jnp.stack(h_layers, axis=0)
    C = H                              # module appends state[0] == h_t to C
    N = jnp.stack(c_layers, axis=0)    # state[1] == c_t
    M = jnp.stack(n_layers, axis=0)    # state[2] == n_t
    return H[-1], (H, C, N, M)


# ----------------------------------------------------------------------------
# Pure-JAX reference (exact PyTorch forward) for validation
# ----------------------------------------------------------------------------
def _ref_slstm_forward(x, params, num_layers):
    T, B, _ = x.shape
    H_layers, C_layers, N_layers, M_layers = [], [], [], []
    inp = x
    for layer in range(num_layers):
        wx, wh, b = params[layer]
        hid = wh.shape[0]
        h = jnp.zeros((B, hid), jnp.float32)
        c = jnp.zeros((B, hid), jnp.float32)
        n = jnp.zeros((B, hid), jnp.float32)
        m = jnp.zeros((B, hid), jnp.float32)
        lh, lc, ln, lm = [], [], [], []
        for t in range(T):
            gates = inp[t] @ wx + h @ wh + b
            z_tilda, i_tilda, f_tilda, o_tilda = jnp.split(gates, 4, axis=1)
            z_t = jnp.tanh(z_tilda)
            i_t = jnp.exp(i_tilda)
            f_t = jax.nn.sigmoid(f_tilda)
            o_t = jax.nn.sigmoid(o_tilda)
            m_t = jnp.maximum(jnp.log(f_t) + m, jnp.log(i_t))
            i_prime = jnp.exp(i_tilda - m_t)
            c_t = f_t * c + i_prime * z_t
            n_t = f_t * n + i_prime
            h_t = o_t * (c_t / n_t)
            h, c, n, m = h_t, c_t, n_t, m_t
            lh.append(h_t); lc.append(h_t); ln.append(c_t); lm.append(n_t)
        H_layers.append(jnp.stack(lh, 0))
        C_layers.append(jnp.stack(lc, 0))
        N_layers.append(jnp.stack(ln, 0))
        M_layers.append(jnp.stack(lm, 0))
        inp = H_layers[-1]
    H = jnp.stack(H_layers, 0)
    C = jnp.stack(C_layers, 0)
    N = jnp.stack(N_layers, 0)
    M = jnp.stack(M_layers, 0)
    return H[-1], (H, C, N, M)


def _init_params(key, input_size, hidden_size, num_layers):
    params = []
    for layer in range(num_layers):
        din = input_size if layer == 0 else hidden_size
        fan0 = din + hidden_size
        fan1 = 4 * hidden_size
        limit = (6.0 / (fan0 + fan1)) ** 0.5  # xavier_uniform bound
        key, sub = jax.random.split(key)
        W = jax.random.uniform(sub, (fan0, fan1), jnp.float32, -limit, limit)
        wx = W[:din]
        wh = W[din:]
        b = jnp.zeros((fan1,), jnp.float32)
        params.append((wx, wh, b))
    return params


if __name__ == "__main__":
    T, B = 8, 2
    input_size, hidden_size, num_layers = 16, 32, 2

    key = jax.random.PRNGKey(0)
    kx, kp = jax.random.split(key)
    x = jax.random.normal(kx, (T, B, input_size), jnp.float32)
    params = _init_params(kp, input_size, hidden_size, num_layers)

    def run(use_bf16, single_buffer_wh):
        out, states = slstm_forward(x, params, num_layers=num_layers,
                                    use_bf16=use_bf16,
                                    single_buffer_wh=single_buffer_wh)
        jax.block_until_ready((out, states))
        return out, states

    try:
        out, (H, C, N, M) = run(True, True)
    except Exception:
        # This jax/libtpu combo rejected single-buffered Wh; use default.
        out, (H, C, N, M) = run(True, False)

    assert out.shape == (T, B, hidden_size)
    assert H.shape == (num_layers, T, B, hidden_size)

    # Validate against the pure-JAX (PyTorch-exact) reference.  bf16 MXU
    # inputs, bf16 gx storage and the approximate reciprocal give a
    # mixed-precision result; fall back to the f32/exact-divide parity mode
    # if the mixed-precision tolerance is not met.
    ref_out, (rH, rC, rN, rM) = _ref_slstm_forward(x, params, num_layers)

    def ok_at(tol, a_list):
        return all(bool(jnp.allclose(a, b_, rtol=tol, atol=tol))
                   for a, b_ in a_list)

    pairs = ((out, ref_out), (H, rH), (C, rC), (N, rN), (M, rM))
    ok = ok_at(3e-2, pairs)
    if not ok:
        try:
            out, (H, C, N, M) = run(False, True)
        except Exception:
            out, (H, C, N, M) = run(False, False)
        pairs = ((out, ref_out), (H, rH), (C, rC), (N, rN), (M, rM))
        ok = ok_at(1e-2, pairs)
    assert ok, "mismatch vs reference"

    print("KERNEL_OK")
</pallas_src>

<mosaic_0001>
module attributes {stable_mosaic.version = 11 : i64} {
  func.func @_slstm_recurrent_kernel(%arg0: i32, %arg1: i32, %arg2: memref<8x2x512xbf16, #tpu.memory_space<vmem>>, %arg3: memref<128x512xbf16, #tpu.memory_space<vmem>>, %arg4: memref<8x2x128xf32, #tpu.memory_space<vmem>>, %arg5: memref<8x2x128xf32, #tpu.memory_space<vmem>>, %arg6: memref<8x2x128xf32, #tpu.memory_space<vmem>>, %arg7: memref<2x128xf32, #tpu.memory_space<vmem>>, %arg8: memref<2x128xf32, #tpu.memory_space<vmem>>, %arg9: memref<2x128xf32, #tpu.memory_space<vmem>>, %arg10: memref<2x128xf32, #tpu.memory_space<vmem>>) attributes {dimension_semantics = [#tpu.dimension_semantics<parallel>, #tpu.dimension_semantics<arbitrary>], iteration_bounds = array<i64: 1, 1>, scalar_prefetch = 0 : i64, scratch_operands = 4 : i64, tpu.core_type = #tpu.core_type<tc>, window_params = [{transform_indices = @transform_0, window_bounds = array<i64: 8, 2, 512>}, {pipeline_mode = #tpu.pipeline_mode<synchronous>, transform_indices = @transform_1, window_bounds = array<i64: 128, 512>}, {transform_indices = @transform_2, window_bounds = array<i64: 8, 2, 128>}, {transform_indices = @transform_3, window_bounds = array<i64: 8, 2, 128>}, {transform_indices = @transform_4, window_bounds = array<i64: 8, 2, 128>}]} {
    %c0_i32 = arith.constant 0 : i32
    %0 = arith.cmpi eq, %arg1, %c0_i32 : i32
    %1 = arith.extui %0 : i1 to i32
    %c0_i32_0 = arith.constant 0 : i32
    %2 = arith.cmpi ne, %1, %c0_i32_0 : i32
    scf.if %2 {
      %cst_264 = arith.constant 0.000000e+00 : f32
      %587 = vector.broadcast %cst_264 : f32 to vector<2x128xf32>
      %c0_265 = arith.constant 0 : index
      %c0_266 = arith.constant 0 : index
      %588 = vector.load %arg7[%c0_265, %c0_266] : memref<2x128xf32, #tpu.memory_space<vmem>>, vector<2x128xf32>
      tpu.vector_store %arg7[%c0_265, %c0_266], %587 {strides = array<i32>} : memref<2x128xf32, #tpu.memory_space<vmem>>, vector<2x128xf32>,
      %cst_267 = arith.constant 0.000000e+00 : f32
      %589 = vector.broadcast %cst_267 : f32 to vector<2x128xf32>
      %c0_268 = arith.constant 0 : index
      %c0_269 = arith.constant 0 : index
      %590 = vector.load %arg8[%c0_268, %c0_269] : memref<2x128xf32, #tpu.memory_space<vmem>>, vector<2x128xf32>
      tpu.vector_store %arg8[%c0_268, %c0_269], %589 {strides = array<i32>} : memref<2x128xf32, #tpu.memory_space<vmem>>, vector<2x128xf32>,
      %cst_270 = arith.constant 0.000000e+00 : f32
      %591 = vector.broadcast %cst_270 : f32 to vector<2x128xf32>
      %c0_271 = arith.constant 0 : index
      %c0_272 = arith.constant 0 : index
      %592 = vector.load %arg9[%c0_271, %c0_272] : memref<2x128xf32, #tpu.memory_space<vmem>>, vector<2x128xf32>
      tpu.vector_store %arg9[%c0_271, %c0_272], %591 {strides = array<i32>} : memref<2x128xf32, #tpu.memory_space<vmem>>, vector<2x128xf32>,
      %cst_273 = arith.constant 0.000000e+00 : f32
      %593 = vector.broadcast %cst_273 : f32 to vector<2x128xf32>
      %c0_274 = arith.constant 0 : index
      %c0_275 = arith.constant 0 : index
      %594 = vector.load %arg10[%c0_274, %c0_275] : memref<2x128xf32, #tpu.memory_space<vmem>>, vector<2x128xf32>
      tpu.vector_store %arg10[%c0_274, %c0_275], %593 {strides = array<i32>} : memref<2x128xf32, #tpu.memory_space<vmem>>, vector<2x128xf32>,
    } else {
    }
    %c0_i32_1 = arith.constant 0 : i32
    %3 = arith.index_cast %c0_i32_1 : i32 to index
    %c0 = arith.constant 0 : index
    %c0_2 = arith.constant 0 : index
    %4 = vector.load %arg2[%3, %c0, %c0_2] : memref<8x2x512xbf16, #tpu.memory_space<vmem>>, vector<1x2x512xbf16>
    %5 = vector.shape_cast %4 : vector<1x2x512xbf16> to vector<2x512xbf16>
    %6 = arith.extf %5 : vector<2x512xbf16> to vector<2x512xf32>
    %c0_3 = arith.constant 0 : index
    %c0_4 = arith.constant 0 : index
    %7 = vector.load %arg7[%c0_3, %c0_4] : memref<2x128xf32, #tpu.memory_space<vmem>>, vector<2x128xf32>
    %8 = arith.truncf %7 : vector<2x128xf32> to vector<2x128xbf16>
    %c0_5 = arith.constant 0 : index
    %c0_6 = arith.constant 0 : index
    %9 = vector.load %arg3[%c0_5, %c0_6] : memref<128x512xbf16, #tpu.memory_space<vmem>>, vector<128x512xbf16>
    %cst = arith.constant dense<0.000000e+00> : vector<2x512xf32>
    %10 = tpu.matmul %8, %9, %cst {dimension_numbers = #tpu.dot_dimension_numbers<[1], [0], [0], [1], [0, 0, 1, 1], [], []>} : vector<2x128xbf16>, vector<128x512xbf16>, vector<2x512xf32> -> vector<2x512xf32>
    %11 = arith.addf %6, %10 : vector<2x512xf32>
    %12 = vector.extract_strided_slice %11 {offsets = [0, 0], sizes = [2, 128], strides = [1, 1]} : vector<2x512xf32> to vector<2x128xf32>
    %13 = vector.extract_strided_slice %11 {offsets = [0, 128], sizes = [2, 128], strides = [1, 1]} : vector<2x512xf32> to vector<2x128xf32>
    %14 = vector.extract_strided_slice %11 {offsets = [0, 256], sizes = [2, 128], strides = [1, 1]} : vector<2x512xf32> to vector<2x128xf32>
    %15 = vector.extract_strided_slice %11 {offsets = [0, 384], sizes = [2, 128], strides = [1, 1]} : vector<2x512xf32> to vector<2x128xf32>
    %16 = math.tanh %12 : vector<2x128xf32>
    %17 = arith.negf %14 : vector<2x128xf32>
    %18 = math.exp %17 : vector<2x128xf32>
    %cst_7 = arith.constant 1.000000e+00 : f32
    %19 = vector.broadcast %cst_7 : f32 to vector<2x128xf32>
    %20 = arith.addf %19, %18 : vector<2x128xf32>
    %21 = arith.divf %19, %20 : vector<2x128xf32>
    %22 = arith.negf %15 : vector<2x128xf32>
    %23 = math.exp %22 : vector<2x128xf32>
    %cst_8 = arith.constant 1.000000e+00 : f32
    %24 = vector.broadcast %cst_8 : f32 to vector<2x128xf32>
    %25 = arith.addf %24, %23 : vector<2x128xf32>
    %26 = arith.divf %24, %25 : vector<2x128xf32>
    %cst_9 = arith.constant 0.000000e+00 : f32
    %27 = vector.broadcast %cst_9 : f32 to vector<2x128xf32>
    %28 = arith.subf %27, %14 : vector<2x128xf32>
    %cst_10 = arith.constant 0.000000e+00 : f32
    %29 = vector.broadcast %cst_10 : f32 to vector<2x128xf32>
    %30 = arith.maximumf %28, %29 : vector<2x128xf32>
    %31 = vector.broadcast %cst_10 : f32 to vector<2x128xf32>
    %32 = arith.subf %28, %31 : vector<2x128xf32>
    %33 = arith.cmpf one, %32, %32 : vector<2x128xf32>
    %34 = vector.broadcast %cst_10 : f32 to vector<2x128xf32>
    %35 = arith.addf %28, %34 : vector<2x128xf32>
    %36 = math.absf %32 : vector<2x128xf32>
    %cst_11 = arith.constant 0.000000e+00 : f32
    %37 = vector.broadcast %cst_11 : f32 to vector<2x128xf32>
    %38 = arith.subf %37, %36 : vector<2x128xf32>
    %39 = math.exp %38 : vector<2x128xf32>
    %40 = math.log1p %39 : vector<2x128xf32>
    %41 = arith.addf %30, %40 : vector<2x128xf32>
    %42 = arith.select %33, %35, %41 : vector<2x128xi1>, vector<2x128xf32>
    %cst_12 = arith.constant 0.000000e+00 : f32
    %43 = vector.broadcast %cst_12 : f32 to vector<2x128xf32>
    %44 = arith.subf %43, %42 : vector<2x128xf32>
    %c0_13 = arith.constant 0 : index
    %c0_14 = arith.constant 0 : index
    %45 = vector.load %arg10[%c0_13, %c0_14] : memref<2x128xf32, #tpu.memory_space<vmem>>, vector<2x128xf32>
    %46 = arith.addf %44, %45 : vector<2x128xf32>
    %47 = arith.maximumf %46, %13 : vector<2x128xf32>
    %48 = arith.subf %13, %47 : vector<2x128xf32>
    %49 = math.exp %48 : vector<2x128xf32>
    %c0_15 = arith.constant 0 : index
    %c0_16 = arith.constant 0 : index
    %50 = vector.load %arg8[%c0_15, %c0_16] : memref<2x128xf32, #tpu.memory_space<vmem>>, vector<2x128xf32>
    %51 = arith.mulf %21, %50 : vector<2x128xf32>
    %52 = arith.mulf %49, %16 : vector<2x128xf32>
    %53 = arith.addf %51, %52 : vector<2x128xf32>
    %c0_17 = arith.constant 0 : index
    %c0_18 = arith.constant 0 : index
    %54 = vector.load %arg9[%c0_17, %c0_18] : memref<2x128xf32, #tpu.memory_space<vmem>>, vector<2x128xf32>
    %55 = arith.mulf %21, %54 : vector<2x128xf32>
    %56 = arith.addf %55, %49 : vector<2x128xf32>
    %57 = tpu.reciprocal %56 {approx = true} : vector<2x128xf32> -> vector<2x128xf32>
    %58 = arith.mulf %53, %57 : vector<2x128xf32>
    %59 = arith.mulf %26, %58 : vector<2x128xf32>
    %c0_19 = arith.constant 0 : index
    %c0_20 = arith.constant 0 : index
    %60 = vector.load %arg7[%c0_19, %c0_20] : memref<2x128xf32, #tpu.memory_space<vmem>>, vector<2x128xf32>
    tpu.vector_store %arg7[%c0_19, %c0_20], %59 {strides = array<i32>} : memref<2x128xf32, #tpu.memory_space<vmem>>, vector<2x128xf32>,
    %c0_21 = arith.constant 0 : index
    %c0_22 = arith.constant 0 : index
    %61 = vector.load %arg8[%c0_21, %c0_22] : memref<2x128xf32, #tpu.memory_space<vmem>>, vector<2x128xf32>
    tpu.vector_store %arg8[%c0_21, %c0_22], %53 {strides = array<i32>} : memref<2x128xf32, #tpu.memory_space<vmem>>, vector<2x128xf32>,
    %c0_23 = arith.constant 0 : index
    %c0_24 = arith.constant 0 : index
    %62 = vector.load %arg9[%c0_23, %c0_24] : memref<2x128xf32, #tpu.memory_space<vmem>>, vector<2x128xf32>
    tpu.vector_store %arg9[%c0_23, %c0_24], %56 {strides = array<i32>} : memref<2x128xf32, #tpu.memory_space<vmem>>, vector<2x128xf32>,
    %c0_25 = arith.constant 0 : index
    %c0_26 = arith.constant 0 : index
    %63 = vector.load %arg10[%c0_25, %c0_26] : memref<2x128xf32, #tpu.memory_space<vmem>>, vector<2x128xf32>
    tpu.vector_store %arg10[%c0_25, %c0_26], %47 {strides = array<i32>} : memref<2x128xf32, #tpu.memory_space<vmem>>, vector<2x128xf32>,
    %64 = arith.index_cast %c0_i32_1 : i32 to index
    %c0_27 = arith.constant 0 : index
    %c0_28 = arith.constant 0 : index
    %65 = vector.load %arg4[%64, %c0_27, %c0_28] : memref<8x2x128xf32, #tpu.memory_space<vmem>>, vector<1x2x128xf32>
    %66 = vector.shape_cast %65 : vector<1x2x128xf32> to vector<2x128xf32>
    %67 = vector.shape_cast %59 : vector<2x128xf32> to vector<1x2x128xf32>
    tpu.vector_store %arg4[%64, %c0_27, %c0_28], %67 {strides = array<i32>} : memref<8x2x128xf32, #tpu.memory_space<vmem>>, vector<1x2x128xf32>,
    %68 = arith.index_cast %c0_i32_1 : i32 to index
    %c0_29 = arith.constant 0 : index
    %c0_30 = arith.constant 0 : index
    %69 = vector.load %arg5[%68, %c0_29, %c0_30] : memref<8x2x128xf32, #tpu.memory_space<vmem>>, vector<1x2x128xf32>
    %70 = vector.shape_cast %69 : vector<1x2x128xf32> to vector<2x128xf32>
    %71 = vector.shape_cast %53 : vector<2x128xf32> to vector<1x2x128xf32>
    tpu.vector_store %arg5[%68, %c0_29, %c0_30], %71 {strides = array<i32>} : memref<8x2x128xf32, #tpu.memory_space<vmem>>, vector<1x2x128xf32>,
    %72 = arith.index_cast %c0_i32_1 : i32 to index
    %c0_31 = arith.constant 0 : index
    %c0_32 = arith.constant 0 : index
    %73 = vector.load %arg6[%72, %c0_31, %c0_32] : memref<8x2x128xf32, #tpu.memory_space<vmem>>, vector<1x2x128xf32>
    %74 = vector.shape_cast %73 : vector<1x2x128xf32> to vector<2x128xf32>
    %75 = vector.shape_cast %56 : vector<2x128xf32> to vector<1x2x128xf32>
    tpu.vector_store %arg6[%72, %c0_31, %c0_32], %75 {strides = array<i32>} : memref<8x2x128xf32, #tpu.memory_space<vmem>>, vector<1x2x128xf32>,
    %c1_i32 = arith.constant 1 : i32
    %76 = arith.index_cast %c1_i32 : i32 to index
    %c0_33 = arith.constant 0 : index
    %c0_34 = arith.constant 0 : index
    %77 = vector.load %arg2[%76, %c0_33, %c0_34] : memref<8x2x512xbf16, #tpu.memory_space<vmem>>, vector<1x2x512xbf16>
    %78 = vector.shape_cast %77 : vector<1x2x512xbf16> to vector<2x512xbf16>
    %79 = arith.extf %78 : vector<2x512xbf16> to vector<2x512xf32>
    %c0_35 = arith.constant 0 : index
    %c0_36 = arith.constant 0 : index
    %80 = vector.load %arg7[%c0_35, %c0_36] : memref<2x128xf32, #tpu.memory_space<vmem>>, vector<2x128xf32>
    %81 = arith.truncf %80 : vector<2x128xf32> to vector<2x128xbf16>
    %c0_37 = arith.constant 0 : index
    %c0_38 = arith.constant 0 : index
    %82 = vector.load %arg3[%c0_37, %c0_38] : memref<128x512xbf16, #tpu.memory_space<vmem>>, vector<128x512xbf16>
    %cst_39 = arith.constant dense<0.000000e+00> : vector<2x512xf32>
    %83 = tpu.matmul %81, %82, %cst_39 {dimension_numbers = #tpu.dot_dimension_numbers<[1], [0], [0], [1], [0, 0, 1, 1], [], []>} : vector<2x128xbf16>, vector<128x512xbf16>, vector<2x512xf32> -> vector<2x512xf32>
    %84 = arith.addf %79, %83 : vector<2x512xf32>
    %85 = vector.extract_strided_slice %84 {offsets = [0, 0], sizes = [2, 128], strides = [1, 1]} : vector<2x512xf32> to vector<2x128xf32>
    %86 = vector.extract_strided_slice %84 {offsets = [0, 128], sizes = [2, 128], strides = [1, 1]} : vector<2x512xf32> to vector<2x128xf32>
    %87 = vector.extract_strided_slice %84 {offsets = [0, 256], sizes = [2, 128], strides = [1, 1]} : vector<2x512xf32> to vector<2x128xf32>
    %88 = vector.extract_strided_slice %84 {offsets = [0, 384], sizes = [2, 128], strides = [1, 1]} : vector<2x512xf32> to vector<2x128xf32>
    %89 = math.tanh %85 : vector<2x128xf32>
    %90 = arith.negf %87 : vector<2x128xf32>
    %91 = math.exp %90 : vector<2x128xf32>
    %cst_40 = arith.constant 1.000000e+00 : f32
    %92 = vector.broadcast %cst_40 : f32 to vector<2x128xf32>
    %93 = arith.addf %92, %91 : vector<2x128xf32>
    %94 = arith.divf %92, %93 : vector<2x128xf32>
    %95 = arith.negf %88 : vector<2x128xf32>
    %96 = math.exp %95 : vector<2x128xf32>
    %cst_41 = arith.constant 1.000000e+00 : f32
    %97 = vector.broadcast %cst_41 : f32 to vector<2x128xf32>
    %98 = arith.addf %97, %96 : vector<2x128xf32>
    %99 = arith.divf %97, %98 : vector<2x128xf32>
    %cst_42 = arith.constant 0.000000e+00 : f32
    %100 = vector.broadcast %cst_42 : f32 to vector<2x128xf32>
    %101 = arith.subf %100, %87 : vector<2x128xf32>
    %cst_43 = arith.constant 0.000000e+00 : f32
    %102 = vector.broadcast %cst_43 : f32 to vector<2x128xf32>
    %103 = arith.maximumf %101, %102 : vector<2x128xf32>
    %104 = vector.broadcast %cst_43 : f32 to vector<2x128xf32>
    %105 = arith.subf %101, %104 : vector<2x128xf32>
    %106 = arith.cmpf one, %105, %105 : vector<2x128xf32>
    %107 = vector.broadcast %cst_43 : f32 to vector<2x128xf32>
    %108 = arith.addf %101, %107 : vector<2x128xf32>
    %109 = math.absf %105 : vector<2x128xf32>
    %cst_44 = arith.constant 0.000000e+00 : f32
    %110 = vector.broadcast %cst_44 : f32 to vector<2x128xf32>
    %111 = arith.subf %110, %109 : vector<2x128xf32>
    %112 = math.exp %111 : vector<2x128xf32>
    %113 = math.log1p %112 : vector<2x128xf32>
    %114 = arith.addf %103, %113 : vector<2x128xf32>
    %115 = arith.select %106, %108, %114 : vector<2x128xi1>, vector<2x128xf32>
    %cst_45 = arith.constant 0.000000e+00 : f32
    %116 = vector.broadcast %cst_45 : f32 to vector<2x128xf32>
    %117 = arith.subf %116, %115 : vector<2x128xf32>
    %c0_46 = arith.constant 0 : index
    %c0_47 = arith.constant 0 : index
    %118 = vector.load %arg10[%c0_46, %c0_47] : memref<2x128xf32, #tpu.memory_space<vmem>>, vector<2x128xf32>
    %119 = arith.addf %117, %118 : vector<2x128xf32>
    %120 = arith.maximumf %119, %86 : vector<2x128xf32>
    %121 = arith.subf %86, %120 : vector<2x128xf32>
    %122 = math.exp %121 : vector<2x128xf32>
    %c0_48 = arith.constant 0 : index
    %c0_49 = arith.constant 0 : index
    %123 = vector.load %arg8[%c0_48, %c0_49] : memref<2x128xf32, #tpu.memory_space<vmem>>, vector<2x128xf32>
    %124 = arith.mulf %94, %123 : vector<2x128xf32>
    %125 = arith.mulf %122, %89 : vector<2x128xf32>
    %126 = arith.addf %124, %125 : vector<2x128xf32>
    %c0_50 = arith.constant 0 : index
    %c0_51 = arith.constant 0 : index
    %127 = vector.load %arg9[%c0_50, %c0_51] : memref<2x128xf32, #tpu.memory_space<vmem>>, vector<2x128xf32>
    %128 = arith.mulf %94, %127 : vector<2x128xf32>
    %129 = arith.addf %128, %122 : vector<2x128xf32>
    %130 = tpu.reciprocal %129 {approx = true} : vector<2x128xf32> -> vector<2x128xf32>
    %131 = arith.mulf %126, %130 : vector<2x128xf32>
    %132 = arith.mulf %99, %131 : vector<2x128xf32>
    %c0_52 = arith.constant 0 : index
    %c0_53 = arith.constant 0 : index
    %133 = vector.load %arg7[%c0_52, %c0_53] : memref<2x128xf32, #tpu.memory_space<vmem>>, vector<2x128xf32>
    tpu.vector_store %arg7[%c0_52, %c0_53], %132 {strides = array<i32>} : memref<2x128xf32, #tpu.memory_space<vmem>>, vector<2x128xf32>,
    %c0_54 = arith.constant 0 : index
    %c0_55 = arith.constant 0 : index
    %134 = vector.load %arg8[%c0_54, %c0_55] : memref<2x128xf32, #tpu.memory_space<vmem>>, vector<2x128xf32>
    tpu.vector_store %arg8[%c0_54, %c0_55], %126 {strides = array<i32>} : memref<2x128xf32, #tpu.memory_space<vmem>>, vector<2x128xf32>,
    %c0_56 = arith.constant 0 : index
    %c0_57 = arith.constant 0 : index
    %135 = vector.load %arg9[%c0_56, %c0_57] : memref<2x128xf32, #tpu.memory_space<vmem>>, vector<2x128xf32>
    tpu.vector_store %arg9[%c0_56, %c0_57], %129 {strides = array<i32>} : memref<2x128xf32, #tpu.memory_space<vmem>>, vector<2x128xf32>,
    %c0_58 = arith.constant 0 : index
    %c0_59 = arith.constant 0 : index
    %136 = vector.load %arg10[%c0_58, %c0_59] : memref<2x128xf32, #tpu.memory_space<vmem>>, vector<2x128xf32>
    tpu.vector_store %arg10[%c0_58, %c0_59], %120 {strides = array<i32>} : memref<2x128xf32, #tpu.memory_space<vmem>>, vector<2x128xf32>,
    %137 = arith.index_cast %c1_i32 : i32 to index
    %c0_60 = arith.constant 0 : index
    %c0_61 = arith.constant 0 : index
    %138 = vector.load %arg4[%137, %c0_60, %c0_61] : memref<8x2x128xf32, #tpu.memory_space<vmem>>, vector<1x2x128xf32>
    %139 = vector.shape_cast %138 : vector<1x2x128xf32> to vector<2x128xf32>
    %140 = vector.shape_cast %132 : vector<2x128xf32> to vector<1x2x128xf32>
    tpu.vector_store %arg4[%137, %c0_60, %c0_61], %140 {strides = array<i32>} : memref<8x2x128xf32, #tpu.memory_space<vmem>>, vector<1x2x128xf32>,
    %141 = arith.index_cast %c1_i32 : i32 to index
    %c0_62 = arith.constant 0 : index
    %c0_63 = arith.constant 0 : index
    %142 = vector.load %arg5[%141, %c0_62, %c0_63] : memref<8x2x128xf32, #tpu.memory_space<vmem>>, vector<1x2x128xf32>
    %143 = vector.shape_cast %142 : vector<1x2x128xf32> to vector<2x128xf32>
    %144 = vector.shape_cast %126 : vector<2x128xf32> to vector<1x2x128xf32>
    tpu.vector_store %arg5[%141, %c0_62, %c0_63], %144 {strides = array<i32>} : memref<8x2x128xf32, #tpu.memory_space<vmem>>, vector<1x2x128xf32>,
    %145 = arith.index_cast %c1_i32 : i32 to index
    %c0_64 = arith.constant 0 : index
    %c0_65 = arith.constant 0 : index
    %146 = vector.load %arg6[%145, %c0_64, %c0_65] : memref<8x2x128xf32, #tpu.memory_space<vmem>>, vector<1x2x128xf32>
    %147 = vector.shape_cast %146 : vector<1x2x128xf32> to vector<2x128xf32>
    %148 = vector.shape_cast %129 : vector<2x128xf32> to vector<1x2x128xf32>
    tpu.vector_store %arg6[%145, %c0_64, %c0_65], %148 {strides = array<i32>} : memref<8x2x128xf32, #tpu.memory_space<vmem>>, vector<1x2x128xf32>,
    %c2_i32 = arith.constant 2 : i32
    %149 = arith.index_cast %c2_i32 : i32 to index
    %c0_66 = arith.constant 0 : index
    %c0_67 = arith.constant 0 : index
    %150 = vector.load %arg2[%149, %c0_66, %c0_67] : memref<8x2x512xbf16, #tpu.memory_space<vmem>>, vector<1x2x512xbf16>
    %151 = vector.shape_cast %150 : vector<1x2x512xbf16> to vector<2x512xbf16>
    %152 = arith.extf %151 : vector<2x512xbf16> to vector<2x512xf32>
    %c0_68 = arith.constant 0 : index
    %c0_69 = arith.constant 0 : index
    %153 = vector.load %arg7[%c0_68, %c0_69] : memref<2x128xf32, #tpu.memory_space<vmem>>, vector<2x128xf32>
    %154 = arith.truncf %153 : vector<2x128xf32> to vector<2x128xbf16>
    %c0_70 = arith.constant 0 : index
    %c0_71 = arith.constant 0 : index
    %155 = vector.load %arg3[%c0_70, %c0_71] : memref<128x512xbf16, #tpu.memory_space<vmem>>, vector<128x512xbf16>
    %cst_72 = arith.constant dense<0.000000e+00> : vector<2x512xf32>
    %156 = tpu.matmul %154, %155, %cst_72 {dimension_numbers = #tpu.dot_dimension_numbers<[1], [0], [0], [1], [0, 0, 1, 1], [], []>} : vector<2x128xbf16>, vector<128x512xbf16>, vector<2x512xf32> -> vector<2x512xf32>
    %157 = arith.addf %152, %156 : vector<2x512xf32>
    %158 = vector.extract_strided_slice %157 {offsets = [0, 0], sizes = [2, 128], strides = [1, 1]} : vector<2x512xf32> to vector<2x128xf32>
    %159 = vector.extract_strided_slice %157 {offsets = [0, 128], sizes = [2, 128], strides = [1, 1]} : vector<2x512xf32> to vector<2x128xf32>
    %160 = vector.extract_strided_slice %157 {offsets = [0, 256], sizes = [2, 128], strides = [1, 1]} : vector<2x512xf32> to vector<2x128xf32>
    %161 = vector.extract_strided_slice %157 {offsets = [0, 384], sizes = [2, 128], strides = [1, 1]} : vector<2x512xf32> to vector<2x128xf32>
    %162 = math.tanh %158 : vector<2x128xf32>
    %163 = arith.negf %160 : vector<2x128xf32>
    %164 = math.exp %163 : vector<2x128xf32>
    %cst_73 = arith.constant 1.000000e+00 : f32
    %165 = vector.broadcast %cst_73 : f32 to vector<2x128xf32>
    %166 = arith.addf %165, %164 : vector<2x128xf32>
    %167 = arith.divf %165, %166 : vector<2x128xf32>
    %168 = arith.negf %161 : vector<2x128xf32>
    %169 = math.exp %168 : vector<2x128xf32>
    %cst_74 = arith.constant 1.000000e+00 : f32
    %170 = vector.broadcast %cst_74 : f32 to vector<2x128xf32>
    %171 = arith.addf %170, %169 : vector<2x128xf32>
    %172 = arith.divf %170, %171 : vector<2x128xf32>
    %cst_75 = arith.constant 0.000000e+00 : f32
    %173 = vector.broadcast %cst_75 : f32 to vector<2x128xf32>
    %174 = arith.subf %173, %160 : vector<2x128xf32>
    %cst_76 = arith.constant 0.000000e+00 : f32
    %175 = vector.broadcast %cst_76 : f32 to vector<2x128xf32>
    %176 = arith.maximumf %174, %175 : vector<2x128xf32>
    %177 = vector.broadcast %cst_76 : f32 to vector<2x128xf32>
    %178 = arith.subf %174, %177 : vector<2x128xf32>
    %179 = arith.cmpf one, %178, %178 : vector<2x128xf32>
    %180 = vector.broadcast %cst_76 : f32 to vector<2x128xf32>
    %181 = arith.addf %174, %180 : vector<2x128xf32>
    %182 = math.absf %178 : vector<2x128xf32>
    %cst_77 = arith.constant 0.000000e+00 : f32
    %183 = vector.broadcast %cst_77 : f32 to vector<2x128xf32>
    %184 = arith.subf %183, %182 : vector<2x128xf32>
    %185 = math.exp %184 : vector<2x128xf32>
    %186 = math.log1p %185 : vector<2x128xf32>
    %187 = arith.addf %176, %186 : vector<2x128xf32>
    %188 = arith.select %179, %181, %187 : vector<2x128xi1>, vector<2x128xf32>
    %cst_78 = arith.constant 0.000000e+00 : f32
    %189 = vector.broadcast %cst_78 : f32 to vector<2x128xf32>
    %190 = arith.subf %189, %188 : vector<2x128xf32>
    %c0_79 = arith.constant 0 : index
    %c0_80 = arith.constant 0 : index
    %191 = vector.load %arg10[%c0_79, %c0_80] : memref<2x128xf32, #tpu.memory_space<vmem>>, vector<2x128xf32>
    %192 = arith.addf %190, %191 : vector<2x128xf32>
    %193 = arith.maximumf %192, %159 : vector<2x128xf32>
    %194 = arith.subf %159, %193 : vector<2x128xf32>
    %195 = math.exp %194 : vector<2x128xf32>
    %c0_81 = arith.constant 0 : index
    %c0_82 = arith.constant 0 : index
    %196 = vector.load %arg8[%c0_81, %c0_82] : memref<2x128xf32, #tpu.memory_space<vmem>>, vector<2x128xf32>
    %197 = arith.mulf %167, %196 : vector<2x128xf32>
    %198 = arith.mulf %195, %162 : vector<2x128xf32>
    %199 = arith.addf %197, %198 : vector<2x128xf32>
    %c0_83 = arith.constant 0 : index
    %c0_84 = arith.constant 0 : index
    %200 = vector.load %arg9[%c0_83, %c0_84] : memref<2x128xf32, #tpu.memory_space<vmem>>, vector<2x128xf32>
    %201 = arith.mulf %167, %200 : vector<2x128xf32>
    %202 = arith.addf %201, %195 : vector<2x128xf32>
    %203 = tpu.reciprocal %202 {approx = true} : vector<2x128xf32> -> vector<2x128xf32>
    %204 = arith.mulf %199, %203 : vector<2x128xf32>
    %205 = arith.mulf %172, %204 : vector<2x128xf32>
    %c0_85 = arith.constant 0 : index
    %c0_86 = arith.constant 0 : index
    %206 = vector.load %arg7[%c0_85, %c0_86] : memref<2x128xf32, #tpu.memory_space<vmem>>, vector<2x128xf32>
    tpu.vector_store %arg7[%c0_85, %c0_86], %205 {strides = array<i32>} : memref<2x128xf32, #tpu.memory_space<vmem>>, vector<2x128xf32>,
    %c0_87 = arith.constant 0 : index
    %c0_88 = arith.constant 0 : index
    %207 = vector.load %arg8[%c0_87, %c0_88] : memref<2x128xf32, #tpu.memory_space<vmem>>, vector<2x128xf32>
    tpu.vector_store %arg8[%c0_87, %c0_88], %199 {strides = array<i32>} : memref<2x128xf32, #tpu.memory_space<vmem>>, vector<2x128xf32>,
    %c0_89 = arith.constant 0 : index
    %c0_90 = arith.constant 0 : index
    %208 = vector.load %arg9[%c0_89, %c0_90] : memref<2x128xf32, #tpu.memory_space<vmem>>, vector<2x128xf32>
    tpu.vector_store %arg9[%c0_89, %c0_90], %202 {strides = array<i32>} : memref<2x128xf32, #tpu.memory_space<vmem>>, vector<2x128xf32>,
    %c0_91 = arith.constant 0 : index
    %c0_92 = arith.constant 0 : index
    %209 = vector.load %arg10[%c0_91, %c0_92] : memref<2x128xf32, #tpu.memory_space<vmem>>, vector<2x128xf32>
    tpu.vector_store %arg10[%c0_91, %c0_92], %193 {strides = array<i32>} : memref<2x128xf32, #tpu.memory_space<vmem>>, vector<2x128xf32>,
    %210 = arith.index_cast %c2_i32 : i32 to index
    %c0_93 = arith.constant 0 : index
    %c0_94 = arith.constant 0 : index
    %211 = vector.load %arg4[%210, %c0_93, %c0_94] : memref<8x2x128xf32, #tpu.memory_space<vmem>>, vector<1x2x128xf32>
    %212 = vector.shape_cast %211 : vector<1x2x128xf32> to vector<2x128xf32>
    %213 = vector.shape_cast %205 : vector<2x128xf32> to vector<1x2x128xf32>
    tpu.vector_store %arg4[%210, %c0_93, %c0_94], %213 {strides = array<i32>} : memref<8x2x128xf32, #tpu.memory_space<vmem>>, vector<1x2x128xf32>,
    %214 = arith.index_cast %c2_i32 : i32 to index
    %c0_95 = arith.constant 0 : index
    %c0_96 = arith.constant 0 : index
    %215 = vector.load %arg5[%214, %c0_95, %c0_96] : memref<8x2x128xf32, #tpu.memory_space<vmem>>, vector<1x2x128xf32>
    %216 = vector.shape_cast %215 : vector<1x2x128xf32> to vector<2x128xf32>
    %217 = vector.shape_cast %199 : vector<2x128xf32> to vector<1x2x128xf32>
    tpu.vector_store %arg5[%214, %c0_95, %c0_96], %217 {strides = array<i32>} : memref<8x2x128xf32, #tpu.memory_space<vmem>>, vector<1x2x128xf32>,
    %218 = arith.index_cast %c2_i32 : i32 to index
    %c0_97 = arith.constant 0 : index
    %c0_98 = arith.constant 0 : index
    %219 = vector.load %arg6[%218, %c0_97, %c0_98] : memref<8x2x128xf32, #tpu.memory_space<vmem>>, vector<1x2x128xf32>
    %220 = vector.shape_cast %219 : vector<1x2x128xf32> to vector<2x128xf32>
    %221 = vector.shape_cast %202 : vector<2x128xf32> to vector<1x2x128xf32>
    tpu.vector_store %arg6[%218, %c0_97, %c0_98], %221 {strides = array<i32>} : memref<8x2x128xf32, #tpu.memory_space<vmem>>, vector<1x2x128xf32>,
    %c3_i32 = arith.constant 3 : i32
    %222 = arith.index_cast %c3_i32 : i32 to index
    %c0_99 = arith.constant 0 : index
    %c0_100 = arith.constant 0 : index
    %223 = vector.load %arg2[%222, %c0_99, %c0_100] : memref<8x2x512xbf16, #tpu.memory_space<vmem>>, vector<1x2x512xbf16>
    %224 = vector.shape_cast %223 : vector<1x2x512xbf16> to vector<2x512xbf16>
    %225 = arith.extf %224 : vector<2x512xbf16> to vector<2x512xf32>
    %c0_101 = arith.constant 0 : index
    %c0_102 = arith.constant 0 : index
    %226 = vector.load %arg7[%c0_101, %c0_102] : memref<2x128xf32, #tpu.memory_space<vmem>>, vector<2x128xf32>
    %227 = arith.truncf %226 : vector<2x128xf32> to vector<2x128xbf16>
    %c0_103 = arith.constant 0 : index
    %c0_104 = arith.constant 0 : index
    %228 = vector.load %arg3[%c0_103, %c0_104] : memref<128x512xbf16, #tpu.memory_space<vmem>>, vector<128x512xbf16>
    %cst_105 = arith.constant dense<0.000000e+00> : vector<2x512xf32>
    %229 = tpu.matmul %227, %228, %cst_105 {dimension_numbers = #tpu.dot_dimension_numbers<[1], [0], [0], [1], [0, 0, 1, 1], [], []>} : vector<2x128xbf16>, vector<128x512xbf16>, vector<2x512xf32> -> vector<2x512xf32>
    %230 = arith.addf %225, %229 : vector<2x512xf32>
    %231 = vector.extract_strided_slice %230 {offsets = [0, 0], sizes = [2, 128], strides = [1, 1]} : vector<2x512xf32> to vector<2x128xf32>
    %232 = vector.extract_strided_slice %230 {offsets = [0, 128], sizes = [2, 128], strides = [1, 1]} : vector<2x512xf32> to vector<2x128xf32>
    %233 = vector.extract_strided_slice %230 {offsets = [0, 256], sizes = [2, 128], strides = [1, 1]} : vector<2x512xf32> to vector<2x128xf32>
    %234 = vector.extract_strided_slice %230 {offsets = [0, 384], sizes = [2, 128], strides = [1, 1]} : vector<2x512xf32> to vector<2x128xf32>
    %235 = math.tanh %231 : vector<2x128xf32>
    %236 = arith.negf %233 : vector<2x128xf32>
    %237 = math.exp %236 : vector<2x128xf32>
    %cst_106 = arith.constant 1.000000e+00 : f32
    %238 = vector.broadcast %cst_106 : f32 to vector<2x128xf32>
    %239 = arith.addf %238, %237 : vector<2x128xf32>
    %240 = arith.divf %238, %239 : vector<2x128xf32>
    %241 = arith.negf %234 : vector<2x128xf32>
    %242 = math.exp %241 : vector<2x128xf32>
    %cst_107 = arith.constant 1.000000e+00 : f32
    %243 = vector.broadcast %cst_107 : f32 to vector<2x128xf32>
    %244 = arith.addf %243, %242 : vector<2x128xf32>
    %245 = arith.divf %243, %244 : vector<2x128xf32>
    %cst_108 = arith.constant 0.000000e+00 : f32
    %246 = vector.broadcast %cst_108 : f32 to vector<2x128xf32>
    %247 = arith.subf %246, %233 : vector<2x128xf32>
    %cst_109 = arith.constant 0.000000e+00 : f32
    %248 = vector.broadcast %cst_109 : f32 to vector<2x128xf32>
    %249 = arith.maximumf %247, %248 : vector<2x128xf32>
    %250 = vector.broadcast %cst_109 : f32 to vector<2x128xf32>
    %251 = arith.subf %247, %250 : vector<2x128xf32>
    %252 = arith.cmpf one, %251, %251 : vector<2x128xf32>
    %253 = vector.broadcast %cst_109 : f32 to vector<2x128xf32>
    %254 = arith.addf %247, %253 : vector<2x128xf32>
    %255 = math.absf %251 : vector<2x128xf32>
    %cst_110 = arith.constant 0.000000e+00 : f32
    %256 = vector.broadcast %cst_110 : f32 to vector<2x128xf32>
    %257 = arith.subf %256, %255 : vector<2x128xf32>
    %258 = math.exp %257 : vector<2x128xf32>
    %259 = math.log1p %258 : vector<2x128xf32>
    %260 = arith.addf %249, %259 : vector<2x128xf32>
    %261 = arith.select %252, %254, %260 : vector<2x128xi1>, vector<2x128xf32>
    %cst_111 = arith.constant 0.000000e+00 : f32
    %262 = vector.broadcast %cst_111 : f32 to vector<2x128xf32>
    %263 = arith.subf %262, %261 : vector<2x128xf32>
    %c0_112 = arith.constant 0 : index
    %c0_113 = arith.constant 0 : index
    %264 = vector.load %arg10[%c0_112, %c0_113] : memref<2x128xf32, #tpu.memory_space<vmem>>, vector<2x128xf32>
    %265 = arith.addf %263, %264 : vector<2x128xf32>
    %266 = arith.maximumf %265, %232 : vector<2x128xf32>
    %267 = arith.subf %232, %266 : vector<2x128xf32>
    %268 = math.exp %267 : vector<2x128xf32>
    %c0_114 = arith.constant 0 : index
    %c0_115 = arith.constant 0 : index
    %269 = vector.load %arg8[%c0_114, %c0_115] : memref<2x128xf32, #tpu.memory_space<vmem>>, vector<2x128xf32>
    %270 = arith.mulf %240, %269 : vector<2x128xf32>
    %271 = arith.mulf %268, %235 : vector<2x128xf32>
    %272 = arith.addf %270, %271 : vector<2x128xf32>
    %c0_116 = arith.constant 0 : index
    %c0_117 = arith.constant 0 : index
    %273 = vector.load %arg9[%c0_116, %c0_117] : memref<2x128xf32, #tpu.memory_space<vmem>>, vector<2x128xf32>
    %274 = arith.mulf %240, %273 : vector<2x128xf32>
    %275 = arith.addf %274, %268 : vector<2x128xf32>
    %276 = tpu.reciprocal %275 {approx = true} : vector<2x128xf32> -> vector<2x128xf32>
    %277 = arith.mulf %272, %276 : vector<2x128xf32>
    %278 = arith.mulf %245, %277 : vector<2x128xf32>
    %c0_118 = arith.constant 0 : index
    %c0_119 = arith.constant 0 : index
    %279 = vector.load %arg7[%c0_118, %c0_119] : memref<2x128xf32, #tpu.memory_space<vmem>>, vector<2x128xf32>
    tpu.vector_store %arg7[%c0_118, %c0_119], %278 {strides = array<i32>} : memref<2x128xf32, #tpu.memory_space<vmem>>, vector<2x128xf32>,
    %c0_120 = arith.constant 0 : index
    %c0_121 = arith.constant 0 : index
    %280 = vector.load %arg8[%c0_120, %c0_121] : memref<2x128xf32, #tpu.memory_space<vmem>>, vector<2x128xf32>
    tpu.vector_store %arg8[%c0_120, %c0_121], %272 {strides = array<i32>} : memref<2x128xf32, #tpu.memory_space<vmem>>, vector<2x128xf32>,
    %c0_122 = arith.constant 0 : index
    %c0_123 = arith.constant 0 : index
    %281 = vector.load %arg9[%c0_122, %c0_123] : memref<2x128xf32, #tpu.memory_space<vmem>>, vector<2x128xf32>
    tpu.vector_store %arg9[%c0_122, %c0_123], %275 {strides = array<i32>} : memref<2x128xf32, #tpu.memory_space<vmem>>, vector<2x128xf32>,
    %c0_124 = arith.constant 0 : index
    %c0_125 = arith.constant 0 : index
    %282 = vector.load %arg10[%c0_124, %c0_125] : memref<2x128xf32, #tpu.memory_space<vmem>>, vector<2x128xf32>
    tpu.vector_store %arg10[%c0_124, %c0_125], %266 {strides = array<i32>} : memref<2x128xf32, #tpu.memory_space<vmem>>, vector<2x128xf32>,
    %283 = arith.index_cast %c3_i32 : i32 to index
    %c0_126 = arith.constant 0 : index
    %c0_127 = arith.constant 0 : index
    %284 = vector.load %arg4[%283, %c0_126, %c0_127] : memref<8x2x128xf32, #tpu.memory_space<vmem>>, vector<1x2x128xf32>
    %285 = vector.shape_cast %284 : vector<1x2x128xf32> to vector<2x128xf32>
    %286 = vector.shape_cast %278 : vector<2x128xf32> to vector<1x2x128xf32>
    tpu.vector_store %arg4[%283, %c0_126, %c0_127], %286 {strides = array<i32>} : memref<8x2x128xf32, #tpu.memory_space<vmem>>, vector<1x2x128xf32>,
    %287 = arith.index_cast %c3_i32 : i32 to index
    %c0_128 = arith.constant 0 : index
    %c0_129 = arith.constant 0 : index
    %288 = vector.load %arg5[%287, %c0_128, %c0_129] : memref<8x2x128xf32, #tpu.memory_space<vmem>>, vector<1x2x128xf32>
    %289 = vector.shape_cast %288 : vector<1x2x128xf32> to vector<2x128xf32>
    %290 = vector.shape_cast %272 : vector<2x128xf32> to vector<1x2x128xf32>
    tpu.vector_store %arg5[%287, %c0_128, %c0_129], %290 {strides = array<i32>} : memref<8x2x128xf32, #tpu.memory_space<vmem>>, vector<1x2x128xf32>,
    %291 = arith.index_cast %c3_i32 : i32 to index
    %c0_130 = arith.constant 0 : index
    %c0_131 = arith.constant 0 : index
    %292 = vector.load %arg6[%291, %c0_130, %c0_131] : memref<8x2x128xf32, #tpu.memory_space<vmem>>, vector<1x2x128xf32>
    %293 = vector.shape_cast %292 : vector<1x2x128xf32> to vector<2x128xf32>
    %294 = vector.shape_cast %275 : vector<2x128xf32> to vector<1x2x128xf32>
    tpu.vector_store %arg6[%291, %c0_130, %c0_131], %294 {strides = array<i32>} : memref<8x2x128xf32, #tpu.memory_space<vmem>>, vector<1x2x128xf32>,
    %c4_i32 = arith.constant 4 : i32
    %295 = arith.index_cast %c4_i32 : i32 to index
    %c0_132 = arith.constant 0 : index
    %c0_133 = arith.constant 0 : index
    %296 = vector.load %arg2[%295, %c0_132, %c0_133] : memref<8x2x512xbf16, #tpu.memory_space<vmem>>, vector<1x2x512xbf16>
    %297 = vector.shape_cast %296 : vector<1x2x512xbf16> to vector<2x512xbf16>
    %298 = arith.extf %297 : vector<2x512xbf16> to vector<2x512xf32>
    %c0_134 = arith.constant 0 : index
    %c0_135 = arith.constant 0 : index
    %299 = vector.load %arg7[%c0_134, %c0_135] : memref<2x128xf32, #tpu.memory_space<vmem>>, vector<2x128xf32>
    %300 = arith.truncf %299 : vector<2x128xf32> to vector<2x128xbf16>
    %c0_136 = arith.constant 0 : index
    %c0_137 = arith.constant 0 : index
    %301 = vector.load %arg3[%c0_136, %c0_137] : memref<128x512xbf16, #tpu.memory_space<vmem>>, vector<128x512xbf16>
    %cst_138 = arith.constant dense<0.000000e+00> : vector<2x512xf32>
    %302 = tpu.matmul %300, %301, %cst_138 {dimension_numbers = #tpu.dot_dimension_numbers<[1], [0], [0], [1], [0, 0, 1, 1], [], []>} : vector<2x128xbf16>, vector<128x512xbf16>, vector<2x512xf32> -> vector<2x512xf32>
    %303 = arith.addf %298, %302 : vector<2x512xf32>
    %304 = vector.extract_strided_slice %303 {offsets = [0, 0], sizes = [2, 128], strides = [1, 1]} : vector<2x512xf32> to vector<2x128xf32>
    %305 = vector.extract_strided_slice %303 {offsets = [0, 128], sizes = [2, 128], strides = [1, 1]} : vector<2x512xf32> to vector<2x128xf32>
    %306 = vector.extract_strided_slice %303 {offsets = [0, 256], sizes = [2, 128], strides = [1, 1]} : vector<2x512xf32> to vector<2x128xf32>
    %307 = vector.extract_strided_slice %303 {offsets = [0, 384], sizes = [2, 128], strides = [1, 1]} : vector<2x512xf32> to vector<2x128xf32>
    %308 = math.tanh %304 : vector<2x128xf32>
    %309 = arith.negf %306 : vector<2x128xf32>
    %310 = math.exp %309 : vector<2x128xf32>
    %cst_139 = arith.constant 1.000000e+00 : f32
    %311 = vector.broadcast %cst_139 : f32 to vector<2x128xf32>
    %312 = arith.addf %311, %310 : vector<2x128xf32>
    %313 = arith.divf %311, %312 : vector<2x128xf32>
    %314 = arith.negf %307 : vector<2x128xf32>
    %315 = math.exp %314 : vector<2x128xf32>
    %cst_140 = arith.constant 1.000000e+00 : f32
    %316 = vector.broadcast %cst_140 : f32 to vector<2x128xf32>
    %317 = arith.addf %316, %315 : vector<2x128xf32>
    %318 = arith.divf %316, %317 : vector<2x128xf32>
    %cst_141 = arith.constant 0.000000e+00 : f32
    %319 = vector.broadcast %cst_141 : f32 to vector<2x128xf32>
    %320 = arith.subf %319, %306 : vector<2x128xf32>
    %cst_142 = arith.constant 0.000000e+00 : f32
    %321 = vector.broadcast %cst_142 : f32 to vector<2x128xf32>
    %322 = arith.maximumf %320, %321 : vector<2x128xf32>
    %323 = vector.broadcast %cst_142 : f32 to vector<2x128xf32>
    %324 = arith.subf %320, %323 : vector<2x128xf32>
    %325 = arith.cmpf one, %324, %324 : vector<2x128xf32>
    %326 = vector.broadcast %cst_142 : f32 to vector<2x128xf32>
    %327 = arith.addf %320, %326 : vector<2x128xf32>
    %328 = math.absf %324 : vector<2x128xf32>
    %cst_143 = arith.constant 0.000000e+00 : f32
    %329 = vector.broadcast %cst_143 : f32 to vector<2x128xf32>
    %330 = arith.subf %329, %328 : vector<2x128xf32>
    %331 = math.exp %330 : vector<2x128xf32>
    %332 = math.log1p %331 : vector<2x128xf32>
    %333 = arith.addf %322, %332 : vector<2x128xf32>
    %334 = arith.select %325, %327, %333 : vector<2x128xi1>, vector<2x128xf32>
    %cst_144 = arith.constant 0.000000e+00 : f32
    %335 = vector.broadcast %cst_144 : f32 to vector<2x128xf32>
    %336 = arith.subf %335, %334 : vector<2x128xf32>
    %c0_145 = arith.constant 0 : index
    %c0_146 = arith.constant 0 : index
    %337 = vector.load %arg10[%c0_145, %c0_146] : memref<2x128xf32, #tpu.memory_space<vmem>>, vector<2x128xf32>
    %338 = arith.addf %336, %337 : vector<2x128xf32>
    %339 = arith.maximumf %338, %305 : vector<2x128xf32>
    %340 = arith.subf %305, %339 : vector<2x128xf32>
    %341 = math.exp %340 : vector<2x128xf32>
    %c0_147 = arith.constant 0 : index
    %c0_148 = arith.constant 0 : index
    %342 = vector.load %arg8[%c0_147, %c0_148] : memref<2x128xf32, #tpu.memory_space<vmem>>, vector<2x128xf32>
    %343 = arith.mulf %313, %342 : vector<2x128xf32>
    %344 = arith.mulf %341, %308 : vector<2x128xf32>
    %345 = arith.addf %343, %344 : vector<2x128xf32>
    %c0_149 = arith.constant 0 : index
    %c0_150 = arith.constant 0 : index
    %346 = vector.load %arg9[%c0_149, %c0_150] : memref<2x128xf32, #tpu.memory_space<vmem>>, vector<2x128xf32>
    %347 = arith.mulf %313, %346 : vector<2x128xf32>
    %348 = arith.addf %347, %341 : vector<2x128xf32>
    %349 = tpu.reciprocal %348 {approx = true} : vector<2x128xf32> -> vector<2x128xf32>
    %350 = arith.mulf %345, %349 : vector<2x128xf32>
    %351 = arith.mulf %318, %350 : vector<2x128xf32>
    %c0_151 = arith.constant 0 : index
    %c0_152 = arith.constant 0 : index
    %352 = vector.load %arg7[%c0_151, %c0_152] : memref<2x128xf32, #tpu.memory_space<vmem>>, vector<2x128xf32>
    tpu.vector_store %arg7[%c0_151, %c0_152], %351 {strides = array<i32>} : memref<2x128xf32, #tpu.memory_space<vmem>>, vector<2x128xf32>,
    %c0_153 = arith.constant 0 : index
    %c0_154 = arith.constant 0 : index
    %353 = vector.load %arg8[%c0_153, %c0_154] : memref<2x128xf32, #tpu.memory_space<vmem>>, vector<2x128xf32>
    tpu.vector_store %arg8[%c0_153, %c0_154], %345 {strides = array<i32>} : memref<2x128xf32, #tpu.memory_space<vmem>>, vector<2x128xf32>,
    %c0_155 = arith.constant 0 : index
    %c0_156 = arith.constant 0 : index
    %354 = vector.load %arg9[%c0_155, %c0_156] : memref<2x128xf32, #tpu.memory_space<vmem>>, vector<2x128xf32>
    tpu.vector_store %arg9[%c0_155, %c0_156], %348 {strides = array<i32>} : memref<2x128xf32, #tpu.memory_space<vmem>>, vector<2x128xf32>,
    %c0_157 = arith.constant 0 : index
    %c0_158 = arith.constant 0 : index
    %355 = vector.load %arg10[%c0_157, %c0_158] : memref<2x128xf32, #tpu.memory_space<vmem>>, vector<2x128xf32>
    tpu.vector_store %arg10[%c0_157, %c0_158], %339 {strides = array<i32>} : memref<2x128xf32, #tpu.memory_space<vmem>>, vector<2x128xf32>,
    %356 = arith.index_cast %c4_i32 : i32 to index
    %c0_159 = arith.constant 0 : index
    %c0_160 = arith.constant 0 : index
    %357 = vector.load %arg4[%356, %c0_159, %c0_160] : memref<8x2x128xf32, #tpu.memory_space<vmem>>, vector<1x2x128xf32>
    %358 = vector.shape_cast %357 : vector<1x2x128xf32> to vector<2x128xf32>
    %359 = vector.shape_cast %351 : vector<2x128xf32> to vector<1x2x128xf32>
    tpu.vector_store %arg4[%356, %c0_159, %c0_160], %359 {strides = array<i32>} : memref<8x2x128xf32, #tpu.memory_space<vmem>>, vector<1x2x128xf32>,
    %360 = arith.index_cast %c4_i32 : i32 to index
    %c0_161 = arith.constant 0 : index
    %c0_162 = arith.constant 0 : index
    %361 = vector.load %arg5[%360, %c0_161, %c0_162] : memref<8x2x128xf32, #tpu.memory_space<vmem>>, vector<1x2x128xf32>
    %362 = vector.shape_cast %361 : vector<1x2x128xf32> to vector<2x128xf32>
    %363 = vector.shape_cast %345 : vector<2x128xf32> to vector<1x2x128xf32>
    tpu.vector_store %arg5[%360, %c0_161, %c0_162], %363 {strides = array<i32>} : memref<8x2x128xf32, #tpu.memory_space<vmem>>, vector<1x2x128xf32>,
    %364 = arith.index_cast %c4_i32 : i32 to index
    %c0_163 = arith.constant 0 : index
    %c0_164 = arith.constant 0 : index
    %365 = vector.load %arg6[%364, %c0_163, %c0_164] : memref<8x2x128xf32, #tpu.memory_space<vmem>>, vector<1x2x128xf32>
    %366 = vector.shape_cast %365 : vector<1x2x128xf32> to vector<2x128xf32>
    %367 = vector.shape_cast %348 : vector<2x128xf32> to vector<1x2x128xf32>
    tpu.vector_store %arg6[%364, %c0_163, %c0_164], %367 {strides = array<i32>} : memref<8x2x128xf32, #tpu.memory_space<vmem>>, vector<1x2x128xf32>,
    %c5_i32 = arith.constant 5 : i32
    %368 = arith.index_cast %c5_i32 : i32 to index
    %c0_165 = arith.constant 0 : index
    %c0_166 = arith.constant 0 : index
    %369 = vector.load %arg2[%368, %c0_165, %c0_166] : memref<8x2x512xbf16, #tpu.memory_space<vmem>>, vector<1x2x512xbf16>
    %370 = vector.shape_cast %369 : vector<1x2x512xbf16> to vector<2x512xbf16>
    %371 = arith.extf %370 : vector<2x512xbf16> to vector<2x512xf32>
    %c0_167 = arith.constant 0 : index
    %c0_168 = arith.constant 0 : index
    %372 = vector.load %arg7[%c0_167, %c0_168] : memref<2x128xf32, #tpu.memory_space<vmem>>, vector<2x128xf32>
    %373 = arith.truncf %372 : vector<2x128xf32> to vector<2x128xbf16>
    %c0_169 = arith.constant 0 : index
    %c0_170 = arith.constant 0 : index
    %374 = vector.load %arg3[%c0_169, %c0_170] : memref<128x512xbf16, #tpu.memory_space<vmem>>, vector<128x512xbf16>
    %cst_171 = arith.constant dense<0.000000e+00> : vector<2x512xf32>
    %375 = tpu.matmul %373, %374, %cst_171 {dimension_numbers = #tpu.dot_dimension_numbers<[1], [0], [0], [1], [0, 0, 1, 1], [], []>} : vector<2x128xbf16>, vector<128x512xbf16>, vector<2x512xf32> -> vector<2x512xf32>
    %376 = arith.addf %371, %375 : vector<2x512xf32>
    %377 = vector.extract_strided_slice %376 {offsets = [0, 0], sizes = [2, 128], strides = [1, 1]} : vector<2x512xf32> to vector<2x128xf32>
    %378 = vector.extract_strided_slice %376 {offsets = [0, 128], sizes = [2, 128], strides = [1, 1]} : vector<2x512xf32> to vector<2x128xf32>
    %379 = vector.extract_strided_slice %376 {offsets = [0, 256], sizes = [2, 128], strides = [1, 1]} : vector<2x512xf32> to vector<2x128xf32>
    %380 = vector.extract_strided_slice %376 {offsets = [0, 384], sizes = [2, 128], strides = [1, 1]} : vector<2x512xf32> to vector<2x128xf32>
    %381 = math.tanh %377 : vector<2x128xf32>
    %382 = arith.negf %379 : vector<2x128xf32>
    %383 = math.exp %382 : vector<2x128xf32>
    %cst_172 = arith.constant 1.000000e+00 : f32
    %384 = vector.broadcast %cst_172 : f32 to vector<2x128xf32>
    %385 = arith.addf %384, %383 : vector<2x128xf32>
    %386 = arith.divf %384, %385 : vector<2x128xf32>
    %387 = arith.negf %380 : vector<2x128xf32>
    %388 = math.exp %387 : vector<2x128xf32>
    %cst_173 = arith.constant 1.000000e+00 : f32
    %389 = vector.broadcast %cst_173 : f32 to vector<2x128xf32>
    %390 = arith.addf %389, %388 : vector<2x128xf32>
    %391 = arith.divf %389, %390 : vector<2x128xf32>
    %cst_174 = arith.constant 0.000000e+00 : f32
    %392 = vector.broadcast %cst_174 : f32 to vector<2x128xf32>
    %393 = arith.subf %392, %379 : vector<2x128xf32>
    %cst_175 = arith.constant 0.000000e+00 : f32
    %394 = vector.broadcast %cst_175 : f32 to vector<2x128xf32>
    %395 = arith.maximumf %393, %394 : vector<2x128xf32>
    %396 = vector.broadcast %cst_175 : f32 to vector<2x128xf32>
    %397 = arith.subf %393, %396 : vector<2x128xf32>
    %398 = arith.cmpf one, %397, %397 : vector<2x128xf32>
    %399 = vector.broadcast %cst_175 : f32 to vector<2x128xf32>
    %400 = arith.addf %393, %399 : vector<2x128xf32>
    %401 = math.absf %397 : vector<2x128xf32>
    %cst_176 = arith.constant 0.000000e+00 : f32
    %402 = vector.broadcast %cst_176 : f32 to vector<2x128xf32>
    %403 = arith.subf %402, %401 : vector<2x128xf32>
    %404 = math.exp %403 : vector<2x128xf32>
    %405 = math.log1p %404 : vector<2x128xf32>
    %406 = arith.addf %395, %405 : vector<2x128xf32>
    %407 = arith.select %398, %400, %406 : vector<2x128xi1>, vector<2x128xf32>
    %cst_177 = arith.constant 0.000000e+00 : f32
    %408 = vector.broadcast %cst_177 : f32 to vector<2x128xf32>
    %409 = arith.subf %408, %407 : vector<2x128xf32>
    %c0_178 = arith.constant 0 : index
    %c0_179 = arith.constant 0 : index
    %410 = vector.load %arg10[%c0_178, %c0_179] : memref<2x128xf32, #tpu.memory_space<vmem>>, vector<2x128xf32>
    %411 = arith.addf %409, %410 : vector<2x128xf32>
    %412 = arith.maximumf %411, %378 : vector<2x128xf32>
    %413 = arith.subf %378, %412 : vector<2x128xf32>
    %414 = math.exp %413 : vector<2x128xf32>
    %c0_180 = arith.constant 0 : index
    %c0_181 = arith.constant 0 : index
    %415 = vector.load %arg8[%c0_180, %c0_181] : memref<2x128xf32, #tpu.memory_space<vmem>>, vector<2x128xf32>
    %416 = arith.mulf %386, %415 : vector<2x128xf32>
    %417 = arith.mulf %414, %381 : vector<2x128xf32>
    %418 = arith.addf %416, %417 : vector<2x128xf32>
    %c0_182 = arith.constant 0 : index
    %c0_183 = arith.constant 0 : index
    %419 = vector.load %arg9[%c0_182, %c0_183] : memref<2x128xf32, #tpu.memory_space<vmem>>, vector<2x128xf32>
    %420 = arith.mulf %386, %419 : vector<2x128xf32>
    %421 = arith.addf %420, %414 : vector<2x128xf32>
    %422 = tpu.reciprocal %421 {approx = true} : vector<2x128xf32> -> vector<2x128xf32>
    %423 = arith.mulf %418, %422 : vector<2x128xf32>
    %424 = arith.mulf %391, %423 : vector<2x128xf32>
    %c0_184 = arith.constant 0 : index
    %c0_185 = arith.constant 0 : index
    %425 = vector.load %arg7[%c0_184, %c0_185] : memref<2x128xf32, #tpu.memory_space<vmem>>, vector<2x128xf32>
    tpu.vector_store %arg7[%c0_184, %c0_185], %424 {strides = array<i32>} : memref<2x128xf32, #tpu.memory_space<vmem>>, vector<2x128xf32>,
    %c0_186 = arith.constant 0 : index
    %c0_187 = arith.constant 0 : index
    %426 = vector.load %arg8[%c0_186, %c0_187] : memref<2x128xf32, #tpu.memory_space<vmem>>, vector<2x128xf32>
    tpu.vector_store %arg8[%c0_186, %c0_187], %418 {strides = array<i32>} : memref<2x128xf32, #tpu.memory_space<vmem>>, vector<2x128xf32>,
    %c0_188 = arith.constant 0 : index
    %c0_189 = arith.constant 0 : index
    %427 = vector.load %arg9[%c0_188, %c0_189] : memref<2x128xf32, #tpu.memory_space<vmem>>, vector<2x128xf32>
    tpu.vector_store %arg9[%c0_188, %c0_189], %421 {strides = array<i32>} : memref<2x128xf32, #tpu.memory_space<vmem>>, vector<2x128xf32>,
    %c0_190 = arith.constant 0 : index
    %c0_191 = arith.constant 0 : index
    %428 = vector.load %arg10[%c0_190, %c0_191] : memref<2x128xf32, #tpu.memory_space<vmem>>, vector<2x128xf32>
    tpu.vector_store %arg10[%c0_190, %c0_191], %412 {strides = array<i32>} : memref<2x128xf32, #tpu.memory_space<vmem>>, vector<2x128xf32>,
    %429 = arith.index_cast %c5_i32 : i32 to index
    %c0_192 = arith.constant 0 : index
    %c0_193 = arith.constant 0 : index
    %430 = vector.load %arg4[%429, %c0_192, %c0_193] : memref<8x2x128xf32, #tpu.memory_space<vmem>>, vector<1x2x128xf32>
    %431 = vector.shape_cast %430 : vector<1x2x128xf32> to vector<2x128xf32>
    %432 = vector.shape_cast %424 : vector<2x128xf32> to vector<1x2x128xf32>
    tpu.vector_store %arg4[%429, %c0_192, %c0_193], %432 {strides = array<i32>} : memref<8x2x128xf32, #tpu.memory_space<vmem>>, vector<1x2x128xf32>,
    %433 = arith.index_cast %c5_i32 : i32 to index
    %c0_194 = arith.constant 0 : index
    %c0_195 = arith.constant 0 : index
    %434 = vector.load %arg5[%433, %c0_194, %c0_195] : memref<8x2x128xf32, #tpu.memory_space<vmem>>, vector<1x2x128xf32>
    %435 = vector.shape_cast %434 : vector<1x2x128xf32> to vector<2x128xf32>
    %436 = vector.shape_cast %418 : vector<2x128xf32> to vector<1x2x128xf32>
    tpu.vector_store %arg5[%433, %c0_194, %c0_195], %436 {strides = array<i32>} : memref<8x2x128xf32, #tpu.memory_space<vmem>>, vector<1x2x128xf32>,
    %437 = arith.index_cast %c5_i32 : i32 to index
    %c0_196 = arith.constant 0 : index
    %c0_197 = arith.constant 0 : index
    %438 = vector.load %arg6[%437, %c0_196, %c0_197] : memref<8x2x128xf32, #tpu.memory_space<vmem>>, vector<1x2x128xf32>
    %439 = vector.shape_cast %438 : vector<1x2x128xf32> to vector<2x128xf32>
    %440 = vector.shape_cast %421 : vector<2x128xf32> to vector<1x2x128xf32>
    tpu.vector_store %arg6[%437, %c0_196, %c0_197], %440 {strides = array<i32>} : memref<8x2x128xf32, #tpu.memory_space<vmem>>, vector<1x2x128xf32>,
    %c6_i32 = arith.constant 6 : i32
    %441 = arith.index_cast %c6_i32 : i32 to index
    %c0_198 = arith.constant 0 : index
    %c0_199 = arith.constant 0 : index
    %442 = vector.load %arg2[%441, %c0_198, %c0_199] : memref<8x2x512xbf16, #tpu.memory_space<vmem>>, vector<1x2x512xbf16>
    %443 = vector.shape_cast %442 : vector<1x2x512xbf16> to vector<2x512xbf16>
    %444 = arith.extf %443 : vector<2x512xbf16> to vector<2x512xf32>
    %c0_200 = arith.constant 0 : index
    %c0_201 = arith.constant 0 : index
    %445 = vector.load %arg7[%c0_200, %c0_201] : memref<2x128xf32, #tpu.memory_space<vmem>>, vector<2x128xf32>
    %446 = arith.truncf %445 : vector<2x128xf32> to vector<2x128xbf16>
    %c0_202 = arith.constant 0 : index
    %c0_203 = arith.constant 0 : index
    %447 = vector.load %arg3[%c0_202, %c0_203] : memref<128x512xbf16, #tpu.memory_space<vmem>>, vector<128x512xbf16>
    %cst_204 = arith.constant dense<0.000000e+00> : vector<2x512xf32>
    %448 = tpu.matmul %446, %447, %cst_204 {dimension_numbers = #tpu.dot_dimension_numbers<[1], [0], [0], [1], [0, 0, 1, 1], [], []>} : vector<2x128xbf16>, vector<128x512xbf16>, vector<2x512xf32> -> vector<2x512xf32>
    %449 = arith.addf %444, %448 : vector<2x512xf32>
    %450 = vector.extract_strided_slice %449 {offsets = [0, 0], sizes = [2, 128], strides = [1, 1]} : vector<2x512xf32> to vector<2x128xf32>
    %451 = vector.extract_strided_slice %449 {offsets = [0, 128], sizes = [2, 128], strides = [1, 1]} : vector<2x512xf32> to vector<2x128xf32>
    %452 = vector.extract_strided_slice %449 {offsets = [0, 256], sizes = [2, 128], strides = [1, 1]} : vector<2x512xf32> to vector<2x128xf32>
    %453 = vector.extract_strided_slice %449 {offsets = [0, 384], sizes = [2, 128], strides = [1, 1]} : vector<2x512xf32> to vector<2x128xf32>
    %454 = math.tanh %450 : vector<2x128xf32>
    %455 = arith.negf %452 : vector<2x128xf32>
    %456 = math.exp %455 : vector<2x128xf32>
    %cst_205 = arith.constant 1.000000e+00 : f32
    %457 = vector.broadcast %cst_205 : f32 to vector<2x128xf32>
    %458 = arith.addf %457, %456 : vector<2x128xf32>
    %459 = arith.divf %457, %458 : vector<2x128xf32>
    %460 = arith.negf %453 : vector<2x128xf32>
    %461 = math.exp %460 : vector<2x128xf32>
    %cst_206 = arith.constant 1.000000e+00 : f32
    %462 = vector.broadcast %cst_206 : f32 to vector<2x128xf32>
    %463 = arith.addf %462, %461 : vector<2x128xf32>
    %464 = arith.divf %462, %463 : vector<2x128xf32>
    %cst_207 = arith.constant 0.000000e+00 : f32
    %465 = vector.broadcast %cst_207 : f32 to vector<2x128xf32>
    %466 = arith.subf %465, %452 : vector<2x128xf32>
    %cst_208 = arith.constant 0.000000e+00 : f32
    %467 = vector.broadcast %cst_208 : f32 to vector<2x128xf32>
    %468 = arith.maximumf %466, %467 : vector<2x128xf32>
    %469 = vector.broadcast %cst_208 : f32 to vector<2x128xf32>
    %470 = arith.subf %466, %469 : vector<2x128xf32>
    %471 = arith.cmpf one, %470, %470 : vector<2x128xf32>
    %472 = vector.broadcast %cst_208 : f32 to vector<2x128xf32>
    %473 = arith.addf %466, %472 : vector<2x128xf32>
    %474 = math.absf %470 : vector<2x128xf32>
    %cst_209 = arith.constant 0.000000e+00 : f32
    %475 = vector.broadcast %cst_209 : f32 to vector<2x128xf32>
    %476 = arith.subf %475, %474 : vector<2x128xf32>
    %477 = math.exp %476 : vector<2x128xf32>
    %478 = math.log1p %477 : vector<2x128xf32>
    %479 = arith.addf %468, %478 : vector<2x128xf32>
    %480 = arith.select %471, %473, %479 : vector<2x128xi1>, vector<2x128xf32>
    %cst_210 = arith.constant 0.000000e+00 : f32
    %481 = vector.broadcast %cst_210 : f32 to vector<2x128xf32>
    %482 = arith.subf %481, %480 : vector<2x128xf32>
    %c0_211 = arith.constant 0 : index
    %c0_212 = arith.constant 0 : index
    %483 = vector.load %arg10[%c0_211, %c0_212] : memref<2x128xf32, #tpu.memory_space<vmem>>, vector<2x128xf32>
    %484 = arith.addf %482, %483 : vector<2x128xf32>
    %485 = arith.maximumf %484, %451 : vector<2x128xf32>
    %486 = arith.subf %451, %485 : vector<2x128xf32>
    %487 = math.exp %486 : vector<2x128xf32>
    %c0_213 = arith.constant 0 : index
    %c0_214 = arith.constant 0 : index
    %488 = vector.load %arg8[%c0_213, %c0_214] : memref<2x128xf32, #tpu.memory_space<vmem>>, vector<2x128xf32>
    %489 = arith.mulf %459, %488 : vector<2x128xf32>
    %490 = arith.mulf %487, %454 : vector<2x128xf32>
    %491 = arith.addf %489, %490 : vector<2x128xf32>
    %c0_215 = arith.constant 0 : index
    %c0_216 = arith.constant 0 : index
    %492 = vector.load %arg9[%c0_215, %c0_216] : memref<2x128xf32, #tpu.memory_space<vmem>>, vector<2x128xf32>
    %493 = arith.mulf %459, %492 : vector<2x128xf32>
    %494 = arith.addf %493, %487 : vector<2x128xf32>
    %495 = tpu.reciprocal %494 {approx = true} : vector<2x128xf32> -> vector<2x128xf32>
    %496 = arith.mulf %491, %495 : vector<2x128xf32>
    %497 = arith.mulf %464, %496 : vector<2x128xf32>
    %c0_217 = arith.constant 0 : index
    %c0_218 = arith.constant 0 : index
    %498 = vector.load %arg7[%c0_217, %c0_218] : memref<2x128xf32, #tpu.memory_space<vmem>>, vector<2x128xf32>
    tpu.vector_store %arg7[%c0_217, %c0_218], %497 {strides = array<i32>} : memref<2x128xf32, #tpu.memory_space<vmem>>, vector<2x128xf32>,
    %c0_219 = arith.constant 0 : index
    %c0_220 = arith.constant 0 : index
    %499 = vector.load %arg8[%c0_219, %c0_220] : memref<2x128xf32, #tpu.memory_space<vmem>>, vector<2x128xf32>
    tpu.vector_store %arg8[%c0_219, %c0_220], %491 {strides = array<i32>} : memref<2x128xf32, #tpu.memory_space<vmem>>, vector<2x128xf32>,
    %c0_221 = arith.constant 0 : index
    %c0_222 = arith.constant 0 : index
    %500 = vector.load %arg9[%c0_221, %c0_222] : memref<2x128xf32, #tpu.memory_space<vmem>>, vector<2x128xf32>
    tpu.vector_store %arg9[%c0_221, %c0_222], %494 {strides = array<i32>} : memref<2x128xf32, #tpu.memory_space<vmem>>, vector<2x128xf32>,
    %c0_223 = arith.constant 0 : index
    %c0_224 = arith.constant 0 : index
    %501 = vector.load %arg10[%c0_223, %c0_224] : memref<2x128xf32, #tpu.memory_space<vmem>>, vector<2x128xf32>
    tpu.vector_store %arg10[%c0_223, %c0_224], %485 {strides = array<i32>} : memref<2x128xf32, #tpu.memory_space<vmem>>, vector<2x128xf32>,
    %502 = arith.index_cast %c6_i32 : i32 to index
    %c0_225 = arith.constant 0 : index
    %c0_226 = arith.constant 0 : index
    %503 = vector.load %arg4[%502, %c0_225, %c0_226] : memref<8x2x128xf32, #tpu.memory_space<vmem>>, vector<1x2x128xf32>
    %504 = vector.shape_cast %503 : vector<1x2x128xf32> to vector<2x128xf32>
    %505 = vector.shape_cast %497 : vector<2x128xf32> to vector<1x2x128xf32>
    tpu.vector_store %arg4[%502, %c0_225, %c0_226], %505 {strides = array<i32>} : memref<8x2x128xf32, #tpu.memory_space<vmem>>, vector<1x2x128xf32>,
    %506 = arith.index_cast %c6_i32 : i32 to index
    %c0_227 = arith.constant 0 : index
    %c0_228 = arith.constant 0 : index
    %507 = vector.load %arg5[%506, %c0_227, %c0_228] : memref<8x2x128xf32, #tpu.memory_space<vmem>>, vector<1x2x128xf32>
    %508 = vector.shape_cast %507 : vector<1x2x128xf32> to vector<2x128xf32>
    %509 = vector.shape_cast %491 : vector<2x128xf32> to vector<1x2x128xf32>
    tpu.vector_store %arg5[%506, %c0_227, %c0_228], %509 {strides = array<i32>} : memref<8x2x128xf32, #tpu.memory_space<vmem>>, vector<1x2x128xf32>,
    %510 = arith.index_cast %c6_i32 : i32 to index
    %c0_229 = arith.constant 0 : index
    %c0_230 = arith.constant 0 : index
    %511 = vector.load %arg6[%510, %c0_229, %c0_230] : memref<8x2x128xf32, #tpu.memory_space<vmem>>, vector<1x2x128xf32>
    %512 = vector.shape_cast %511 : vector<1x2x128xf32> to vector<2x128xf32>
    %513 = vector.shape_cast %494 : vector<2x128xf32> to vector<1x2x128xf32>
    tpu.vector_store %arg6[%510, %c0_229, %c0_230], %513 {strides = array<i32>} : memref<8x2x128xf32, #tpu.memory_space<vmem>>, vector<1x2x128xf32>,
    %c7_i32 = arith.constant 7 : i32
    %514 = arith.index_cast %c7_i32 : i32 to index
    %c0_231 = arith.constant 0 : index
    %c0_232 = arith.constant 0 : index
    %515 = vector.load %arg2[%514, %c0_231, %c0_232] : memref<8x2x512xbf16, #tpu.memory_space<vmem>>, vector<1x2x512xbf16>
    %516 = vector.shape_cast %515 : vector<1x2x512xbf16> to vector<2x512xbf16>
    %517 = arith.extf %516 : vector<2x512xbf16> to vector<2x512xf32>
    %c0_233 = arith.constant 0 : index
    %c0_234 = arith.constant 0 : index
    %518 = vector.load %arg7[%c0_233, %c0_234] : memref<2x128xf32, #tpu.memory_space<vmem>>, vector<2x128xf32>
    %519 = arith.truncf %518 : vector<2x128xf32> to vector<2x128xbf16>
    %c0_235 = arith.constant 0 : index
    %c0_236 = arith.constant 0 : index
    %520 = vector.load %arg3[%c0_235, %c0_236] : memref<128x512xbf16, #tpu.memory_space<vmem>>, vector<128x512xbf16>
    %cst_237 = arith.constant dense<0.000000e+00> : vector<2x512xf32>
    %521 = tpu.matmul %519, %520, %cst_237 {dimension_numbers = #tpu.dot_dimension_numbers<[1], [0], [0], [1], [0, 0, 1, 1], [], []>} : vector<2x128xbf16>, vector<128x512xbf16>, vector<2x512xf32> -> vector<2x512xf32>
    %522 = arith.addf %517, %521 : vector<2x512xf32>
    %523 = vector.extract_strided_slice %522 {offsets = [0, 0], sizes = [2, 128], strides = [1, 1]} : vector<2x512xf32> to vector<2x128xf32>
    %524 = vector.extract_strided_slice %522 {offsets = [0, 128], sizes = [2, 128], strides = [1, 1]} : vector<2x512xf32> to vector<2x128xf32>
    %525 = vector.extract_strided_slice %522 {offsets = [0, 256], sizes = [2, 128], strides = [1, 1]} : vector<2x512xf32> to vector<2x128xf32>
    %526 = vector.extract_strided_slice %522 {offsets = [0, 384], sizes = [2, 128], strides = [1, 1]} : vector<2x512xf32> to vector<2x128xf32>
    %527 = math.tanh %523 : vector<2x128xf32>
    %528 = arith.negf %525 : vector<2x128xf32>
    %529 = math.exp %528 : vector<2x128xf32>
    %cst_238 = arith.constant 1.000000e+00 : f32
    %530 = vector.broadcast %cst_238 : f32 to vector<2x128xf32>
    %531 = arith.addf %530, %529 : vector<2x128xf32>
    %532 = arith.divf %530, %531 : vector<2x128xf32>
    %533 = arith.negf %526 : vector<2x128xf32>
    %534 = math.exp %533 : vector<2x128xf32>
    %cst_239 = arith.constant 1.000000e+00 : f32
    %535 = vector.broadcast %cst_239 : f32 to vector<2x128xf32>
    %536 = arith.addf %535, %534 : vector<2x128xf32>
    %537 = arith.divf %535, %536 : vector<2x128xf32>
    %cst_240 = arith.constant 0.000000e+00 : f32
    %538 = vector.broadcast %cst_240 : f32 to vector<2x128xf32>
    %539 = arith.subf %538, %525 : vector<2x128xf32>
    %cst_241 = arith.constant 0.000000e+00 : f32
    %540 = vector.broadcast %cst_241 : f32 to vector<2x128xf32>
    %541 = arith.maximumf %539, %540 : vector<2x128xf32>
    %542 = vector.broadcast %cst_241 : f32 to vector<2x128xf32>
    %543 = arith.subf %539, %542 : vector<2x128xf32>
    %544 = arith.cmpf one, %543, %543 : vector<2x128xf32>
    %545 = vector.broadcast %cst_241 : f32 to vector<2x128xf32>
    %546 = arith.addf %539, %545 : vector<2x128xf32>
    %547 = math.absf %543 : vector<2x128xf32>
    %cst_242 = arith.constant 0.000000e+00 : f32
    %548 = vector.broadcast %cst_242 : f32 to vector<2x128xf32>
    %549 = arith.subf %548, %547 : vector<2x128xf32>
    %550 = math.exp %549 : vector<2x128xf32>
    %551 = math.log1p %550 : vector<2x128xf32>
    %552 = arith.addf %541, %551 : vector<2x128xf32>
    %553 = arith.select %544, %546, %552 : vector<2x128xi1>, vector<2x128xf32>
    %cst_243 = arith.constant 0.000000e+00 : f32
    %554 = vector.broadcast %cst_243 : f32 to vector<2x128xf32>
    %555 = arith.subf %554, %553 : vector<2x128xf32>
    %c0_244 = arith.constant 0 : index
    %c0_245 = arith.constant 0 : index
    %556 = vector.load %arg10[%c0_244, %c0_245] : memref<2x128xf32, #tpu.memory_space<vmem>>, vector<2x128xf32>
    %557 = arith.addf %555, %556 : vector<2x128xf32>
    %558 = arith.maximumf %557, %524 : vector<2x128xf32>
    %559 = arith.subf %524, %558 : vector<2x128xf32>
    %560 = math.exp %559 : vector<2x128xf32>
    %c0_246 = arith.constant 0 : index
    %c0_247 = arith.constant 0 : index
    %561 = vector.load %arg8[%c0_246, %c0_247] : memref<2x128xf32, #tpu.memory_space<vmem>>, vector<2x128xf32>
    %562 = arith.mulf %532, %561 : vector<2x128xf32>
    %563 = arith.mulf %560, %527 : vector<2x128xf32>
    %564 = arith.addf %562, %563 : vector<2x128xf32>
    %c0_248 = arith.constant 0 : index
    %c0_249 = arith.constant 0 : index
    %565 = vector.load %arg9[%c0_248, %c0_249] : memref<2x128xf32, #tpu.memory_space<vmem>>, vector<2x128xf32>
    %566 = arith.mulf %532, %565 : vector<2x128xf32>
    %567 = arith.addf %566, %560 : vector<2x128xf32>
    %568 = tpu.reciprocal %567 {approx = true} : vector<2x128xf32> -> vector<2x128xf32>
    %569 = arith.mulf %564, %568 : vector<2x128xf32>
    %570 = arith.mulf %537, %569 : vector<2x128xf32>
    %c0_250 = arith.constant 0 : index
    %c0_251 = arith.constant 0 : index
    %571 = vector.load %arg7[%c0_250, %c0_251] : memref<2x128xf32, #tpu.memory_space<vmem>>, vector<2x128xf32>
    tpu.vector_store %arg7[%c0_250, %c0_251], %570 {strides = array<i32>} : memref<2x128xf32, #tpu.memory_space<vmem>>, vector<2x128xf32>,
    %c0_252 = arith.constant 0 : index
    %c0_253 = arith.constant 0 : index
    %572 = vector.load %arg8[%c0_252, %c0_253] : memref<2x128xf32, #tpu.memory_space<vmem>>, vector<2x128xf32>
    tpu.vector_store %arg8[%c0_252, %c0_253], %564 {strides = array<i32>} : memref<2x128xf32, #tpu.memory_space<vmem>>, vector<2x128xf32>,
    %c0_254 = arith.constant 0 : index
    %c0_255 = arith.constant 0 : index
    %573 = vector.load %arg9[%c0_254, %c0_255] : memref<2x128xf32, #tpu.memory_space<vmem>>, vector<2x128xf32>
    tpu.vector_store %arg9[%c0_254, %c0_255], %567 {strides = array<i32>} : memref<2x128xf32, #tpu.memory_space<vmem>>, vector<2x128xf32>,
    %c0_256 = arith.constant 0 : index
    %c0_257 = arith.constant 0 : index
    %574 = vector.load %arg10[%c0_256, %c0_257] : memref<2x128xf32, #tpu.memory_space<vmem>>, vector<2x128xf32>
    tpu.vector_store %arg10[%c0_256, %c0_257], %558 {strides = array<i32>} : memref<2x128xf32, #tpu.memory_space<vmem>>, vector<2x128xf32>,
    %575 = arith.index_cast %c7_i32 : i32 to index
    %c0_258 = arith.constant 0 : index
    %c0_259 = arith.constant 0 : index
    %576 = vector.load %arg4[%575, %c0_258, %c0_259] : memref<8x2x128xf32, #tpu.memory_space<vmem>>, vector<1x2x128xf32>
    %577 = vector.shape_cast %576 : vector<1x2x128xf32> to vector<2x128xf32>
    %578 = vector.shape_cast %570 : vector<2x128xf32> to vector<1x2x128xf32>
    tpu.vector_store %arg4[%575, %c0_258, %c0_259], %578 {strides = array<i32>} : memref<8x2x128xf32, #tpu.memory_space<vmem>>, vector<1x2x128xf32>,
    %579 = arith.index_cast %c7_i32 : i32 to index
    %c0_260 = arith.constant 0 : index
    %c0_261 = arith.constant 0 : index
    %580 = vector.load %arg5[%579, %c0_260, %c0_261] : memref<8x2x128xf32, #tpu.memory_space<vmem>>, vector<1x2x128xf32>
    %581 = vector.shape_cast %580 : vector<1x2x128xf32> to vector<2x128xf32>
    %582 = vector.shape_cast %564 : vector<2x128xf32> to vector<1x2x128xf32>
    tpu.vector_store %arg5[%579, %c0_260, %c0_261], %582 {strides = array<i32>} : memref<8x2x128xf32, #tpu.memory_space<vmem>>, vector<1x2x128xf32>,
    %583 = arith.index_cast %c7_i32 : i32 to index
    %c0_262 = arith.constant 0 : index
    %c0_263 = arith.constant 0 : index
    %584 = vector.load %arg6[%583, %c0_262, %c0_263] : memref<8x2x128xf32, #tpu.memory_space<vmem>>, vector<1x2x128xf32>
    %585 = vector.shape_cast %584 : vector<1x2x128xf32> to vector<2x128xf32>
    %586 = vector.shape_cast %567 : vector<2x128xf32> to vector<1x2x128xf32>
    tpu.vector_store %arg6[%583, %c0_262, %c0_263], %586 {strides = array<i32>} : memref<8x2x128xf32, #tpu.memory_space<vmem>>, vector<1x2x128xf32>,
    %c8_i32 = arith.constant 8 : i32
    return
  }
  func.func @transform_0(%arg0: i32, %arg1: i32) -> (i32, i32, i32) {
    %c0_i32 = arith.constant 0 : i32
    %c0_i32_0 = arith.constant 0 : i32
    return %arg1, %arg0, %c0_i32 : i32, i32, i32
  }
  func.func @transform_1(%arg0: i32, %arg1: i32) -> (i32, i32) {
    %c0_i32 = arith.constant 0 : i32
    %c0_i32_0 = arith.constant 0 : i32
    %c0_i32_1 = arith.constant 0 : i32
    return %c0_i32, %c0_i32_0 : i32, i32
  }
  func.func @transform_2(%arg0: i32, %arg1: i32) -> (i32, i32, i32) {
    %c0_i32 = arith.constant 0 : i32
    %c0_i32_0 = arith.constant 0 : i32
    return %arg1, %arg0, %c0_i32 : i32, i32, i32
  }
  func.func @transform_3(%arg0: i32, %arg1: i32) -> (i32, i32, i32) {
    %c0_i32 = arith.constant 0 : i32
    %c0_i32_0 = arith.constant 0 : i32
    return %arg1, %arg0, %c0_i32 : i32, i32, i32
  }
  func.func @transform_4(%arg0: i32, %arg1: i32) -> (i32, i32, i32) {
    %c0_i32 = arith.constant 0 : i32
    %c0_i32_0 = arith.constant 0 : i32
    return %arg1, %arg0, %c0_i32 : i32, i32, i32
  }
}

module attributes {stable_mosaic.version = 11 : i64} {
  func.func @_slstm_recurrent_kernel(%arg0: i32, %arg1: i32, %arg2: memref<8x2x512xbf16, #tpu.memory_space<vmem>>, %arg3: memref<128x512xbf16, #tpu.memory_space<vmem>>, %arg4: memref<8x2x128xf32, #tpu.memory_space<vmem>>, %arg5: memref<8x2x128xf32, #tpu.memory_space<vmem>>, %arg6: memref<8x2x128xf32, #tpu.memory_space<vmem>>, %arg7: memref<2x128xf32, #tpu.memory_space<vmem>>, %arg8: memref<2x128xf32, #tpu.memory_space<vmem>>, %arg9: memref<2x128xf32, #tpu.memory_space<vmem>>, %arg10: memref<2x128xf32, #tpu.memory_space<vmem>>) attributes {dimension_semantics = [#tpu.dimension_semantics<parallel>, #tpu.dimension_semantics<arbitrary>], iteration_bounds = array<i64: 1, 1>, scalar_prefetch = 0 : i64, scratch_operands = 4 : i64, tpu.core_type = #tpu.core_type<tc>, window_params = [{transform_indices = @transform_0, window_bounds = array<i64: 8, 2, 512>}, {pipeline_mode = #tpu.pipeline_mode<synchronous>, transform_indices = @transform_1, window_bounds = array<i64: 128, 512>}, {transform_indices = @transform_2, window_bounds = array<i64: 8, 2, 128>}, {transform_indices = @transform_3, window_bounds = array<i64: 8, 2, 128>}, {transform_indices = @transform_4, window_bounds = array<i64: 8, 2, 128>}]} {
    %c0_i32 = arith.constant 0 : i32
    %0 = arith.cmpi eq, %arg1, %c0_i32 : i32
    %1 = arith.extui %0 : i1 to i32
    %c0_i32_0 = arith.constant 0 : i32
    %2 = arith.cmpi ne, %1, %c0_i32_0 : i32
    scf.if %2 {
      %cst_264 = arith.constant 0.000000e+00 : f32
      %587 = vector.broadcast %cst_264 : f32 to vector<2x128xf32>
      %c0_265 = arith.constant 0 : index
      %c0_266 = arith.constant 0 : index
      %588 = vector.load %arg7[%c0_265, %c0_266] : memref<2x128xf32, #tpu.memory_space<vmem>>, vector<2x128xf32>
      tpu.vector_store %arg7[%c0_265, %c0_266], %587 {strides = array<i32>} : memref<2x128xf32, #tpu.memory_space<vmem>>, vector<2x128xf32>,
      %cst_267 = arith.constant 0.000000e+00 : f32
      %589 = vector.broadcast %cst_267 : f32 to vector<2x128xf32>
      %c0_268 = arith.constant 0 : index
      %c0_269 = arith.constant 0 : index
      %590 = vector.load %arg8[%c0_268, %c0_269] : memref<2x128xf32, #tpu.memory_space<vmem>>, vector<2x128xf32>
      tpu.vector_store %arg8[%c0_268, %c0_269], %589 {strides = array<i32>} : memref<2x128xf32, #tpu.memory_space<vmem>>, vector<2x128xf32>,
      %cst_270 = arith.constant 0.000000e+00 : f32
      %591 = vector.broadcast %cst_270 : f32 to vector<2x128xf32>
      %c0_271 = arith.constant 0 : index
      %c0_272 = arith.constant 0 : index
      %592 = vector.load %arg9[%c0_271, %c0_272] : memref<2x128xf32, #tpu.memory_space<vmem>>, vector<2x128xf32>
      tpu.vector_store %arg9[%c0_271, %c0_272], %591 {strides = array<i32>} : memref<2x128xf32, #tpu.memory_space<vmem>>, vector<2x128xf32>,
      %cst_273 = arith.constant 0.000000e+00 : f32
      %593 = vector.broadcast %cst_273 : f32 to vector<2x128xf32>
      %c0_274 = arith.constant 0 : index
      %c0_275 = arith.constant 0 : index
      %594 = vector.load %arg10[%c0_274, %c0_275] : memref<2x128xf32, #tpu.memory_space<vmem>>, vector<2x128xf32>
      tpu.vector_store %arg10[%c0_274, %c0_275], %593 {strides = array<i32>} : memref<2x128xf32, #tpu.memory_space<vmem>>, vector<2x128xf32>,
    } else {
    }
    %c0_i32_1 = arith.constant 0 : i32
    %3 = arith.index_cast %c0_i32_1 : i32 to index
    %c0 = arith.constant 0 : index
    %c0_2 = arith.constant 0 : index
    %4 = vector.load %arg2[%3, %c0, %c0_2] : memref<8x2x512xbf16, #tpu.memory_space<vmem>>, vector<1x2x512xbf16>
    %5 = vector.shape_cast %4 : vector<1x2x512xbf16> to vector<2x512xbf16>
    %6 = arith.extf %5 : vector<2x512xbf16> to vector<2x512xf32>
    %c0_3 = arith.constant 0 : index
    %c0_4 = arith.constant 0 : index
    %7 = vector.load %arg7[%c0_3, %c0_4] : memref<2x128xf32, #tpu.memory_space<vmem>>, vector<2x128xf32>
    %8 = arith.truncf %7 : vector<2x128xf32> to vector<2x128xbf16>
    %c0_5 = arith.constant 0 : index
    %c0_6 = arith.constant 0 : index
    %9 = vector.load %arg3[%c0_5, %c0_6] : memref<128x512xbf16, #tpu.memory_space<vmem>>, vector<128x512xbf16>
    %cst = arith.constant dense<0.000000e+00> : vector<2x512xf32>
    %10 = tpu.matmul %8, %9, %cst {dimension_numbers = #tpu.dot_dimension_numbers<[1], [0], [0], [1], [0, 0, 1, 1], [], []>} : vector<2x128xbf16>, vector<128x512xbf16>, vector<2x512xf32> -> vector<2x512xf32>
    %11 = arith.addf %6, %10 : vector<2x512xf32>
    %12 = vector.extract_strided_slice %11 {offsets = [0, 0], sizes = [2, 128], strides = [1, 1]} : vector<2x512xf32> to vector<2x128xf32>
    %13 = vector.extract_strided_slice %11 {offsets = [0, 128], sizes = [2, 128], strides = [1, 1]} : vector<2x512xf32> to vector<2x128xf32>
    %14 = vector.extract_strided_slice %11 {offsets = [0, 256], sizes = [2, 128], strides = [1, 1]} : vector<2x512xf32> to vector<2x128xf32>
    %15 = vector.extract_strided_slice %11 {offsets = [0, 384], sizes = [2, 128], strides = [1, 1]} : vector<2x512xf32> to vector<2x128xf32>
    %16 = math.tanh %12 : vector<2x128xf32>
    %17 = arith.negf %14 : vector<2x128xf32>
    %18 = math.exp %17 : vector<2x128xf32>
    %cst_7 = arith.constant 1.000000e+00 : f32
    %19 = vector.broadcast %cst_7 : f32 to vector<2x128xf32>
    %20 = arith.addf %19, %18 : vector<2x128xf32>
    %21 = arith.divf %19, %20 : vector<2x128xf32>
    %22 = arith.negf %15 : vector<2x128xf32>
    %23 = math.exp %22 : vector<2x128xf32>
    %cst_8 = arith.constant 1.000000e+00 : f32
    %24 = vector.broadcast %cst_8 : f32 to vector<2x128xf32>
    %25 = arith.addf %24, %23 : vector<2x128xf32>
    %26 = arith.divf %24, %25 : vector<2x128xf32>
    %cst_9 = arith.constant 0.000000e+00 : f32
    %27 = vector.broadcast %cst_9 : f32 to vector<2x128xf32>
    %28 = arith.subf %27, %14 : vector<2x128xf32>
    %cst_10 = arith.constant 0.000000e+00 : f32
    %29 = vector.broadcast %cst_10 : f32 to vector<2x128xf32>
    %30 = arith.maximumf %28, %29 : vector<2x128xf32>
    %31 = vector.broadcast %cst_10 : f32 to vector<2x128xf32>
    %32 = arith.subf %28, %31 : vector<2x128xf32>
    %33 = arith.cmpf one, %32, %32 : vector<2x128xf32>
    %34 = vector.broadcast %cst_10 : f32 to vector<2x128xf32>
    %35 = arith.addf %28, %34 : vector<2x128xf32>
    %36 = math.absf %32 : vector<2x128xf32>
    %cst_11 = arith.constant 0.000000e+00 : f32
    %37 = vector.broadcast %cst_11 : f32 to vector<2x128xf32>
    %38 = arith.subf %37, %36 : vector<2x128xf32>
    %39 = math.exp %38 : vector<2x128xf32>
    %40 = math.log1p %39 : vector<2x128xf32>
    %41 = arith.addf %30, %40 : vector<2x128xf32>
    %42 = arith.select %33, %35, %41 : vector<2x128xi1>, vector<2x128xf32>
    %cst_12 = arith.constant 0.000000e+00 : f32
    %43 = vector.broadcast %cst_12 : f32 to vector<2x128xf32>
    %44 = arith.subf %43, %42 : vector<2x128xf32>
    %c0_13 = arith.constant 0 : index
    %c0_14 = arith.constant 0 : index
    %45 = vector.load %arg10[%c0_13, %c0_14] : memref<2x128xf32, #tpu.memory_space<vmem>>, vector<2x128xf32>
    %46 = arith.addf %44, %45 : vector<2x128xf32>
    %47 = arith.maximumf %46, %13 : vector<2x128xf32>
    %48 = arith.subf %13, %47 : vector<2x128xf32>
    %49 = math.exp %48 : vector<2x128xf32>
    %c0_15 = arith.constant 0 : index
    %c0_16 = arith.constant 0 : index
    %50 = vector.load %arg8[%c0_15, %c0_16] : memref<2x128xf32, #tpu.memory_space<vmem>>, vector<2x128xf32>
    %51 = arith.mulf %21, %50 : vector<2x128xf32>
    %52 = arith.mulf %49, %16 : vector<2x128xf32>
    %53 = arith.addf %51, %52 : vector<2x128xf32>
    %c0_17 = arith.constant 0 : index
    %c0_18 = arith.constant 0 : index
    %54 = vector.load %arg9[%c0_17, %c0_18] : memref<2x128xf32, #tpu.memory_space<vmem>>, vector<2x128xf32>
    %55 = arith.mulf %21, %54 : vector<2x128xf32>
    %56 = arith.addf %55, %49 : vector<2x128xf32>
    %57 = tpu.reciprocal %56 {approx = true} : vector<2x128xf32> -> vector<2x128xf32>
    %58 = arith.mulf %53, %57 : vector<2x128xf32>
    %59 = arith.mulf %26, %58 : vector<2x128xf32>
    %c0_19 = arith.constant 0 : index
    %c0_20 = arith.constant 0 : index
    %60 = vector.load %arg7[%c0_19, %c0_20] : memref<2x128xf32, #tpu.memory_space<vmem>>, vector<2x128xf32>
    tpu.vector_store %arg7[%c0_19, %c0_20], %59 {strides = array<i32>} : memref<2x128xf32, #tpu.memory_space<vmem>>, vector<2x128xf32>,
    %c0_21 = arith.constant 0 : index
    %c0_22 = arith.constant 0 : index
    %61 = vector.load %arg8[%c0_21, %c0_22] : memref<2x128xf32, #tpu.memory_space<vmem>>, vector<2x128xf32>
    tpu.vector_store %arg8[%c0_21, %c0_22], %53 {strides = array<i32>} : memref<2x128xf32, #tpu.memory_space<vmem>>, vector<2x128xf32>,
    %c0_23 = arith.constant 0 : index
    %c0_24 = arith.constant 0 : index
    %62 = vector.load %arg9[%c0_23, %c0_24] : memref<2x128xf32, #tpu.memory_space<vmem>>, vector<2x128xf32>
    tpu.vector_store %arg9[%c0_23, %c0_24], %56 {strides = array<i32>} : memref<2x128xf32, #tpu.memory_space<vmem>>, vector<2x128xf32>,
    %c0_25 = arith.constant 0 : index
    %c0_26 = arith.constant 0 : index
    %63 = vector.load %arg10[%c0_25, %c0_26] : memref<2x128xf32, #tpu.memory_space<vmem>>, vector<2x128xf32>
    tpu.vector_store %arg10[%c0_25, %c0_26], %47 {strides = array<i32>} : memref<2x128xf32, #tpu.memory_space<vmem>>, vector<2x128xf32>,
    %64 = arith.index_cast %c0_i32_1 : i32 to index
    %c0_27 = arith.constant 0 : index
    %c0_28 = arith.constant 0 : index
    %65 = vector.load %arg4[%64, %c0_27, %c0_28] : memref<8x2x128xf32, #tpu.memory_space<vmem>>, vector<1x2x128xf32>
    %66 = vector.shape_cast %65 : vector<1x2x128xf32> to vector<2x128xf32>
    %67 = vector.shape_cast %59 : vector<2x128xf32> to vector<1x2x128xf32>
    tpu.vector_store %arg4[%64, %c0_27, %c0_28], %67 {strides = array<i32>} : memref<8x2x128xf32, #tpu.memory_space<vmem>>, vector<1x2x128xf32>,
    %68 = arith.index_cast %c0_i32_1 : i32 to index
    %c0_29 = arith.constant 0 : index
    %c0_30 = arith.constant 0 : index
    %69 = vector.load %arg5[%68, %c0_29, %c0_30] : memref<8x2x128xf32, #tpu.memory_space<vmem>>, vector<1x2x128xf32>
    %70 = vector.shape_cast %69 : vector<1x2x128xf32> to vector<2x128xf32>
    %71 = vector.shape_cast %53 : vector<2x128xf32> to vector<1x2x128xf32>
    tpu.vector_store %arg5[%68, %c0_29, %c0_30], %71 {strides = array<i32>} : memref<8x2x128xf32, #tpu.memory_space<vmem>>, vector<1x2x128xf32>,
    %72 = arith.index_cast %c0_i32_1 : i32 to index
    %c0_31 = arith.constant 0 : index
    %c0_32 = arith.constant 0 : index
    %73 = vector.load %arg6[%72, %c0_31, %c0_32] : memref<8x2x128xf32, #tpu.memory_space<vmem>>, vector<1x2x128xf32>
    %74 = vector.shape_cast %73 : vector<1x2x128xf32> to vector<2x128xf32>
    %75 = vector.shape_cast %56 : vector<2x128xf32> to vector<1x2x128xf32>
    tpu.vector_store %arg6[%72, %c0_31, %c0_32], %75 {strides = array<i32>} : memref<8x2x128xf32, #tpu.memory_space<vmem>>, vector<1x2x128xf32>,
    %c1_i32 = arith.constant 1 : i32
    %76 = arith.index_cast %c1_i32 : i32 to index
    %c0_33 = arith.constant 0 : index
    %c0_34 = arith.constant 0 : index
    %77 = vector.load %arg2[%76, %c0_33, %c0_34] : memref<8x2x512xbf16, #tpu.memory_space<vmem>>, vector<1x2x512xbf16>
    %78 = vector.shape_cast %77 : vector<1x2x512xbf16> to vector<2x512xbf16>
    %79 = arith.extf %78 : vector<2x512xbf16> to vector<2x512xf32>
    %c0_35 = arith.constant 0 : index
    %c0_36 = arith.constant 0 : index
    %80 = vector.load %arg7[%c0_35, %c0_36] : memref<2x128xf32, #tpu.memory_space<vmem>>, vector<2x128xf32>
    %81 = arith.truncf %80 : vector<2x128xf32> to vector<2x128xbf16>
    %c0_37 = arith.constant 0 : index
    %c0_38 = arith.constant 0 : index
    %82 = vector.load %arg3[%c0_37, %c0_38] : memref<128x512xbf16, #tpu.memory_space<vmem>>, vector<128x512xbf16>
    %cst_39 = arith.constant dense<0.000000e+00> : vector<2x512xf32>
    %83 = tpu.matmul %81, %82, %cst_39 {dimension_numbers = #tpu.dot_dimension_numbers<[1], [0], [0], [1], [0, 0, 1, 1], [], []>} : vector<2x128xbf16>, vector<128x512xbf16>, vector<2x512xf32> -> vector<2x512xf32>
    %84 = arith.addf %79, %83 : vector<2x512xf32>
    %85 = vector.extract_strided_slice %84 {offsets = [0, 0], sizes = [2, 128], strides = [1, 1]} : vector<2x512xf32> to vector<2x128xf32>
    %86 = vector.extract_strided_slice %84 {offsets = [0, 128], sizes = [2, 128], strides = [1, 1]} : vector<2x512xf32> to vector<2x128xf32>
    %87 = vector.extract_strided_slice %84 {offsets = [0, 256], sizes = [2, 128], strides = [1, 1]} : vector<2x512xf32> to vector<2x128xf32>
    %88 = vector.extract_strided_slice %84 {offsets = [0, 384], sizes = [2, 128], strides = [1, 1]} : vector<2x512xf32> to vector<2x128xf32>
    %89 = math.tanh %85 : vector<2x128xf32>
    %90 = arith.negf %87 : vector<2x128xf32>
    %91 = math.exp %90 : vector<2x128xf32>
    %cst_40 = arith.constant 1.000000e+00 : f32
    %92 = vector.broadcast %cst_40 : f32 to vector<2x128xf32>
    %93 = arith.addf %92, %91 : vector<2x128xf32>
    %94 = arith.divf %92, %93 : vector<2x128xf32>
    %95 = arith.negf %88 : vector<2x128xf32>
    %96 = math.exp %95 : vector<2x128xf32>
    %cst_41 = arith.constant 1.000000e+00 : f32
    %97 = vector.broadcast %cst_41 : f32 to vector<2x128xf32>
    %98 = arith.addf %97, %96 : vector<2x128xf32>
    %99 = arith.divf %97, %98 : vector<2x128xf32>
    %cst_42 = arith.constant 0.000000e+00 : f32
    %100 = vector.broadcast %cst_42 : f32 to vector<2x128xf32>
    %101 = arith.subf %100, %87 : vector<2x128xf32>
    %cst_43 = arith.constant 0.000000e+00 : f32
    %102 = vector.broadcast %cst_43 : f32 to vector<2x128xf32>
    %103 = arith.maximumf %101, %102 : vector<2x128xf32>
    %104 = vector.broadcast %cst_43 : f32 to vector<2x128xf32>
    %105 = arith.subf %101, %104 : vector<2x128xf32>
    %106 = arith.cmpf one, %105, %105 : vector<2x128xf32>
    %107 = vector.broadcast %cst_43 : f32 to vector<2x128xf32>
    %108 = arith.addf %101, %107 : vector<2x128xf32>
    %109 = math.absf %105 : vector<2x128xf32>
    %cst_44 = arith.constant 0.000000e+00 : f32
    %110 = vector.broadcast %cst_44 : f32 to vector<2x128xf32>
    %111 = arith.subf %110, %109 : vector<2x128xf32>
    %112 = math.exp %111 : vector<2x128xf32>
    %113 = math.log1p %112 : vector<2x128xf32>
    %114 = arith.addf %103, %113 : vector<2x128xf32>
    %115 = arith.select %106, %108, %114 : vector<2x128xi1>, vector<2x128xf32>
    %cst_45 = arith.constant 0.000000e+00 : f32
    %116 = vector.broadcast %cst_45 : f32 to vector<2x128xf32>
    %117 = arith.subf %116, %115 : vector<2x128xf32>
    %c0_46 = arith.constant 0 : index
    %c0_47 = arith.constant 0 : index
    %118 = vector.load %arg10[%c0_46, %c0_47] : memref<2x128xf32, #tpu.memory_space<vmem>>, vector<2x128xf32>
    %119 = arith.addf %117, %118 : vector<2x128xf32>
    %120 = arith.maximumf %119, %86 : vector<2x128xf32>
    %121 = arith.subf %86, %120 : vector<2x128xf32>
    %122 = math.exp %121 : vector<2x128xf32>
    %c0_48 = arith.constant 0 : index
    %c0_49 = arith.constant 0 : index
    %123 = vector.load %arg8[%c0_48, %c0_49] : memref<2x128xf32, #tpu.memory_space<vmem>>, vector<2x128xf32>
    %124 = arith.mulf %94, %123 : vector<2x128xf32>
    %125 = arith.mulf %122, %89 : vector<2x128xf32>
    %126 = arith.addf %124, %125 : vector<2x128xf32>
    %c0_50 = arith.constant 0 : index
    %c0_51 = arith.constant 0 : index
    %127 = vector.load %arg9[%c0_50, %c0_51] : memref<2x128xf32, #tpu.memory_space<vmem>>, vector<2x128xf32>
    %128 = arith.mulf %94, %127 : vector<2x128xf32>
    %129 = arith.addf %128, %122 : vector<2x128xf32>
    %130 = tpu.reciprocal %129 {approx = true} : vector<2x128xf32> -> vector<2x128xf32>
    %131 = arith.mulf %126, %130 : vector<2x128xf32>
    %132 = arith.mulf %99, %131 : vector<2x128xf32>
    %c0_52 = arith.constant 0 : index
    %c0_53 = arith.constant 0 : index
    %133 = vector.load %arg7[%c0_52, %c0_53] : memref<2x128xf32, #tpu.memory_space<vmem>>, vector<2x128xf32>
    tpu.vector_store %arg7[%c0_52, %c0_53], %132 {strides = array<i32>} : memref<2x128xf32, #tpu.memory_space<vmem>>, vector<2x128xf32>,
    %c0_54 = arith.constant 0 : index
    %c0_55 = arith.constant 0 : index
    %134 = vector.load %arg8[%c0_54, %c0_55] : memref<2x128xf32, #tpu.memory_space<vmem>>, vector<2x128xf32>
    tpu.vector_store %arg8[%c0_54, %c0_55], %126 {strides = array<i32>} : memref<2x128xf32, #tpu.memory_space<vmem>>, vector<2x128xf32>,
    %c0_56 = arith.constant 0 : index
    %c0_57 = arith.constant 0 : index
    %135 = vector.load %arg9[%c0_56, %c0_57] : memref<2x128xf32, #tpu.memory_space<vmem>>, vector<2x128xf32>
    tpu.vector_store %arg9[%c0_56, %c0_57], %129 {strides = array<i32>} : memref<2x128xf32, #tpu.memory_space<vmem>>, vector<2x128xf32>,
    %c0_58 = arith.constant 0 : index
    %c0_59 = arith.constant 0 : index
    %136 = vector.load %arg10[%c0_58, %c0_59] : memref<2x128xf32, #tpu.memory_space<vmem>>, vector<2x128xf32>
    tpu.vector_store %arg10[%c0_58, %c0_59], %120 {strides = array<i32>} : memref<2x128xf32, #tpu.memory_space<vmem>>, vector<2x128xf32>,
    %137 = arith.index_cast %c1_i32 : i32 to index
    %c0_60 = arith.constant 0 : index
    %c0_61 = arith.constant 0 : index
    %138 = vector.load %arg4[%137, %c0_60, %c0_61] : memref<8x2x128xf32, #tpu.memory_space<vmem>>, vector<1x2x128xf32>
    %139 = vector.shape_cast %138 : vector<1x2x128xf32> to vector<2x128xf32>
    %140 = vector.shape_cast %132 : vector<2x128xf32> to vector<1x2x128xf32>
    tpu.vector_store %arg4[%137, %c0_60, %c0_61], %140 {strides = array<i32>} : memref<8x2x128xf32, #tpu.memory_space<vmem>>, vector<1x2x128xf32>,
    %141 = arith.index_cast %c1_i32 : i32 to index
    %c0_62 = arith.constant 0 : index
    %c0_63 = arith.constant 0 : index
    %142 = vector.load %arg5[%141, %c0_62, %c0_63] : memref<8x2x128xf32, #tpu.memory_space<vmem>>, vector<1x2x128xf32>
    %143 = vector.shape_cast %142 : vector<1x2x128xf32> to vector<2x128xf32>
    %144 = vector.shape_cast %126 : vector<2x128xf32> to vector<1x2x128xf32>
    tpu.vector_store %arg5[%141, %c0_62, %c0_63], %144 {strides = array<i32>} : memref<8x2x128xf32, #tpu.memory_space<vmem>>, vector<1x2x128xf32>,
    %145 = arith.index_cast %c1_i32 : i32 to index
    %c0_64 = arith.constant 0 : index
    %c0_65 = arith.constant 0 : index
    %146 = vector.load %arg6[%145, %c0_64, %c0_65] : memref<8x2x128xf32, #tpu.memory_space<vmem>>, vector<1x2x128xf32>
    %147 = vector.shape_cast %146 : vector<1x2x128xf32> to vector<2x128xf32>
    %148 = vector.shape_cast %129 : vector<2x128xf32> to vector<1x2x128xf32>
    tpu.vector_store %arg6[%145, %c0_64, %c0_65], %148 {strides = array<i32>} : memref<8x2x128xf32, #tpu.memory_space<vmem>>, vector<1x2x128xf32>,
    %c2_i32 = arith.constant 2 : i32
    %149 = arith.index_cast %c2_i32 : i32 to index
    %c0_66 = arith.constant 0 : index
    %c0_67 = arith.constant 0 : index
    %150 = vector.load %arg2[%149, %c0_66, %c0_67] : memref<8x2x512xbf16, #tpu.memory_space<vmem>>, vector<1x2x512xbf16>
    %151 = vector.shape_cast %150 : vector<1x2x512xbf16> to vector<2x512xbf16>
    %152 = arith.extf %151 : vector<2x512xbf16> to vector<2x512xf32>
    %c0_68 = arith.constant 0 : index
    %c0_69 = arith.constant 0 : index
    %153 = vector.load %arg7[%c0_68, %c0_69] : memref<2x128xf32, #tpu.memory_space<vmem>>, vector<2x128xf32>
    %154 = arith.truncf %153 : vector<2x128xf32> to vector<2x128xbf16>
    %c0_70 = arith.constant 0 : index
    %c0_71 = arith.constant 0 : index
    %155 = vector.load %arg3[%c0_70, %c0_71] : memref<128x512xbf16, #tpu.memory_space<vmem>>, vector<128x512xbf16>
    %cst_72 = arith.constant dense<0.000000e+00> : vector<2x512xf32>
    %156 = tpu.matmul %154, %155, %cst_72 {dimension_numbers = #tpu.dot_dimension_numbers<[1], [0], [0], [1], [0, 0, 1, 1], [], []>} : vector<2x128xbf16>, vector<128x512xbf16>, vector<2x512xf32> -> vector<2x512xf32>
    %157 = arith.addf %152, %156 : vector<2x512xf32>
    %158 = vector.extract_strided_slice %157 {offsets = [0, 0], sizes = [2, 128], strides = [1, 1]} : vector<2x512xf32> to vector<2x128xf32>
    %159 = vector.extract_strided_slice %157 {offsets = [0, 128], sizes = [2, 128], strides = [1, 1]} : vector<2x512xf32> to vector<2x128xf32>
    %160 = vector.extract_strided_slice %157 {offsets = [0, 256], sizes = [2, 128], strides = [1, 1]} : vector<2x512xf32> to vector<2x128xf32>
    %161 = vector.extract_strided_slice %157 {offsets = [0, 384], sizes = [2, 128], strides = [1, 1]} : vector<2x512xf32> to vector<2x128xf32>
    %162 = math.tanh %158 : vector<2x128xf32>
    %163 = arith.negf %160 : vector<2x128xf32>
    %164 = math.exp %163 : vector<2x128xf32>
    %cst_73 = arith.constant 1.000000e+00 : f32
    %165 = vector.broadcast %cst_73 : f32 to vector<2x128xf32>
    %166 = arith.addf %165, %164 : vector<2x128xf32>
    %167 = arith.divf %165, %166 : vector<2x128xf32>
    %168 = arith.negf %161 : vector<2x128xf32>
    %169 = math.exp %168 : vector<2x128xf32>
    %cst_74 = arith.constant 1.000000e+00 : f32
    %170 = vector.broadcast %cst_74 : f32 to vector<2x128xf32>
    %171 = arith.addf %170, %169 : vector<2x128xf32>
    %172 = arith.divf %170, %171 : vector<2x128xf32>
    %cst_75 = arith.constant 0.000000e+00 : f32
    %173 = vector.broadcast %cst_75 : f32 to vector<2x128xf32>
    %174 = arith.subf %173, %160 : vector<2x128xf32>
    %cst_76 = arith.constant 0.000000e+00 : f32
    %175 = vector.broadcast %cst_76 : f32 to vector<2x128xf32>
    %176 = arith.maximumf %174, %175 : vector<2x128xf32>
    %177 = vector.broadcast %cst_76 : f32 to vector<2x128xf32>
    %178 = arith.subf %174, %177 : vector<2x128xf32>
    %179 = arith.cmpf one, %178, %178 : vector<2x128xf32>
    %180 = vector.broadcast %cst_76 : f32 to vector<2x128xf32>
    %181 = arith.addf %174, %180 : vector<2x128xf32>
    %182 = math.absf %178 : vector<2x128xf32>
    %cst_77 = arith.constant 0.000000e+00 : f32
    %183 = vector.broadcast %cst_77 : f32 to vector<2x128xf32>
    %184 = arith.subf %183, %182 : vector<2x128xf32>
    %185 = math.exp %184 : vector<2x128xf32>
    %186 = math.log1p %185 : vector<2x128xf32>
    %187 = arith.addf %176, %186 : vector<2x128xf32>
    %188 = arith.select %179, %181, %187 : vector<2x128xi1>, vector<2x128xf32>
    %cst_78 = arith.constant 0.000000e+00 : f32
    %189 = vector.broadcast %cst_78 : f32 to vector<2x128xf32>
    %190 = arith.subf %189, %188 : vector<2x128xf32>
    %c0_79 = arith.constant 0 : index
    %c0_80 = arith.constant 0 : index
    %191 = vector.load %arg10[%c0_79, %c0_80] : memref<2x128xf32, #tpu.memory_space<vmem>>, vector<2x128xf32>
    %192 = arith.addf %190, %191 : vector<2x128xf32>
    %193 = arith.maximumf %192, %159 : vector<2x128xf32>
    %194 = arith.subf %159, %193 : vector<2x128xf32>
    %195 = math.exp %194 : vector<2x128xf32>
    %c0_81 = arith.constant 0 : index
    %c0_82 = arith.constant 0 : index
    %196 = vector.load %arg8[%c0_81, %c0_82] : memref<2x128xf32, #tpu.memory_space<vmem>>, vector<2x128xf32>
    %197 = arith.mulf %167, %196 : vector<2x128xf32>
    %198 = arith.mulf %195, %162 : vector<2x128xf32>
    %199 = arith.addf %197, %198 : vector<2x128xf32>
    %c0_83 = arith.constant 0 : index
    %c0_84 = arith.constant 0 : index
    %200 = vector.load %arg9[%c0_83, %c0_84] : memref<2x128xf32, #tpu.memory_space<vmem>>, vector<2x128xf32>
    %201 = arith.mulf %167, %200 : vector<2x128xf32>
    %202 = arith.addf %201, %195 : vector<2x128xf32>
    %203 = tpu.reciprocal %202 {approx = true} : vector<2x128xf32> -> vector<2x128xf32>
    %204 = arith.mulf %199, %203 : vector<2x128xf32>
    %205 = arith.mulf %172, %204 : vector<2x128xf32>
    %c0_85 = arith.constant 0 : index
    %c0_86 = arith.constant 0 : index
    %206 = vector.load %arg7[%c0_85, %c0_86] : memref<2x128xf32, #tpu.memory_space<vmem>>, vector<2x128xf32>
    tpu.vector_store %arg7[%c0_85, %c0_86], %205 {strides = array<i32>} : memref<2x128xf32, #tpu.memory_space<vmem>>, vector<2x128xf32>,
    %c0_87 = arith.constant 0 : index
    %c0_88 = arith.constant 0 : index
    %207 = vector.load %arg8[%c0_87, %c0_88] : memref<2x128xf32, #tpu.memory_space<vmem>>, vector<2x128xf32>
    tpu.vector_store %arg8[%c0_87, %c0_88], %199 {strides = array<i32>} : memref<2x128xf32, #tpu.memory_space<vmem>>, vector<2x128xf32>,
    %c0_89 = arith.constant 0 : index
    %c0_90 = arith.constant 0 : index
    %208 = vector.load %arg9[%c0_89, %c0_90] : memref<2x128xf32, #tpu.memory_space<vmem>>, vector<2x128xf32>
    tpu.vector_store %arg9[%c0_89, %c0_90], %202 {strides = array<i32>} : memref<2x128xf32, #tpu.memory_space<vmem>>, vector<2x128xf32>,
    %c0_91 = arith.constant 0 : index
    %c0_92 = arith.constant 0 : index
    %209 = vector.load %arg10[%c0_91, %c0_92] : memref<2x128xf32, #tpu.memory_space<vmem>>, vector<2x128xf32>
    tpu.vector_store %arg10[%c0_91, %c0_92], %193 {strides = array<i32>} : memref<2x128xf32, #tpu.memory_space<vmem>>, vector<2x128xf32>,
    %210 = arith.index_cast %c2_i32 : i32 to index
    %c0_93 = arith.constant 0 : index
    %c0_94 = arith.constant 0 : index
    %211 = vector.load %arg4[%210, %c0_93, %c0_94] : memref<8x2x128xf32, #tpu.memory_space<vmem>>, vector<1x2x128xf32>
    %212 = vector.shape_cast %211 : vector<1x2x128xf32> to vector<2x128xf32>
    %213 = vector.shape_cast %205 : vector<2x128xf32> to vector<1x2x128xf32>
    tpu.vector_store %arg4[%210, %c0_93, %c0_94], %213 {strides = array<i32>} : memref<8x2x128xf32, #tpu.memory_space<vmem>>, vector<1x2x128xf32>,
    %214 = arith.index_cast %c2_i32 : i32 to index
    %c0_95 = arith.constant 0 : index
    %c0_96 = arith.constant 0 : index
    %215 = vector.load %arg5[%214, %c0_95, %c0_96] : memref<8x2x128xf32, #tpu.memory_space<vmem>>, vector<1x2x128xf32>
    %216 = vector.shape_cast %215 : vector<1x2x128xf32> to vector<2x128xf32>
    %217 = vector.shape_cast %199 : vector<2x128xf32> to vector<1x2x128xf32>
    tpu.vector_store %arg5[%214, %c0_95, %c0_96], %217 {strides = array<i32>} : memref<8x2x128xf32, #tpu.memory_space<vmem>>, vector<1x2x128xf32>,
    %218 = arith.index_cast %c2_i32 : i32 to index
    %c0_97 = arith.constant 0 : index
    %c0_98 = arith.constant 0 : index
    %219 = vector.load %arg6[%218, %c0_97, %c0_98] : memref<8x2x128xf32, #tpu.memory_space<vmem>>, vector<1x2x128xf32>
    %220 = vector.shape_cast %219 : vector<1x2x128xf32> to vector<2x128xf32>
    %221 = vector.shape_cast %202 : vector<2x128xf32> to vector<1x2x128xf32>
    tpu.vector_store %arg6[%218, %c0_97, %c0_98], %221 {strides = array<i32>} : memref<8x2x128xf32, #tpu.memory_space<vmem>>, vector<1x2x128xf32>,
    %c3_i32 = arith.constant 3 : i32
    %222 = arith.index_cast %c3_i32 : i32 to index
    %c0_99 = arith.constant 0 : index
    %c0_100 = arith.constant 0 : index
    %223 = vector.load %arg2[%222, %c0_99, %c0_100] : memref<8x2x512xbf16, #tpu.memory_space<vmem>>, vector<1x2x512xbf16>
    %224 = vector.shape_cast %223 : vector<1x2x512xbf16> to vector<2x512xbf16>
    %225 = arith.extf %224 : vector<2x512xbf16> to vector<2x512xf32>
    %c0_101 = arith.constant 0 : index
    %c0_102 = arith.constant 0 : index
    %226 = vector.load %arg7[%c0_101, %c0_102] : memref<2x128xf32, #tpu.memory_space<vmem>>, vector<2x128xf32>
    %227 = arith.truncf %226 : vector<2x128xf32> to vector<2x128xbf16>
    %c0_103 = arith.constant 0 : index
    %c0_104 = arith.constant 0 : index
    %228 = vector.load %arg3[%c0_103, %c0_104] : memref<128x512xbf16, #tpu.memory_space<vmem>>, vector<128x512xbf16>
    %cst_105 = arith.constant dense<0.000000e+00> : vector<2x512xf32>
    %229 = tpu.matmul %227, %228, %cst_105 {dimension_numbers = #tpu.dot_dimension_numbers<[1], [0], [0], [1], [0, 0, 1, 1], [], []>} : vector<2x128xbf16>, vector<128x512xbf16>, vector<2x512xf32> -> vector<2x512xf32>
    %230 = arith.addf %225, %229 : vector<2x512xf32>
    %231 = vector.extract_strided_slice %230 {offsets = [0, 0], sizes = [2, 128], strides = [1, 1]} : vector<2x512xf32> to vector<2x128xf32>
    %232 = vector.extract_strided_slice %230 {offsets = [0, 128], sizes = [2, 128], strides = [1, 1]} : vector<2x512xf32> to vector<2x128xf32>
    %233 = vector.extract_strided_slice %230 {offsets = [0, 256], sizes = [2, 128], strides = [1, 1]} : vector<2x512xf32> to vector<2x128xf32>
    %234 = vector.extract_strided_slice %230 {offsets = [0, 384], sizes = [2, 128], strides = [1, 1]} : vector<2x512xf32> to vector<2x128xf32>
    %235 = math.tanh %231 : vector<2x128xf32>
    %236 = arith.negf %233 : vector<2x128xf32>
    %237 = math.exp %236 : vector<2x128xf32>
    %cst_106 = arith.constant 1.000000e+00 : f32
    %238 = vector.broadcast %cst_106 : f32 to vector<2x128xf32>
    %239 = arith.addf %238, %237 : vector<2x128xf32>
    %240 = arith.divf %238, %239 : vector<2x128xf32>
    %241 = arith.negf %234 : vector<2x128xf32>
    %242 = math.exp %241 : vector<2x128xf32>
    %cst_107 = arith.constant 1.000000e+00 : f32
    %243 = vector.broadcast %cst_107 : f32 to vector<2x128xf32>
    %244 = arith.addf %243, %242 : vector<2x128xf32>
    %245 = arith.divf %243, %244 : vector<2x128xf32>
    %cst_108 = arith.constant 0.000000e+00 : f32
    %246 = vector.broadcast %cst_108 : f32 to vector<2x128xf32>
    %247 = arith.subf %246, %233 : vector<2x128xf32>
    %cst_109 = arith.constant 0.000000e+00 : f32
    %248 = vector.broadcast %cst_109 : f32 to vector<2x128xf32>
    %249 = arith.maximumf %247, %248 : vector<2x128xf32>
    %250 = vector.broadcast %cst_109 : f32 to vector<2x128xf32>
    %251 = arith.subf %247, %250 : vector<2x128xf32>
    %252 = arith.cmpf one, %251, %251 : vector<2x128xf32>
    %253 = vector.broadcast %cst_109 : f32 to vector<2x128xf32>
    %254 = arith.addf %247, %253 : vector<2x128xf32>
    %255 = math.absf %251 : vector<2x128xf32>
    %cst_110 = arith.constant 0.000000e+00 : f32
    %256 = vector.broadcast %cst_110 : f32 to vector<2x128xf32>
    %257 = arith.subf %256, %255 : vector<2x128xf32>
    %258 = math.exp %257 : vector<2x128xf32>
    %259 = math.log1p %258 : vector<2x128xf32>
    %260 = arith.addf %249, %259 : vector<2x128xf32>
    %261 = arith.select %252, %254, %260 : vector<2x128xi1>, vector<2x128xf32>
    %cst_111 = arith.constant 0.000000e+00 : f32
    %262 = vector.broadcast %cst_111 : f32 to vector<2x128xf32>
    %263 = arith.subf %262, %261 : vector<2x128xf32>
    %c0_112 = arith.constant 0 : index
    %c0_113 = arith.constant 0 : index
    %264 = vector.load %arg10[%c0_112, %c0_113] : memref<2x128xf32, #tpu.memory_space<vmem>>, vector<2x128xf32>
    %265 = arith.addf %263, %264 : vector<2x128xf32>
    %266 = arith.maximumf %265, %232 : vector<2x128xf32>
    %267 = arith.subf %232, %266 : vector<2x128xf32>
    %268 = math.exp %267 : vector<2x128xf32>
    %c0_114 = arith.constant 0 : index
    %c0_115 = arith.constant 0 : index
    %269 = vector.load %arg8[%c0_114, %c0_115] : memref<2x128xf32, #tpu.memory_space<vmem>>, vector<2x128xf32>
    %270 = arith.mulf %240, %269 : vector<2x128xf32>
    %271 = arith.mulf %268, %235 : vector<2x128xf32>
    %272 = arith.addf %270, %271 : vector<2x128xf32>
    %c0_116 = arith.constant 0 : index
    %c0_117 = arith.constant 0 : index
    %273 = vector.load %arg9[%c0_116, %c0_117] : memref<2x128xf32, #tpu.memory_space<vmem>>, vector<2x128xf32>
    %274 = arith.mulf %240, %273 : vector<2x128xf32>
    %275 = arith.addf %274, %268 : vector<2x128xf32>
    %276 = tpu.reciprocal %275 {approx = true} : vector<2x128xf32> -> vector<2x128xf32>
    %277 = arith.mulf %272, %276 : vector<2x128xf32>
    %278 = arith.mulf %245, %277 : vector<2x128xf32>
    %c0_118 = arith.constant 0 : index
    %c0_119 = arith.constant 0 : index
    %279 = vector.load %arg7[%c0_118, %c0_119] : memref<2x128xf32, #tpu.memory_space<vmem>>, vector<2x128xf32>
    tpu.vector_store %arg7[%c0_118, %c0_119], %278 {strides = array<i32>} : memref<2x128xf32, #tpu.memory_space<vmem>>, vector<2x128xf32>,
    %c0_120 = arith.constant 0 : index
    %c0_121 = arith.constant 0 : index
    %280 = vector.load %arg8[%c0_120, %c0_121] : memref<2x128xf32, #tpu.memory_space<vmem>>, vector<2x128xf32>
    tpu.vector_store %arg8[%c0_120, %c0_121], %272 {strides = array<i32>} : memref<2x128xf32, #tpu.memory_space<vmem>>, vector<2x128xf32>,
    %c0_122 = arith.constant 0 : index
    %c0_123 = arith.constant 0 : index
    %281 = vector.load %arg9[%c0_122, %c0_123] : memref<2x128xf32, #tpu.memory_space<vmem>>, vector<2x128xf32>
    tpu.vector_store %arg9[%c0_122, %c0_123], %275 {strides = array<i32>} : memref<2x128xf32, #tpu.memory_space<vmem>>, vector<2x128xf32>,
    %c0_124 = arith.constant 0 : index
    %c0_125 = arith.constant 0 : index
    %282 = vector.load %arg10[%c0_124, %c0_125] : memref<2x128xf32, #tpu.memory_space<vmem>>, vector<2x128xf32>
    tpu.vector_store %arg10[%c0_124, %c0_125], %266 {strides = array<i32>} : memref<2x128xf32, #tpu.memory_space<vmem>>, vector<2x128xf32>,
    %283 = arith.index_cast %c3_i32 : i32 to index
    %c0_126 = arith.constant 0 : index
    %c0_127 = arith.constant 0 : index
    %284 = vector.load %arg4[%283, %c0_126, %c0_127] : memref<8x2x128xf32, #tpu.memory_space<vmem>>, vector<1x2x128xf32>
    %285 = vector.shape_cast %284 : vector<1x2x128xf32> to vector<2x128xf32>
    %286 = vector.shape_cast %278 : vector<2x128xf32> to vector<1x2x128xf32>
    tpu.vector_store %arg4[%283, %c0_126, %c0_127], %286 {strides = array<i32>} : memref<8x2x128xf32, #tpu.memory_space<vmem>>, vector<1x2x128xf32>,
    %287 = arith.index_cast %c3_i32 : i32 to index
    %c0_128 = arith.constant 0 : index
    %c0_129 = arith.constant 0 : index
    %288 = vector.load %arg5[%287, %c0_128, %c0_129] : memref<8x2x128xf32, #tpu.memory_space<vmem>>, vector<1x2x128xf32>
    %289 = vector.shape_cast %288 : vector<1x2x128xf32> to vector<2x128xf32>
    %290 = vector.shape_cast %272 : vector<2x128xf32> to vector<1x2x128xf32>
    tpu.vector_store %arg5[%287, %c0_128, %c0_129], %290 {strides = array<i32>} : memref<8x2x128xf32, #tpu.memory_space<vmem>>, vector<1x2x128xf32>,
    %291 = arith.index_cast %c3_i32 : i32 to index
    %c0_130 = arith.constant 0 : index
    %c0_131 = arith.constant 0 : index
    %292 = vector.load %arg6[%291, %c0_130, %c0_131] : memref<8x2x128xf32, #tpu.memory_space<vmem>>, vector<1x2x128xf32>
    %293 = vector.shape_cast %292 : vector<1x2x128xf32> to vector<2x128xf32>
    %294 = vector.shape_cast %275 : vector<2x128xf32> to vector<1x2x128xf32>
    tpu.vector_store %arg6[%291, %c0_130, %c0_131], %294 {strides = array<i32>} : memref<8x2x128xf32, #tpu.memory_space<vmem>>, vector<1x2x128xf32>,
    %c4_i32 = arith.constant 4 : i32
    %295 = arith.index_cast %c4_i32 : i32 to index
    %c0_132 = arith.constant 0 : index
    %c0_133 = arith.constant 0 : index
    %296 = vector.load %arg2[%295, %c0_132, %c0_133] : memref<8x2x512xbf16, #tpu.memory_space<vmem>>, vector<1x2x512xbf16>
    %297 = vector.shape_cast %296 : vector<1x2x512xbf16> to vector<2x512xbf16>
    %298 = arith.extf %297 : vector<2x512xbf16> to vector<2x512xf32>
    %c0_134 = arith.constant 0 : index
    %c0_135 = arith.constant 0 : index
    %299 = vector.load %arg7[%c0_134, %c0_135] : memref<2x128xf32, #tpu.memory_space<vmem>>, vector<2x128xf32>
    %300 = arith.truncf %299 : vector<2x128xf32> to vector<2x128xbf16>
    %c0_136 = arith.constant 0 : index
    %c0_137 = arith.constant 0 : index
    %301 = vector.load %arg3[%c0_136, %c0_137] : memref<128x512xbf16, #tpu.memory_space<vmem>>, vector<128x512xbf16>
    %cst_138 = arith.constant dense<0.000000e+00> : vector<2x512xf32>
    %302 = tpu.matmul %300, %301, %cst_138 {dimension_numbers = #tpu.dot_dimension_numbers<[1], [0], [0], [1], [0, 0, 1, 1], [], []>} : vector<2x128xbf16>, vector<128x512xbf16>, vector<2x512xf32> -> vector<2x512xf32>
    %303 = arith.addf %298, %302 : vector<2x512xf32>
    %304 = vector.extract_strided_slice %303 {offsets = [0, 0], sizes = [2, 128], strides = [1, 1]} : vector<2x512xf32> to vector<2x128xf32>
    %305 = vector.extract_strided_slice %303 {offsets = [0, 128], sizes = [2, 128], strides = [1, 1]} : vector<2x512xf32> to vector<2x128xf32>
    %306 = vector.extract_strided_slice %303 {offsets = [0, 256], sizes = [2, 128], strides = [1, 1]} : vector<2x512xf32> to vector<2x128xf32>
    %307 = vector.extract_strided_slice %303 {offsets = [0, 384], sizes = [2, 128], strides = [1, 1]} : vector<2x512xf32> to vector<2x128xf32>
    %308 = math.tanh %304 : vector<2x128xf32>
    %309 = arith.negf %306 : vector<2x128xf32>
    %310 = math.exp %309 : vector<2x128xf32>
    %cst_139 = arith.constant 1.000000e+00 : f32
    %311 = vector.broadcast %cst_139 : f32 to vector<2x128xf32>
    %312 = arith.addf %311, %310 : vector<2x128xf32>
    %313 = arith.divf %311, %312 : vector<2x128xf32>
    %314 = arith.negf %307 : vector<2x128xf32>
    %315 = math.exp %314 : vector<2x128xf32>
    %cst_140 = arith.constant 1.000000e+00 : f32
    %316 = vector.broadcast %cst_140 : f32 to vector<2x128xf32>
    %317 = arith.addf %316, %315 : vector<2x128xf32>
    %318 = arith.divf %316, %317 : vector<2x128xf32>
    %cst_141 = arith.constant 0.000000e+00 : f32
    %319 = vector.broadcast %cst_141 : f32 to vector<2x128xf32>
    %320 = arith.subf %319, %306 : vector<2x128xf32>
    %cst_142 = arith.constant 0.000000e+00 : f32
    %321 = vector.broadcast %cst_142 : f32 to vector<2x128xf32>
    %322 = arith.maximumf %320, %321 : vector<2x128xf32>
    %323 = vector.broadcast %cst_142 : f32 to vector<2x128xf32>
    %324 = arith.subf %320, %323 : vector<2x128xf32>
    %325 = arith.cmpf one, %324, %324 : vector<2x128xf32>
    %326 = vector.broadcast %cst_142 : f32 to vector<2x128xf32>
    %327 = arith.addf %320, %326 : vector<2x128xf32>
    %328 = math.absf %324 : vector<2x128xf32>
    %cst_143 = arith.constant 0.000000e+00 : f32
    %329 = vector.broadcast %cst_143 : f32 to vector<2x128xf32>
    %330 = arith.subf %329, %328 : vector<2x128xf32>
    %331 = math.exp %330 : vector<2x128xf32>
    %332 = math.log1p %331 : vector<2x128xf32>
    %333 = arith.addf %322, %332 : vector<2x128xf32>
    %334 = arith.select %325, %327, %333 : vector<2x128xi1>, vector<2x128xf32>
    %cst_144 = arith.constant 0.000000e+00 : f32
    %335 = vector.broadcast %cst_144 : f32 to vector<2x128xf32>
    %336 = arith.subf %335, %334 : vector<2x128xf32>
    %c0_145 = arith.constant 0 : index
    %c0_146 = arith.constant 0 : index
    %337 = vector.load %arg10[%c0_145, %c0_146] : memref<2x128xf32, #tpu.memory_space<vmem>>, vector<2x128xf32>
    %338 = arith.addf %336, %337 : vector<2x128xf32>
    %339 = arith.maximumf %338, %305 : vector<2x128xf32>
    %340 = arith.subf %305, %339 : vector<2x128xf32>
    %341 = math.exp %340 : vector<2x128xf32>
    %c0_147 = arith.constant 0 : index
    %c0_148 = arith.constant 0 : index
    %342 = vector.load %arg8[%c0_147, %c0_148] : memref<2x128xf32, #tpu.memory_space<vmem>>, vector<2x128xf32>
    %343 = arith.mulf %313, %342 : vector<2x128xf32>
    %344 = arith.mulf %341, %308 : vector<2x128xf32>
    %345 = arith.addf %343, %344 : vector<2x128xf32>
    %c0_149 = arith.constant 0 : index
    %c0_150 = arith.constant 0 : index
    %346 = vector.load %arg9[%c0_149, %c0_150] : memref<2x128xf32, #tpu.memory_space<vmem>>, vector<2x128xf32>
    %347 = arith.mulf %313, %346 : vector<2x128xf32>
    %348 = arith.addf %347, %341 : vector<2x128xf32>
    %349 = tpu.reciprocal %348 {approx = true} : vector<2x128xf32> -> vector<2x128xf32>
    %350 = arith.mulf %345, %349 : vector<2x128xf32>
    %351 = arith.mulf %318, %350 : vector<2x128xf32>
    %c0_151 = arith.constant 0 : index
    %c0_152 = arith.constant 0 : index
    %352 = vector.load %arg7[%c0_151, %c0_152] : memref<2x128xf32, #tpu.memory_space<vmem>>, vector<2x128xf32>
    tpu.vector_store %arg7[%c0_151, %c0_152], %351 {strides = array<i32>} : memref<2x128xf32, #tpu.memory_space<vmem>>, vector<2x128xf32>,
    %c0_153 = arith.constant 0 : index
    %c0_154 = arith.constant 0 : index
    %353 = vector.load %arg8[%c0_153, %c0_154] : memref<2x128xf32, #tpu.memory_space<vmem>>, vector<2x128xf32>
    tpu.vector_store %arg8[%c0_153, %c0_154], %345 {strides = array<i32>} : memref<2x128xf32, #tpu.memory_space<vmem>>, vector<2x128xf32>,
    %c0_155 = arith.constant 0 : index
    %c0_156 = arith.constant 0 : index
    %354 = vector.load %arg9[%c0_155, %c0_156] : memref<2x128xf32, #tpu.memory_space<vmem>>, vector<2x128xf32>
    tpu.vector_store %arg9[%c0_155, %c0_156], %348 {strides = array<i32>} : memref<2x128xf32, #tpu.memory_space<vmem>>, vector<2x128xf32>,
    %c0_157 = arith.constant 0 : index
    %c0_158 = arith.constant 0 : index
    %355 = vector.load %arg10[%c0_157, %c0_158] : memref<2x128xf32, #tpu.memory_space<vmem>>, vector<2x128xf32>
    tpu.vector_store %arg10[%c0_157, %c0_158], %339 {strides = array<i32>} : memref<2x128xf32, #tpu.memory_space<vmem>>, vector<2x128xf32>,
    %356 = arith.index_cast %c4_i32 : i32 to index
    %c0_159 = arith.constant 0 : index
    %c0_160 = arith.constant 0 : index
    %357 = vector.load %arg4[%356, %c0_159, %c0_160] : memref<8x2x128xf32, #tpu.memory_space<vmem>>, vector<1x2x128xf32>
    %358 = vector.shape_cast %357 : vector<1x2x128xf32> to vector<2x128xf32>
    %359 = vector.shape_cast %351 : vector<2x128xf32> to vector<1x2x128xf32>
    tpu.vector_store %arg4[%356, %c0_159, %c0_160], %359 {strides = array<i32>} : memref<8x2x128xf32, #tpu.memory_space<vmem>>, vector<1x2x128xf32>,
    %360 = arith.index_cast %c4_i32 : i32 to index
    %c0_161 = arith.constant 0 : index
    %c0_162 = arith.constant 0 : index
    %361 = vector.load %arg5[%360, %c0_161, %c0_162] : memref<8x2x128xf32, #tpu.memory_space<vmem>>, vector<1x2x128xf32>
    %362 = vector.shape_cast %361 : vector<1x2x128xf32> to vector<2x128xf32>
    %363 = vector.shape_cast %345 : vector<2x128xf32> to vector<1x2x128xf32>
    tpu.vector_store %arg5[%360, %c0_161, %c0_162], %363 {strides = array<i32>} : memref<8x2x128xf32, #tpu.memory_space<vmem>>, vector<1x2x128xf32>,
    %364 = arith.index_cast %c4_i32 : i32 to index
    %c0_163 = arith.constant 0 : index
    %c0_164 = arith.constant 0 : index
    %365 = vector.load %arg6[%364, %c0_163, %c0_164] : memref<8x2x128xf32, #tpu.memory_space<vmem>>, vector<1x2x128xf32>
    %366 = vector.shape_cast %365 : vector<1x2x128xf32> to vector<2x128xf32>
    %367 = vector.shape_cast %348 : vector<2x128xf32> to vector<1x2x128xf32>
    tpu.vector_store %arg6[%364, %c0_163, %c0_164], %367 {strides = array<i32>} : memref<8x2x128xf32, #tpu.memory_space<vmem>>, vector<1x2x128xf32>,
    %c5_i32 = arith.constant 5 : i32
    %368 = arith.index_cast %c5_i32 : i32 to index
    %c0_165 = arith.constant 0 : index
    %c0_166 = arith.constant 0 : index
    %369 = vector.load %arg2[%368, %c0_165, %c0_166] : memref<8x2x512xbf16, #tpu.memory_space<vmem>>, vector<1x2x512xbf16>
    %370 = vector.shape_cast %369 : vector<1x2x512xbf16> to vector<2x512xbf16>
    %371 = arith.extf %370 : vector<2x512xbf16> to vector<2x512xf32>
    %c0_167 = arith.constant 0 : index
    %c0_168 = arith.constant 0 : index
    %372 = vector.load %arg7[%c0_167, %c0_168] : memref<2x128xf32, #tpu.memory_space<vmem>>, vector<2x128xf32>
    %373 = arith.truncf %372 : vector<2x128xf32> to vector<2x128xbf16>
    %c0_169 = arith.constant 0 : index
    %c0_170 = arith.constant 0 : index
    %374 = vector.load %arg3[%c0_169, %c0_170] : memref<128x512xbf16, #tpu.memory_space<vmem>>, vector<128x512xbf16>
    %cst_171 = arith.constant dense<0.000000e+00> : vector<2x512xf32>
    %375 = tpu.matmul %373, %374, %cst_171 {dimension_numbers = #tpu.dot_dimension_numbers<[1], [0], [0], [1], [0, 0, 1, 1], [], []>} : vector<2x128xbf16>, vector<128x512xbf16>, vector<2x512xf32> -> vector<2x512xf32>
    %376 = arith.addf %371, %375 : vector<2x512xf32>
    %377 = vector.extract_strided_slice %376 {offsets = [0, 0], sizes = [2, 128], strides = [1, 1]} : vector<2x512xf32> to vector<2x128xf32>
    %378 = vector.extract_strided_slice %376 {offsets = [0, 128], sizes = [2, 128], strides = [1, 1]} : vector<2x512xf32> to vector<2x128xf32>
    %379 = vector.extract_strided_slice %376 {offsets = [0, 256], sizes = [2, 128], strides = [1, 1]} : vector<2x512xf32> to vector<2x128xf32>
    %380 = vector.extract_strided_slice %376 {offsets = [0, 384], sizes = [2, 128], strides = [1, 1]} : vector<2x512xf32> to vector<2x128xf32>
    %381 = math.tanh %377 : vector<2x128xf32>
    %382 = arith.negf %379 : vector<2x128xf32>
    %383 = math.exp %382 : vector<2x128xf32>
    %cst_172 = arith.constant 1.000000e+00 : f32
    %384 = vector.broadcast %cst_172 : f32 to vector<2x128xf32>
    %385 = arith.addf %384, %383 : vector<2x128xf32>
    %386 = arith.divf %384, %385 : vector<2x128xf32>
    %387 = arith.negf %380 : vector<2x128xf32>
    %388 = math.exp %387 : vector<2x128xf32>
    %cst_173 = arith.constant 1.000000e+00 : f32
    %389 = vector.broadcast %cst_173 : f32 to vector<2x128xf32>
    %390 = arith.addf %389, %388 : vector<2x128xf32>
    %391 = arith.divf %389, %390 : vector<2x128xf32>
    %cst_174 = arith.constant 0.000000e+00 : f32
    %392 = vector.broadcast %cst_174 : f32 to vector<2x128xf32>
    %393 = arith.subf %392, %379 : vector<2x128xf32>
    %cst_175 = arith.constant 0.000000e+00 : f32
    %394 = vector.broadcast %cst_175 : f32 to vector<2x128xf32>
    %395 = arith.maximumf %393, %394 : vector<2x128xf32>
    %396 = vector.broadcast %cst_175 : f32 to vector<2x128xf32>
    %397 = arith.subf %393, %396 : vector<2x128xf32>
    %398 = arith.cmpf one, %397, %397 : vector<2x128xf32>
    %399 = vector.broadcast %cst_175 : f32 to vector<2x128xf32>
    %400 = arith.addf %393, %399 : vector<2x128xf32>
    %401 = math.absf %397 : vector<2x128xf32>
    %cst_176 = arith.constant 0.000000e+00 : f32
    %402 = vector.broadcast %cst_176 : f32 to vector<2x128xf32>
    %403 = arith.subf %402, %401 : vector<2x128xf32>
    %404 = math.exp %403 : vector<2x128xf32>
    %405 = math.log1p %404 : vector<2x128xf32>
    %406 = arith.addf %395, %405 : vector<2x128xf32>
    %407 = arith.select %398, %400, %406 : vector<2x128xi1>, vector<2x128xf32>
    %cst_177 = arith.constant 0.000000e+00 : f32
    %408 = vector.broadcast %cst_177 : f32 to vector<2x128xf32>
    %409 = arith.subf %408, %407 : vector<2x128xf32>
    %c0_178 = arith.constant 0 : index
    %c0_179 = arith.constant 0 : index
    %410 = vector.load %arg10[%c0_178, %c0_179] : memref<2x128xf32, #tpu.memory_space<vmem>>, vector<2x128xf32>
    %411 = arith.addf %409, %410 : vector<2x128xf32>
    %412 = arith.maximumf %411, %378 : vector<2x128xf32>
    %413 = arith.subf %378, %412 : vector<2x128xf32>
    %414 = math.exp %413 : vector<2x128xf32>
    %c0_180 = arith.constant 0 : index
    %c0_181 = arith.constant 0 : index
    %415 = vector.load %arg8[%c0_180, %c0_181] : memref<2x128xf32, #tpu.memory_space<vmem>>, vector<2x128xf32>
    %416 = arith.mulf %386, %415 : vector<2x128xf32>
    %417 = arith.mulf %414, %381 : vector<2x128xf32>
    %418 = arith.addf %416, %417 : vector<2x128xf32>
    %c0_182 = arith.constant 0 : index
    %c0_183 = arith.constant 0 : index
    %419 = vector.load %arg9[%c0_182, %c0_183] : memref<2x128xf32, #tpu.memory_space<vmem>>, vector<2x128xf32>
    %420 = arith.mulf %386, %419 : vector<2x128xf32>
    %421 = arith.addf %420, %414 : vector<2x128xf32>
    %422 = tpu.reciprocal %421 {approx = true} : vector<2x128xf32> -> vector<2x128xf32>
    %423 = arith.mulf %418, %422 : vector<2x128xf32>
    %424 = arith.mulf %391, %423 : vector<2x128xf32>
    %c0_184 = arith.constant 0 : index
    %c0_185 = arith.constant 0 : index
    %425 = vector.load %arg7[%c0_184, %c0_185] : memref<2x128xf32, #tpu.memory_space<vmem>>, vector<2x128xf32>
    tpu.vector_store %arg7[%c0_184, %c0_185], %424 {strides = array<i32>} : memref<2x128xf32, #tpu.memory_space<vmem>>, vector<2x128xf32>,
    %c0_186 = arith.constant 0 : index
    %c0_187 = arith.constant 0 : index
    %426 = vector.load %arg8[%c0_186, %c0_187] : memref<2x128xf32, #tpu.memory_space<vmem>>, vector<2x128xf32>
    tpu.vector_store %arg8[%c0_186, %c0_187], %418 {strides = array<i32>} : memref<2x128xf32, #tpu.memory_space<vmem>>, vector<2x128xf32>,
    %c0_188 = arith.constant 0 : index
    %c0_189 = arith.constant 0 : index
    %427 = vector.load %arg9[%c0_188, %c0_189] : memref<2x128xf32, #tpu.memory_space<vmem>>, vector<2x128xf32>
    tpu.vector_store %arg9[%c0_188, %c0_189], %421 {strides = array<i32>} : memref<2x128xf32, #tpu.memory_space<vmem>>, vector<2x128xf32>,
    %c0_190 = arith.constant 0 : index
    %c0_191 = arith.constant 0 : index
    %428 = vector.load %arg10[%c0_190, %c0_191] : memref<2x128xf32, #tpu.memory_space<vmem>>, vector<2x128xf32>
    tpu.vector_store %arg10[%c0_190, %c0_191], %412 {strides = array<i32>} : memref<2x128xf32, #tpu.memory_space<vmem>>, vector<2x128xf32>,
    %429 = arith.index_cast %c5_i32 : i32 to index
    %c0_192 = arith.constant 0 : index
    %c0_193 = arith.constant 0 : index
    %430 = vector.load %arg4[%429, %c0_192, %c0_193] : memref<8x2x128xf32, #tpu.memory_space<vmem>>, vector<1x2x128xf32>
    %431 = vector.shape_cast %430 : vector<1x2x128xf32> to vector<2x128xf32>
    %432 = vector.shape_cast %424 : vector<2x128xf32> to vector<1x2x128xf32>
    tpu.vector_store %arg4[%429, %c0_192, %c0_193], %432 {strides = array<i32>} : memref<8x2x128xf32, #tpu.memory_space<vmem>>, vector<1x2x128xf32>,
    %433 = arith.index_cast %c5_i32 : i32 to index
    %c0_194 = arith.constant 0 : index
    %c0_195 = arith.constant 0 : index
    %434 = vector.load %arg5[%433, %c0_194, %c0_195] : memref<8x2x128xf32, #tpu.memory_space<vmem>>, vector<1x2x128xf32>
    %435 = vector.shape_cast %434 : vector<1x2x128xf32> to vector<2x128xf32>
    %436 = vector.shape_cast %418 : vector<2x128xf32> to vector<1x2x128xf32>
    tpu.vector_store %arg5[%433, %c0_194, %c0_195], %436 {strides = array<i32>} : memref<8x2x128xf32, #tpu.memory_space<vmem>>, vector<1x2x128xf32>,
    %437 = arith.index_cast %c5_i32 : i32 to index
    %c0_196 = arith.constant 0 : index
    %c0_197 = arith.constant 0 : index
    %438 = vector.load %arg6[%437, %c0_196, %c0_197] : memref<8x2x128xf32, #tpu.memory_space<vmem>>, vector<1x2x128xf32>
    %439 = vector.shape_cast %438 : vector<1x2x128xf32> to vector<2x128xf32>
    %440 = vector.shape_cast %421 : vector<2x128xf32> to vector<1x2x128xf32>
    tpu.vector_store %arg6[%437, %c0_196, %c0_197], %440 {strides = array<i32>} : memref<8x2x128xf32, #tpu.memory_space<vmem>>, vector<1x2x128xf32>,
    %c6_i32 = arith.constant 6 : i32
    %441 = arith.index_cast %c6_i32 : i32 to index
    %c0_198 = arith.constant 0 : index
    %c0_199 = arith.constant 0 : index
    %442 = vector.load %arg2[%441, %c0_198, %c0_199] : memref<8x2x512xbf16, #tpu.memory_space<vmem>>, vector<1x2x512xbf16>
    %443 = vector.shape_cast %442 : vector<1x2x512xbf16> to vector<2x512xbf16>
    %444 = arith.extf %443 : vector<2x512xbf16> to vector<2x512xf32>
    %c0_200 = arith.constant 0 : index
    %c0_201 = arith.constant 0 : index
    %445 = vector.load %arg7[%c0_200, %c0_201] : memref<2x128xf32, #tpu.memory_space<vmem>>, vector<2x128xf32>
    %446 = arith.truncf %445 : vector<2x128xf32> to vector<2x128xbf16>
    %c0_202 = arith.constant 0 : index
    %c0_203 = arith.constant 0 : index
    %447 = vector.load %arg3[%c0_202, %c0_203] : memref<128x512xbf16, #tpu.memory_space<vmem>>, vector<128x512xbf16>
    %cst_204 = arith.constant dense<0.000000e+00> : vector<2x512xf32>
    %448 = tpu.matmul %446, %447, %cst_204 {dimension_numbers = #tpu.dot_dimension_numbers<[1], [0], [0], [1], [0, 0, 1, 1], [], []>} : vector<2x128xbf16>, vector<128x512xbf16>, vector<2x512xf32> -> vector<2x512xf32>
    %449 = arith.addf %444, %448 : vector<2x512xf32>
    %450 = vector.extract_strided_slice %449 {offsets = [0, 0], sizes = [2, 128], strides = [1, 1]} : vector<2x512xf32> to vector<2x128xf32>
    %451 = vector.extract_strided_slice %449 {offsets = [0, 128], sizes = [2, 128], strides = [1, 1]} : vector<2x512xf32> to vector<2x128xf32>
    %452 = vector.extract_strided_slice %449 {offsets = [0, 256], sizes = [2, 128], strides = [1, 1]} : vector<2x512xf32> to vector<2x128xf32>
    %453 = vector.extract_strided_slice %449 {offsets = [0, 384], sizes = [2, 128], strides = [1, 1]} : vector<2x512xf32> to vector<2x128xf32>
    %454 = math.tanh %450 : vector<2x128xf32>
    %455 = arith.negf %452 : vector<2x128xf32>
    %456 = math.exp %455 : vector<2x128xf32>
    %cst_205 = arith.constant 1.000000e+00 : f32
    %457 = vector.broadcast %cst_205 : f32 to vector<2x128xf32>
    %458 = arith.addf %457, %456 : vector<2x128xf32>
    %459 = arith.divf %457, %458 : vector<2x128xf32>
    %460 = arith.negf %453 : vector<2x128xf32>
    %461 = math.exp %460 : vector<2x128xf32>
    %cst_206 = arith.constant 1.000000e+00 : f32
    %462 = vector.broadcast %cst_206 : f32 to vector<2x128xf32>
    %463 = arith.addf %462, %461 : vector<2x128xf32>
    %464 = arith.divf %462, %463 : vector<2x128xf32>
    %cst_207 = arith.constant 0.000000e+00 : f32
    %465 = vector.broadcast %cst_207 : f32 to vector<2x128xf32>
    %466 = arith.subf %465, %452 : vector<2x128xf32>
    %cst_208 = arith.constant 0.000000e+00 : f32
    %467 = vector.broadcast %cst_208 : f32 to vector<2x128xf32>
    %468 = arith.maximumf %466, %467 : vector<2x128xf32>
    %469 = vector.broadcast %cst_208 : f32 to vector<2x128xf32>
    %470 = arith.subf %466, %469 : vector<2x128xf32>
    %471 = arith.cmpf one, %470, %470 : vector<2x128xf32>
    %472 = vector.broadcast %cst_208 : f32 to vector<2x128xf32>
    %473 = arith.addf %466, %472 : vector<2x128xf32>
    %474 = math.absf %470 : vector<2x128xf32>
    %cst_209 = arith.constant 0.000000e+00 : f32
    %475 = vector.broadcast %cst_209 : f32 to vector<2x128xf32>
    %476 = arith.subf %475, %474 : vector<2x128xf32>
    %477 = math.exp %476 : vector<2x128xf32>
    %478 = math.log1p %477 : vector<2x128xf32>
    %479 = arith.addf %468, %478 : vector<2x128xf32>
    %480 = arith.select %471, %473, %479 : vector<2x128xi1>, vector<2x128xf32>
    %cst_210 = arith.constant 0.000000e+00 : f32
    %481 = vector.broadcast %cst_210 : f32 to vector<2x128xf32>
    %482 = arith.subf %481, %480 : vector<2x128xf32>
    %c0_211 = arith.constant 0 : index
    %c0_212 = arith.constant 0 : index
    %483 = vector.load %arg10[%c0_211, %c0_212] : memref<2x128xf32, #tpu.memory_space<vmem>>, vector<2x128xf32>
    %484 = arith.addf %482, %483 : vector<2x128xf32>
    %485 = arith.maximumf %484, %451 : vector<2x128xf32>
    %486 = arith.subf %451, %485 : vector<2x128xf32>
    %487 = math.exp %486 : vector<2x128xf32>
    %c0_213 = arith.constant 0 : index
    %c0_214 = arith.constant 0 : index
    %488 = vector.load %arg8[%c0_213, %c0_214] : memref<2x128xf32, #tpu.memory_space<vmem>>, vector<2x128xf32>
    %489 = arith.mulf %459, %488 : vector<2x128xf32>
    %490 = arith.mulf %487, %454 : vector<2x128xf32>
    %491 = arith.addf %489, %490 : vector<2x128xf32>
    %c0_215 = arith.constant 0 : index
    %c0_216 = arith.constant 0 : index
    %492 = vector.load %arg9[%c0_215, %c0_216] : memref<2x128xf32, #tpu.memory_space<vmem>>, vector<2x128xf32>
    %493 = arith.mulf %459, %492 : vector<2x128xf32>
    %494 = arith.addf %493, %487 : vector<2x128xf32>
    %495 = tpu.reciprocal %494 {approx = true} : vector<2x128xf32> -> vector<2x128xf32>
    %496 = arith.mulf %491, %495 : vector<2x128xf32>
    %497 = arith.mulf %464, %496 : vector<2x128xf32>
    %c0_217 = arith.constant 0 : index
    %c0_218 = arith.constant 0 : index
    %498 = vector.load %arg7[%c0_217, %c0_218] : memref<2x128xf32, #tpu.memory_space<vmem>>, vector<2x128xf32>
    tpu.vector_store %arg7[%c0_217, %c0_218], %497 {strides = array<i32>} : memref<2x128xf32, #tpu.memory_space<vmem>>, vector<2x128xf32>,
    %c0_219 = arith.constant 0 : index
    %c0_220 = arith.constant 0 : index
    %499 = vector.load %arg8[%c0_219, %c0_220] : memref<2x128xf32, #tpu.memory_space<vmem>>, vector<2x128xf32>
    tpu.vector_store %arg8[%c0_219, %c0_220], %491 {strides = array<i32>} : memref<2x128xf32, #tpu.memory_space<vmem>>, vector<2x128xf32>,
    %c0_221 = arith.constant 0 : index
    %c0_222 = arith.constant 0 : index
    %500 = vector.load %arg9[%c0_221, %c0_222] : memref<2x128xf32, #tpu.memory_space<vmem>>, vector<2x128xf32>
    tpu.vector_store %arg9[%c0_221, %c0_222], %494 {strides = array<i32>} : memref<2x128xf32, #tpu.memory_space<vmem>>, vector<2x128xf32>,
    %c0_223 = arith.constant 0 : index
    %c0_224 = arith.constant 0 : index
    %501 = vector.load %arg10[%c0_223, %c0_224] : memref<2x128xf32, #tpu.memory_space<vmem>>, vector<2x128xf32>
    tpu.vector_store %arg10[%c0_223, %c0_224], %485 {strides = array<i32>} : memref<2x128xf32, #tpu.memory_space<vmem>>, vector<2x128xf32>,
    %502 = arith.index_cast %c6_i32 : i32 to index
    %c0_225 = arith.constant 0 : index
    %c0_226 = arith.constant 0 : index
    %503 = vector.load %arg4[%502, %c0_225, %c0_226] : memref<8x2x128xf32, #tpu.memory_space<vmem>>, vector<1x2x128xf32>
    %504 = vector.shape_cast %503 : vector<1x2x128xf32> to vector<2x128xf32>
    %505 = vector.shape_cast %497 : vector<2x128xf32> to vector<1x2x128xf32>
    tpu.vector_store %arg4[%502, %c0_225, %c0_226], %505 {strides = array<i32>} : memref<8x2x128xf32, #tpu.memory_space<vmem>>, vector<1x2x128xf32>,
    %506 = arith.index_cast %c6_i32 : i32 to index
    %c0_227 = arith.constant 0 : index
    %c0_228 = arith.constant 0 : index
    %507 = vector.load %arg5[%506, %c0_227, %c0_228] : memref<8x2x128xf32, #tpu.memory_space<vmem>>, vector<1x2x128xf32>
    %508 = vector.shape_cast %507 : vector<1x2x128xf32> to vector<2x128xf32>
    %509 = vector.shape_cast %491 : vector<2x128xf32> to vector<1x2x128xf32>
    tpu.vector_store %arg5[%506, %c0_227, %c0_228], %509 {strides = array<i32>} : memref<8x2x128xf32, #tpu.memory_space<vmem>>, vector<1x2x128xf32>,
    %510 = arith.index_cast %c6_i32 : i32 to index
    %c0_229 = arith.constant 0 : index
    %c0_230 = arith.constant 0 : index
    %511 = vector.load %arg6[%510, %c0_229, %c0_230] : memref<8x2x128xf32, #tpu.memory_space<vmem>>, vector<1x2x128xf32>
    %512 = vector.shape_cast %511 : vector<1x2x128xf32> to vector<2x128xf32>
    %513 = vector.shape_cast %494 : vector<2x128xf32> to vector<1x2x128xf32>
    tpu.vector_store %arg6[%510, %c0_229, %c0_230], %513 {strides = array<i32>} : memref<8x2x128xf32, #tpu.memory_space<vmem>>, vector<1x2x128xf32>,
    %c7_i32 = arith.constant 7 : i32
    %514 = arith.index_cast %c7_i32 : i32 to index
    %c0_231 = arith.constant 0 : index
    %c0_232 = arith.constant 0 : index
    %515 = vector.load %arg2[%514, %c0_231, %c0_232] : memref<8x2x512xbf16, #tpu.memory_space<vmem>>, vector<1x2x512xbf16>
    %516 = vector.shape_cast %515 : vector<1x2x512xbf16> to vector<2x512xbf16>
    %517 = arith.extf %516 : vector<2x512xbf16> to vector<2x512xf32>
    %c0_233 = arith.constant 0 : index
    %c0_234 = arith.constant 0 : index
    %518 = vector.load %arg7[%c0_233, %c0_234] : memref<2x128xf32, #tpu.memory_space<vmem>>, vector<2x128xf32>
    %519 = arith.truncf %518 : vector<2x128xf32> to vector<2x128xbf16>
    %c0_235 = arith.constant 0 : index
    %c0_236 = arith.constant 0 : index
    %520 = vector.load %arg3[%c0_235, %c0_236] : memref<128x512xbf16, #tpu.memory_space<vmem>>, vector<128x512xbf16>
    %cst_237 = arith.constant dense<0.000000e+00> : vector<2x512xf32>
    %521 = tpu.matmul %519, %520, %cst_237 {dimension_numbers = #tpu.dot_dimension_numbers<[1], [0], [0], [1], [0, 0, 1, 1], [], []>} : vector<2x128xbf16>, vector<128x512xbf16>, vector<2x512xf32> -> vector<2x512xf32>
    %522 = arith.addf %517, %521 : vector<2x512xf32>
    %523 = vector.extract_strided_slice %522 {offsets = [0, 0], sizes = [2, 128], strides = [1, 1]} : vector<2x512xf32> to vector<2x128xf32>
    %524 = vector.extract_strided_slice %522 {offsets = [0, 128], sizes = [2, 128], strides = [1, 1]} : vector<2x512xf32> to vector<2x128xf32>
    %525 = vector.extract_strided_slice %522 {offsets = [0, 256], sizes = [2, 128], strides = [1, 1]} : vector<2x512xf32> to vector<2x128xf32>
    %526 = vector.extract_strided_slice %522 {offsets = [0, 384], sizes = [2, 128], strides = [1, 1]} : vector<2x512xf32> to vector<2x128xf32>
    %527 = math.tanh %523 : vector<2x128xf32>
    %528 = arith.negf %525 : vector<2x128xf32>
    %529 = math.exp %528 : vector<2x128xf32>
    %cst_238 = arith.constant 1.000000e+00 : f32
    %530 = vector.broadcast %cst_238 : f32 to vector<2x128xf32>
    %531 = arith.addf %530, %529 : vector<2x128xf32>
    %532 = arith.divf %530, %531 : vector<2x128xf32>
    %533 = arith.negf %526 : vector<2x128xf32>
    %534 = math.exp %533 : vector<2x128xf32>
    %cst_239 = arith.constant 1.000000e+00 : f32
    %535 = vector.broadcast %cst_239 : f32 to vector<2x128xf32>
    %536 = arith.addf %535, %534 : vector<2x128xf32>
    %537 = arith.divf %535, %536 : vector<2x128xf32>
    %cst_240 = arith.constant 0.000000e+00 : f32
    %538 = vector.broadcast %cst_240 : f32 to vector<2x128xf32>
    %539 = arith.subf %538, %525 : vector<2x128xf32>
    %cst_241 = arith.constant 0.000000e+00 : f32
    %540 = vector.broadcast %cst_241 : f32 to vector<2x128xf32>
    %541 = arith.maximumf %539, %540 : vector<2x128xf32>
    %542 = vector.broadcast %cst_241 : f32 to vector<2x128xf32>
    %543 = arith.subf %539, %542 : vector<2x128xf32>
    %544 = arith.cmpf one, %543, %543 : vector<2x128xf32>
    %545 = vector.broadcast %cst_241 : f32 to vector<2x128xf32>
    %546 = arith.addf %539, %545 : vector<2x128xf32>
    %547 = math.absf %543 : vector<2x128xf32>
    %cst_242 = arith.constant 0.000000e+00 : f32
    %548 = vector.broadcast %cst_242 : f32 to vector<2x128xf32>
    %549 = arith.subf %548, %547 : vector<2x128xf32>
    %550 = math.exp %549 : vector<2x128xf32>
    %551 = math.log1p %550 : vector<2x128xf32>
    %552 = arith.addf %541, %551 : vector<2x128xf32>
    %553 = arith.select %544, %546, %552 : vector<2x128xi1>, vector<2x128xf32>
    %cst_243 = arith.constant 0.000000e+00 : f32
    %554 = vector.broadcast %cst_243 : f32 to vector<2x128xf32>
    %555 = arith.subf %554, %553 : vector<2x128xf32>
    %c0_244 = arith.constant 0 : index
    %c0_245 = arith.constant 0 : index
    %556 = vector.load %arg10[%c0_244, %c0_245] : memref<2x128xf32, #tpu.memory_space<vmem>>, vector<2x128xf32>
    %557 = arith.addf %555, %556 : vector<2x128xf32>
    %558 = arith.maximumf %557, %524 : vector<2x128xf32>
    %559 = arith.subf %524, %558 : vector<2x128xf32>
    %560 = math.exp %559 : vector<2x128xf32>
    %c0_246 = arith.constant 0 : index
    %c0_247 = arith.constant 0 : index
    %561 = vector.load %arg8[%c0_246, %c0_247] : memref<2x128xf32, #tpu.memory_space<vmem>>, vector<2x128xf32>
    %562 = arith.mulf %532, %561 : vector<2x128xf32>
    %563 = arith.mulf %560, %527 : vector<2x128xf32>
    %564 = arith.addf %562, %563 : vector<2x128xf32>
    %c0_248 = arith.constant 0 : index
    %c0_249 = arith.constant 0 : index
    %565 = vector.load %arg9[%c0_248, %c0_249] : memref<2x128xf32, #tpu.memory_space<vmem>>, vector<2x128xf32>
    %566 = arith.mulf %532, %565 : vector<2x128xf32>
    %567 = arith.addf %566, %560 : vector<2x128xf32>
    %568 = tpu.reciprocal %567 {approx = true} : vector<2x128xf32> -> vector<2x128xf32>
    %569 = arith.mulf %564, %568 : vector<2x128xf32>
    %570 = arith.mulf %537, %569 : vector<2x128xf32>
    %c0_250 = arith.constant 0 : index
    %c0_251 = arith.constant 0 : index
    %571 = vector.load %arg7[%c0_250, %c0_251] : memref<2x128xf32, #tpu.memory_space<vmem>>, vector<2x128xf32>
    tpu.vector_store %arg7[%c0_250, %c0_251], %570 {strides = array<i32>} : memref<2x128xf32, #tpu.memory_space<vmem>>, vector<2x128xf32>,
    %c0_252 = arith.constant 0 : index
    %c0_253 = arith.constant 0 : index
    %572 = vector.load %arg8[%c0_252, %c0_253] : memref<2x128xf32, #tpu.memory_space<vmem>>, vector<2x128xf32>
    tpu.vector_store %arg8[%c0_252, %c0_253], %564 {strides = array<i32>} : memref<2x128xf32, #tpu.memory_space<vmem>>, vector<2x128xf32>,
    %c0_254 = arith.constant 0 : index
    %c0_255 = arith.constant 0 : index
    %573 = vector.load %arg9[%c0_254, %c0_255] : memref<2x128xf32, #tpu.memory_space<vmem>>, vector<2x128xf32>
    tpu.vector_store %arg9[%c0_254, %c0_255], %567 {strides = array<i32>} : memref<2x128xf32, #tpu.memory_space<vmem>>, vector<2x128xf32>,
    %c0_256 = arith.constant 0 : index
    %c0_257 = arith.constant 0 : index
    %574 = vector.load %arg10[%c0_256, %c0_257] : memref<2x128xf32, #tpu.memory_space<vmem>>, vector<2x128xf32>
    tpu.vector_store %arg10[%c0_256, %c0_257], %558 {strides = array<i32>} : memref<2x128xf32, #tpu.memory_space<vmem>>, vector<2x128xf32>,
    %575 = arith.index_cast %c7_i32 : i32 to index
    %c0_258 = arith.constant 0 : index
    %c0_259 = arith.constant 0 : index
    %576 = vector.load %arg4[%575, %c0_258, %c0_259] : memref<8x2x128xf32, #tpu.memory_space<vmem>>, vector<1x2x128xf32>
    %577 = vector.shape_cast %576 : vector<1x2x128xf32> to vector<2x128xf32>
    %578 = vector.shape_cast %570 : vector<2x128xf32> to vector<1x2x128xf32>
    tpu.vector_store %arg4[%575, %c0_258, %c0_259], %578 {strides = array<i32>} : memref<8x2x128xf32, #tpu.memory_space<vmem>>, vector<1x2x128xf32>,
    %579 = arith.index_cast %c7_i32 : i32 to index
    %c0_260 = arith.constant 0 : index
    %c0_261 = arith.constant 0 : index
    %580 = vector.load %arg5[%579, %c0_260, %c0_261] : memref<8x2x128xf32, #tpu.memory_space<vmem>>, vector<1x2x128xf32>
    %581 = vector.shape_cast %580 : vector<1x2x128xf32> to vector<2x128xf32>
    %582 = vector.shape_cast %564 : vector<2x128xf32> to vector<1x2x128xf32>
    tpu.vector_store %arg5[%579, %c0_260, %c0_261], %582 {strides = array<i32>} : memref<8x2x128xf32, #tpu.memory_space<vmem>>, vector<1x2x128xf32>,
    %583 = arith.index_cast %c7_i32 : i32 to index
    %c0_262 = arith.constant 0 : index
    %c0_263 = arith.constant 0 : index
    %584 = vector.load %arg6[%583, %c0_262, %c0_263] : memref<8x2x128xf32, #tpu.memory_space<vmem>>, vector<1x2x128xf32>
    %585 = vector.shape_cast %584 : vector<1x2x128xf32> to vector<2x128xf32>
    %586 = vector.shape_cast %567 : vector<2x128xf32> to vector<1x2x128xf32>
    tpu.vector_store %arg6[%583, %c0_262, %c0_263], %586 {strides = array<i32>} : memref<8x2x128xf32, #tpu.memory_space<vmem>>, vector<1x2x128xf32>,
    %c8_i32 = arith.constant 8 : i32
    return
  }
  func.func @transform_0(%arg0: i32, %arg1: i32) -> (i32, i32, i32) {
    %c0_i32 = arith.constant 0 : i32
    %c0_i32_0 = arith.constant 0 : i32
    return %arg1, %arg0, %c0_i32 : i32, i32, i32
  }
  func.func @transform_1(%arg0: i32, %arg1: i32) -> (i32, i32) {
    %c0_i32 = arith.constant 0 : i32
    %c0_i32_0 = arith.constant 0 : i32
    %c0_i32_1 = arith.constant 0 : i32
    return %c0_i32, %c0_i32_0 : i32, i32
  }
  func.func @transform_2(%arg0: i32, %arg1: i32) -> (i32, i32, i32) {
    %c0_i32 = arith.constant 0 : i32
    %c0_i32_0 = arith.constant 0 : i32
    return %arg1, %arg0, %c0_i32 : i32, i32, i32
  }
  func.func @transform_3(%arg0: i32, %arg1: i32) -> (i32, i32, i32) {
    %c0_i32 = arith.constant 0 : i32
    %c0_i32_0 = arith.constant 0 : i32
    return %arg1, %arg0, %c0_i32 : i32, i32, i32
  }
  func.func @transform_4(%arg0: i32, %arg1: i32) -> (i32, i32, i32) {
    %c0_i32 = arith.constant 0 : i32
    %c0_i32_0 = arith.constant 0 : i32
    return %arg1, %arg0, %c0_i32 : i32, i32, i32
  }
}

</mosaic_0001>

<llo_original>
// kernel: slstm_forward.2
$region0: #{slstm_forward.2}
  #allocation0 [shape = 'u32[]', space=smem, size = 0x4, offset = 0x4, fixed_abs, tag = 'smem constant byte address 0x4 - core index']
  #allocation1 [shape = 'u32[144,128]{1,0:T(1,128)}', space=vmem, size = 0x12000, scoped, tag = 'internal scratch']
  #allocation2 [shape = 'f32[2,128]{1,0:T(2,128)}', space=vmem, size = 0x400, scoped, tag = 'scratch operand']
  #allocation3 [shape = 'f32[2,128]{1,0:T(2,128)}', space=vmem, size = 0x400, scoped, tag = 'scratch operand']
  #allocation4 [shape = 'f32[2,128]{1,0:T(2,128)}', space=vmem, size = 0x400, scoped, tag = 'scratch operand']
  #allocation5 [shape = 'f32[2,128]{1,0:T(2,128)}', space=vmem, size = 0x400, scoped, tag = 'scratch operand']
  %s0 = inlined_call_operand.vmem [shape: bf16[8,2,512], index: 0, kind: input, shape index: {}]
  %s1 = inlined_call_operand.vmem [shape: bf16[128,512], index: 1, kind: input, shape index: {}]
  %s2 = inlined_call_operand.vmem [shape: f32[8,2,128], index: 2, kind: output, shape index: {0}]
  %s3 = inlined_call_operand.vmem [shape: f32[8,2,128], index: 3, kind: output, shape index: {1}]
  %s4 = inlined_call_operand.vmem [shape: f32[8,2,128], index: 4, kind: output, shape index: {2}]
  %5 = xla_tuple %s2, %s3, %s4
  %s6 = sld [smem:[#allocation0]]
  $region38: #{slstm_forward.2} parent=0
    _
  %s8 = ssub.s32 1, %s6
  %s9 = scalar_select 0, %s8, %s6
  // Predicated region
  $region2: #{slstm_forward.2} parent=0 // pred_check
    _
  $region3: #{slstm_forward.2} parent=0 // pred_check_branch
    %11 = sbr.rel (0) target = $region5
  $region4: #{slstm_forward.2} parent=0 // pred_region
    _
  $region5: #{slstm_forward.2} parent=0 // pred_fallthru
    _
  // Predicated region
  $region6: #{slstm_forward.2} parent=0 // pred_check
    _
  $region7: #{slstm_forward.2} parent=0 // pred_check_branch
    %13 = sbr.rel (0) target = $region9
  $region8: #{slstm_forward.2} parent=0 // pred_region
    _
  $region9: #{slstm_forward.2} parent=0 // pred_fallthru
    _
  %p15 = scmp.eq.s32.totalorder 0, 0
  // Predicated region
  $region10: #{slstm_forward.2} parent=0 // pred_check
    %p16 = pneg %p15
  $region11: #{slstm_forward.2} parent=0 // pred_check_branch
    %18 = sbr.rel (%p16) target = $region13
  $region12: #{slstm_forward.2} parent=0 // pred_region
    %19 = vst [vmem:[#allocation2] sm:$0x3] 0.0
    %20 = vst [vmem:[#allocation3] sm:$0x3] 0.0
    %21 = vst [vmem:[#allocation4] sm:$0x3] 0.0
    %22 = vst [vmem:[#allocation5] sm:$0x3] 0.0
  $region13: #{slstm_forward.2} parent=0 // pred_fallthru
    _
  %v23 = vld [vmem:[%s0] sm:$0xf]
  %v24 = vunpack.c.l.bf16 %v23
  %v25 = vld [vmem:[#allocation2] sm:$0x3]
  %v26 = vpack.c.bf16 %v25, %v25
  %v27 = vld [vmem:[%s1] sm:$0xff]
  %v28 = vld [vmem:[%s1 + $0x8] sm:$0xff]
  %v29 = vld [vmem:[%s1 + $0x10] sm:$0xff]
  %v30 = vld [vmem:[%s1 + $0x18] sm:$0xff]
  %v31 = vld [vmem:[%s1 + $0x20] sm:$0xff]
  %v32 = vld [vmem:[%s1 + $0x28] sm:$0xff]
  %v33 = vld [vmem:[%s1 + $0x30] sm:$0xff]
  %v34 = vld [vmem:[%s1 + $0x38] sm:$0xff]
  %v35 = vld [vmem:[%s1 + $0x40] sm:$0xff]
  %v36 = vld [vmem:[%s1 + $0x48] sm:$0xff]
  %v37 = vld [vmem:[%s1 + $0x50] sm:$0xff]
  %v38 = vld [vmem:[%s1 + $0x58] sm:$0xff]
  %v39 = vld [vmem:[%s1 + $0x60] sm:$0xff]
  %v40 = vld [vmem:[%s1 + $0x68] sm:$0xff]
  %v41 = vld [vmem:[%s1 + $0x70] sm:$0xff]
  %v42 = vld [vmem:[%s1 + $0x78] sm:$0xff]
  %v43 = vld [vmem:[%s1 + $0x80] sm:$0xff]
  %v44 = vld [vmem:[%s1 + $0x88] sm:$0xff]
  %v45 = vld [vmem:[%s1 + $0x90] sm:$0xff]
  %v46 = vld [vmem:[%s1 + $0x98] sm:$0xff]
  %v47 = vld [vmem:[%s1 + $0xa0] sm:$0xff]
  %v48 = vld [vmem:[%s1 + $0xa8] sm:$0xff]
  %v49 = vld [vmem:[%s1 + $0xb0] sm:$0xff]
  %v50 = vld [vmem:[%s1 + $0xb8] sm:$0xff]
  %v51 = vld [vmem:[%s1 + $0xc0] sm:$0xff]
  %v52 = vld [vmem:[%s1 + $0xc8] sm:$0xff]
  %v53 = vld [vmem:[%s1 + $0xd0] sm:$0xff]
  %v54 = vld [vmem:[%s1 + $0xd8] sm:$0xff]
  %v55 = vld [vmem:[%s1 + $0xe0] sm:$0xff]
  %v56 = vld [vmem:[%s1 + $0xe8] sm:$0xff]
  %v57 = vld [vmem:[%s1 + $0xf0] sm:$0xff]
  %v58 = vld [vmem:[%s1 + $0xf8] sm:$0xff]
  %v91 = vunpack.c.l.b16 %v27
  %v92 = vunpack.c.h.b16 %v27
  %v93 = vunpack.c.l.b16 %v28
  %v94 = vunpack.c.h.b16 %v28
  %v95 = vunpack.c.l.b16 %v29
  %v96 = vunpack.c.h.b16 %v29
  %v97 = vunpack.c.l.b16 %v30
  %v98 = vunpack.c.h.b16 %v30
  %v99 = vunpack.c.l.b16 %v31
  %v100 = vunpack.c.h.b16 %v31
  %v101 = vunpack.c.l.b16 %v32
  %v102 = vunpack.c.h.b16 %v32
  %v103 = vunpack.c.l.b16 %v33
  %v104 = vunpack.c.h.b16 %v33
  %v105 = vunpack.c.l.b16 %v34
  %v106 = vunpack.c.h.b16 %v34
  %v107 = vunpack.c.l.b16 %v35
  %v108 = vunpack.c.h.b16 %v35
  %v109 = vunpack.c.l.b16 %v36
  %v110 = vunpack.c.h.b16 %v36
  %v111 = vunpack.c.l.b16 %v37
  %v112 = vunpack.c.h.b16 %v37
  %v113 = vunpack.c.l.b16 %v38
  %v114 = vunpack.c.h.b16 %v38
  %v115 = vunpack.c.l.b16 %v39
  %v116 = vunpack.c.h.b16 %v39
  %v117 = vunpack.c.l.b16 %v40
  %v118 = vunpack.c.h.b16 %v40
  %v119 = vunpack.c.l.b16 %v41
  %v120 = vunpack.c.h.b16 %v41
  %v121 = vunpack.c.l.b16 %v42
  %v122 = vunpack.c.h.b16 %v42
  %v123 = vunpack.c.l.b16 %v43
  %v124 = vunpack.c.h.b16 %v43
  %v125 = vunpack.c.l.b16 %v44
  %v126 = vunpack.c.h.b16 %v44
  %v127 = vunpack.c.l.b16 %v45
  %v128 = vunpack.c.h.b16 %v45
  %v129 = vunpack.c.l.b16 %v46
  %v130 = vunpack.c.h.b16 %v46
  %v131 = vunpack.c.l.b16 %v47
  %v132 = vunpack.c.h.b16 %v47
  %v133 = vunpack.c.l.b16 %v48
  %v134 = vunpack.c.h.b16 %v48
  %v135 = vunpack.c.l.b16 %v49
  %v136 = vunpack.c.h.b16 %v49
  %v137 = vunpack.c.l.b16 %v50
  %v138 = vunpack.c.h.b16 %v50
  %v139 = vunpack.c.l.b16 %v51
  %v140 = vunpack.c.h.b16 %v51
  %v141 = vunpack.c.l.b16 %v52
  %v142 = vunpack.c.h.b16 %v52
  %v143 = vunpack.c.l.b16 %v53
  %v144 = vunpack.c.h.b16 %v53
  %v145 = vunpack.c.l.b16 %v54
  %v146 = vunpack.c.h.b16 %v54
  %v147 = vunpack.c.l.b16 %v55
  %v148 = vunpack.c.h.b16 %v55
  %v149 = vunpack.c.l.b16 %v56
  %v150 = vunpack.c.h.b16 %v56
  %v151 = vunpack.c.l.b16 %v57
  %v152 = vunpack.c.h.b16 %v57
  %v153 = vunpack.c.l.b16 %v58
  %v154 = vunpack.c.h.b16 %v58
  %v155 = vpack.c.b16 %v95, %v91
  %v156 = vpack.c.b16 %v96, %v92
  %v157 = vpack.c.b16 %v97, %v93
  %v158 = vpack.c.b16 %v98, %v94
  %v159 = vpack.c.b16 %v103, %v99
  %v160 = vpack.c.b16 %v104, %v100
  %v161 = vpack.c.b16 %v105, %v101
  %v162 = vpack.c.b16 %v106, %v102
  %v163 = vpack.c.b16 %v111, %v107
  %v164 = vpack.c.b16 %v112, %v108
  %v165 = vpack.c.b16 %v113, %v109
  %v166 = vpack.c.b16 %v114, %v110
  %v167 = vpack.c.b16 %v119, %v115
  %v168 = vpack.c.b16 %v120, %v116
  %v169 = vpack.c.b16 %v121, %v117
  %v170 = vpack.c.b16 %v122, %v118
  %v171 = vpack.c.b16 %v127, %v123
  %v172 = vpack.c.b16 %v128, %v124
  %v173 = vpack.c.b16 %v129, %v125
  %v174 = vpack.c.b16 %v130, %v126
  %v175 = vpack.c.b16 %v135, %v131
  %v176 = vpack.c.b16 %v136, %v132
  %v177 = vpack.c.b16 %v137, %v133
  %v178 = vpack.c.b16 %v138, %v134
  %v179 = vpack.c.b16 %v143, %v139
  %v180 = vpack.c.b16 %v144, %v140
  %v181 = vpack.c.b16 %v145, %v141
  %v182 = vpack.c.b16 %v146, %v142
  %v183 = vpack.c.b16 %v151, %v147
  %v184 = vpack.c.b16 %v152, %v148
  %v185 = vpack.c.b16 %v153, %v149
  %v186 = vpack.c.b16 %v154, %v150
  %219 = vmatprep.subr.bf16.mxu0 %v156
  %220 = vmatpush1.bf16.msra.mxu0 %v155
  %221 = vmatprep.subr.bf16.mxu0 %v160
  %222 = vmatpush1.bf16.msra.mxu0 %v159
  %223 = vmatprep.subr.bf16.mxu0 %v164
  %224 = vmatpush1.bf16.msra.mxu0 %v163
  %225 = vmatprep.subr.bf16.mxu0 %v168
  %226 = vmatpush1.bf16.msra.mxu0 %v167
  %227 = vmatprep.subr.bf16.mxu0 %v172
  %228 = vmatpush1.bf16.msra.mxu0 %v171
  %229 = vmatprep.subr.bf16.mxu0 %v176
  %230 = vmatpush1.bf16.msra.mxu0 %v175
  %231 = vmatprep.subr.bf16.mxu0 %v180
  %232 = vmatpush1.bf16.msra.mxu0 %v179
  %233 = vmatprep.subr.bf16.mxu0 %v184
  %234 = vmatpush1.bf16.msra.mxu0 %v183
  %235 = vmatprep.subr.bf16.mxu0 0
  %236 = vmatpush1.bf16.msra.mxu0 0
  %237 = vmatprep.subr.bf16.mxu0 0
  %238 = vmatpush1.bf16.msra.mxu0 0
  %239 = vmatprep.subr.bf16.mxu0 0
  %240 = vmatpush1.bf16.msra.mxu0 0
  %241 = vmatprep.subr.bf16.mxu0 0
  %242 = vmatpush1.bf16.msra.mxu0 0
  %243 = vmatprep.subr.bf16.mxu0 0
  %244 = vmatpush1.bf16.msra.mxu0 0
  %245 = vmatprep.subr.bf16.mxu0 0
  %246 = vmatpush1.bf16.msra.mxu0 0
  %247 = vmatprep.subr.bf16.mxu0 0
  %248 = vmatpush1.bf16.msra.mxu0 0
  %249 = vmatprep.subr.bf16.mxu0 0
  %250 = vmatpush1.bf16.msra.mxu0 0
  %251 = vmatprep.mubr.bf16.mxu0 0
  %252 = vmatmul.mubr.bf16.gmra.mrb[0].mxu0 %v26
  %v253 = vpop.f32.mrb[0].mxu0
  %v254 = vadd.f32 0.0, %v253
  %v255 = vpop.f32.mrb[0].mxu0
  %v256 = vadd.f32 0.0, %v255
  %v257 = vpop.f32.mrb[0].mxu0
  %v258 = vpop.f32.mrb[0].mxu0
  %259 = vdwg.mxu0
  %260 = vmatprep.subr.bf16.mxu0 %v158
  %261 = vmatpush1.bf16.msra.mxu0 %v157
  %262 = vmatprep.subr.bf16.mxu0 %v162
  %263 = vmatpush1.bf16.msra.mxu0 %v161
  %264 = vmatprep.subr.bf16.mxu0 %v166
  %265 = vmatpush1.bf16.msra.mxu0 %v165
  %266 = vmatprep.subr.bf16.mxu0 %v170
  %267 = vmatpush1.bf16.msra.mxu0 %v169
  %268 = vmatprep.subr.bf16.mxu0 %v174
  %269 = vmatpush1.bf16.msra.mxu0 %v173
  %270 = vmatprep.subr.bf16.mxu0 %v178
  %271 = vmatpush1.bf16.msra.mxu0 %v177
  %272 = vmatprep.subr.bf16.mxu0 %v182
  %273 = vmatpush1.bf16.msra.mxu0 %v181
  %274 = vmatprep.subr.bf16.mxu0 %v186
  %275 = vmatpush1.bf16.msra.mxu0 %v185
  %276 = vmatprep.subr.bf16.mxu0 0
  %277 = vmatpush1.bf16.msra.mxu0 0
  %278 = vmatprep.subr.bf16.mxu0 0
  %279 = vmatpush1.bf16.msra.mxu0 0
  %280 = vmatprep.subr.bf16.mxu0 0
  %281 = vmatpush1.bf16.msra.mxu0 0
  %282 = vmatprep.subr.bf16.mxu0 0
  %283 = vmatpush1.bf16.msra.mxu0 0
  %284 = vmatprep.subr.bf16.mxu0 0
  %285 = vmatpush1.bf16.msra.mxu0 0
  %286 = vmatprep.subr.bf16.mxu0 0
  %287 = vmatpush1.bf16.msra.mxu0 0
  %288 = vmatprep.subr.bf16.mxu0 0
  %289 = vmatpush1.bf16.msra.mxu0 0
  %290 = vmatprep.subr.bf16.mxu0 0
  %291 = vmatpush1.bf16.msra.mxu0 0
  %292 = vmatprep.mubr.bf16.mxu0 0
  %293 = vmatmul.mubr.bf16.gmra.mrb[0].mxu0 %v26
  %v294 = vpop.f32.mrb[0].mxu0
  %v295 = vadd.f32 0.0, %v294
  %v296 = vpop.f32.mrb[0].mxu0
  %v297 = vadd.f32 0.0, %v296
  %v298 = vpop.f32.mrb[0].mxu0
  %v299 = vpop.f32.mrb[0].mxu0
  %300 = vdwg.mxu0
  %v305 = vcombine.low %v254, %v256
  %v306 = vcombine.low %v295, %v297
  %v308 = vunpack.c.l.s4 1983009808
  %v309 = vunpack.c.0.s8 %v308
  %v310 = vlaneseq
  %v311 = vshrl.u32 %v310, 7
  %v312 = vsub.s32 %v309, %v311
  %v313 = vrot.slane %v305, %v312
  %v315 = vunpack.c.l.s4 1983009808
  %v316 = vunpack.c.0.s8 %v315
  %v317 = vlaneseq
  %v318 = vshrl.u32 %v317, 7
  %v319 = vsub.s32 %v316, %v318
  %v320 = vrot.slane %v306, %v319
  %v321 = vcombine.low %v313, %v320
  %v323 = vadd.f32 %v24, %v321
  %v324 = vtanh.pop %v323
  %v326 = vrot.slane %v323, 4
  %v328 = vxor.u32 %v326, 2147483648
  %v329 = vmul.f32 %v328, 1.442695
  %v330 = vpow.pop %v329
  %v331 = vadd.f32 %v330, 1.0
  %v332 = vrcp.pop %v331
  %v333 = vmul.f32 1.0, %v332
  %v334 = vrot.slane %v323, 6
  %v336 = vxor.u32 %v334, 2147483648
  %v337 = vmul.f32 %v336, 1.442695
  %v338 = vpow.pop %v337
  %v339 = vadd.f32 %v338, 1.0
  %v340 = vrcp.pop %v339
  %v341 = vmul.f32 1.0, %v340
  %v342 = vsub.f32 0.0, %v326
  %v343 = vmax.f32 %v342, 0.0
  %vm344 = vcmp.ne.f32.partialorder %v342, %v342
  %v345 = vadd.f32 %v342, 0.0
  %v346 = vand.u32 2147483647, %v342
  %v347 = vsub.f32 0.0, %v346
  %v348 = vmul.f32 %v347, 1.442695
  %v349 = vpow.pop %v348
  %v350 = vadd.f32 %v349, 1.0
  %v351 = vlog2.pop %v350
  %v352 = vmul.f32 %v351, 0.6931472
  %v353 = vmul.f32 -0.5, %v349
  %v354 = vadd.f32 %v353, 1.0
  %v355 = vmul.f32 %v354, %v349
  %v356 = vand.u32 2147483647, %v349
  %vm357 = vcmp.lt.f32.partialorder %v356, 0.0004427343
  %v358 = vsel %vm357, %v355, %v352
  %v359 = vadd.f32 %v343, %v358
  %v360 = vsel %vm344, %v345, %v359
  %v361 = vsub.f32 0.0, %v360
  %v362 = vld [vmem:[#allocation5] sm:$0x3]
  %v363 = vadd.f32 %v361, %v362
  %v364 = vrot.slane %v323, 2
  %v366 = vmax.f32 %v363, %v364
  %v367 = vsub.f32 %v364, %v366
  %v368 = vmul.f32 %v367, 1.442695
  %v369 = vpow.pop %v368
  %v370 = vld [vmem:[#allocation3] sm:$0x3]
  %v371 = vmul.f32 %v333, %v370
  %v372 = vmul.f32 %v369, %v324
  %v373 = vadd.f32 %v371, %v372
  %v374 = vld [vmem:[#allocation4] sm:$0x3]
  %v375 = vmul.f32 %v333, %v374
  %v376 = vadd.f32 %v375, %v369
  %v377 = vrcp.pop %v376
  %v378 = vmul.f32 %v373, %v377
  %v379 = vmul.f32 %v341, %v378
  %380 = vst [vmem:[#allocation2] sm:$0x3] %v379
  %381 = vst [vmem:[#allocation3] sm:$0x3] %v373
  %382 = vst [vmem:[#allocation4] sm:$0x3] %v376
  %383 = vst [vmem:[#allocation5] sm:$0x3] %v366
  %384 = vst [vmem:[%s2] sm:$0x3] %v379
  %385 = vst [vmem:[%s3] sm:$0x3] %v373
  %386 = vst [vmem:[%s4] sm:$0x3] %v376
  %s387 = scalar_lea.vmem %s0, 4
  %v388 = vld [vmem:[%s387] sm:$0xf]
  %v389 = vunpack.c.l.bf16 %v388
  %v390 = vld [vmem:[#allocation2] sm:$0x3]
  %v391 = vpack.c.bf16 %v390, %v390
  %v392 = vld [vmem:[%s1] sm:$0xff]
  %v393 = vld [vmem:[%s1 + $0x8] sm:$0xff]
  %v394 = vld [vmem:[%s1 + $0x10] sm:$0xff]
  %v395 = vld [vmem:[%s1 + $0x18] sm:$0xff]
  %v396 = vld [vmem:[%s1 + $0x20] sm:$0xff]
  %v397 = vld [vmem:[%s1 + $0x28] sm:$0xff]
  %v398 = vld [vmem:[%s1 + $0x30] sm:$0xff]
  %v399 = vld [vmem:[%s1 + $0x38] sm:$0xff]
  %v400 = vld [vmem:[%s1 + $0x40] sm:$0xff]
  %v401 = vld [vmem:[%s1 + $0x48] sm:$0xff]
  %v402 = vld [vmem:[%s1 + $0x50] sm:$0xff]
  %v403 = vld [vmem:[%s1 + $0x58] sm:$0xff]
  %v404 = vld [vmem:[%s1 + $0x60] sm:$0xff]
  %v405 = vld [vmem:[%s1 + $0x68] sm:$0xff]
  %v406 = vld [vmem:[%s1 + $0x70] sm:$0xff]
  %v407 = vld [vmem:[%s1 + $0x78] sm:$0xff]
  %v408 = vld [vmem:[%s1 + $0x80] sm:$0xff]
  %v409 = vld [vmem:[%s1 + $0x88] sm:$0xff]
  %v410 = vld [vmem:[%s1 + $0x90] sm:$0xff]
  %v411 = vld [vmem:[%s1 + $0x98] sm:$0xff]
  %v412 = vld [vmem:[%s1 + $0xa0] sm:$0xff]
  %v413 = vld [vmem:[%s1 + $0xa8] sm:$0xff]
  %v414 = vld [vmem:[%s1 + $0xb0] sm:$0xff]
  %v415 = vld [vmem:[%s1 + $0xb8] sm:$0xff]
  %v416 = vld [vmem:[%s1 + $0xc0] sm:$0xff]
  %v417 = vld [vmem:[%s1 + $0xc8] sm:$0xff]
  %v418 = vld [vmem:[%s1 + $0xd0] sm:$0xff]
  %v419 = vld [vmem:[%s1 + $0xd8] sm:$0xff]
  %v420 = vld [vmem:[%s1 + $0xe0] sm:$0xff]
  %v421 = vld [vmem:[%s1 + $0xe8] sm:$0xff]
  %v422 = vld [vmem:[%s1 + $0xf0] sm:$0xff]
  %v423 = vld [vmem:[%s1 + $0xf8] sm:$0xff]
  %v456 = vunpack.c.l.b16 %v392
  %v457 = vunpack.c.h.b16 %v392
  %v458 = vunpack.c.l.b16 %v393
  %v459 = vunpack.c.h.b16 %v393
  %v460 = vunpack.c.l.b16 %v394
  %v461 = vunpack.c.h.b16 %v394
  %v462 = vunpack.c.l.b16 %v395
  %v463 = vunpack.c.h.b16 %v395
  %v464 = vunpack.c.l.b16 %v396
  %v465 = vunpack.c.h.b16 %v396
  %v466 = vunpack.c.l.b16 %v397
  %v467 = vunpack.c.h.b16 %v397
  %v468 = vunpack.c.l.b16 %v398
  %v469 = vunpack.c.h.b16 %v398
  %v470 = vunpack.c.l.b16 %v399
  %v471 = vunpack.c.h.b16 %v399
  %v472 = vunpack.c.l.b16 %v400
  %v473 = vunpack.c.h.b16 %v400
  %v474 = vunpack.c.l.b16 %v401
  %v475 = vunpack.c.h.b16 %v401
  %v476 = vunpack.c.l.b16 %v402
  %v477 = vunpack.c.h.b16 %v402
  %v478 = vunpack.c.l.b16 %v403
  %v479 = vunpack.c.h.b16 %v403
  %v480 = vunpack.c.l.b16 %v404
  %v481 = vunpack.c.h.b16 %v404
  %v482 = vunpack.c.l.b16 %v405
  %v483 = vunpack.c.h.b16 %v405
  %v484 = vunpack.c.l.b16 %v406
  %v485 = vunpack.c.h.b16 %v406
  %v486 = vunpack.c.l.b16 %v407
  %v487 = vunpack.c.h.b16 %v407
  %v488 = vunpack.c.l.b16 %v408
  %v489 = vunpack.c.h.b16 %v408
  %v490 = vunpack.c.l.b16 %v409
  %v491 = vunpack.c.h.b16 %v409
  %v492 = vunpack.c.l.b16 %v410
  %v493 = vunpack.c.h.b16 %v410
  %v494 = vunpack.c.l.b16 %v411
  %v495 = vunpack.c.h.b16 %v411
  %v496 = vunpack.c.l.b16 %v412
  %v497 = vunpack.c.h.b16 %v412
  %v498 = vunpack.c.l.b16 %v413
  %v499 = vunpack.c.h.b16 %v413
  %v500 = vunpack.c.l.b16 %v414
  %v501 = vunpack.c.h.b16 %v414
  %v502 = vunpack.c.l.b16 %v415
  %v503 = vunpack.c.h.b16 %v415
  %v504 = vunpack.c.l.b16 %v416
  %v505 = vunpack.c.h.b16 %v416
  %v506 = vunpack.c.l.b16 %v417
  %v507 = vunpack.c.h.b16 %v417
  %v508 = vunpack.c.l.b16 %v418
  %v509 = vunpack.c.h.b16 %v418
  %v510 = vunpack.c.l.b16 %v419
  %v511 = vunpack.c.h.b16 %v419
  %v512 = vunpack.c.l.b16 %v420
  %v513 = vunpack.c.h.b16 %v420
  %v514 = vunpack.c.l.b16 %v421
  %v515 = vunpack.c.h.b16 %v421
  %v516 = vunpack.c.l.b16 %v422
  %v517 = vunpack.c.h.b16 %v422
  %v518 = vunpack.c.l.b16 %v423
  %v519 = vunpack.c.h.b16 %v423
  %v520 = vpack.c.b16 %v460, %v456
  %v521 = vpack.c.b16 %v461, %v457
  %v522 = vpack.c.b16 %v462, %v458
  %v523 = vpack.c.b16 %v463, %v459
  %v524 = vpack.c.b16 %v468, %v464
  %v525 = vpack.c.b16 %v469, %v465
  %v526 = vpack.c.b16 %v470, %v466
  %v527 = vpack.c.b16 %v471, %v467
  %v528 = vpack.c.b16 %v476, %v472
  %v529 = vpack.c.b16 %v477, %v473
  %v530 = vpack.c.b16 %v478, %v474
  %v531 = vpack.c.b16 %v479, %v475
  %v532 = vpack.c.b16 %v484, %v480
  %v533 = vpack.c.b16 %v485, %v481
  %v534 = vpack.c.b16 %v486, %v482
  %v535 = vpack.c.b16 %v487, %v483
  %v536 = vpack.c.b16 %v492, %v488
  %v537 = vpack.c.b16 %v493, %v489
  %v538 = vpack.c.b16 %v494, %v490
  %v539 = vpack.c.b16 %v495, %v491
  %v540 = vpack.c.b16 %v500, %v496
  %v541 = vpack.c.b16 %v501, %v497
  %v542 = vpack.c.b16 %v502, %v498
  %v543 = vpack.c.b16 %v503, %v499
  %v544 = vpack.c.b16 %v508, %v504
  %v545 = vpack.c.b16 %v509, %v505
  %v546 = vpack.c.b16 %v510, %v506
  %v547 = vpack.c.b16 %v511, %v507
  %v548 = vpack.c.b16 %v516, %v512
  %v549 = vpack.c.b16 %v517, %v513
  %v550 = vpack.c.b16 %v518, %v514
  %v551 = vpack.c.b16 %v519, %v515
  %584 = vmatprep.subr.bf16.mxu0 %v521
  %585 = vmatpush1.bf16.msra.mxu0 %v520
  %586 = vmatprep.subr.bf16.mxu0 %v525
  %587 = vmatpush1.bf16.msra.mxu0 %v524
  %588 = vmatprep.subr.bf16.mxu0 %v529
  %589 = vmatpush1.bf16.msra.mxu0 %v528
  %590 = vmatprep.subr.bf16.mxu0 %v533
  %591 = vmatpush1.bf16.msra.mxu0 %v532
  %592 = vmatprep.subr.bf16.mxu0 %v537
  %593 = vmatpush1.bf16.msra.mxu0 %v536
  %594 = vmatprep.subr.bf16.mxu0 %v541
  %595 = vmatpush1.bf16.msra.mxu0 %v540
  %596 = vmatprep.subr.bf16.mxu0 %v545
  %597 = vmatpush1.bf16.msra.mxu0 %v544
  %598 = vmatprep.subr.bf16.mxu0 %v549
  %599 = vmatpush1.bf16.msra.mxu0 %v548
  %600 = vmatprep.subr.bf16.mxu0 0
  %601 = vmatpush1.bf16.msra.mxu0 0
  %602 = vmatprep.subr.bf16.mxu0 0
  %603 = vmatpush1.bf16.msra.mxu0 0
  %604 = vmatprep.subr.bf16.mxu0 0
  %605 = vmatpush1.bf16.msra.mxu0 0
  %606 = vmatprep.subr.bf16.mxu0 0
  %607 = vmatpush1.bf16.msra.mxu0 0
  %608 = vmatprep.subr.bf16.mxu0 0
  %609 = vmatpush1.bf16.msra.mxu0 0
  %610 = vmatprep.subr.bf16.mxu0 0
  %611 = vmatpush1.bf16.msra.mxu0 0
  %612 = vmatprep.subr.bf16.mxu0 0
  %613 = vmatpush1.bf16.msra.mxu0 0
  %614 = vmatprep.subr.bf16.mxu0 0
  %615 = vmatpush1.bf16.msra.mxu0 0
  %616 = vmatprep.mubr.bf16.mxu0 0
  %617 = vmatmul.mubr.bf16.gmra.mrb[0].mxu0 %v391
  %v618 = vpop.f32.mrb[0].mxu0
  %v619 = vadd.f32 0.0, %v618
  %v620 = vpop.f32.mrb[0].mxu0
  %v621 = vadd.f32 0.0, %v620
  %v622 = vpop.f32.mrb[0].mxu0
  %v623 = vpop.f32.mrb[0].mxu0
  %624 = vdwg.mxu0
  %625 = vmatprep.subr.bf16.mxu0 %v523
  %626 = vmatpush1.bf16.msra.mxu0 %v522
  %627 = vmatprep.subr.bf16.mxu0 %v527
  %628 = vmatpush1.bf16.msra.mxu0 %v526
  %629 = vmatprep.subr.bf16.mxu0 %v531
  %630 = vmatpush1.bf16.msra.mxu0 %v530
  %631 = vmatprep.subr.bf16.mxu0 %v535
  %632 = vmatpush1.bf16.msra.mxu0 %v534
  %633 = vmatprep.subr.bf16.mxu0 %v539
  %634 = vmatpush1.bf16.msra.mxu0 %v538
  %635 = vmatprep.subr.bf16.mxu0 %v543
  %636 = vmatpush1.bf16.msra.mxu0 %v542
  %637 = vmatprep.subr.bf16.mxu0 %v547
  %638 = vmatpush1.bf16.msra.mxu0 %v546
  %639 = vmatprep.subr.bf16.mxu0 %v551
  %640 = vmatpush1.bf16.msra.mxu0 %v550
  %641 = vmatprep.subr.bf16.mxu0 0
  %642 = vmatpush1.bf16.msra.mxu0 0
  %643 = vmatprep.subr.bf16.mxu0 0
  %644 = vmatpush1.bf16.msra.mxu0 0
  %645 = vmatprep.subr.bf16.mxu0 0
  %646 = vmatpush1.bf16.msra.mxu0 0
  %647 = vmatprep.subr.bf16.mxu0 0
  %648 = vmatpush1.bf16.msra.mxu0 0
  %649 = vmatprep.subr.bf16.mxu0 0
  %650 = vmatpush1.bf16.msra.mxu0 0
  %651 = vmatprep.subr.bf16.mxu0 0
  %652 = vmatpush1.bf16.msra.mxu0 0
  %653 = vmatprep.subr.bf16.mxu0 0
  %654 = vmatpush1.bf16.msra.mxu0 0
  %655 = vmatprep.subr.bf16.mxu0 0
  %656 = vmatpush1.bf16.msra.mxu0 0
  %657 = vmatprep.mubr.bf16.mxu0 0
  %658 = vmatmul.mubr.bf16.gmra.mrb[0].mxu0 %v391
  %v659 = vpop.f32.mrb[0].mxu0
  %v660 = vadd.f32 0.0, %v659
  %v661 = vpop.f32.mrb[0].mxu0
  %v662 = vadd.f32 0.0, %v661
  %v663 = vpop.f32.mrb[0].mxu0
  %v664 = vpop.f32.mrb[0].mxu0
  %665 = vdwg.mxu0
  %v670 = vcombine.low %v619, %v621
  %v671 = vcombine.low %v660, %v662
  %v673 = vunpack.c.l.s4 1983009808
  %v674 = vunpack.c.0.s8 %v673
  %v675 = vlaneseq
  %v676 = vshrl.u32 %v675, 7
  %v677 = vsub.s32 %v674, %v676
  %v678 = vrot.slane %v670, %v677
  %v680 = vunpack.c.l.s4 1983009808
  %v681 = vunpack.c.0.s8 %v680
  %v682 = vlaneseq
  %v683 = vshrl.u32 %v682, 7
  %v684 = vsub.s32 %v681, %v683
  %v685 = vrot.slane %v671, %v684
  %v686 = vcombine.low %v678, %v685
  %v688 = vadd.f32 %v389, %v686
  %v689 = vtanh.pop %v688
  %v691 = vrot.slane %v688, 4
  %v693 = vxor.u32 %v691, 2147483648
  %v694 = vmul.f32 %v693, 1.442695
  %v695 = vpow.pop %v694
  %v696 = vadd.f32 %v695, 1.0
  %v697 = vrcp.pop %v696
  %v698 = vmul.f32 1.0, %v697
  %v699 = vrot.slane %v688, 6
  %v701 = vxor.u32 %v699, 2147483648
  %v702 = vmul.f32 %v701, 1.442695
  %v703 = vpow.pop %v702
  %v704 = vadd.f32 %v703, 1.0
  %v705 = vrcp.pop %v704
  %v706 = vmul.f32 1.0, %v705
  %v707 = vsub.f32 0.0, %v691
  %v708 = vmax.f32 %v707, 0.0
  %vm709 = vcmp.ne.f32.partialorder %v707, %v707
  %v710 = vadd.f32 %v707, 0.0
  %v711 = vand.u32 2147483647, %v707
  %v712 = vsub.f32 0.0, %v711
  %v713 = vmul.f32 %v712, 1.442695
  %v714 = vpow.pop %v713
  %v715 = vadd.f32 %v714, 1.0
  %v716 = vlog2.pop %v715
  %v717 = vmul.f32 %v716, 0.6931472
  %v718 = vmul.f32 -0.5, %v714
  %v719 = vadd.f32 %v718, 1.0
  %v720 = vmul.f32 %v719, %v714
  %v721 = vand.u32 2147483647, %v714
  %vm722 = vcmp.lt.f32.partialorder %v721, 0.0004427343
  %v723 = vsel %vm722, %v720, %v717
  %v724 = vadd.f32 %v708, %v723
  %v725 = vsel %vm709, %v710, %v724
  %v726 = vsub.f32 0.0, %v725
  %v727 = vld [vmem:[#allocation5] sm:$0x3]
  %v728 = vadd.f32 %v726, %v727
  %v729 = vrot.slane %v688, 2
  %v731 = vmax.f32 %v728, %v729
  %v732 = vsub.f32 %v729, %v731
  %v733 = vmul.f32 %v732, 1.442695
  %v734 = vpow.pop %v733
  %v735 = vld [vmem:[#allocation3] sm:$0x3]
  %v736 = vmul.f32 %v698, %v735
  %v737 = vmul.f32 %v734, %v689
  %v738 = vadd.f32 %v736, %v737
  %v739 = vld [vmem:[#allocation4] sm:$0x3]
  %v740 = vmul.f32 %v698, %v739
  %v741 = vadd.f32 %v740, %v734
  %v742 = vrcp.pop %v741
  %v743 = vmul.f32 %v738, %v742
  %v744 = vmul.f32 %v706, %v743
  %745 = vst [vmem:[#allocation2] sm:$0x3] %v744
  %746 = vst [vmem:[#allocation3] sm:$0x3] %v738
  %747 = vst [vmem:[#allocation4] sm:$0x3] %v741
  %748 = vst [vmem:[#allocation5] sm:$0x3] %v731
  %s749 = scalar_lea.vmem %s2, 2
  %750 = vst [vmem:[%s749] sm:$0x3] %v744
  %s751 = scalar_lea.vmem %s3, 2
  %752 = vst [vmem:[%s751] sm:$0x3] %v738
  %s753 = scalar_lea.vmem %s4, 2
  %754 = vst [vmem:[%s753] sm:$0x3] %v741
  %s755 = scalar_lea.vmem %s0, 8
  %v756 = vld [vmem:[%s755] sm:$0xf]
  %v757 = vunpack.c.l.bf16 %v756
  %v758 = vld [vmem:[#allocation2] sm:$0x3]
  %v759 = vpack.c.bf16 %v758, %v758
  %v760 = vld [vmem:[%s1] sm:$0xff]
  %v761 = vld [vmem:[%s1 + $0x8] sm:$0xff]
  %v762 = vld [vmem:[%s1 + $0x10] sm:$0xff]
  %v763 = vld [vmem:[%s1 + $0x18] sm:$0xff]
  %v764 = vld [vmem:[%s1 + $0x20] sm:$0xff]
  %v765 = vld [vmem:[%s1 + $0x28] sm:$0xff]
  %v766 = vld [vmem:[%s1 + $0x30] sm:$0xff]
  %v767 = vld [vmem:[%s1 + $0x38] sm:$0xff]
  %v768 = vld [vmem:[%s1 + $0x40] sm:$0xff]
  %v769 = vld [vmem:[%s1 + $0x48] sm:$0xff]
  %v770 = vld [vmem:[%s1 + $0x50] sm:$0xff]
  %v771 = vld [vmem:[%s1 + $0x58] sm:$0xff]
  %v772 = vld [vmem:[%s1 + $0x60] sm:$0xff]
  %v773 = vld [vmem:[%s1 + $0x68] sm:$0xff]
  %v774 = vld [vmem:[%s1 + $0x70] sm:$0xff]
  %v775 = vld [vmem:[%s1 + $0x78] sm:$0xff]
  %v776 = vld [vmem:[%s1 + $0x80] sm:$0xff]
  %v777 = vld [vmem:[%s1 + $0x88] sm:$0xff]
  %v778 = vld [vmem:[%s1 + $0x90] sm:$0xff]
  %v779 = vld [vmem:[%s1 + $0x98] sm:$0xff]
  %v780 = vld [vmem:[%s1 + $0xa0] sm:$0xff]
  %v781 = vld [vmem:[%s1 + $0xa8] sm:$0xff]
  %v782 = vld [vmem:[%s1 + $0xb0] sm:$0xff]
  %v783 = vld [vmem:[%s1 + $0xb8] sm:$0xff]
  %v784 = vld [vmem:[%s1 + $0xc0] sm:$0xff]
  %v785 = vld [vmem:[%s1 + $0xc8] sm:$0xff]
  %v786 = vld [vmem:[%s1 + $0xd0] sm:$0xff]
  %v787 = vld [vmem:[%s1 + $0xd8] sm:$0xff]
  %v788 = vld [vmem:[%s1 + $0xe0] sm:$0xff]
  %v789 = vld [vmem:[%s1 + $0xe8] sm:$0xff]
  %v790 = vld [vmem:[%s1 + $0xf0] sm:$0xff]
  %v791 = vld [vmem:[%s1 + $0xf8] sm:$0xff]
  %v824 = vunpack.c.l.b16 %v760
  %v825 = vunpack.c.h.b16 %v760
  %v826 = vunpack.c.l.b16 %v761
  %v827 = vunpack.c.h.b16 %v761
  %v828 = vunpack.c.l.b16 %v762
  %v829 = vunpack.c.h.b16 %v762
  %v830 = vunpack.c.l.b16 %v763
  %v831 = vunpack.c.h.b16 %v763
  %v832 = vunpack.c.l.b16 %v764
  %v833 = vunpack.c.h.b16 %v764
  %v834 = vunpack.c.l.b16 %v765
  %v835 = vunpack.c.h.b16 %v765
  %v836 = vunpack.c.l.b16 %v766
  %v837 = vunpack.c.h.b16 %v766
  %v838 = vunpack.c.l.b16 %v767
  %v839 = vunpack.c.h.b16 %v767
  %v840 = vunpack.c.l.b16 %v768
  %v841 = vunpack.c.h.b16 %v768
  %v842 = vunpack.c.l.b16 %v769
  %v843 = vunpack.c.h.b16 %v769
  %v844 = vunpack.c.l.b16 %v770
  %v845 = vunpack.c.h.b16 %v770
  %v846 = vunpack.c.l.b16 %v771
  %v847 = vunpack.c.h.b16 %v771
  %v848 = vunpack.c.l.b16 %v772
  %v849 = vunpack.c.h.b16 %v772
  %v850 = vunpack.c.l.b16 %v773
  %v851 = vunpack.c.h.b16 %v773
  %v852 = vunpack.c.l.b16 %v774
  %v853 = vunpack.c.h.b16 %v774
  %v854 = vunpack.c.l.b16 %v775
  %v855 = vunpack.c.h.b16 %v775
  %v856 = vunpack.c.l.b16 %v776
  %v857 = vunpack.c.h.b16 %v776
  %v858 = vunpack.c.l.b16 %v777
  %v859 = vunpack.c.h.b16 %v777
  %v860 = vunpack.c.l.b16 %v778
  %v861 = vunpack.c.h.b16 %v778
  %v862 = vunpack.c.l.b16 %v779
  %v863 = vunpack.c.h.b16 %v779
  %v864 = vunpack.c.l.b16 %v780
  %v865 = vunpack.c.h.b16 %v780
  %v866 = vunpack.c.l.b16 %v781
  %v867 = vunpack.c.h.b16 %v781
  %v868 = vunpack.c.l.b16 %v782
  %v869 = vunpack.c.h.b16 %v782
  %v870 = vunpack.c.l.b16 %v783
  %v871 = vunpack.c.h.b16 %v783
  %v872 = vunpack.c.l.b16 %v784
  %v873 = vunpack.c.h.b16 %v784
  %v874 = vunpack.c.l.b16 %v785
  %v875 = vunpack.c.h.b16 %v785
  %v876 = vunpack.c.l.b16 %v786
  %v877 = vunpack.c.h.b16 %v786
  %v878 = vunpack.c.l.b16 %v787
  %v879 = vunpack.c.h.b16 %v787
  %v880 = vunpack.c.l.b16 %v788
  %v881 = vunpack.c.h.b16 %v788
  %v882 = vunpack.c.l.b16 %v789
  %v883 = vunpack.c.h.b16 %v789
  %v884 = vunpack.c.l.b16 %v790
  %v885 = vunpack.c.h.b16 %v790
  %v886 = vunpack.c.l.b16 %v791
  %v887 = vunpack.c.h.b16 %v791
  %v888 = vpack.c.b16 %v828, %v824
  %v889 = vpack.c.b16 %v829, %v825
  %v890 = vpack.c.b16 %v830, %v826
  %v891 = vpack.c.b16 %v831, %v827
  %v892 = vpack.c.b16 %v836, %v832
  %v893 = vpack.c.b16 %v837, %v833
  %v894 = vpack.c.b16 %v838, %v834
  %v895 = vpack.c.b16 %v839, %v835
  %v896 = vpack.c.b16 %v844, %v840
  %v897 = vpack.c.b16 %v845, %v841
  %v898 = vpack.c.b16 %v846, %v842
  %v899 = vpack.c.b16 %v847, %v843
  %v900 = vpack.c.b16 %v852, %v848
  %v901 = vpack.c.b16 %v853, %v849
  %v902 = vpack.c.b16 %v854, %v850
  %v903 = vpack.c.b16 %v855, %v851
  %v904 = vpack.c.b16 %v860, %v856
  %v905 = vpack.c.b16 %v861, %v857
  %v906 = vpack.c.b16 %v862, %v858
  %v907 = vpack.c.b16 %v863, %v859
  %v908 = vpack.c.b16 %v868, %v864
  %v909 = vpack.c.b16 %v869, %v865
  %v910 = vpack.c.b16 %v870, %v866
  %v911 = vpack.c.b16 %v871, %v867
  %v912 = vpack.c.b16 %v876, %v872
  %v913 = vpack.c.b16 %v877, %v873
  %v914 = vpack.c.b16 %v878, %v874
  %v915 = vpack.c.b16 %v879, %v875
  %v916 = vpack.c.b16 %v884, %v880
  %v917 = vpack.c.b16 %v885, %v881
  %v918 = vpack.c.b16 %v886, %v882
  %v919 = vpack.c.b16 %v887, %v883
  %952 = vmatprep.subr.bf16.mxu0 %v889
  %953 = vmatpush1.bf16.msra.mxu0 %v888
  %954 = vmatprep.subr.bf16.mxu0 %v893
  %955 = vmatpush1.bf16.msra.mxu0 %v892
  %956 = vmatprep.subr.bf16.mxu0 %v897
  %957 = vmatpush1.bf16.msra.mxu0 %v896
  %958 = vmatprep.subr.bf16.mxu0 %v901
  %959 = vmatpush1.bf16.msra.mxu0 %v900
  %960 = vmatprep.subr.bf16.mxu0 %v905
  %961 = vmatpush1.bf16.msra.mxu0 %v904
  %962 = vmatprep.subr.bf16.mxu0 %v909
  %963 = vmatpush1.bf16.msra.mxu0 %v908
  %964 = vmatprep.subr.bf16.mxu0 %v913
  %965 = vmatpush1.bf16.msra.mxu0 %v912
  %966 = vmatprep.subr.bf16.mxu0 %v917
  %967 = vmatpush1.bf16.msra.mxu0 %v916
  %968 = vmatprep.subr.bf16.mxu0 0
  %969 = vmatpush1.bf16.msra.mxu0 0
  %970 = vmatprep.subr.bf16.mxu0 0
  %971 = vmatpush1.bf16.msra.mxu0 0
  %972 = vmatprep.subr.bf16.mxu0 0
  %973 = vmatpush1.bf16.msra.mxu0 0
  %974 = vmatprep.subr.bf16.mxu0 0
  %975 = vmatpush1.bf16.msra.mxu0 0
  %976 = vmatprep.subr.bf16.mxu0 0
  %977 = vmatpush1.bf16.msra.mxu0 0
  %978 = vmatprep.subr.bf16.mxu0 0
  %979 = vmatpush1.bf16.msra.mxu0 0
  %980 = vmatprep.subr.bf16.mxu0 0
  %981 = vmatpush1.bf16.msra.mxu0 0
  %982 = vmatprep.subr.bf16.mxu0 0
  %983 = vmatpush1.bf16.msra.mxu0 0
  %984 = vmatprep.mubr.bf16.mxu0 0
  %985 = vmatmul.mubr.bf16.gmra.mrb[0].mxu0 %v759
  %v986 = vpop.f32.mrb[0].mxu0
  %v987 = vadd.f32 0.0, %v986
  %v988 = vpop.f32.mrb[0].mxu0
  %v989 = vadd.f32 0.0, %v988
  %v990 = vpop.f32.mrb[0].mxu0
  %v991 = vpop.f32.mrb[0].mxu0
  %992 = vdwg.mxu0
  %993 = vmatprep.subr.bf16.mxu0 %v891
  %994 = vmatpush1.bf16.msra.mxu0 %v890
  %995 = vmatprep.subr.bf16.mxu0 %v895
  %996 = vmatpush1.bf16.msra.mxu0 %v894
  %997 = vmatprep.subr.bf16.mxu0 %v899
  %998 = vmatpush1.bf16.msra.mxu0 %v898
  %999 = vmatprep.subr.bf16.mxu0 %v903
  %1000 = vmatpush1.bf16.msra.mxu0 %v902
  %1001 = vmatprep.subr.bf16.mxu0 %v907
  %1002 = vmatpush1.bf16.msra.mxu0 %v906
  %1003 = vmatprep.subr.bf16.mxu0 %v911
  %1004 = vmatpush1.bf16.msra.mxu0 %v910
  %1005 = vmatprep.subr.bf16.mxu0 %v915
  %1006 = vmatpush1.bf16.msra.mxu0 %v914
  %1007 = vmatprep.subr.bf16.mxu0 %v919
  %1008 = vmatpush1.bf16.msra.mxu0 %v918
  %1009 = vmatprep.subr.bf16.mxu0 0
  %1010 = vmatpush1.bf16.msra.mxu0 0
  %1011 = vmatprep.subr.bf16.mxu0 0
  %1012 = vmatpush1.bf16.msra.mxu0 0
  %1013 = vmatprep.subr.bf16.mxu0 0
  %1014 = vmatpush1.bf16.msra.mxu0 0
  %1015 = vmatprep.subr.bf16.mxu0 0
  %1016 = vmatpush1.bf16.msra.mxu0 0
  %1017 = vmatprep.subr.bf16.mxu0 0
  %1018 = vmatpush1.bf16.msra.mxu0 0
  %1019 = vmatprep.subr.bf16.mxu0 0
  %1020 = vmatpush1.bf16.msra.mxu0 0
  %1021 = vmatprep.subr.bf16.mxu0 0
  %1022 = vmatpush1.bf16.msra.mxu0 0
  %1023 = vmatprep.subr.bf16.mxu0 0
  %1024 = vmatpush1.bf16.msra.mxu0 0
  %1025 = vmatprep.mubr.bf16.mxu0 0
  %1026 = vmatmul.mubr.bf16.gmra.mrb[0].mxu0 %v759
  %v1027 = vpop.f32.mrb[0].mxu0
  %v1028 = vadd.f32 0.0, %v1027
  %v1029 = vpop.f32.mrb[0].mxu0
  %v1030 = vadd.f32 0.0, %v1029
  %v1031 = vpop.f32.mrb[0].mxu0
  %v1032 = vpop.f32.mrb[0].mxu0
  %1033 = vdwg.mxu0
  %v1038 = vcombine.low %v987, %v989
  %v1039 = vcombine.low %v1028, %v1030
  %v1041 = vunpack.c.l.s4 1983009808
  %v1042 = vunpack.c.0.s8 %v1041
  %v1043 = vlaneseq
  %v1044 = vshrl.u32 %v1043, 7
  %v1045 = vsub.s32 %v1042, %v1044
  %v1046 = vrot.slane %v1038, %v1045
  %v1048 = vunpack.c.l.s4 1983009808
  %v1049 = vunpack.c.0.s8 %v1048
  %v1050 = vlaneseq
  %v1051 = vshrl.u32 %v1050, 7
  %v1052 = vsub.s32 %v1049, %v1051
  %v1053 = vrot.slane %v1039, %v1052
  %v1054 = vcombine.low %v1046, %v1053
  %v1056 = vadd.f32 %v757, %v1054
  %v1057 = vtanh.pop %v1056
  %v1059 = vrot.slane %v1056, 4
  %v1061 = vxor.u32 %v1059, 2147483648
  %v1062 = vmul.f32 %v1061, 1.442695
  %v1063 = vpow.pop %v1062
  %v1064 = vadd.f32 %v1063, 1.0
  %v1065 = vrcp.pop %v1064
  %v1066 = vmul.f32 1.0, %v1065
  %v1067 = vrot.slane %v1056, 6
  %v1069 = vxor.u32 %v1067, 2147483648
  %v1070 = vmul.f32 %v1069, 1.442695
  %v1071 = vpow.pop %v1070
  %v1072 = vadd.f32 %v1071, 1.0
  %v1073 = vrcp.pop %v1072
  %v1074 = vmul.f32 1.0, %v1073
  %v1075 = vsub.f32 0.0, %v1059
  %v1076 = vmax.f32 %v1075, 0.0
  %vm1077 = vcmp.ne.f32.partialorder %v1075, %v1075
  %v1078 = vadd.f32 %v1075, 0.0
  %v1079 = vand.u32 2147483647, %v1075
  %v1080 = vsub.f32 0.0, %v1079
  %v1081 = vmul.f32 %v1080, 1.442695
  %v1082 = vpow.pop %v1081
  %v1083 = vadd.f32 %v1082, 1.0
  %v1084 = vlog2.pop %v1083
  %v1085 = vmul.f32 %v1084, 0.6931472
  %v1086 = vmul.f32 -0.5, %v1082
  %v1087 = vadd.f32 %v1086, 1.0
  %v1088 = vmul.f32 %v1087, %v1082
  %v1089 = vand.u32 2147483647, %v1082
  %vm1090 = vcmp.lt.f32.partialorder %v1089, 0.0004427343
  %v1091 = vsel %vm1090, %v1088, %v1085
  %v1092 = vadd.f32 %v1076, %v1091
  %v1093 = vsel %vm1077, %v1078, %v1092
  %v1094 = vsub.f32 0.0, %v1093
  %v1095 = vld [vmem:[#allocation5] sm:$0x3]
  %v1096 = vadd.f32 %v1094, %v1095
  %v1097 = vrot.slane %v1056, 2
  %v1099 = vmax.f32 %v1096, %v1097
  %v1100 = vsub.f32 %v1097, %v1099
  %v1101 = vmul.f32 %v1100, 1.442695
  %v1102 = vpow.pop %v1101
  %v1103 = vld [vmem:[#allocation3] sm:$0x3]
  %v1104 = vmul.f32 %v1066, %v1103
  %v1105 = vmul.f32 %v1102, %v1057
  %v1106 = vadd.f32 %v1104, %v1105
  %v1107 = vld [vmem:[#allocation4] sm:$0x3]
  %v1108 = vmul.f32 %v1066, %v1107
  %v1109 = vadd.f32 %v1108, %v1102
  %v1110 = vrcp.pop %v1109
  %v1111 = vmul.f32 %v1106, %v1110
  %v1112 = vmul.f32 %v1074, %v1111
  %1113 = vst [vmem:[#allocation2] sm:$0x3] %v1112
  %1114 = vst [vmem:[#allocation3] sm:$0x3] %v1106
  %1115 = vst [vmem:[#allocation4] sm:$0x3] %v1109
  %1116 = vst [vmem:[#allocation5] sm:$0x3] %v1099
  %s1117 = scalar_lea.vmem %s2, 4
  %1118 = vst [vmem:[%s1117] sm:$0x3] %v1112
  %s1119 = scalar_lea.vmem %s3, 4
  %1120 = vst [vmem:[%s1119] sm:$0x3] %v1106
  %s1121 = scalar_lea.vmem %s4, 4
  %1122 = vst [vmem:[%s1121] sm:$0x3] %v1109
  %s1123 = scalar_lea.vmem %s0, 12
  %v1124 = vld [vmem:[%s1123] sm:$0xf]
  %v1125 = vunpack.c.l.bf16 %v1124
  %v1126 = vld [vmem:[#allocation2] sm:$0x3]
  %v1127 = vpack.c.bf16 %v1126, %v1126
  %v1128 = vld [vmem:[%s1] sm:$0xff]
  %v1129 = vld [vmem:[%s1 + $0x8] sm:$0xff]
  %v1130 = vld [vmem:[%s1 + $0x10] sm:$0xff]
  %v1131 = vld [vmem:[%s1 + $0x18] sm:$0xff]
  %v1132 = vld [vmem:[%s1 + $0x20] sm:$0xff]
  %v1133 = vld [vmem:[%s1 + $0x28] sm:$0xff]
  %v1134 = vld [vmem:[%s1 + $0x30] sm:$0xff]
  %v1135 = vld [vmem:[%s1 + $0x38] sm:$0xff]
  %v1136 = vld [vmem:[%s1 + $0x40] sm:$0xff]
  %v1137 = vld [vmem:[%s1 + $0x48] sm:$0xff]
  %v1138 = vld [vmem:[%s1 + $0x50] sm:$0xff]
  %v1139 = vld [vmem:[%s1 + $0x58] sm:$0xff]
  %v1140 = vld [vmem:[%s1 + $0x60] sm:$0xff]
  %v1141 = vld [vmem:[%s1 + $0x68] sm:$0xff]
  %v1142 = vld [vmem:[%s1 + $0x70] sm:$0xff]
  %v1143 = vld [vmem:[%s1 + $0x78] sm:$0xff]
  %v1144 = vld [vmem:[%s1 + $0x80] sm:$0xff]
  %v1145 = vld [vmem:[%s1 + $0x88] sm:$0xff]
  %v1146 = vld [vmem:[%s1 + $0x90] sm:$0xff]
  %v1147 = vld [vmem:[%s1 + $0x98] sm:$0xff]
  %v1148 = vld [vmem:[%s1 + $0xa0] sm:$0xff]
  %v1149 = vld [vmem:[%s1 + $0xa8] sm:$0xff]
  %v1150 = vld [vmem:[%s1 + $0xb0] sm:$0xff]
  %v1151 = vld [vmem:[%s1 + $0xb8] sm:$0xff]
  %v1152 = vld [vmem:[%s1 + $0xc0] sm:$0xff]
  %v1153 = vld [vmem:[%s1 + $0xc8] sm:$0xff]
  %v1154 = vld [vmem:[%s1 + $0xd0] sm:$0xff]
  %v1155 = vld [vmem:[%s1 + $0xd8] sm:$0xff]
  %v1156 = vld [vmem:[%s1 + $0xe0] sm:$0xff]
  %v1157 = vld [vmem:[%s1 + $0xe8] sm:$0xff]
  %v1158 = vld [vmem:[%s1 + $0xf0] sm:$0xff]
  %v1159 = vld [vmem:[%s1 + $0xf8] sm:$0xff]
  %v1192 = vunpack.c.l.b16 %v1128
  %v1193 = vunpack.c.h.b16 %v1128
  %v1194 = vunpack.c.l.b16 %v1129
  %v1195 = vunpack.c.h.b16 %v1129
  %v1196 = vunpack.c.l.b16 %v1130
  %v1197 = vunpack.c.h.b16 %v1130
  %v1198 = vunpack.c.l.b16 %v1131
  %v1199 = vunpack.c.h.b16 %v1131
  %v1200 = vunpack.c.l.b16 %v1132
  %v1201 = vunpack.c.h.b16 %v1132
  %v1202 = vunpack.c.l.b16 %v1133
  %v1203 = vunpack.c.h.b16 %v1133
  %v1204 = vunpack.c.l.b16 %v1134
  %v1205 = vunpack.c.h.b16 %v1134
  %v1206 = vunpack.c.l.b16 %v1135
  %v1207 = vunpack.c.h.b16 %v1135
  %v1208 = vunpack.c.l.b16 %v1136
  %v1209 = vunpack.c.h.b16 %v1136
  %v1210 = vunpack.c.l.b16 %v1137
  %v1211 = vunpack.c.h.b16 %v1137
  %v1212 = vunpack.c.l.b16 %v1138
  %v1213 = vunpack.c.h.b16 %v1138
  %v1214 = vunpack.c.l.b16 %v1139
  %v1215 = vunpack.c.h.b16 %v1139
  %v1216 = vunpack.c.l.b16 %v1140
  %v1217 = vunpack.c.h.b16 %v1140
  %v1218 = vunpack.c.l.b16 %v1141
  %v1219 = vunpack.c.h.b16 %v1141
  %v1220 = vunpack.c.l.b16 %v1142
  %v1221 = vunpack.c.h.b16 %v1142
  %v1222 = vunpack.c.l.b16 %v1143
  %v1223 = vunpack.c.h.b16 %v1143
  %v1224 = vunpack.c.l.b16 %v1144
  %v1225 = vunpack.c.h.b16 %v1144
  %v1226 = vunpack.c.l.b16 %v1145
  %v1227 = vunpack.c.h.b16 %v1145
  %v1228 = vunpack.c.l.b16 %v1146
  %v1229 = vunpack.c.h.b16 %v1146
  %v1230 = vunpack.c.l.b16 %v1147
  %v1231 = vunpack.c.h.b16 %v1147
  %v1232 = vunpack.c.l.b16 %v1148
  %v1233 = vunpack.c.h.b16 %v1148
  %v1234 = vunpack.c.l.b16 %v1149
  %v1235 = vunpack.c.h.b16 %v1149
  %v1236 = vunpack.c.l.b16 %v1150
  %v1237 = vunpack.c.h.b16 %v1150
  %v1238 = vunpack.c.l.b16 %v1151
  %v1239 = vunpack.c.h.b16 %v1151
  %v1240 = vunpack.c.l.b16 %v1152
  %v1241 = vunpack.c.h.b16 %v1152
  %v1242 = vunpack.c.l.b16 %v1153
  %v1243 = vunpack.c.h.b16 %v1153
  %v1244 = vunpack.c.l.b16 %v1154
  %v1245 = vunpack.c.h.b16 %v1154
  %v1246 = vunpack.c.l.b16 %v1155
  %v1247 = vunpack.c.h.b16 %v1155
  %v1248 = vunpack.c.l.b16 %v1156
  %v1249 = vunpack.c.h.b16 %v1156
  %v1250 = vunpack.c.l.b16 %v1157
  %v1251 = vunpack.c.h.b16 %v1157
  %v1252 = vunpack.c.l.b16 %v1158
  %v1253 = vunpack.c.h.b16 %v1158
  %v1254 = vunpack.c.l.b16 %v1159
  %v1255 = vunpack.c.h.b16 %v1159
  %v1256 = vpack.c.b16 %v1196, %v1192
  %v1257 = vpack.c.b16 %v1197, %v1193
  %v1258 = vpack.c.b16 %v1198, %v1194
  %v1259 = vpack.c.b16 %v1199, %v1195
  %v1260 = vpack.c.b16 %v1204, %v1200
  %v1261 = vpack.c.b16 %v1205, %v1201
  %v1262 = vpack.c.b16 %v1206, %v1202
  %v1263 = vpack.c.b16 %v1207, %v1203
  %v1264 = vpack.c.b16 %v1212, %v1208
  %v1265 = vpack.c.b16 %v1213, %v1209
  %v1266 = vpack.c.b16 %v1214, %v1210
  %v1267 = vpack.c.b16 %v1215, %v1211
  %v1268 = vpack.c.b16 %v1220, %v1216
  %v1269 = vpack.c.b16 %v1221, %v1217
  %v1270 = vpack.c.b16 %v1222, %v1218
  %v1271 = vpack.c.b16 %v1223, %v1219
  %v1272 = vpack.c.b16 %v1228, %v1224
  %v1273 = vpack.c.b16 %v1229, %v1225
  %v1274 = vpack.c.b16 %v1230, %v1226
  %v1275 = vpack.c.b16 %v1231, %v1227
  %v1276 = vpack.c.b16 %v1236, %v1232
  %v1277 = vpack.c.b16 %v1237, %v1233
  %v1278 = vpack.c.b16 %v1238, %v1234
  %v1279 = vpack.c.b16 %v1239, %v1235
  %v1280 = vpack.c.b16 %v1244, %v1240
  %v1281 = vpack.c.b16 %v1245, %v1241
  %v1282 = vpack.c.b16 %v1246, %v1242
  %v1283 = vpack.c.b16 %v1247, %v1243
  %v1284 = vpack.c.b16 %v1252, %v1248
  %v1285 = vpack.c.b16 %v1253, %v1249
  %v1286 = vpack.c.b16 %v1254, %v1250
  %v1287 = vpack.c.b16 %v1255, %v1251
  %1320 = vmatprep.subr.bf16.mxu0 %v1257
  %1321 = vmatpush1.bf16.msra.mxu0 %v1256
  %1322 = vmatprep.subr.bf16.mxu0 %v1261
  %1323 = vmatpush1.bf16.msra.mxu0 %v1260
  %1324 = vmatprep.subr.bf16.mxu0 %v1265
  %1325 = vmatpush1.bf16.msra.mxu0 %v1264
  %1326 = vmatprep.subr.bf16.mxu0 %v1269
  %1327 = vmatpush1.bf16.msra.mxu0 %v1268
  %1328 = vmatprep.subr.bf16.mxu0 %v1273
  %1329 = vmatpush1.bf16.msra.mxu0 %v1272
  %1330 = vmatprep.subr.bf16.mxu0 %v1277
  %1331 = vmatpush1.bf16.msra.mxu0 %v1276
  %1332 = vmatprep.subr.bf16.mxu0 %v1281
  %1333 = vmatpush1.bf16.msra.mxu0 %v1280
  %1334 = vmatprep.subr.bf16.mxu0 %v1285
  %1335 = vmatpush1.bf16.msra.mxu0 %v1284
  %1336 = vmatprep.subr.bf16.mxu0 0
  %1337 = vmatpush1.bf16.msra.mxu0 0
  %1338 = vmatprep.subr.bf16.mxu0 0
  %1339 = vmatpush1.bf16.msra.mxu0 0
  %1340 = vmatprep.subr.bf16.mxu0 0
  %1341 = vmatpush1.bf16.msra.mxu0 0
  %1342 = vmatprep.subr.bf16.mxu0 0
  %1343 = vmatpush1.bf16.msra.mxu0 0
  %1344 = vmatprep.subr.bf16.mxu0 0
  %1345 = vmatpush1.bf16.msra.mxu0 0
  %1346 = vmatprep.subr.bf16.mxu0 0
  %1347 = vmatpush1.bf16.msra.mxu0 0
  %1348 = vmatprep.subr.bf16.mxu0 0
  %1349 = vmatpush1.bf16.msra.mxu0 0
  %1350 = vmatprep.subr.bf16.mxu0 0
  %1351 = vmatpush1.bf16.msra.mxu0 0
  %1352 = vmatprep.mubr.bf16.mxu0 0
  %1353 = vmatmul.mubr.bf16.gmra.mrb[0].mxu0 %v1127
  %v1354 = vpop.f32.mrb[0].mxu0
  %v1355 = vadd.f32 0.0, %v1354
  %v1356 = vpop.f32.mrb[0].mxu0
  %v1357 = vadd.f32 0.0, %v1356
  %v1358 = vpop.f32.mrb[0].mxu0
  %v1359 = vpop.f32.mrb[0].mxu0
  %1360 = vdwg.mxu0
  %1361 = vmatprep.subr.bf16.mxu0 %v1259
  %1362 = vmatpush1.bf16.msra.mxu0 %v1258
  %1363 = vmatprep.subr.bf16.mxu0 %v1263
  %1364 = vmatpush1.bf16.msra.mxu0 %v1262
  %1365 = vmatprep.subr.bf16.mxu0 %v1267
  %1366 = vmatpush1.bf16.msra.mxu0 %v1266
  %1367 = vmatprep.subr.bf16.mxu0 %v1271
  %1368 = vmatpush1.bf16.msra.mxu0 %v1270
  %1369 = vmatprep.subr.bf16.mxu0 %v1275
  %1370 = vmatpush1.bf16.msra.mxu0 %v1274
  %1371 = vmatprep.subr.bf16.mxu0 %v1279
  %1372 = vmatpush1.bf16.msra.mxu0 %v1278
  %1373 = vmatprep.subr.bf16.mxu0 %v1283
  %1374 = vmatpush1.bf16.msra.mxu0 %v1282
  %1375 = vmatprep.subr.bf16.mxu0 %v1287
  %1376 = vmatpush1.bf16.msra.mxu0 %v1286
  %1377 = vmatprep.subr.bf16.mxu0 0
  %1378 = vmatpush1.bf16.msra.mxu0 0
  %1379 = vmatprep.subr.bf16.mxu0 0
  %1380 = vmatpush1.bf16.msra.mxu0 0
  %1381 = vmatprep.subr.bf16.mxu0 0
  %1382 = vmatpush1.bf16.msra.mxu0 0
  %1383 = vmatprep.subr.bf16.mxu0 0
  %1384 = vmatpush1.bf16.msra.mxu0 0
  %1385 = vmatprep.subr.bf16.mxu0 0
  %1386 = vmatpush1.bf16.msra.mxu0 0
  %1387 = vmatprep.subr.bf16.mxu0 0
  %1388 = vmatpush1.bf16.msra.mxu0 0
  %1389 = vmatprep.subr.bf16.mxu0 0
  %1390 = vmatpush1.bf16.msra.mxu0 0
  %1391 = vmatprep.subr.bf16.mxu0 0
  %1392 = vmatpush1.bf16.msra.mxu0 0
  %1393 = vmatprep.mubr.bf16.mxu0 0
  %1394 = vmatmul.mubr.bf16.gmra.mrb[0].mxu0 %v1127
  %v1395 = vpop.f32.mrb[0].mxu0
  %v1396 = vadd.f32 0.0, %v1395
  %v1397 = vpop.f32.mrb[0].mxu0
  %v1398 = vadd.f32 0.0, %v1397
  %v1399 = vpop.f32.mrb[0].mxu0
  %v1400 = vpop.f32.mrb[0].mxu0
  %1401 = vdwg.mxu0
  %v1406 = vcombine.low %v1355, %v1357
  %v1407 = vcombine.low %v1396, %v1398
  %v1409 = vunpack.c.l.s4 1983009808
  %v1410 = vunpack.c.0.s8 %v1409
  %v1411 = vlaneseq
  %v1412 = vshrl.u32 %v1411, 7
  %v1413 = vsub.s32 %v1410, %v1412
  %v1414 = vrot.slane %v1406, %v1413
  %v1416 = vunpack.c.l.s4 1983009808
  %v1417 = vunpack.c.0.s8 %v1416
  %v1418 = vlaneseq
  %v1419 = vshrl.u32 %v1418, 7
  %v1420 = vsub.s32 %v1417, %v1419
  %v1421 = vrot.slane %v1407, %v1420
  %v1422 = vcombine.low %v1414, %v1421
  %v1424 = vadd.f32 %v1125, %v1422
  %v1425 = vtanh.pop %v1424
  %v1427 = vrot.slane %v1424, 4
  %v1429 = vxor.u32 %v1427, 2147483648
  %v1430 = vmul.f32 %v1429, 1.442695
  %v1431 = vpow.pop %v1430
  %v1432 = vadd.f32 %v1431, 1.0
  %v1433 = vrcp.pop %v1432
  %v1434 = vmul.f32 1.0, %v1433
  %v1435 = vrot.slane %v1424, 6
  %v1437 = vxor.u32 %v1435, 2147483648
  %v1438 = vmul.f32 %v1437, 1.442695
  %v1439 = vpow.pop %v1438
  %v1440 = vadd.f32 %v1439, 1.0
  %v1441 = vrcp.pop %v1440
  %v1442 = vmul.f32 1.0, %v1441
  %v1443 = vsub.f32 0.0, %v1427
  %v1444 = vmax.f32 %v1443, 0.0
  %vm1445 = vcmp.ne.f32.partialorder %v1443, %v1443
  %v1446 = vadd.f32 %v1443, 0.0
  %v1447 = vand.u32 2147483647, %v1443
  %v1448 = vsub.f32 0.0, %v1447
  %v1449 = vmul.f32 %v1448, 1.442695
  %v1450 = vpow.pop %v1449
  %v1451 = vadd.f32 %v1450, 1.0
  %v1452 = vlog2.pop %v1451
  %v1453 = vmul.f32 %v1452, 0.6931472
  %v1454 = vmul.f32 -0.5, %v1450
  %v1455 = vadd.f32 %v1454, 1.0
  %v1456 = vmul.f32 %v1455, %v1450
  %v1457 = vand.u32 2147483647, %v1450
  %vm1458 = vcmp.lt.f32.partialorder %v1457, 0.0004427343
  %v1459 = vsel %vm1458, %v1456, %v1453
  %v1460 = vadd.f32 %v1444, %v1459
  %v1461 = vsel %vm1445, %v1446, %v1460
  %v1462 = vsub.f32 0.0, %v1461
  %v1463 = vld [vmem:[#allocation5] sm:$0x3]
  %v1464 = vadd.f32 %v1462, %v1463
  %v1465 = vrot.slane %v1424, 2
  %v1467 = vmax.f32 %v1464, %v1465
  %v1468 = vsub.f32 %v1465, %v1467
  %v1469 = vmul.f32 %v1468, 1.442695
  %v1470 = vpow.pop %v1469
  %v1471 = vld [vmem:[#allocation3] sm:$0x3]
  %v1472 = vmul.f32 %v1434, %v1471
  %v1473 = vmul.f32 %v1470, %v1425
  %v1474 = vadd.f32 %v1472, %v1473
  %v1475 = vld [vmem:[#allocation4] sm:$0x3]
  %v1476 = vmul.f32 %v1434, %v1475
  %v1477 = vadd.f32 %v1476, %v1470
  %v1478 = vrcp.pop %v1477
  %v1479 = vmul.f32 %v1474, %v1478
  %v1480 = vmul.f32 %v1442, %v1479
  %1481 = vst [vmem:[#allocation2] sm:$0x3] %v1480
  %1482 = vst [vmem:[#allocation3] sm:$0x3] %v1474
  %1483 = vst [vmem:[#allocation4] sm:$0x3] %v1477
  %1484 = vst [vmem:[#allocation5] sm:$0x3] %v1467
  %s1485 = scalar_lea.vmem %s2, 6
  %1486 = vst [vmem:[%s1485] sm:$0x3] %v1480
  %s1487 = scalar_lea.vmem %s3, 6
  %1488 = vst [vmem:[%s1487] sm:$0x3] %v1474
  %s1489 = scalar_lea.vmem %s4, 6
  %1490 = vst [vmem:[%s1489] sm:$0x3] %v1477
  %s1491 = scalar_lea.vmem %s0, 16
  %v1492 = vld [vmem:[%s1491] sm:$0xf]
  %v1493 = vunpack.c.l.bf16 %v1492
  %v1494 = vld [vmem:[#allocation2] sm:$0x3]
  %v1495 = vpack.c.bf16 %v1494, %v1494
  %v1496 = vld [vmem:[%s1] sm:$0xff]
  %v1497 = vld [vmem:[%s1 + $0x8] sm:$0xff]
  %v1498 = vld [vmem:[%s1 + $0x10] sm:$0xff]
  %v1499 = vld [vmem:[%s1 + $0x18] sm:$0xff]
  %v1500 = vld [vmem:[%s1 + $0x20] sm:$0xff]
  %v1501 = vld [vmem:[%s1 + $0x28] sm:$0xff]
  %v1502 = vld [vmem:[%s1 + $0x30] sm:$0xff]
  %v1503 = vld [vmem:[%s1 + $0x38] sm:$0xff]
  %v1504 = vld [vmem:[%s1 + $0x40] sm:$0xff]
  %v1505 = vld [vmem:[%s1 + $0x48] sm:$0xff]
  %v1506 = vld [vmem:[%s1 + $0x50] sm:$0xff]
  %v1507 = vld [vmem:[%s1 + $0x58] sm:$0xff]
  %v1508 = vld [vmem:[%s1 + $0x60] sm:$0xff]
  %v1509 = vld [vmem:[%s1 + $0x68] sm:$0xff]
  %v1510 = vld [vmem:[%s1 + $0x70] sm:$0xff]
  %v1511 = vld [vmem:[%s1 + $0x78] sm:$0xff]
  %v1512 = vld [vmem:[%s1 + $0x80] sm:$0xff]
  %v1513 = vld [vmem:[%s1 + $0x88] sm:$0xff]
  %v1514 = vld [vmem:[%s1 + $0x90] sm:$0xff]
  %v1515 = vld [vmem:[%s1 + $0x98] sm:$0xff]
  %v1516 = vld [vmem:[%s1 + $0xa0] sm:$0xff]
  %v1517 = vld [vmem:[%s1 + $0xa8] sm:$0xff]
  %v1518 = vld [vmem:[%s1 + $0xb0] sm:$0xff]
  %v1519 = vld [vmem:[%s1 + $0xb8] sm:$0xff]
  %v1520 = vld [vmem:[%s1 + $0xc0] sm:$0xff]
  %v1521 = vld [vmem:[%s1 + $0xc8] sm:$0xff]
  %v1522 = vld [vmem:[%s1 + $0xd0] sm:$0xff]
  %v1523 = vld [vmem:[%s1 + $0xd8] sm:$0xff]
  %v1524 = vld [vmem:[%s1 + $0xe0] sm:$0xff]
  %v1525 = vld [vmem:[%s1 + $0xe8] sm:$0xff]
  %v1526 = vld [vmem:[%s1 + $0xf0] sm:$0xff]
  %v1527 = vld [vmem:[%s1 + $0xf8] sm:$0xff]
  %v1560 = vunpack.c.l.b16 %v1496
  %v1561 = vunpack.c.h.b16 %v1496
  %v1562 = vunpack.c.l.b16 %v1497
  %v1563 = vunpack.c.h.b16 %v1497
  %v1564 = vunpack.c.l.b16 %v1498
  %v1565 = vunpack.c.h.b16 %v1498
  %v1566 = vunpack.c.l.b16 %v1499
  %v1567 = vunpack.c.h.b16 %v1499
  %v1568 = vunpack.c.l.b16 %v1500
  %v1569 = vunpack.c.h.b16 %v1500
  %v1570 = vunpack.c.l.b16 %v1501
  %v1571 = vunpack.c.h.b16 %v1501
  %v1572 = vunpack.c.l.b16 %v1502
  %v1573 = vunpack.c.h.b16 %v1502
  %v1574 = vunpack.c.l.b16 %v1503
  %v1575 = vunpack.c.h.b16 %v1503
  %v1576 = vunpack.c.l.b16 %v1504
  %v1577 = vunpack.c.h.b16 %v1504
  %v1578 = vunpack.c.l.b16 %v1505
  %v1579 = vunpack.c.h.b16 %v1505
  %v1580 = vunpack.c.l.b16 %v1506
  %v1581 = vunpack.c.h.b16 %v1506
  %v1582 = vunpack.c.l.b16 %v1507
  %v1583 = vunpack.c.h.b16 %v1507
  %v1584 = vunpack.c.l.b16 %v1508
  %v1585 = vunpack.c.h.b16 %v1508
  %v1586 = vunpack.c.l.b16 %v1509
  %v1587 = vunpack.c.h.b16 %v1509
  %v1588 = vunpack.c.l.b16 %v1510
  %v1589 = vunpack.c.h.b16 %v1510
  %v1590 = vunpack.c.l.b16 %v1511
  %v1591 = vunpack.c.h.b16 %v1511
  %v1592 = vunpack.c.l.b16 %v1512
  %v1593 = vunpack.c.h.b16 %v1512
  %v1594 = vunpack.c.l.b16 %v1513
  %v1595 = vunpack.c.h.b16 %v1513
  %v1596 = vunpack.c.l.b16 %v1514
  %v1597 = vunpack.c.h.b16 %v1514
  %v1598 = vunpack.c.l.b16 %v1515
  %v1599 = vunpack.c.h.b16 %v1515
  %v1600 = vunpack.c.l.b16 %v1516
  %v1601 = vunpack.c.h.b16 %v1516
  %v1602 = vunpack.c.l.b16 %v1517
  %v1603 = vunpack.c.h.b16 %v1517
  %v1604 = vunpack.c.l.b16 %v1518
  %v1605 = vunpack.c.h.b16 %v1518
  %v1606 = vunpack.c.l.b16 %v1519
  %v1607 = vunpack.c.h.b16 %v1519
  %v1608 = vunpack.c.l.b16 %v1520
  %v1609 = vunpack.c.h.b16 %v1520
  %v1610 = vunpack.c.l.b16 %v1521
  %v1611 = vunpack.c.h.b16 %v1521
  %v1612 = vunpack.c.l.b16 %v1522
  %v1613 = vunpack.c.h.b16 %v1522
  %v1614 = vunpack.c.l.b16 %v1523
  %v1615 = vunpack.c.h.b16 %v1523
  %v1616 = vunpack.c.l.b16 %v1524
  %v1617 = vunpack.c.h.b16 %v1524
  %v1618 = vunpack.c.l.b16 %v1525
  %v1619 = vunpack.c.h.b16 %v1525
  %v1620 = vunpack.c.l.b16 %v1526
  %v1621 = vunpack.c.h.b16 %v1526
  %v1622 = vunpack.c.l.b16 %v1527
  %v1623 = vunpack.c.h.b16 %v1527
  %v1624 = vpack.c.b16 %v1564, %v1560
  %v1625 = vpack.c.b16 %v1565, %v1561
  %v1626 = vpack.c.b16 %v1566, %v1562
  %v1627 = vpack.c.b16 %v1567, %v1563
  %v1628 = vpack.c.b16 %v1572, %v1568
  %v1629 = vpack.c.b16 %v1573, %v1569
  %v1630 = vpack.c.b16 %v1574, %v1570
  %v1631 = vpack.c.b16 %v1575, %v1571
  %v1632 = vpack.c.b16 %v1580, %v1576
  %v1633 = vpack.c.b16 %v1581, %v1577
  %v1634 = vpack.c.b16 %v1582, %v1578
  %v1635 = vpack.c.b16 %v1583, %v1579
  %v1636 = vpack.c.b16 %v1588, %v1584
  %v1637 = vpack.c.b16 %v1589, %v1585
  %v1638 = vpack.c.b16 %v1590, %v1586
  %v1639 = vpack.c.b16 %v1591, %v1587
  %v1640 = vpack.c.b16 %v1596, %v1592
  %v1641 = vpack.c.b16 %v1597, %v1593
  %v1642 = vpack.c.b16 %v1598, %v1594
  %v1643 = vpack.c.b16 %v1599, %v1595
  %v1644 = vpack.c.b16 %v1604, %v1600
  %v1645 = vpack.c.b16 %v1605, %v1601
  %v1646 = vpack.c.b16 %v1606, %v1602
  %v1647 = vpack.c.b16 %v1607, %v1603
  %v1648 = vpack.c.b16 %v1612, %v1608
  %v1649 = vpack.c.b16 %v1613, %v1609
  %v1650 = vpack.c.b16 %v1614, %v1610
  %v1651 = vpack.c.b16 %v1615, %v1611
  %v1652 = vpack.c.b16 %v1620, %v1616
  %v1653 = vpack.c.b16 %v1621, %v1617
  %v1654 = vpack.c.b16 %v1622, %v1618
  %v1655 = vpack.c.b16 %v1623, %v1619
  %1688 = vmatprep.subr.bf16.mxu0 %v1625
  %1689 = vmatpush1.bf16.msra.mxu0 %v1624
  %1690 = vmatprep.subr.bf16.mxu0 %v1629
  %1691 = vmatpush1.bf16.msra.mxu0 %v1628
  %1692 = vmatprep.subr.bf16.mxu0 %v1633
  %1693 = vmatpush1.bf16.msra.mxu0 %v1632
  %1694 = vmatprep.subr.bf16.mxu0 %v1637
  %1695 = vmatpush1.bf16.msra.mxu0 %v1636
  %1696 = vmatprep.subr.bf16.mxu0 %v1641
  %1697 = vmatpush1.bf16.msra.mxu0 %v1640
  %1698 = vmatprep.subr.bf16.mxu0 %v1645
  %1699 = vmatpush1.bf16.msra.mxu0 %v1644
  %1700 = vmatprep.subr.bf16.mxu0 %v1649
  %1701 = vmatpush1.bf16.msra.mxu0 %v1648
  %1702 = vmatprep.subr.bf16.mxu0 %v1653
  %1703 = vmatpush1.bf16.msra.mxu0 %v1652
  %1704 = vmatprep.subr.bf16.mxu0 0
  %1705 = vmatpush1.bf16.msra.mxu0 0
  %1706 = vmatprep.subr.bf16.mxu0 0
  %1707 = vmatpush1.bf16.msra.mxu0 0
  %1708 = vmatprep.subr.bf16.mxu0 0
  %1709 = vmatpush1.bf16.msra.mxu0 0
  %1710 = vmatprep.subr.bf16.mxu0 0
  %1711 = vmatpush1.bf16.msra.mxu0 0
  %1712 = vmatprep.subr.bf16.mxu0 0
  %1713 = vmatpush1.bf16.msra.mxu0 0
  %1714 = vmatprep.subr.bf16.mxu0 0
  %1715 = vmatpush1.bf16.msra.mxu0 0
  %1716 = vmatprep.subr.bf16.mxu0 0
  %1717 = vmatpush1.bf16.msra.mxu0 0
  %1718 = vmatprep.subr.bf16.mxu0 0
  %1719 = vmatpush1.bf16.msra.mxu0 0
  %1720 = vmatprep.mubr.bf16.mxu0 0
  %1721 = vmatmul.mubr.bf16.gmra.mrb[0].mxu0 %v1495
  %v1722 = vpop.f32.mrb[0].mxu0
  %v1723 = vadd.f32 0.0, %v1722
  %v1724 = vpop.f32.mrb[0].mxu0
  %v1725 = vadd.f32 0.0, %v1724
  %v1726 = vpop.f32.mrb[0].mxu0
  %v1727 = vpop.f32.mrb[0].mxu0
  %1728 = vdwg.mxu0
  %1729 = vmatprep.subr.bf16.mxu0 %v1627
  %1730 = vmatpush1.bf16.msra.mxu0 %v1626
  %1731 = vmatprep.subr.bf16.mxu0 %v1631
  %1732 = vmatpush1.bf16.msra.mxu0 %v1630
  %1733 = vmatprep.subr.bf16.mxu0 %v1635
  %1734 = vmatpush1.bf16.msra.mxu0 %v1634
  %1735 = vmatprep.subr.bf16.mxu0 %v1639
  %1736 = vmatpush1.bf16.msra.mxu0 %v1638
  %1737 = vmatprep.subr.bf16.mxu0 %v1643
  %1738 = vmatpush1.bf16.msra.mxu0 %v1642
  %1739 = vmatprep.subr.bf16.mxu0 %v1647
  %1740 = vmatpush1.bf16.msra.mxu0 %v1646
  %1741 = vmatprep.subr.bf16.mxu0 %v1651
  %1742 = vmatpush1.bf16.msra.mxu0 %v1650
  %1743 = vmatprep.subr.bf16.mxu0 %v1655
  %1744 = vmatpush1.bf16.msra.mxu0 %v1654
  %1745 = vmatprep.subr.bf16.mxu0 0
  %1746 = vmatpush1.bf16.msra.mxu0 0
  %1747 = vmatprep.subr.bf16.mxu0 0
  %1748 = vmatpush1.bf16.msra.mxu0 0
  %1749 = vmatprep.subr.bf16.mxu0 0
  %1750 = vmatpush1.bf16.msra.mxu0 0
  %1751 = vmatprep.subr.bf16.mxu0 0
  %1752 = vmatpush1.bf16.msra.mxu0 0
  %1753 = vmatprep.subr.bf16.mxu0 0
  %1754 = vmatpush1.bf16.msra.mxu0 0
  %1755 = vmatprep.subr.bf16.mxu0 0
  %1756 = vmatpush1.bf16.msra.mxu0 0
  %1757 = vmatprep.subr.bf16.mxu0 0
  %1758 = vmatpush1.bf16.msra.mxu0 0
  %1759 = vmatprep.subr.bf16.mxu0 0
  %1760 = vmatpush1.bf16.msra.mxu0 0
  %1761 = vmatprep.mubr.bf16.mxu0 0
  %1762 = vmatmul.mubr.bf16.gmra.mrb[0].mxu0 %v1495
  %v1763 = vpop.f32.mrb[0].mxu0
  %v1764 = vadd.f32 0.0, %v1763
  %v1765 = vpop.f32.mrb[0].mxu0
  %v1766 = vadd.f32 0.0, %v1765
  %v1767 = vpop.f32.mrb[0].mxu0
  %v1768 = vpop.f32.mrb[0].mxu0
  %1769 = vdwg.mxu0
  %v1774 = vcombine.low %v1723, %v1725
  %v1775 = vcombine.low %v1764, %v1766
  %v1777 = vunpack.c.l.s4 1983009808
  %v1778 = vunpack.c.0.s8 %v1777
  %v1779 = vlaneseq
  %v1780 = vshrl.u32 %v1779, 7
  %v1781 = vsub.s32 %v1778, %v1780
  %v1782 = vrot.slane %v1774, %v1781
  %v1784 = vunpack.c.l.s4 1983009808
  %v1785 = vunpack.c.0.s8 %v1784
  %v1786 = vlaneseq
  %v1787 = vshrl.u32 %v1786, 7
  %v1788 = vsub.s32 %v1785, %v1787
  %v1789 = vrot.slane %v1775, %v1788
  %v1790 = vcombine.low %v1782, %v1789
  %v1792 = vadd.f32 %v1493, %v1790
  %v1793 = vtanh.pop %v1792
  %v1795 = vrot.slane %v1792, 4
  %v1797 = vxor.u32 %v1795, 2147483648
  %v1798 = vmul.f32 %v1797, 1.442695
  %v1799 = vpow.pop %v1798
  %v1800 = vadd.f32 %v1799, 1.0
  %v1801 = vrcp.pop %v1800
  %v1802 = vmul.f32 1.0, %v1801
  %v1803 = vrot.slane %v1792, 6
  %v1805 = vxor.u32 %v1803, 2147483648
  %v1806 = vmul.f32 %v1805, 1.442695
  %v1807 = vpow.pop %v1806
  %v1808 = vadd.f32 %v1807, 1.0
  %v1809 = vrcp.pop %v1808
  %v1810 = vmul.f32 1.0, %v1809
  %v1811 = vsub.f32 0.0, %v1795
  %v1812 = vmax.f32 %v1811, 0.0
  %vm1813 = vcmp.ne.f32.partialorder %v1811, %v1811
  %v1814 = vadd.f32 %v1811, 0.0
  %v1815 = vand.u32 2147483647, %v1811
  %v1816 = vsub.f32 0.0, %v1815
  %v1817 = vmul.f32 %v1816, 1.442695
  %v1818 = vpow.pop %v1817
  %v1819 = vadd.f32 %v1818, 1.0
  %v1820 = vlog2.pop %v1819
  %v1821 = vmul.f32 %v1820, 0.6931472
  %v1822 = vmul.f32 -0.5, %v1818
  %v1823 = vadd.f32 %v1822, 1.0
  %v1824 = vmul.f32 %v1823, %v1818
  %v1825 = vand.u32 2147483647, %v1818
  %vm1826 = vcmp.lt.f32.partialorder %v1825, 0.0004427343
  %v1827 = vsel %vm1826, %v1824, %v1821
  %v1828 = vadd.f32 %v1812, %v1827
  %v1829 = vsel %vm1813, %v1814, %v1828
  %v1830 = vsub.f32 0.0, %v1829
  %v1831 = vld [vmem:[#allocation5] sm:$0x3]
  %v1832 = vadd.f32 %v1830, %v1831
  %v1833 = vrot.slane %v1792, 2
  %v1835 = vmax.f32 %v1832, %v1833
  %v1836 = vsub.f32 %v1833, %v1835
  %v1837 = vmul.f32 %v1836, 1.442695
  %v1838 = vpow.pop %v1837
  %v1839 = vld [vmem:[#allocation3] sm:$0x3]
  %v1840 = vmul.f32 %v1802, %v1839
  %v1841 = vmul.f32 %v1838, %v1793
  %v1842 = vadd.f32 %v1840, %v1841
  %v1843 = vld [vmem:[#allocation4] sm:$0x3]
  %v1844 = vmul.f32 %v1802, %v1843
  %v1845 = vadd.f32 %v1844, %v1838
  %v1846 = vrcp.pop %v1845
  %v1847 = vmul.f32 %v1842, %v1846
  %v1848 = vmul.f32 %v1810, %v1847
  %1849 = vst [vmem:[#allocation2] sm:$0x3] %v1848
  %1850 = vst [vmem:[#allocation3] sm:$0x3] %v1842
  %1851 = vst [vmem:[#allocation4] sm:$0x3] %v1845
  %1852 = vst [vmem:[#allocation5] sm:$0x3] %v1835
  %s1853 = scalar_lea.vmem %s2, 8
  %1854 = vst [vmem:[%s1853] sm:$0x3] %v1848
  %s1855 = scalar_lea.vmem %s3, 8
  %1856 = vst [vmem:[%s1855] sm:$0x3] %v1842
  %s1857 = scalar_lea.vmem %s4, 8
  %1858 = vst [vmem:[%s1857] sm:$0x3] %v1845
  %s1859 = scalar_lea.vmem %s0, 20
  %v1860 = vld [vmem:[%s1859] sm:$0xf]
  %v1861 = vunpack.c.l.bf16 %v1860
  %v1862 = vld [vmem:[#allocation2] sm:$0x3]
  %v1863 = vpack.c.bf16 %v1862, %v1862
  %v1864 = vld [vmem:[%s1] sm:$0xff]
  %v1865 = vld [vmem:[%s1 + $0x8] sm:$0xff]
  %v1866 = vld [vmem:[%s1 + $0x10] sm:$0xff]
  %v1867 = vld [vmem:[%s1 + $0x18] sm:$0xff]
  %v1868 = vld [vmem:[%s1 + $0x20] sm:$0xff]
  %v1869 = vld [vmem:[%s1 + $0x28] sm:$0xff]
  %v1870 = vld [vmem:[%s1 + $0x30] sm:$0xff]
  %v1871 = vld [vmem:[%s1 + $0x38] sm:$0xff]
  %v1872 = vld [vmem:[%s1 + $0x40] sm:$0xff]
  %v1873 = vld [vmem:[%s1 + $0x48] sm:$0xff]
  %v1874 = vld [vmem:[%s1 + $0x50] sm:$0xff]
  %v1875 = vld [vmem:[%s1 + $0x58] sm:$0xff]
  %v1876 = vld [vmem:[%s1 + $0x60] sm:$0xff]
  %v1877 = vld [vmem:[%s1 + $0x68] sm:$0xff]
  %v1878 = vld [vmem:[%s1 + $0x70] sm:$0xff]
  %v1879 = vld [vmem:[%s1 + $0x78] sm:$0xff]
  %v1880 = vld [vmem:[%s1 + $0x80] sm:$0xff]
  %v1881 = vld [vmem:[%s1 + $0x88] sm:$0xff]
  %v1882 = vld [vmem:[%s1 + $0x90] sm:$0xff]
  %v1883 = vld [vmem:[%s1 + $0x98] sm:$0xff]
  %v1884 = vld [vmem:[%s1 + $0xa0] sm:$0xff]
  %v1885 = vld [vmem:[%s1 + $0xa8] sm:$0xff]
  %v1886 = vld [vmem:[%s1 + $0xb0] sm:$0xff]
  %v1887 = vld [vmem:[%s1 + $0xb8] sm:$0xff]
  %v1888 = vld [vmem:[%s1 + $0xc0] sm:$0xff]
  %v1889 = vld [vmem:[%s1 + $0xc8] sm:$0xff]
  %v1890 = vld [vmem:[%s1 + $0xd0] sm:$0xff]
  %v1891 = vld [vmem:[%s1 + $0xd8] sm:$0xff]
  %v1892 = vld [vmem:[%s1 + $0xe0] sm:$0xff]
  %v1893 = vld [vmem:[%s1 + $0xe8] sm:$0xff]
  %v1894 = vld [vmem:[%s1 + $0xf0] sm:$0xff]
  %v1895 = vld [vmem:[%s1 + $0xf8] sm:$0xff]
  %v1928 = vunpack.c.l.b16 %v1864
  %v1929 = vunpack.c.h.b16 %v1864
  %v1930 = vunpack.c.l.b16 %v1865
  %v1931 = vunpack.c.h.b16 %v1865
  %v1932 = vunpack.c.l.b16 %v1866
  %v1933 = vunpack.c.h.b16 %v1866
  %v1934 = vunpack.c.l.b16 %v1867
  %v1935 = vunpack.c.h.b16 %v1867
  %v1936 = vunpack.c.l.b16 %v1868
  %v1937 = vunpack.c.h.b16 %v1868
  %v1938 = vunpack.c.l.b16 %v1869
  %v1939 = vunpack.c.h.b16 %v1869
  %v1940 = vunpack.c.l.b16 %v1870
  %v1941 = vunpack.c.h.b16 %v1870
  %v1942 = vunpack.c.l.b16 %v1871
  %v1943 = vunpack.c.h.b16 %v1871
  %v1944 = vunpack.c.l.b16 %v1872
  %v1945 = vunpack.c.h.b16 %v1872
  %v1946 = vunpack.c.l.b16 %v1873
  %v1947 = vunpack.c.h.b16 %v1873
  %v1948 = vunpack.c.l.b16 %v1874
  %v1949 = vunpack.c.h.b16 %v1874
  %v1950 = vunpack.c.l.b16 %v1875
  %v1951 = vunpack.c.h.b16 %v1875
  %v1952 = vunpack.c.l.b16 %v1876
  %v1953 = vunpack.c.h.b16 %v1876
  %v1954 = vunpack.c.l.b16 %v1877
  %v1955 = vunpack.c.h.b16 %v1877
  %v1956 = vunpack.c.l.b16 %v1878
  %v1957 = vunpack.c.h.b16 %v1878
  %v1958 = vunpack.c.l.b16 %v1879
  %v1959 = vunpack.c.h.b16 %v1879
  %v1960 = vunpack.c.l.b16 %v1880
  %v1961 = vunpack.c.h.b16 %v1880
  %v1962 = vunpack.c.l.b16 %v1881
  %v1963 = vunpack.c.h.b16 %v1881
  %v1964 = vunpack.c.l.b16 %v1882
  %v1965 = vunpack.c.h.b16 %v1882
  %v1966 = vunpack.c.l.b16 %v1883
  %v1967 = vunpack.c.h.b16 %v1883
  %v1968 = vunpack.c.l.b16 %v1884
  %v1969 = vunpack.c.h.b16 %v1884
  %v1970 = vunpack.c.l.b16 %v1885
  %v1971 = vunpack.c.h.b16 %v1885
  %v1972 = vunpack.c.l.b16 %v1886
  %v1973 = vunpack.c.h.b16 %v1886
  %v1974 = vunpack.c.l.b16 %v1887
  %v1975 = vunpack.c.h.b16 %v1887
  %v1976 = vunpack.c.l.b16 %v1888
  %v1977 = vunpack.c.h.b16 %v1888
  %v1978 = vunpack.c.l.b16 %v1889
  %v1979 = vunpack.c.h.b16 %v1889
  %v1980 = vunpack.c.l.b16 %v1890
  %v1981 = vunpack.c.h.b16 %v1890
  %v1982 = vunpack.c.l.b16 %v1891
  %v1983 = vunpack.c.h.b16 %v1891
  %v1984 = vunpack.c.l.b16 %v1892
  %v1985 = vunpack.c.h.b16 %v1892
  %v1986 = vunpack.c.l.b16 %v1893
  %v1987 = vunpack.c.h.b16 %v1893
  %v1988 = vunpack.c.l.b16 %v1894
  %v1989 = vunpack.c.h.b16 %v1894
  %v1990 = vunpack.c.l.b16 %v1895
  %v1991 = vunpack.c.h.b16 %v1895
  %v1992 = vpack.c.b16 %v1932, %v1928
  %v1993 = vpack.c.b16 %v1933, %v1929
  %v1994 = vpack.c.b16 %v1934, %v1930
  %v1995 = vpack.c.b16 %v1935, %v1931
  %v1996 = vpack.c.b16 %v1940, %v1936
  %v1997 = vpack.c.b16 %v1941, %v1937
  %v1998 = vpack.c.b16 %v1942, %v1938
  %v1999 = vpack.c.b16 %v1943, %v1939
  %v2000 = vpack.c.b16 %v1948, %v1944
  %v2001 = vpack.c.b16 %v1949, %v1945
  %v2002 = vpack.c.b16 %v1950, %v1946
  %v2003 = vpack.c.b16 %v1951, %v1947
  %v2004 = vpack.c.b16 %v1956, %v1952
  %v2005 = vpack.c.b16 %v1957, %v1953
  %v2006 = vpack.c.b16 %v1958, %v1954
  %v2007 = vpack.c.b16 %v1959, %v1955
  %v2008 = vpack.c.b16 %v1964, %v1960
  %v2009 = vpack.c.b16 %v1965, %v1961
  %v2010 = vpack.c.b16 %v1966, %v1962
  %v2011 = vpack.c.b16 %v1967, %v1963
  %v2012 = vpack.c.b16 %v1972, %v1968
  %v2013 = vpack.c.b16 %v1973, %v1969
  %v2014 = vpack.c.b16 %v1974, %v1970
  %v2015 = vpack.c.b16 %v1975, %v1971
  %v2016 = vpack.c.b16 %v1980, %v1976
  %v2017 = vpack.c.b16 %v1981, %v1977
  %v2018 = vpack.c.b16 %v1982, %v1978
  %v2019 = vpack.c.b16 %v1983, %v1979
  %v2020 = vpack.c.b16 %v1988, %v1984
  %v2021 = vpack.c.b16 %v1989, %v1985
  %v2022 = vpack.c.b16 %v1990, %v1986
  %v2023 = vpack.c.b16 %v1991, %v1987
  %2056 = vmatprep.subr.bf16.mxu0 %v1993
  %2057 = vmatpush1.bf16.msra.mxu0 %v1992
  %2058 = vmatprep.subr.bf16.mxu0 %v1997
  %2059 = vmatpush1.bf16.msra.mxu0 %v1996
  %2060 = vmatprep.subr.bf16.mxu0 %v2001
  %2061 = vmatpush1.bf16.msra.mxu0 %v2000
  %2062 = vmatprep.subr.bf16.mxu0 %v2005
  %2063 = vmatpush1.bf16.msra.mxu0 %v2004
  %2064 = vmatprep.subr.bf16.mxu0 %v2009
  %2065 = vmatpush1.bf16.msra.mxu0 %v2008
  %2066 = vmatprep.subr.bf16.mxu0 %v2013
  %2067 = vmatpush1.bf16.msra.mxu0 %v2012
  %2068 = vmatprep.subr.bf16.mxu0 %v2017
  %2069 = vmatpush1.bf16.msra.mxu0 %v2016
  %2070 = vmatprep.subr.bf16.mxu0 %v2021
  %2071 = vmatpush1.bf16.msra.mxu0 %v2020
  %2072 = vmatprep.subr.bf16.mxu0 0
  %2073 = vmatpush1.bf16.msra.mxu0 0
  %2074 = vmatprep.subr.bf16.mxu0 0
  %2075 = vmatpush1.bf16.msra.mxu0 0
  %2076 = vmatprep.subr.bf16.mxu0 0
  %2077 = vmatpush1.bf16.msra.mxu0 0
  %2078 = vmatprep.subr.bf16.mxu0 0
  %2079 = vmatpush1.bf16.msra.mxu0 0
  %2080 = vmatprep.subr.bf16.mxu0 0
  %2081 = vmatpush1.bf16.msra.mxu0 0
  %2082 = vmatprep.subr.bf16.mxu0 0
  %2083 = vmatpush1.bf16.msra.mxu0 0
  %2084 = vmatprep.subr.bf16.mxu0 0
  %2085 = vmatpush1.bf16.msra.mxu0 0
  %2086 = vmatprep.subr.bf16.mxu0 0
  %2087 = vmatpush1.bf16.msra.mxu0 0
  %2088 = vmatprep.mubr.bf16.mxu0 0
  %2089 = vmatmul.mubr.bf16.gmra.mrb[0].mxu0 %v1863
  %v2090 = vpop.f32.mrb[0].mxu0
  %v2091 = vadd.f32 0.0, %v2090
  %v2092 = vpop.f32.mrb[0].mxu0
  %v2093 = vadd.f32 0.0, %v2092
  %v2094 = vpop.f32.mrb[0].mxu0
  %v2095 = vpop.f32.mrb[0].mxu0
  %2096 = vdwg.mxu0
  %2097 = vmatprep.subr.bf16.mxu0 %v1995
  %2098 = vmatpush1.bf16.msra.mxu0 %v1994
  %2099 = vmatprep.subr.bf16.mxu0 %v1999
  %2100 = vmatpush1.bf16.msra.mxu0 %v1998
  %2101 = vmatprep.subr.bf16.mxu0 %v2003
  %2102 = vmatpush1.bf16.msra.mxu0 %v2002
  %2103 = vmatprep.subr.bf16.mxu0 %v2007
  %2104 = vmatpush1.bf16.msra.mxu0 %v2006
  %2105 = vmatprep.subr.bf16.mxu0 %v2011
  %2106 = vmatpush1.bf16.msra.mxu0 %v2010
  %2107 = vmatprep.subr.bf16.mxu0 %v2015
  %2108 = vmatpush1.bf16.msra.mxu0 %v2014
  %2109 = vmatprep.subr.bf16.mxu0 %v2019
  %2110 = vmatpush1.bf16.msra.mxu0 %v2018
  %2111 = vmatprep.subr.bf16.mxu0 %v2023
  %2112 = vmatpush1.bf16.msra.mxu0 %v2022
  %2113 = vmatprep.subr.bf16.mxu0 0
  %2114 = vmatpush1.bf16.msra.mxu0 0
  %2115 = vmatprep.subr.bf16.mxu0 0
  %2116 = vmatpush1.bf16.msra.mxu0 0
  %2117 = vmatprep.subr.bf16.mxu0 0
  %2118 = vmatpush1.bf16.msra.mxu0 0
  %2119 = vmatprep.subr.bf16.mxu0 0
  %2120 = vmatpush1.bf16.msra.mxu0 0
  %2121 = vmatprep.subr.bf16.mxu0 0
  %2122 = vmatpush1.bf16.msra.mxu0 0
  %2123 = vmatprep.subr.bf16.mxu0 0
  %2124 = vmatpush1.bf16.msra.mxu0 0
  %2125 = vmatprep.subr.bf16.mxu0 0
  %2126 = vmatpush1.bf16.msra.mxu0 0
  %2127 = vmatprep.subr.bf16.mxu0 0
  %2128 = vmatpush1.bf16.msra.mxu0 0
  %2129 = vmatprep.mubr.bf16.mxu0 0
  %2130 = vmatmul.mubr.bf16.gmra.mrb[0].mxu0 %v1863
  %v2131 = vpop.f32.mrb[0].mxu0
  %v2132 = vadd.f32 0.0, %v2131
  %v2133 = vpop.f32.mrb[0].mxu0
  %v2134 = vadd.f32 0.0, %v2133
  %v2135 = vpop.f32.mrb[0].mxu0
  %v2136 = vpop.f32.mrb[0].mxu0
  %2137 = vdwg.mxu0
  %v2142 = vcombine.low %v2091, %v2093
  %v2143 = vcombine.low %v2132, %v2134
  %v2145 = vunpack.c.l.s4 1983009808
  %v2146 = vunpack.c.0.s8 %v2145
  %v2147 = vlaneseq
  %v2148 = vshrl.u32 %v2147, 7
  %v2149 = vsub.s32 %v2146, %v2148
  %v2150 = vrot.slane %v2142, %v2149
  %v2152 = vunpack.c.l.s4 1983009808
  %v2153 = vunpack.c.0.s8 %v2152
  %v2154 = vlaneseq
  %v2155 = vshrl.u32 %v2154, 7
  %v2156 = vsub.s32 %v2153, %v2155
  %v2157 = vrot.slane %v2143, %v2156
  %v2158 = vcombine.low %v2150, %v2157
  %v2160 = vadd.f32 %v1861, %v2158
  %v2161 = vtanh.pop %v2160
  %v2163 = vrot.slane %v2160, 4
  %v2165 = vxor.u32 %v2163, 2147483648
  %v2166 = vmul.f32 %v2165, 1.442695
  %v2167 = vpow.pop %v2166
  %v2168 = vadd.f32 %v2167, 1.0
  %v2169 = vrcp.pop %v2168
  %v2170 = vmul.f32 1.0, %v2169
  %v2171 = vrot.slane %v2160, 6
  %v2173 = vxor.u32 %v2171, 2147483648
  %v2174 = vmul.f32 %v2173, 1.442695
  %v2175 = vpow.pop %v2174
  %v2176 = vadd.f32 %v2175, 1.0
  %v2177 = vrcp.pop %v2176
  %v2178 = vmul.f32 1.0, %v2177
  %v2179 = vsub.f32 0.0, %v2163
  %v2180 = vmax.f32 %v2179, 0.0
  %vm2181 = vcmp.ne.f32.partialorder %v2179, %v2179
  %v2182 = vadd.f32 %v2179, 0.0
  %v2183 = vand.u32 2147483647, %v2179
  %v2184 = vsub.f32 0.0, %v2183
  %v2185 = vmul.f32 %v2184, 1.442695
  %v2186 = vpow.pop %v2185
  %v2187 = vadd.f32 %v2186, 1.0
  %v2188 = vlog2.pop %v2187
  %v2189 = vmul.f32 %v2188, 0.6931472
  %v2190 = vmul.f32 -0.5, %v2186
  %v2191 = vadd.f32 %v2190, 1.0
  %v2192 = vmul.f32 %v2191, %v2186
  %v2193 = vand.u32 2147483647, %v2186
  %vm2194 = vcmp.lt.f32.partialorder %v2193, 0.0004427343
  %v2195 = vsel %vm2194, %v2192, %v2189
  %v2196 = vadd.f32 %v2180, %v2195
  %v2197 = vsel %vm2181, %v2182, %v2196
  %v2198 = vsub.f32 0.0, %v2197
  %v2199 = vld [vmem:[#allocation5] sm:$0x3]
  %v2200 = vadd.f32 %v2198, %v2199
  %v2201 = vrot.slane %v2160, 2
  %v2203 = vmax.f32 %v2200, %v2201
  %v2204 = vsub.f32 %v2201, %v2203
  %v2205 = vmul.f32 %v2204, 1.442695
  %v2206 = vpow.pop %v2205
  %v2207 = vld [vmem:[#allocation3] sm:$0x3]
  %v2208 = vmul.f32 %v2170, %v2207
  %v2209 = vmul.f32 %v2206, %v2161
  %v2210 = vadd.f32 %v2208, %v2209
  %v2211 = vld [vmem:[#allocation4] sm:$0x3]
  %v2212 = vmul.f32 %v2170, %v2211
  %v2213 = vadd.f32 %v2212, %v2206
  %v2214 = vrcp.pop %v2213
  %v2215 = vmul.f32 %v2210, %v2214
  %v2216 = vmul.f32 %v2178, %v2215
  %2217 = vst [vmem:[#allocation2] sm:$0x3] %v2216
  %2218 = vst [vmem:[#allocation3] sm:$0x3] %v2210
  %2219 = vst [vmem:[#allocation4] sm:$0x3] %v2213
  %2220 = vst [vmem:[#allocation5] sm:$0x3] %v2203
  %s2221 = scalar_lea.vmem %s2, 10
  %2222 = vst [vmem:[%s2221] sm:$0x3] %v2216
  %s2223 = scalar_lea.vmem %s3, 10
  %2224 = vst [vmem:[%s2223] sm:$0x3] %v2210
  %s2225 = scalar_lea.vmem %s4, 10
  %2226 = vst [vmem:[%s2225] sm:$0x3] %v2213
  %s2227 = scalar_lea.vmem %s0, 24
  %v2228 = vld [vmem:[%s2227] sm:$0xf]
  %v2229 = vunpack.c.l.bf16 %v2228
  %v2230 = vld [vmem:[#allocation2] sm:$0x3]
  %v2231 = vpack.c.bf16 %v2230, %v2230
  %v2232 = vld [vmem:[%s1] sm:$0xff]
  %v2233 = vld [vmem:[%s1 + $0x8] sm:$0xff]
  %v2234 = vld [vmem:[%s1 + $0x10] sm:$0xff]
  %v2235 = vld [vmem:[%s1 + $0x18] sm:$0xff]
  %v2236 = vld [vmem:[%s1 + $0x20] sm:$0xff]
  %v2237 = vld [vmem:[%s1 + $0x28] sm:$0xff]
  %v2238 = vld [vmem:[%s1 + $0x30] sm:$0xff]
  %v2239 = vld [vmem:[%s1 + $0x38] sm:$0xff]
  %v2240 = vld [vmem:[%s1 + $0x40] sm:$0xff]
  %v2241 = vld [vmem:[%s1 + $0x48] sm:$0xff]
  %v2242 = vld [vmem:[%s1 + $0x50] sm:$0xff]
  %v2243 = vld [vmem:[%s1 + $0x58] sm:$0xff]
  %v2244 = vld [vmem:[%s1 + $0x60] sm:$0xff]
  %v2245 = vld [vmem:[%s1 + $0x68] sm:$0xff]
  %v2246 = vld [vmem:[%s1 + $0x70] sm:$0xff]
  %v2247 = vld [vmem:[%s1 + $0x78] sm:$0xff]
  %v2248 = vld [vmem:[%s1 + $0x80] sm:$0xff]
  %v2249 = vld [vmem:[%s1 + $0x88] sm:$0xff]
  %v2250 = vld [vmem:[%s1 + $0x90] sm:$0xff]
  %v2251 = vld [vmem:[%s1 + $0x98] sm:$0xff]
  %v2252 = vld [vmem:[%s1 + $0xa0] sm:$0xff]
  %v2253 = vld [vmem:[%s1 + $0xa8] sm:$0xff]
  %v2254 = vld [vmem:[%s1 + $0xb0] sm:$0xff]
  %v2255 = vld [vmem:[%s1 + $0xb8] sm:$0xff]
  %v2256 = vld [vmem:[%s1 + $0xc0] sm:$0xff]
  %v2257 = vld [vmem:[%s1 + $0xc8] sm:$0xff]
  %v2258 = vld [vmem:[%s1 + $0xd0] sm:$0xff]
  %v2259 = vld [vmem:[%s1 + $0xd8] sm:$0xff]
  %v2260 = vld [vmem:[%s1 + $0xe0] sm:$0xff]
  %v2261 = vld [vmem:[%s1 + $0xe8] sm:$0xff]
  %v2262 = vld [vmem:[%s1 + $0xf0] sm:$0xff]
  %v2263 = vld [vmem:[%s1 + $0xf8] sm:$0xff]
  %v2296 = vunpack.c.l.b16 %v2232
  %v2297 = vunpack.c.h.b16 %v2232
  %v2298 = vunpack.c.l.b16 %v2233
  %v2299 = vunpack.c.h.b16 %v2233
  %v2300 = vunpack.c.l.b16 %v2234
  %v2301 = vunpack.c.h.b16 %v2234
  %v2302 = vunpack.c.l.b16 %v2235
  %v2303 = vunpack.c.h.b16 %v2235
  %v2304 = vunpack.c.l.b16 %v2236
  %v2305 = vunpack.c.h.b16 %v2236
  %v2306 = vunpack.c.l.b16 %v2237
  %v2307 = vunpack.c.h.b16 %v2237
  %v2308 = vunpack.c.l.b16 %v2238
  %v2309 = vunpack.c.h.b16 %v2238
  %v2310 = vunpack.c.l.b16 %v2239
  %v2311 = vunpack.c.h.b16 %v2239
  %v2312 = vunpack.c.l.b16 %v2240
  %v2313 = vunpack.c.h.b16 %v2240
  %v2314 = vunpack.c.l.b16 %v2241
  %v2315 = vunpack.c.h.b16 %v2241
  %v2316 = vunpack.c.l.b16 %v2242
  %v2317 = vunpack.c.h.b16 %v2242
  %v2318 = vunpack.c.l.b16 %v2243
  %v2319 = vunpack.c.h.b16 %v2243
  %v2320 = vunpack.c.l.b16 %v2244
  %v2321 = vunpack.c.h.b16 %v2244
  %v2322 = vunpack.c.l.b16 %v2245
  %v2323 = vunpack.c.h.b16 %v2245
  %v2324 = vunpack.c.l.b16 %v2246
  %v2325 = vunpack.c.h.b16 %v2246
  %v2326 = vunpack.c.l.b16 %v2247
  %v2327 = vunpack.c.h.b16 %v2247
  %v2328 = vunpack.c.l.b16 %v2248
  %v2329 = vunpack.c.h.b16 %v2248
  %v2330 = vunpack.c.l.b16 %v2249
  %v2331 = vunpack.c.h.b16 %v2249
  %v2332 = vunpack.c.l.b16 %v2250
  %v2333 = vunpack.c.h.b16 %v2250
  %v2334 = vunpack.c.l.b16 %v2251
  %v2335 = vunpack.c.h.b16 %v2251
  %v2336 = vunpack.c.l.b16 %v2252
  %v2337 = vunpack.c.h.b16 %v2252
  %v2338 = vunpack.c.l.b16 %v2253
  %v2339 = vunpack.c.h.b16 %v2253
  %v2340 = vunpack.c.l.b16 %v2254
  %v2341 = vunpack.c.h.b16 %v2254
  %v2342 = vunpack.c.l.b16 %v2255
  %v2343 = vunpack.c.h.b16 %v2255
  %v2344 = vunpack.c.l.b16 %v2256
  %v2345 = vunpack.c.h.b16 %v2256
  %v2346 = vunpack.c.l.b16 %v2257
  %v2347 = vunpack.c.h.b16 %v2257
  %v2348 = vunpack.c.l.b16 %v2258
  %v2349 = vunpack.c.h.b16 %v2258
  %v2350 = vunpack.c.l.b16 %v2259
  %v2351 = vunpack.c.h.b16 %v2259
  %v2352 = vunpack.c.l.b16 %v2260
  %v2353 = vunpack.c.h.b16 %v2260
  %v2354 = vunpack.c.l.b16 %v2261
  %v2355 = vunpack.c.h.b16 %v2261
  %v2356 = vunpack.c.l.b16 %v2262
  %v2357 = vunpack.c.h.b16 %v2262
  %v2358 = vunpack.c.l.b16 %v2263
  %v2359 = vunpack.c.h.b16 %v2263
  %v2360 = vpack.c.b16 %v2300, %v2296
  %v2361 = vpack.c.b16 %v2301, %v2297
  %v2362 = vpack.c.b16 %v2302, %v2298
  %v2363 = vpack.c.b16 %v2303, %v2299
  %v2364 = vpack.c.b16 %v2308, %v2304
  %v2365 = vpack.c.b16 %v2309, %v2305
  %v2366 = vpack.c.b16 %v2310, %v2306
  %v2367 = vpack.c.b16 %v2311, %v2307
  %v2368 = vpack.c.b16 %v2316, %v2312
  %v2369 = vpack.c.b16 %v2317, %v2313
  %v2370 = vpack.c.b16 %v2318, %v2314
  %v2371 = vpack.c.b16 %v2319, %v2315
  %v2372 = vpack.c.b16 %v2324, %v2320
  %v2373 = vpack.c.b16 %v2325, %v2321
  %v2374 = vpack.c.b16 %v2326, %v2322
  %v2375 = vpack.c.b16 %v2327, %v2323
  %v2376 = vpack.c.b16 %v2332, %v2328
  %v2377 = vpack.c.b16 %v2333, %v2329
  %v2378 = vpack.c.b16 %v2334, %v2330
  %v2379 = vpack.c.b16 %v2335, %v2331
  %v2380 = vpack.c.b16 %v2340, %v2336
  %v2381 = vpack.c.b16 %v2341, %v2337
  %v2382 = vpack.c.b16 %v2342, %v2338
  %v2383 = vpack.c.b16 %v2343, %v2339
  %v2384 = vpack.c.b16 %v2348, %v2344
  %v2385 = vpack.c.b16 %v2349, %v2345
  %v2386 = vpack.c.b16 %v2350, %v2346
  %v2387 = vpack.c.b16 %v2351, %v2347
  %v2388 = vpack.c.b16 %v2356, %v2352
  %v2389 = vpack.c.b16 %v2357, %v2353
  %v2390 = vpack.c.b16 %v2358, %v2354
  %v2391 = vpack.c.b16 %v2359, %v2355
  %2424 = vmatprep.subr.bf16.mxu0 %v2361
  %2425 = vmatpush1.bf16.msra.mxu0 %v2360
  %2426 = vmatprep.subr.bf16.mxu0 %v2365
  %2427 = vmatpush1.bf16.msra.mxu0 %v2364
  %2428 = vmatprep.subr.bf16.mxu0 %v2369
  %2429 = vmatpush1.bf16.msra.mxu0 %v2368
  %2430 = vmatprep.subr.bf16.mxu0 %v2373
  %2431 = vmatpush1.bf16.msra.mxu0 %v2372
  %2432 = vmatprep.subr.bf16.mxu0 %v2377
  %2433 = vmatpush1.bf16.msra.mxu0 %v2376
  %2434 = vmatprep.subr.bf16.mxu0 %v2381
  %2435 = vmatpush1.bf16.msra.mxu0 %v2380
  %2436 = vmatprep.subr.bf16.mxu0 %v2385
  %2437 = vmatpush1.bf16.msra.mxu0 %v2384
  %2438 = vmatprep.subr.bf16.mxu0 %v2389
  %2439 = vmatpush1.bf16.msra.mxu0 %v2388
  %2440 = vmatprep.subr.bf16.mxu0 0
  %2441 = vmatpush1.bf16.msra.mxu0 0
  %2442 = vmatprep.subr.bf16.mxu0 0
  %2443 = vmatpush1.bf16.msra.mxu0 0
  %2444 = vmatprep.subr.bf16.mxu0 0
  %2445 = vmatpush1.bf16.msra.mxu0 0
  %2446 = vmatprep.subr.bf16.mxu0 0
  %2447 = vmatpush1.bf16.msra.mxu0 0
  %2448 = vmatprep.subr.bf16.mxu0 0
  %2449 = vmatpush1.bf16.msra.mxu0 0
  %2450 = vmatprep.subr.bf16.mxu0 0
  %2451 = vmatpush1.bf16.msra.mxu0 0
  %2452 = vmatprep.subr.bf16.mxu0 0
  %2453 = vmatpush1.bf16.msra.mxu0 0
  %2454 = vmatprep.subr.bf16.mxu0 0
  %2455 = vmatpush1.bf16.msra.mxu0 0
  %2456 = vmatprep.mubr.bf16.mxu0 0
  %2457 = vmatmul.mubr.bf16.gmra.mrb[0].mxu0 %v2231
  %v2458 = vpop.f32.mrb[0].mxu0
  %v2459 = vadd.f32 0.0, %v2458
  %v2460 = vpop.f32.mrb[0].mxu0
  %v2461 = vadd.f32 0.0, %v2460
  %v2462 = vpop.f32.mrb[0].mxu0
  %v2463 = vpop.f32.mrb[0].mxu0
  %2464 = vdwg.mxu0
  %2465 = vmatprep.subr.bf16.mxu0 %v2363
  %2466 = vmatpush1.bf16.msra.mxu0 %v2362
  %2467 = vmatprep.subr.bf16.mxu0 %v2367
  %2468 = vmatpush1.bf16.msra.mxu0 %v2366
  %2469 = vmatprep.subr.bf16.mxu0 %v2371
  %2470 = vmatpush1.bf16.msra.mxu0 %v2370
  %2471 = vmatprep.subr.bf16.mxu0 %v2375
  %2472 = vmatpush1.bf16.msra.mxu0 %v2374
  %2473 = vmatprep.subr.bf16.mxu0 %v2379
  %2474 = vmatpush1.bf16.msra.mxu0 %v2378
  %2475 = vmatprep.subr.bf16.mxu0 %v2383
  %2476 = vmatpush1.bf16.msra.mxu0 %v2382
  %2477 = vmatprep.subr.bf16.mxu0 %v2387
  %2478 = vmatpush1.bf16.msra.mxu0 %v2386
  %2479 = vmatprep.subr.bf16.mxu0 %v2391
  %2480 = vmatpush1.bf16.msra.mxu0 %v2390
  %2481 = vmatprep.subr.bf16.mxu0 0
  %2482 = vmatpush1.bf16.msra.mxu0 0
  %2483 = vmatprep.subr.bf16.mxu0 0
  %2484 = vmatpush1.bf16.msra.mxu0 0
  %2485 = vmatprep.subr.bf16.mxu0 0
  %2486 = vmatpush1.bf16.msra.mxu0 0
  %2487 = vmatprep.subr.bf16.mxu0 0
  %2488 = vmatpush1.bf16.msra.mxu0 0
  %2489 = vmatprep.subr.bf16.mxu0 0
  %2490 = vmatpush1.bf16.msra.mxu0 0
  %2491 = vmatprep.subr.bf16.mxu0 0
  %2492 = vmatpush1.bf16.msra.mxu0 0
  %2493 = vmatprep.subr.bf16.mxu0 0
  %2494 = vmatpush1.bf16.msra.mxu0 0
  %2495 = vmatprep.subr.bf16.mxu0 0
  %2496 = vmatpush1.bf16.msra.mxu0 0
  %2497 = vmatprep.mubr.bf16.mxu0 0
  %2498 = vmatmul.mubr.bf16.gmra.mrb[0].mxu0 %v2231
  %v2499 = vpop.f32.mrb[0].mxu0
  %v2500 = vadd.f32 0.0, %v2499
  %v2501 = vpop.f32.mrb[0].mxu0
  %v2502 = vadd.f32 0.0, %v2501
  %v2503 = vpop.f32.mrb[0].mxu0
  %v2504 = vpop.f32.mrb[0].mxu0
  %2505 = vdwg.mxu0
  %v2510 = vcombine.low %v2459, %v2461
  %v2511 = vcombine.low %v2500, %v2502
  %v2513 = vunpack.c.l.s4 1983009808
  %v2514 = vunpack.c.0.s8 %v2513
  %v2515 = vlaneseq
  %v2516 = vshrl.u32 %v2515, 7
  %v2517 = vsub.s32 %v2514, %v2516
  %v2518 = vrot.slane %v2510, %v2517
  %v2520 = vunpack.c.l.s4 1983009808
  %v2521 = vunpack.c.0.s8 %v2520
  %v2522 = vlaneseq
  %v2523 = vshrl.u32 %v2522, 7
  %v2524 = vsub.s32 %v2521, %v2523
  %v2525 = vrot.slane %v2511, %v2524
  %v2526 = vcombine.low %v2518, %v2525
  %v2528 = vadd.f32 %v2229, %v2526
  %v2529 = vtanh.pop %v2528
  %v2531 = vrot.slane %v2528, 4
  %v2533 = vxor.u32 %v2531, 2147483648
  %v2534 = vmul.f32 %v2533, 1.442695
  %v2535 = vpow.pop %v2534
  %v2536 = vadd.f32 %v2535, 1.0
  %v2537 = vrcp.pop %v2536
  %v2538 = vmul.f32 1.0, %v2537
  %v2539 = vrot.slane %v2528, 6
  %v2541 = vxor.u32 %v2539, 2147483648
  %v2542 = vmul.f32 %v2541, 1.442695
  %v2543 = vpow.pop %v2542
  %v2544 = vadd.f32 %v2543, 1.0
  %v2545 = vrcp.pop %v2544
  %v2546 = vmul.f32 1.0, %v2545
  %v2547 = vsub.f32 0.0, %v2531
  %v2548 = vmax.f32 %v2547, 0.0
  %vm2549 = vcmp.ne.f32.partialorder %v2547, %v2547
  %v2550 = vadd.f32 %v2547, 0.0
  %v2551 = vand.u32 2147483647, %v2547
  %v2552 = vsub.f32 0.0, %v2551
  %v2553 = vmul.f32 %v2552, 1.442695
  %v2554 = vpow.pop %v2553
  %v2555 = vadd.f32 %v2554, 1.0
  %v2556 = vlog2.pop %v2555
  %v2557 = vmul.f32 %v2556, 0.6931472
  %v2558 = vmul.f32 -0.5, %v2554
  %v2559 = vadd.f32 %v2558, 1.0
  %v2560 = vmul.f32 %v2559, %v2554
  %v2561 = vand.u32 2147483647, %v2554
  %vm2562 = vcmp.lt.f32.partialorder %v2561, 0.0004427343
  %v2563 = vsel %vm2562, %v2560, %v2557
  %v2564 = vadd.f32 %v2548, %v2563
  %v2565 = vsel %vm2549, %v2550, %v2564
  %v2566 = vsub.f32 0.0, %v2565
  %v2567 = vld [vmem:[#allocation5] sm:$0x3]
  %v2568 = vadd.f32 %v2566, %v2567
  %v2569 = vrot.slane %v2528, 2
  %v2571 = vmax.f32 %v2568, %v2569
  %v2572 = vsub.f32 %v2569, %v2571
  %v2573 = vmul.f32 %v2572, 1.442695
  %v2574 = vpow.pop %v2573
  %v2575 = vld [vmem:[#allocation3] sm:$0x3]
  %v2576 = vmul.f32 %v2538, %v2575
  %v2577 = vmul.f32 %v2574, %v2529
  %v2578 = vadd.f32 %v2576, %v2577
  %v2579 = vld [vmem:[#allocation4] sm:$0x3]
  %v2580 = vmul.f32 %v2538, %v2579
  %v2581 = vadd.f32 %v2580, %v2574
  %v2582 = vrcp.pop %v2581
  %v2583 = vmul.f32 %v2578, %v2582
  %v2584 = vmul.f32 %v2546, %v2583
  %2585 = vst [vmem:[#allocation2] sm:$0x3] %v2584
  %2586 = vst [vmem:[#allocation3] sm:$0x3] %v2578
  %2587 = vst [vmem:[#allocation4] sm:$0x3] %v2581
  %2588 = vst [vmem:[#allocation5] sm:$0x3] %v2571
  %s2589 = scalar_lea.vmem %s2, 12
  %2590 = vst [vmem:[%s2589] sm:$0x3] %v2584
  %s2591 = scalar_lea.vmem %s3, 12
  %2592 = vst [vmem:[%s2591] sm:$0x3] %v2578
  %s2593 = scalar_lea.vmem %s4, 12
  %2594 = vst [vmem:[%s2593] sm:$0x3] %v2581
  %s2595 = scalar_lea.vmem %s0, 28
  %v2596 = vld [vmem:[%s2595] sm:$0xf]
  %v2597 = vunpack.c.l.bf16 %v2596
  %v2598 = vld [vmem:[#allocation2] sm:$0x3]
  %v2599 = vpack.c.bf16 %v2598, %v2598
  %v2600 = vld [vmem:[%s1] sm:$0xff]
  %v2601 = vld [vmem:[%s1 + $0x8] sm:$0xff]
  %v2602 = vld [vmem:[%s1 + $0x10] sm:$0xff]
  %v2603 = vld [vmem:[%s1 + $0x18] sm:$0xff]
  %v2604 = vld [vmem:[%s1 + $0x20] sm:$0xff]
  %v2605 = vld [vmem:[%s1 + $0x28] sm:$0xff]
  %v2606 = vld [vmem:[%s1 + $0x30] sm:$0xff]
  %v2607 = vld [vmem:[%s1 + $0x38] sm:$0xff]
  %v2608 = vld [vmem:[%s1 + $0x40] sm:$0xff]
  %v2609 = vld [vmem:[%s1 + $0x48] sm:$0xff]
  %v2610 = vld [vmem:[%s1 + $0x50] sm:$0xff]
  %v2611 = vld [vmem:[%s1 + $0x58] sm:$0xff]
  %v2612 = vld [vmem:[%s1 + $0x60] sm:$0xff]
  %v2613 = vld [vmem:[%s1 + $0x68] sm:$0xff]
  %v2614 = vld [vmem:[%s1 + $0x70] sm:$0xff]
  %v2615 = vld [vmem:[%s1 + $0x78] sm:$0xff]
  %v2616 = vld [vmem:[%s1 + $0x80] sm:$0xff]
  %v2617 = vld [vmem:[%s1 + $0x88] sm:$0xff]
  %v2618 = vld [vmem:[%s1 + $0x90] sm:$0xff]
  %v2619 = vld [vmem:[%s1 + $0x98] sm:$0xff]
  %v2620 = vld [vmem:[%s1 + $0xa0] sm:$0xff]
  %v2621 = vld [vmem:[%s1 + $0xa8] sm:$0xff]
  %v2622 = vld [vmem:[%s1 + $0xb0] sm:$0xff]
  %v2623 = vld [vmem:[%s1 + $0xb8] sm:$0xff]
  %v2624 = vld [vmem:[%s1 + $0xc0] sm:$0xff]
  %v2625 = vld [vmem:[%s1 + $0xc8] sm:$0xff]
  %v2626 = vld [vmem:[%s1 + $0xd0] sm:$0xff]
  %v2627 = vld [vmem:[%s1 + $0xd8] sm:$0xff]
  %v2628 = vld [vmem:[%s1 + $0xe0] sm:$0xff]
  %v2629 = vld [vmem:[%s1 + $0xe8] sm:$0xff]
  %v2630 = vld [vmem:[%s1 + $0xf0] sm:$0xff]
  %v2631 = vld [vmem:[%s1 + $0xf8] sm:$0xff]
  %v2664 = vunpack.c.l.b16 %v2600
  %v2665 = vunpack.c.h.b16 %v2600
  %v2666 = vunpack.c.l.b16 %v2601
  %v2667 = vunpack.c.h.b16 %v2601
  %v2668 = vunpack.c.l.b16 %v2602
  %v2669 = vunpack.c.h.b16 %v2602
  %v2670 = vunpack.c.l.b16 %v2603
  %v2671 = vunpack.c.h.b16 %v2603
  %v2672 = vunpack.c.l.b16 %v2604
  %v2673 = vunpack.c.h.b16 %v2604
  %v2674 = vunpack.c.l.b16 %v2605
  %v2675 = vunpack.c.h.b16 %v2605
  %v2676 = vunpack.c.l.b16 %v2606
  %v2677 = vunpack.c.h.b16 %v2606
  %v2678 = vunpack.c.l.b16 %v2607
  %v2679 = vunpack.c.h.b16 %v2607
  %v2680 = vunpack.c.l.b16 %v2608
  %v2681 = vunpack.c.h.b16 %v2608
  %v2682 = vunpack.c.l.b16 %v2609
  %v2683 = vunpack.c.h.b16 %v2609
  %v2684 = vunpack.c.l.b16 %v2610
  %v2685 = vunpack.c.h.b16 %v2610
  %v2686 = vunpack.c.l.b16 %v2611
  %v2687 = vunpack.c.h.b16 %v2611
  %v2688 = vunpack.c.l.b16 %v2612
  %v2689 = vunpack.c.h.b16 %v2612
  %v2690 = vunpack.c.l.b16 %v2613
  %v2691 = vunpack.c.h.b16 %v2613
  %v2692 = vunpack.c.l.b16 %v2614
  %v2693 = vunpack.c.h.b16 %v2614
  %v2694 = vunpack.c.l.b16 %v2615
  %v2695 = vunpack.c.h.b16 %v2615
  %v2696 = vunpack.c.l.b16 %v2616
  %v2697 = vunpack.c.h.b16 %v2616
  %v2698 = vunpack.c.l.b16 %v2617
  %v2699 = vunpack.c.h.b16 %v2617
  %v2700 = vunpack.c.l.b16 %v2618
  %v2701 = vunpack.c.h.b16 %v2618
  %v2702 = vunpack.c.l.b16 %v2619
  %v2703 = vunpack.c.h.b16 %v2619
  %v2704 = vunpack.c.l.b16 %v2620
  %v2705 = vunpack.c.h.b16 %v2620
  %v2706 = vunpack.c.l.b16 %v2621
  %v2707 = vunpack.c.h.b16 %v2621
  %v2708 = vunpack.c.l.b16 %v2622
  %v2709 = vunpack.c.h.b16 %v2622
  %v2710 = vunpack.c.l.b16 %v2623
  %v2711 = vunpack.c.h.b16 %v2623
  %v2712 = vunpack.c.l.b16 %v2624
  %v2713 = vunpack.c.h.b16 %v2624
  %v2714 = vunpack.c.l.b16 %v2625
  %v2715 = vunpack.c.h.b16 %v2625
  %v2716 = vunpack.c.l.b16 %v2626
  %v2717 = vunpack.c.h.b16 %v2626
  %v2718 = vunpack.c.l.b16 %v2627
  %v2719 = vunpack.c.h.b16 %v2627
  %v2720 = vunpack.c.l.b16 %v2628
  %v2721 = vunpack.c.h.b16 %v2628
  %v2722 = vunpack.c.l.b16 %v2629
  %v2723 = vunpack.c.h.b16 %v2629
  %v2724 = vunpack.c.l.b16 %v2630
  %v2725 = vunpack.c.h.b16 %v2630
  %v2726 = vunpack.c.l.b16 %v2631
  %v2727 = vunpack.c.h.b16 %v2631
  %v2728 = vpack.c.b16 %v2668, %v2664
  %v2729 = vpack.c.b16 %v2669, %v2665
  %v2730 = vpack.c.b16 %v2670, %v2666
  %v2731 = vpack.c.b16 %v2671, %v2667
  %v2732 = vpack.c.b16 %v2676, %v2672
  %v2733 = vpack.c.b16 %v2677, %v2673
  %v2734 = vpack.c.b16 %v2678, %v2674
  %v2735 = vpack.c.b16 %v2679, %v2675
  %v2736 = vpack.c.b16 %v2684, %v2680
  %v2737 = vpack.c.b16 %v2685, %v2681
  %v2738 = vpack.c.b16 %v2686, %v2682
  %v2739 = vpack.c.b16 %v2687, %v2683
  %v2740 = vpack.c.b16 %v2692, %v2688
  %v2741 = vpack.c.b16 %v2693, %v2689
  %v2742 = vpack.c.b16 %v2694, %v2690
  %v2743 = vpack.c.b16 %v2695, %v2691
  %v2744 = vpack.c.b16 %v2700, %v2696
  %v2745 = vpack.c.b16 %v2701, %v2697
  %v2746 = vpack.c.b16 %v2702, %v2698
  %v2747 = vpack.c.b16 %v2703, %v2699
  %v2748 = vpack.c.b16 %v2708, %v2704
  %v2749 = vpack.c.b16 %v2709, %v2705
  %v2750 = vpack.c.b16 %v2710, %v2706
  %v2751 = vpack.c.b16 %v2711, %v2707
  %v2752 = vpack.c.b16 %v2716, %v2712
  %v2753 = vpack.c.b16 %v2717, %v2713
  %v2754 = vpack.c.b16 %v2718, %v2714
  %v2755 = vpack.c.b16 %v2719, %v2715
  %v2756 = vpack.c.b16 %v2724, %v2720
  %v2757 = vpack.c.b16 %v2725, %v2721
  %v2758 = vpack.c.b16 %v2726, %v2722
  %v2759 = vpack.c.b16 %v2727, %v2723
  %2792 = vmatprep.subr.bf16.mxu0 %v2729
  %2793 = vmatpush1.bf16.msra.mxu0 %v2728
  %2794 = vmatprep.subr.bf16.mxu0 %v2733
  %2795 = vmatpush1.bf16.msra.mxu0 %v2732
  %2796 = vmatprep.subr.bf16.mxu0 %v2737
  %2797 = vmatpush1.bf16.msra.mxu0 %v2736
  %2798 = vmatprep.subr.bf16.mxu0 %v2741
  %2799 = vmatpush1.bf16.msra.mxu0 %v2740
  %2800 = vmatprep.subr.bf16.mxu0 %v2745
  %2801 = vmatpush1.bf16.msra.mxu0 %v2744
  %2802 = vmatprep.subr.bf16.mxu0 %v2749
  %2803 = vmatpush1.bf16.msra.mxu0 %v2748
  %2804 = vmatprep.subr.bf16.mxu0 %v2753
  %2805 = vmatpush1.bf16.msra.mxu0 %v2752
  %2806 = vmatprep.subr.bf16.mxu0 %v2757
  %2807 = vmatpush1.bf16.msra.mxu0 %v2756
  %2808 = vmatprep.subr.bf16.mxu0 0
  %2809 = vmatpush1.bf16.msra.mxu0 0
  %2810 = vmatprep.subr.bf16.mxu0 0
  %2811 = vmatpush1.bf16.msra.mxu0 0
  %2812 = vmatprep.subr.bf16.mxu0 0
  %2813 = vmatpush1.bf16.msra.mxu0 0
  %2814 = vmatprep.subr.bf16.mxu0 0
  %2815 = vmatpush1.bf16.msra.mxu0 0
  %2816 = vmatprep.subr.bf16.mxu0 0
  %2817 = vmatpush1.bf16.msra.mxu0 0
  %2818 = vmatprep.subr.bf16.mxu0 0
  %2819 = vmatpush1.bf16.msra.mxu0 0
  %2820 = vmatprep.subr.bf16.mxu0 0
  %2821 = vmatpush1.bf16.msra.mxu0 0
  %2822 = vmatprep.subr.bf16.mxu0 0
  %2823 = vmatpush1.bf16.msra.mxu0 0
  %2824 = vmatprep.mubr.bf16.mxu0 0
  %2825 = vmatmul.mubr.bf16.gmra.mrb[0].mxu0 %v2599
  %v2826 = vpop.f32.mrb[0].mxu0
  %v2827 = vadd.f32 0.0, %v2826
  %v2828 = vpop.f32.mrb[0].mxu0
  %v2829 = vadd.f32 0.0, %v2828
  %v2830 = vpop.f32.mrb[0].mxu0
  %v2831 = vpop.f32.mrb[0].mxu0
  %2832 = vdwg.mxu0
  %2833 = vmatprep.subr.bf16.mxu0 %v2731
  %2834 = vmatpush1.bf16.msra.mxu0 %v2730
  %2835 = vmatprep.subr.bf16.mxu0 %v2735
  %2836 = vmatpush1.bf16.msra.mxu0 %v2734
  %2837 = vmatprep.subr.bf16.mxu0 %v2739
  %2838 = vmatpush1.bf16.msra.mxu0 %v2738
  %2839 = vmatprep.subr.bf16.mxu0 %v2743
  %2840 = vmatpush1.bf16.msra.mxu0 %v2742
  %2841 = vmatprep.subr.bf16.mxu0 %v2747
  %2842 = vmatpush1.bf16.msra.mxu0 %v2746
  %2843 = vmatprep.subr.bf16.mxu0 %v2751
  %2844 = vmatpush1.bf16.msra.mxu0 %v2750
  %2845 = vmatprep.subr.bf16.mxu0 %v2755
  %2846 = vmatpush1.bf16.msra.mxu0 %v2754
  %2847 = vmatprep.subr.bf16.mxu0 %v2759
  %2848 = vmatpush1.bf16.msra.mxu0 %v2758
  %2849 = vmatprep.subr.bf16.mxu0 0
  %2850 = vmatpush1.bf16.msra.mxu0 0
  %2851 = vmatprep.subr.bf16.mxu0 0
  %2852 = vmatpush1.bf16.msra.mxu0 0
  %2853 = vmatprep.subr.bf16.mxu0 0
  %2854 = vmatpush1.bf16.msra.mxu0 0
  %2855 = vmatprep.subr.bf16.mxu0 0
  %2856 = vmatpush1.bf16.msra.mxu0 0
  %2857 = vmatprep.subr.bf16.mxu0 0
  %2858 = vmatpush1.bf16.msra.mxu0 0
  %2859 = vmatprep.subr.bf16.mxu0 0
  %2860 = vmatpush1.bf16.msra.mxu0 0
  %2861 = vmatprep.subr.bf16.mxu0 0
  %2862 = vmatpush1.bf16.msra.mxu0 0
  %2863 = vmatprep.subr.bf16.mxu0 0
  %2864 = vmatpush1.bf16.msra.mxu0 0
  %2865 = vmatprep.mubr.bf16.mxu0 0
  %2866 = vmatmul.mubr.bf16.gmra.mrb[0].mxu0 %v2599
  %v2867 = vpop.f32.mrb[0].mxu0
  %v2868 = vadd.f32 0.0, %v2867
  %v2869 = vpop.f32.mrb[0].mxu0
  %v2870 = vadd.f32 0.0, %v2869
  %v2871 = vpop.f32.mrb[0].mxu0
  %v2872 = vpop.f32.mrb[0].mxu0
  %2873 = vdwg.mxu0
  %v2878 = vcombine.low %v2827, %v2829
  %v2879 = vcombine.low %v2868, %v2870
  %v2881 = vunpack.c.l.s4 1983009808
  %v2882 = vunpack.c.0.s8 %v2881
  %v2883 = vlaneseq
  %v2884 = vshrl.u32 %v2883, 7
  %v2885 = vsub.s32 %v2882, %v2884
  %v2886 = vrot.slane %v2878, %v2885
  %v2888 = vunpack.c.l.s4 1983009808
  %v2889 = vunpack.c.0.s8 %v2888
  %v2890 = vlaneseq
  %v2891 = vshrl.u32 %v2890, 7
  %v2892 = vsub.s32 %v2889, %v2891
  %v2893 = vrot.slane %v2879, %v2892
  %v2894 = vcombine.low %v2886, %v2893
  %v2896 = vadd.f32 %v2597, %v2894
  %v2897 = vtanh.pop %v2896
  %v2899 = vrot.slane %v2896, 4
  %v2901 = vxor.u32 %v2899, 2147483648
  %v2902 = vmul.f32 %v2901, 1.442695
  %v2903 = vpow.pop %v2902
  %v2904 = vadd.f32 %v2903, 1.0
  %v2905 = vrcp.pop %v2904
  %v2906 = vmul.f32 1.0, %v2905
  %v2907 = vrot.slane %v2896, 6
  %v2909 = vxor.u32 %v2907, 2147483648
  %v2910 = vmul.f32 %v2909, 1.442695
  %v2911 = vpow.pop %v2910
  %v2912 = vadd.f32 %v2911, 1.0
  %v2913 = vrcp.pop %v2912
  %v2914 = vmul.f32 1.0, %v2913
  %v2915 = vsub.f32 0.0, %v2899
  %v2916 = vmax.f32 %v2915, 0.0
  %vm2917 = vcmp.ne.f32.partialorder %v2915, %v2915
  %v2918 = vadd.f32 %v2915, 0.0
  %v2919 = vand.u32 2147483647, %v2915
  %v2920 = vsub.f32 0.0, %v2919
  %v2921 = vmul.f32 %v2920, 1.442695
  %v2922 = vpow.pop %v2921
  %v2923 = vadd.f32 %v2922, 1.0
  %v2924 = vlog2.pop %v2923
  %v2925 = vmul.f32 %v2924, 0.6931472
  %v2926 = vmul.f32 -0.5, %v2922
  %v2927 = vadd.f32 %v2926, 1.0
  %v2928 = vmul.f32 %v2927, %v2922
  %v2929 = vand.u32 2147483647, %v2922
  %vm2930 = vcmp.lt.f32.partialorder %v2929, 0.0004427343
  %v2931 = vsel %vm2930, %v2928, %v2925
  %v2932 = vadd.f32 %v2916, %v2931
  %v2933 = vsel %vm2917, %v2918, %v2932
  %v2934 = vsub.f32 0.0, %v2933
  %v2935 = vld [vmem:[#allocation5] sm:$0x3]
  %v2936 = vadd.f32 %v2934, %v2935
  %v2937 = vrot.slane %v2896, 2
  %v2939 = vmax.f32 %v2936, %v2937
  %v2940 = vsub.f32 %v2937, %v2939
  %v2941 = vmul.f32 %v2940, 1.442695
  %v2942 = vpow.pop %v2941
  %v2943 = vld [vmem:[#allocation3] sm:$0x3]
  %v2944 = vmul.f32 %v2906, %v2943
  %v2945 = vmul.f32 %v2942, %v2897
  %v2946 = vadd.f32 %v2944, %v2945
  %v2947 = vld [vmem:[#allocation4] sm:$0x3]
  %v2948 = vmul.f32 %v2906, %v2947
  %v2949 = vadd.f32 %v2948, %v2942
  %v2950 = vrcp.pop %v2949
  %v2951 = vmul.f32 %v2946, %v2950
  %v2952 = vmul.f32 %v2914, %v2951
  %2953 = vst [vmem:[#allocation2] sm:$0x3] %v2952
  %2954 = vst [vmem:[#allocation3] sm:$0x3] %v2946
  %2955 = vst [vmem:[#allocation4] sm:$0x3] %v2949
  %2956 = vst [vmem:[#allocation5] sm:$0x3] %v2939
  %s2957 = scalar_lea.vmem %s2, 14
  %2958 = vst [vmem:[%s2957] sm:$0x3] %v2952
  %s2959 = scalar_lea.vmem %s3, 14
  %2960 = vst [vmem:[%s2959] sm:$0x3] %v2946
  %s2961 = scalar_lea.vmem %s4, 14
  %2962 = vst [vmem:[%s2961] sm:$0x3] %v2949
  // Predicated region
  $region14: #{slstm_forward.2} parent=0 // pred_check
    _
  $region15: #{slstm_forward.2} parent=0 // pred_check_branch
    %2964 = sbr.rel (0) target = $region17
  $region16: #{slstm_forward.2} parent=0 // pred_region
    _
  $region17: #{slstm_forward.2} parent=0 // pred_fallthru
    _
  // Predicated region
  $region18: #{slstm_forward.2} parent=0 // pred_check
    _
  $region19: #{slstm_forward.2} parent=0 // pred_check_branch
    %2966 = sbr.rel (0) target = $region21
  $region20: #{slstm_forward.2} parent=0 // pred_region
    _
  $region21: #{slstm_forward.2} parent=0 // pred_fallthru
    _
  // Predicated region
  $region22: #{slstm_forward.2} parent=0 // pred_check
    _
  $region23: #{slstm_forward.2} parent=0 // pred_check_branch
    %2968 = sbr.rel (0) target = $region25
  $region24: #{slstm_forward.2} parent=0 // pred_region
    _
  $region25: #{slstm_forward.2} parent=0 // pred_fallthru
    _
  // Predicated region
  $region26: #{slstm_forward.2} parent=0 // pred_check
    _
  $region27: #{slstm_forward.2} parent=0 // pred_check_branch
    %2970 = sbr.rel (0) target = $region29
  $region28: #{slstm_forward.2} parent=0 // pred_region
    _
  $region29: #{slstm_forward.2} parent=0 // pred_fallthru
    _
  // Predicated region
  $region30: #{slstm_forward.2} parent=0 // pred_check
    _
  $region31: #{slstm_forward.2} parent=0 // pred_check_branch
    %2972 = sbr.rel (0) target = $region33
  $region32: #{slstm_forward.2} parent=0 // pred_region
    _
  $region33: #{slstm_forward.2} parent=0 // pred_fallthru
    _
  // Predicated region
  $region34: #{slstm_forward.2} parent=0 // pred_check
    _
  $region35: #{slstm_forward.2} parent=0 // pred_check_branch
    %2974 = sbr.rel (0) target = $region37
  $region36: #{slstm_forward.2} parent=0 // pred_region
    _
  $region37: #{slstm_forward.2} parent=0 // pred_fallthru
    _

// kernel: slstm_forward.2
$region0: #{slstm_forward.2}
  #allocation0 [shape = 'u32[]', space=smem, size = 0x4, offset = 0x4, fixed_abs, tag = 'smem constant byte address 0x4 - core index']
  #allocation1 [shape = 'u32[144,128]{1,0:T(1,128)}', space=vmem, size = 0x12000, scoped, tag = 'internal scratch']
  #allocation2 [shape = 'f32[2,128]{1,0:T(2,128)}', space=vmem, size = 0x400, scoped, tag = 'scratch operand']
  #allocation3 [shape = 'f32[2,128]{1,0:T(2,128)}', space=vmem, size = 0x400, scoped, tag = 'scratch operand']
  #allocation4 [shape = 'f32[2,128]{1,0:T(2,128)}', space=vmem, size = 0x400, scoped, tag = 'scratch operand']
  #allocation5 [shape = 'f32[2,128]{1,0:T(2,128)}', space=vmem, size = 0x400, scoped, tag = 'scratch operand']
  %s0 = inlined_call_operand.vmem [shape: bf16[8,2,512], index: 0, kind: input, shape index: {}]
  %s1 = inlined_call_operand.vmem [shape: bf16[128,512], index: 1, kind: input, shape index: {}]
  %s2 = inlined_call_operand.vmem [shape: f32[8,2,128], index: 2, kind: output, shape index: {0}]
  %s3 = inlined_call_operand.vmem [shape: f32[8,2,128], index: 3, kind: output, shape index: {1}]
  %s4 = inlined_call_operand.vmem [shape: f32[8,2,128], index: 4, kind: output, shape index: {2}]
  %5 = xla_tuple %s2, %s3, %s4
  %s6 = sld [smem:[#allocation0]]
  $region38: #{slstm_forward.2} parent=0
    _
  %s8 = ssub.s32 1, %s6
  %s9 = scalar_select 0, %s8, %s6
  // Predicated region
  $region2: #{slstm_forward.2} parent=0 // pred_check
    _
  $region3: #{slstm_forward.2} parent=0 // pred_check_branch
    %11 = sbr.rel (0) target = $region5
  $region4: #{slstm_forward.2} parent=0 // pred_region
    _
  $region5: #{slstm_forward.2} parent=0 // pred_fallthru
    _
  // Predicated region
  $region6: #{slstm_forward.2} parent=0 // pred_check
    _
  $region7: #{slstm_forward.2} parent=0 // pred_check_branch
    %13 = sbr.rel (0) target = $region9
  $region8: #{slstm_forward.2} parent=0 // pred_region
    _
  $region9: #{slstm_forward.2} parent=0 // pred_fallthru
    _
  %p15 = scmp.eq.s32.totalorder 0, 0
  // Predicated region
  $region10: #{slstm_forward.2} parent=0 // pred_check
    %p16 = pneg %p15
  $region11: #{slstm_forward.2} parent=0 // pred_check_branch
    %18 = sbr.rel (%p16) target = $region13
  $region12: #{slstm_forward.2} parent=0 // pred_region
    %19 = vst [vmem:[#allocation2] sm:$0x3] 0.0
    %20 = vst [vmem:[#allocation3] sm:$0x3] 0.0
    %21 = vst [vmem:[#allocation4] sm:$0x3] 0.0
    %22 = vst [vmem:[#allocation5] sm:$0x3] 0.0
  $region13: #{slstm_forward.2} parent=0 // pred_fallthru
    _
  %v23 = vld [vmem:[%s0] sm:$0xf]
  %v24 = vunpack.c.l.bf16 %v23
  %v25 = vld [vmem:[#allocation2] sm:$0x3]
  %v26 = vpack.c.bf16 %v25, %v25
  %v27 = vld [vmem:[%s1] sm:$0xff]
  %v28 = vld [vmem:[%s1 + $0x8] sm:$0xff]
  %v29 = vld [vmem:[%s1 + $0x10] sm:$0xff]
  %v30 = vld [vmem:[%s1 + $0x18] sm:$0xff]
  %v31 = vld [vmem:[%s1 + $0x20] sm:$0xff]
  %v32 = vld [vmem:[%s1 + $0x28] sm:$0xff]
  %v33 = vld [vmem:[%s1 + $0x30] sm:$0xff]
  %v34 = vld [vmem:[%s1 + $0x38] sm:$0xff]
  %v35 = vld [vmem:[%s1 + $0x40] sm:$0xff]
  %v36 = vld [vmem:[%s1 + $0x48] sm:$0xff]
  %v37 = vld [vmem:[%s1 + $0x50] sm:$0xff]
  %v38 = vld [vmem:[%s1 + $0x58] sm:$0xff]
  %v39 = vld [vmem:[%s1 + $0x60] sm:$0xff]
  %v40 = vld [vmem:[%s1 + $0x68] sm:$0xff]
  %v41 = vld [vmem:[%s1 + $0x70] sm:$0xff]
  %v42 = vld [vmem:[%s1 + $0x78] sm:$0xff]
  %v43 = vld [vmem:[%s1 + $0x80] sm:$0xff]
  %v44 = vld [vmem:[%s1 + $0x88] sm:$0xff]
  %v45 = vld [vmem:[%s1 + $0x90] sm:$0xff]
  %v46 = vld [vmem:[%s1 + $0x98] sm:$0xff]
  %v47 = vld [vmem:[%s1 + $0xa0] sm:$0xff]
  %v48 = vld [vmem:[%s1 + $0xa8] sm:$0xff]
  %v49 = vld [vmem:[%s1 + $0xb0] sm:$0xff]
  %v50 = vld [vmem:[%s1 + $0xb8] sm:$0xff]
  %v51 = vld [vmem:[%s1 + $0xc0] sm:$0xff]
  %v52 = vld [vmem:[%s1 + $0xc8] sm:$0xff]
  %v53 = vld [vmem:[%s1 + $0xd0] sm:$0xff]
  %v54 = vld [vmem:[%s1 + $0xd8] sm:$0xff]
  %v55 = vld [vmem:[%s1 + $0xe0] sm:$0xff]
  %v56 = vld [vmem:[%s1 + $0xe8] sm:$0xff]
  %v57 = vld [vmem:[%s1 + $0xf0] sm:$0xff]
  %v58 = vld [vmem:[%s1 + $0xf8] sm:$0xff]
  %v91 = vunpack.c.l.b16 %v27
  %v92 = vunpack.c.h.b16 %v27
  %v93 = vunpack.c.l.b16 %v28
  %v94 = vunpack.c.h.b16 %v28
  %v95 = vunpack.c.l.b16 %v29
  %v96 = vunpack.c.h.b16 %v29
  %v97 = vunpack.c.l.b16 %v30
  %v98 = vunpack.c.h.b16 %v30
  %v99 = vunpack.c.l.b16 %v31
  %v100 = vunpack.c.h.b16 %v31
  %v101 = vunpack.c.l.b16 %v32
  %v102 = vunpack.c.h.b16 %v32
  %v103 = vunpack.c.l.b16 %v33
  %v104 = vunpack.c.h.b16 %v33
  %v105 = vunpack.c.l.b16 %v34
  %v106 = vunpack.c.h.b16 %v34
  %v107 = vunpack.c.l.b16 %v35
  %v108 = vunpack.c.h.b16 %v35
  %v109 = vunpack.c.l.b16 %v36
  %v110 = vunpack.c.h.b16 %v36
  %v111 = vunpack.c.l.b16 %v37
  %v112 = vunpack.c.h.b16 %v37
  %v113 = vunpack.c.l.b16 %v38
  %v114 = vunpack.c.h.b16 %v38
  %v115 = vunpack.c.l.b16 %v39
  %v116 = vunpack.c.h.b16 %v39
  %v117 = vunpack.c.l.b16 %v40
  %v118 = vunpack.c.h.b16 %v40
  %v119 = vunpack.c.l.b16 %v41
  %v120 = vunpack.c.h.b16 %v41
  %v121 = vunpack.c.l.b16 %v42
  %v122 = vunpack.c.h.b16 %v42
  %v123 = vunpack.c.l.b16 %v43
  %v124 = vunpack.c.h.b16 %v43
  %v125 = vunpack.c.l.b16 %v44
  %v126 = vunpack.c.h.b16 %v44
  %v127 = vunpack.c.l.b16 %v45
  %v128 = vunpack.c.h.b16 %v45
  %v129 = vunpack.c.l.b16 %v46
  %v130 = vunpack.c.h.b16 %v46
  %v131 = vunpack.c.l.b16 %v47
  %v132 = vunpack.c.h.b16 %v47
  %v133 = vunpack.c.l.b16 %v48
  %v134 = vunpack.c.h.b16 %v48
  %v135 = vunpack.c.l.b16 %v49
  %v136 = vunpack.c.h.b16 %v49
  %v137 = vunpack.c.l.b16 %v50
  %v138 = vunpack.c.h.b16 %v50
  %v139 = vunpack.c.l.b16 %v51
  %v140 = vunpack.c.h.b16 %v51
  %v141 = vunpack.c.l.b16 %v52
  %v142 = vunpack.c.h.b16 %v52
  %v143 = vunpack.c.l.b16 %v53
  %v144 = vunpack.c.h.b16 %v53
  %v145 = vunpack.c.l.b16 %v54
  %v146 = vunpack.c.h.b16 %v54
  %v147 = vunpack.c.l.b16 %v55
  %v148 = vunpack.c.h.b16 %v55
  %v149 = vunpack.c.l.b16 %v56
  %v150 = vunpack.c.h.b16 %v56
  %v151 = vunpack.c.l.b16 %v57
  %v152 = vunpack.c.h.b16 %v57
  %v153 = vunpack.c.l.b16 %v58
  %v154 = vunpack.c.h.b16 %v58
  %v155 = vpack.c.b16 %v95, %v91
  %v156 = vpack.c.b16 %v96, %v92
  %v157 = vpack.c.b16 %v97, %v93
  %v158 = vpack.c.b16 %v98, %v94
  %v159 = vpack.c.b16 %v103, %v99
  %v160 = vpack.c.b16 %v104, %v100
  %v161 = vpack.c.b16 %v105, %v101
  %v162 = vpack.c.b16 %v106, %v102
  %v163 = vpack.c.b16 %v111, %v107
  %v164 = vpack.c.b16 %v112, %v108
  %v165 = vpack.c.b16 %v113, %v109
  %v166 = vpack.c.b16 %v114, %v110
  %v167 = vpack.c.b16 %v119, %v115
  %v168 = vpack.c.b16 %v120, %v116
  %v169 = vpack.c.b16 %v121, %v117
  %v170 = vpack.c.b16 %v122, %v118
  %v171 = vpack.c.b16 %v127, %v123
  %v172 = vpack.c.b16 %v128, %v124
  %v173 = vpack.c.b16 %v129, %v125
  %v174 = vpack.c.b16 %v130, %v126
  %v175 = vpack.c.b16 %v135, %v131
  %v176 = vpack.c.b16 %v136, %v132
  %v177 = vpack.c.b16 %v137, %v133
  %v178 = vpack.c.b16 %v138, %v134
  %v179 = vpack.c.b16 %v143, %v139
  %v180 = vpack.c.b16 %v144, %v140
  %v181 = vpack.c.b16 %v145, %v141
  %v182 = vpack.c.b16 %v146, %v142
  %v183 = vpack.c.b16 %v151, %v147
  %v184 = vpack.c.b16 %v152, %v148
  %v185 = vpack.c.b16 %v153, %v149
  %v186 = vpack.c.b16 %v154, %v150
  %219 = vmatprep.subr.bf16.mxu0 %v156
  %220 = vmatpush1.bf16.msra.mxu0 %v155
  %221 = vmatprep.subr.bf16.mxu0 %v160
  %222 = vmatpush1.bf16.msra.mxu0 %v159
  %223 = vmatprep.subr.bf16.mxu0 %v164
  %224 = vmatpush1.bf16.msra.mxu0 %v163
  %225 = vmatprep.subr.bf16.mxu0 %v168
  %226 = vmatpush1.bf16.msra.mxu0 %v167
  %227 = vmatprep.subr.bf16.mxu0 %v172
  %228 = vmatpush1.bf16.msra.mxu0 %v171
  %229 = vmatprep.subr.bf16.mxu0 %v176
  %230 = vmatpush1.bf16.msra.mxu0 %v175
  %231 = vmatprep.subr.bf16.mxu0 %v180
  %232 = vmatpush1.bf16.msra.mxu0 %v179
  %233 = vmatprep.subr.bf16.mxu0 %v184
  %234 = vmatpush1.bf16.msra.mxu0 %v183
  %235 = vmatprep.subr.bf16.mxu0 0
  %236 = vmatpush1.bf16.msra.mxu0 0
  %237 = vmatprep.subr.bf16.mxu0 0
  %238 = vmatpush1.bf16.msra.mxu0 0
  %239 = vmatprep.subr.bf16.mxu0 0
  %240 = vmatpush1.bf16.msra.mxu0 0
  %241 = vmatprep.subr.bf16.mxu0 0
  %242 = vmatpush1.bf16.msra.mxu0 0
  %243 = vmatprep.subr.bf16.mxu0 0
  %244 = vmatpush1.bf16.msra.mxu0 0
  %245 = vmatprep.subr.bf16.mxu0 0
  %246 = vmatpush1.bf16.msra.mxu0 0
  %247 = vmatprep.subr.bf16.mxu0 0
  %248 = vmatpush1.bf16.msra.mxu0 0
  %249 = vmatprep.subr.bf16.mxu0 0
  %250 = vmatpush1.bf16.msra.mxu0 0
  %251 = vmatprep.mubr.bf16.mxu0 0
  %252 = vmatmul.mubr.bf16.gmra.mrb[0].mxu0 %v26
  %v253 = vpop.f32.mrb[0].mxu0
  %v254 = vadd.f32 0.0, %v253
  %v255 = vpop.f32.mrb[0].mxu0
  %v256 = vadd.f32 0.0, %v255
  %v257 = vpop.f32.mrb[0].mxu0
  %v258 = vpop.f32.mrb[0].mxu0
  %259 = vdwg.mxu0
  %260 = vmatprep.subr.bf16.mxu0 %v158
  %261 = vmatpush1.bf16.msra.mxu0 %v157
  %262 = vmatprep.subr.bf16.mxu0 %v162
  %263 = vmatpush1.bf16.msra.mxu0 %v161
  %264 = vmatprep.subr.bf16.mxu0 %v166
  %265 = vmatpush1.bf16.msra.mxu0 %v165
  %266 = vmatprep.subr.bf16.mxu0 %v170
  %267 = vmatpush1.bf16.msra.mxu0 %v169
  %268 = vmatprep.subr.bf16.mxu0 %v174
  %269 = vmatpush1.bf16.msra.mxu0 %v173
  %270 = vmatprep.subr.bf16.mxu0 %v178
  %271 = vmatpush1.bf16.msra.mxu0 %v177
  %272 = vmatprep.subr.bf16.mxu0 %v182
  %273 = vmatpush1.bf16.msra.mxu0 %v181
  %274 = vmatprep.subr.bf16.mxu0 %v186
  %275 = vmatpush1.bf16.msra.mxu0 %v185
  %276 = vmatprep.subr.bf16.mxu0 0
  %277 = vmatpush1.bf16.msra.mxu0 0
  %278 = vmatprep.subr.bf16.mxu0 0
  %279 = vmatpush1.bf16.msra.mxu0 0
  %280 = vmatprep.subr.bf16.mxu0 0
  %281 = vmatpush1.bf16.msra.mxu0 0
  %282 = vmatprep.subr.bf16.mxu0 0
  %283 = vmatpush1.bf16.msra.mxu0 0
  %284 = vmatprep.subr.bf16.mxu0 0
  %285 = vmatpush1.bf16.msra.mxu0 0
  %286 = vmatprep.subr.bf16.mxu0 0
  %287 = vmatpush1.bf16.msra.mxu0 0
  %288 = vmatprep.subr.bf16.mxu0 0
  %289 = vmatpush1.bf16.msra.mxu0 0
  %290 = vmatprep.subr.bf16.mxu0 0
  %291 = vmatpush1.bf16.msra.mxu0 0
  %292 = vmatprep.mubr.bf16.mxu0 0
  %293 = vmatmul.mubr.bf16.gmra.mrb[0].mxu0 %v26
  %v294 = vpop.f32.mrb[0].mxu0
  %v295 = vadd.f32 0.0, %v294
  %v296 = vpop.f32.mrb[0].mxu0
  %v297 = vadd.f32 0.0, %v296
  %v298 = vpop.f32.mrb[0].mxu0
  %v299 = vpop.f32.mrb[0].mxu0
  %300 = vdwg.mxu0
  %v305 = vcombine.low %v254, %v256
  %v306 = vcombine.low %v295, %v297
  %v308 = vunpack.c.l.s4 1983009808
  %v309 = vunpack.c.0.s8 %v308
  %v310 = vlaneseq
  %v311 = vshrl.u32 %v310, 7
  %v312 = vsub.s32 %v309, %v311
  %v313 = vrot.slane %v305, %v312
  %v315 = vunpack.c.l.s4 1983009808
  %v316 = vunpack.c.0.s8 %v315
  %v317 = vlaneseq
  %v318 = vshrl.u32 %v317, 7
  %v319 = vsub.s32 %v316, %v318
  %v320 = vrot.slane %v306, %v319
  %v321 = vcombine.low %v313, %v320
  %v323 = vadd.f32 %v24, %v321
  %v324 = vtanh.pop %v323
  %v326 = vrot.slane %v323, 4
  %v328 = vxor.u32 %v326, 2147483648
  %v329 = vmul.f32 %v328, 1.442695
  %v330 = vpow.pop %v329
  %v331 = vadd.f32 %v330, 1.0
  %v332 = vrcp.pop %v331
  %v333 = vmul.f32 1.0, %v332
  %v334 = vrot.slane %v323, 6
  %v336 = vxor.u32 %v334, 2147483648
  %v337 = vmul.f32 %v336, 1.442695
  %v338 = vpow.pop %v337
  %v339 = vadd.f32 %v338, 1.0
  %v340 = vrcp.pop %v339
  %v341 = vmul.f32 1.0, %v340
  %v342 = vsub.f32 0.0, %v326
  %v343 = vmax.f32 %v342, 0.0
  %vm344 = vcmp.ne.f32.partialorder %v342, %v342
  %v345 = vadd.f32 %v342, 0.0
  %v346 = vand.u32 2147483647, %v342
  %v347 = vsub.f32 0.0, %v346
  %v348 = vmul.f32 %v347, 1.442695
  %v349 = vpow.pop %v348
  %v350 = vadd.f32 %v349, 1.0
  %v351 = vlog2.pop %v350
  %v352 = vmul.f32 %v351, 0.6931472
  %v353 = vmul.f32 -0.5, %v349
  %v354 = vadd.f32 %v353, 1.0
  %v355 = vmul.f32 %v354, %v349
  %v356 = vand.u32 2147483647, %v349
  %vm357 = vcmp.lt.f32.partialorder %v356, 0.0004427343
  %v358 = vsel %vm357, %v355, %v352
  %v359 = vadd.f32 %v343, %v358
  %v360 = vsel %vm344, %v345, %v359
  %v361 = vsub.f32 0.0, %v360
  %v362 = vld [vmem:[#allocation5] sm:$0x3]
  %v363 = vadd.f32 %v361, %v362
  %v364 = vrot.slane %v323, 2
  %v366 = vmax.f32 %v363, %v364
  %v367 = vsub.f32 %v364, %v366
  %v368 = vmul.f32 %v367, 1.442695
  %v369 = vpow.pop %v368
  %v370 = vld [vmem:[#allocation3] sm:$0x3]
  %v371 = vmul.f32 %v333, %v370
  %v372 = vmul.f32 %v369, %v324
  %v373 = vadd.f32 %v371, %v372
  %v374 = vld [vmem:[#allocation4] sm:$0x3]
  %v375 = vmul.f32 %v333, %v374
  %v376 = vadd.f32 %v375, %v369
  %v377 = vrcp.pop %v376
  %v378 = vmul.f32 %v373, %v377
  %v379 = vmul.f32 %v341, %v378
  %380 = vst [vmem:[#allocation2] sm:$0x3] %v379
  %381 = vst [vmem:[#allocation3] sm:$0x3] %v373
  %382 = vst [vmem:[#allocation4] sm:$0x3] %v376
  %383 = vst [vmem:[#allocation5] sm:$0x3] %v366
  %384 = vst [vmem:[%s2] sm:$0x3] %v379
  %385 = vst [vmem:[%s3] sm:$0x3] %v373
  %386 = vst [vmem:[%s4] sm:$0x3] %v376
  %s387 = scalar_lea.vmem %s0, 4
  %v388 = vld [vmem:[%s387] sm:$0xf]
  %v389 = vunpack.c.l.bf16 %v388
  %v390 = vld [vmem:[#allocation2] sm:$0x3]
  %v391 = vpack.c.bf16 %v390, %v390
  %v392 = vld [vmem:[%s1] sm:$0xff]
  %v393 = vld [vmem:[%s1 + $0x8] sm:$0xff]
  %v394 = vld [vmem:[%s1 + $0x10] sm:$0xff]
  %v395 = vld [vmem:[%s1 + $0x18] sm:$0xff]
  %v396 = vld [vmem:[%s1 + $0x20] sm:$0xff]
  %v397 = vld [vmem:[%s1 + $0x28] sm:$0xff]
  %v398 = vld [vmem:[%s1 + $0x30] sm:$0xff]
  %v399 = vld [vmem:[%s1 + $0x38] sm:$0xff]
  %v400 = vld [vmem:[%s1 + $0x40] sm:$0xff]
  %v401 = vld [vmem:[%s1 + $0x48] sm:$0xff]
  %v402 = vld [vmem:[%s1 + $0x50] sm:$0xff]
  %v403 = vld [vmem:[%s1 + $0x58] sm:$0xff]
  %v404 = vld [vmem:[%s1 + $0x60] sm:$0xff]
  %v405 = vld [vmem:[%s1 + $0x68] sm:$0xff]
  %v406 = vld [vmem:[%s1 + $0x70] sm:$0xff]
  %v407 = vld [vmem:[%s1 + $0x78] sm:$0xff]
  %v408 = vld [vmem:[%s1 + $0x80] sm:$0xff]
  %v409 = vld [vmem:[%s1 + $0x88] sm:$0xff]
  %v410 = vld [vmem:[%s1 + $0x90] sm:$0xff]
  %v411 = vld [vmem:[%s1 + $0x98] sm:$0xff]
  %v412 = vld [vmem:[%s1 + $0xa0] sm:$0xff]
  %v413 = vld [vmem:[%s1 + $0xa8] sm:$0xff]
  %v414 = vld [vmem:[%s1 + $0xb0] sm:$0xff]
  %v415 = vld [vmem:[%s1 + $0xb8] sm:$0xff]
  %v416 = vld [vmem:[%s1 + $0xc0] sm:$0xff]
  %v417 = vld [vmem:[%s1 + $0xc8] sm:$0xff]
  %v418 = vld [vmem:[%s1 + $0xd0] sm:$0xff]
  %v419 = vld [vmem:[%s1 + $0xd8] sm:$0xff]
  %v420 = vld [vmem:[%s1 + $0xe0] sm:$0xff]
  %v421 = vld [vmem:[%s1 + $0xe8] sm:$0xff]
  %v422 = vld [vmem:[%s1 + $0xf0] sm:$0xff]
  %v423 = vld [vmem:[%s1 + $0xf8] sm:$0xff]
  %v456 = vunpack.c.l.b16 %v392
  %v457 = vunpack.c.h.b16 %v392
  %v458 = vunpack.c.l.b16 %v393
  %v459 = vunpack.c.h.b16 %v393
  %v460 = vunpack.c.l.b16 %v394
  %v461 = vunpack.c.h.b16 %v394
  %v462 = vunpack.c.l.b16 %v395
  %v463 = vunpack.c.h.b16 %v395
  %v464 = vunpack.c.l.b16 %v396
  %v465 = vunpack.c.h.b16 %v396
  %v466 = vunpack.c.l.b16 %v397
  %v467 = vunpack.c.h.b16 %v397
  %v468 = vunpack.c.l.b16 %v398
  %v469 = vunpack.c.h.b16 %v398
  %v470 = vunpack.c.l.b16 %v399
  %v471 = vunpack.c.h.b16 %v399
  %v472 = vunpack.c.l.b16 %v400
  %v473 = vunpack.c.h.b16 %v400
  %v474 = vunpack.c.l.b16 %v401
  %v475 = vunpack.c.h.b16 %v401
  %v476 = vunpack.c.l.b16 %v402
  %v477 = vunpack.c.h.b16 %v402
  %v478 = vunpack.c.l.b16 %v403
  %v479 = vunpack.c.h.b16 %v403
  %v480 = vunpack.c.l.b16 %v404
  %v481 = vunpack.c.h.b16 %v404
  %v482 = vunpack.c.l.b16 %v405
  %v483 = vunpack.c.h.b16 %v405
  %v484 = vunpack.c.l.b16 %v406
  %v485 = vunpack.c.h.b16 %v406
  %v486 = vunpack.c.l.b16 %v407
  %v487 = vunpack.c.h.b16 %v407
  %v488 = vunpack.c.l.b16 %v408
  %v489 = vunpack.c.h.b16 %v408
  %v490 = vunpack.c.l.b16 %v409
  %v491 = vunpack.c.h.b16 %v409
  %v492 = vunpack.c.l.b16 %v410
  %v493 = vunpack.c.h.b16 %v410
  %v494 = vunpack.c.l.b16 %v411
  %v495 = vunpack.c.h.b16 %v411
  %v496 = vunpack.c.l.b16 %v412
  %v497 = vunpack.c.h.b16 %v412
  %v498 = vunpack.c.l.b16 %v413
  %v499 = vunpack.c.h.b16 %v413
  %v500 = vunpack.c.l.b16 %v414
  %v501 = vunpack.c.h.b16 %v414
  %v502 = vunpack.c.l.b16 %v415
  %v503 = vunpack.c.h.b16 %v415
  %v504 = vunpack.c.l.b16 %v416
  %v505 = vunpack.c.h.b16 %v416
  %v506 = vunpack.c.l.b16 %v417
  %v507 = vunpack.c.h.b16 %v417
  %v508 = vunpack.c.l.b16 %v418
  %v509 = vunpack.c.h.b16 %v418
  %v510 = vunpack.c.l.b16 %v419
  %v511 = vunpack.c.h.b16 %v419
  %v512 = vunpack.c.l.b16 %v420
  %v513 = vunpack.c.h.b16 %v420
  %v514 = vunpack.c.l.b16 %v421
  %v515 = vunpack.c.h.b16 %v421
  %v516 = vunpack.c.l.b16 %v422
  %v517 = vunpack.c.h.b16 %v422
  %v518 = vunpack.c.l.b16 %v423
  %v519 = vunpack.c.h.b16 %v423
  %v520 = vpack.c.b16 %v460, %v456
  %v521 = vpack.c.b16 %v461, %v457
  %v522 = vpack.c.b16 %v462, %v458
  %v523 = vpack.c.b16 %v463, %v459
  %v524 = vpack.c.b16 %v468, %v464
  %v525 = vpack.c.b16 %v469, %v465
  %v526 = vpack.c.b16 %v470, %v466
  %v527 = vpack.c.b16 %v471, %v467
  %v528 = vpack.c.b16 %v476, %v472
  %v529 = vpack.c.b16 %v477, %v473
  %v530 = vpack.c.b16 %v478, %v474
  %v531 = vpack.c.b16 %v479, %v475
  %v532 = vpack.c.b16 %v484, %v480
  %v533 = vpack.c.b16 %v485, %v481
  %v534 = vpack.c.b16 %v486, %v482
  %v535 = vpack.c.b16 %v487, %v483
  %v536 = vpack.c.b16 %v492, %v488
  %v537 = vpack.c.b16 %v493, %v489
  %v538 = vpack.c.b16 %v494, %v490
  %v539 = vpack.c.b16 %v495, %v491
  %v540 = vpack.c.b16 %v500, %v496
  %v541 = vpack.c.b16 %v501, %v497
  %v542 = vpack.c.b16 %v502, %v498
  %v543 = vpack.c.b16 %v503, %v499
  %v544 = vpack.c.b16 %v508, %v504
  %v545 = vpack.c.b16 %v509, %v505
  %v546 = vpack.c.b16 %v510, %v506
  %v547 = vpack.c.b16 %v511, %v507
  %v548 = vpack.c.b16 %v516, %v512
  %v549 = vpack.c.b16 %v517, %v513
  %v550 = vpack.c.b16 %v518, %v514
  %v551 = vpack.c.b16 %v519, %v515
  %584 = vmatprep.subr.bf16.mxu0 %v521
  %585 = vmatpush1.bf16.msra.mxu0 %v520
  %586 = vmatprep.subr.bf16.mxu0 %v525
  %587 = vmatpush1.bf16.msra.mxu0 %v524
  %588 = vmatprep.subr.bf16.mxu0 %v529
  %589 = vmatpush1.bf16.msra.mxu0 %v528
  %590 = vmatprep.subr.bf16.mxu0 %v533
  %591 = vmatpush1.bf16.msra.mxu0 %v532
  %592 = vmatprep.subr.bf16.mxu0 %v537
  %593 = vmatpush1.bf16.msra.mxu0 %v536
  %594 = vmatprep.subr.bf16.mxu0 %v541
  %595 = vmatpush1.bf16.msra.mxu0 %v540
  %596 = vmatprep.subr.bf16.mxu0 %v545
  %597 = vmatpush1.bf16.msra.mxu0 %v544
  %598 = vmatprep.subr.bf16.mxu0 %v549
  %599 = vmatpush1.bf16.msra.mxu0 %v548
  %600 = vmatprep.subr.bf16.mxu0 0
  %601 = vmatpush1.bf16.msra.mxu0 0
  %602 = vmatprep.subr.bf16.mxu0 0
  %603 = vmatpush1.bf16.msra.mxu0 0
  %604 = vmatprep.subr.bf16.mxu0 0
  %605 = vmatpush1.bf16.msra.mxu0 0
  %606 = vmatprep.subr.bf16.mxu0 0
  %607 = vmatpush1.bf16.msra.mxu0 0
  %608 = vmatprep.subr.bf16.mxu0 0
  %609 = vmatpush1.bf16.msra.mxu0 0
  %610 = vmatprep.subr.bf16.mxu0 0
  %611 = vmatpush1.bf16.msra.mxu0 0
  %612 = vmatprep.subr.bf16.mxu0 0
  %613 = vmatpush1.bf16.msra.mxu0 0
  %614 = vmatprep.subr.bf16.mxu0 0
  %615 = vmatpush1.bf16.msra.mxu0 0
  %616 = vmatprep.mubr.bf16.mxu0 0
  %617 = vmatmul.mubr.bf16.gmra.mrb[0].mxu0 %v391
  %v618 = vpop.f32.mrb[0].mxu0
  %v619 = vadd.f32 0.0, %v618
  %v620 = vpop.f32.mrb[0].mxu0
  %v621 = vadd.f32 0.0, %v620
  %v622 = vpop.f32.mrb[0].mxu0
  %v623 = vpop.f32.mrb[0].mxu0
  %624 = vdwg.mxu0
  %625 = vmatprep.subr.bf16.mxu0 %v523
  %626 = vmatpush1.bf16.msra.mxu0 %v522
  %627 = vmatprep.subr.bf16.mxu0 %v527
  %628 = vmatpush1.bf16.msra.mxu0 %v526
  %629 = vmatprep.subr.bf16.mxu0 %v531
  %630 = vmatpush1.bf16.msra.mxu0 %v530
  %631 = vmatprep.subr.bf16.mxu0 %v535
  %632 = vmatpush1.bf16.msra.mxu0 %v534
  %633 = vmatprep.subr.bf16.mxu0 %v539
  %634 = vmatpush1.bf16.msra.mxu0 %v538
  %635 = vmatprep.subr.bf16.mxu0 %v543
  %636 = vmatpush1.bf16.msra.mxu0 %v542
  %637 = vmatprep.subr.bf16.mxu0 %v547
  %638 = vmatpush1.bf16.msra.mxu0 %v546
  %639 = vmatprep.subr.bf16.mxu0 %v551
  %640 = vmatpush1.bf16.msra.mxu0 %v550
  %641 = vmatprep.subr.bf16.mxu0 0
  %642 = vmatpush1.bf16.msra.mxu0 0
  %643 = vmatprep.subr.bf16.mxu0 0
  %644 = vmatpush1.bf16.msra.mxu0 0
  %645 = vmatprep.subr.bf16.mxu0 0
  %646 = vmatpush1.bf16.msra.mxu0 0
  %647 = vmatprep.subr.bf16.mxu0 0
  %648 = vmatpush1.bf16.msra.mxu0 0
  %649 = vmatprep.subr.bf16.mxu0 0
  %650 = vmatpush1.bf16.msra.mxu0 0
  %651 = vmatprep.subr.bf16.mxu0 0
  %652 = vmatpush1.bf16.msra.mxu0 0
  %653 = vmatprep.subr.bf16.mxu0 0
  %654 = vmatpush1.bf16.msra.mxu0 0
  %655 = vmatprep.subr.bf16.mxu0 0
  %656 = vmatpush1.bf16.msra.mxu0 0
  %657 = vmatprep.mubr.bf16.mxu0 0
  %658 = vmatmul.mubr.bf16.gmra.mrb[0].mxu0 %v391
  %v659 = vpop.f32.mrb[0].mxu0
  %v660 = vadd.f32 0.0, %v659
  %v661 = vpop.f32.mrb[0].mxu0
  %v662 = vadd.f32 0.0, %v661
  %v663 = vpop.f32.mrb[0].mxu0
  %v664 = vpop.f32.mrb[0].mxu0
  %665 = vdwg.mxu0
  %v670 = vcombine.low %v619, %v621
  %v671 = vcombine.low %v660, %v662
  %v673 = vunpack.c.l.s4 1983009808
  %v674 = vunpack.c.0.s8 %v673
  %v675 = vlaneseq
  %v676 = vshrl.u32 %v675, 7
  %v677 = vsub.s32 %v674, %v676
  %v678 = vrot.slane %v670, %v677
  %v680 = vunpack.c.l.s4 1983009808
  %v681 = vunpack.c.0.s8 %v680
  %v682 = vlaneseq
  %v683 = vshrl.u32 %v682, 7
  %v684 = vsub.s32 %v681, %v683
  %v685 = vrot.slane %v671, %v684
  %v686 = vcombine.low %v678, %v685
  %v688 = vadd.f32 %v389, %v686
  %v689 = vtanh.pop %v688
  %v691 = vrot.slane %v688, 4
  %v693 = vxor.u32 %v691, 2147483648
  %v694 = vmul.f32 %v693, 1.442695
  %v695 = vpow.pop %v694
  %v696 = vadd.f32 %v695, 1.0
  %v697 = vrcp.pop %v696
  %v698 = vmul.f32 1.0, %v697
  %v699 = vrot.slane %v688, 6
  %v701 = vxor.u32 %v699, 2147483648
  %v702 = vmul.f32 %v701, 1.442695
  %v703 = vpow.pop %v702
  %v704 = vadd.f32 %v703, 1.0
  %v705 = vrcp.pop %v704
  %v706 = vmul.f32 1.0, %v705
  %v707 = vsub.f32 0.0, %v691
  %v708 = vmax.f32 %v707, 0.0
  %vm709 = vcmp.ne.f32.partialorder %v707, %v707
  %v710 = vadd.f32 %v707, 0.0
  %v711 = vand.u32 2147483647, %v707
  %v712 = vsub.f32 0.0, %v711
  %v713 = vmul.f32 %v712, 1.442695
  %v714 = vpow.pop %v713
  %v715 = vadd.f32 %v714, 1.0
  %v716 = vlog2.pop %v715
  %v717 = vmul.f32 %v716, 0.6931472
  %v718 = vmul.f32 -0.5, %v714
  %v719 = vadd.f32 %v718, 1.0
  %v720 = vmul.f32 %v719, %v714
  %v721 = vand.u32 2147483647, %v714
  %vm722 = vcmp.lt.f32.partialorder %v721, 0.0004427343
  %v723 = vsel %vm722, %v720, %v717
  %v724 = vadd.f32 %v708, %v723
  %v725 = vsel %vm709, %v710, %v724
  %v726 = vsub.f32 0.0, %v725
  %v727 = vld [vmem:[#allocation5] sm:$0x3]
  %v728 = vadd.f32 %v726, %v727
  %v729 = vrot.slane %v688, 2
  %v731 = vmax.f32 %v728, %v729
  %v732 = vsub.f32 %v729, %v731
  %v733 = vmul.f32 %v732, 1.442695
  %v734 = vpow.pop %v733
  %v735 = vld [vmem:[#allocation3] sm:$0x3]
  %v736 = vmul.f32 %v698, %v735
  %v737 = vmul.f32 %v734, %v689
  %v738 = vadd.f32 %v736, %v737
  %v739 = vld [vmem:[#allocation4] sm:$0x3]
  %v740 = vmul.f32 %v698, %v739
  %v741 = vadd.f32 %v740, %v734
  %v742 = vrcp.pop %v741
  %v743 = vmul.f32 %v738, %v742
  %v744 = vmul.f32 %v706, %v743
  %745 = vst [vmem:[#allocation2] sm:$0x3] %v744
  %746 = vst [vmem:[#allocation3] sm:$0x3] %v738
  %747 = vst [vmem:[#allocation4] sm:$0x3] %v741
  %748 = vst [vmem:[#allocation5] sm:$0x3] %v731
  %s749 = scalar_lea.vmem %s2, 2
  %750 = vst [vmem:[%s749] sm:$0x3] %v744
  %s751 = scalar_lea.vmem %s3, 2
  %752 = vst [vmem:[%s751] sm:$0x3] %v738
  %s753 = scalar_lea.vmem %s4, 2
  %754 = vst [vmem:[%s753] sm:$0x3] %v741
  %s755 = scalar_lea.vmem %s0, 8
  %v756 = vld [vmem:[%s755] sm:$0xf]
  %v757 = vunpack.c.l.bf16 %v756
  %v758 = vld [vmem:[#allocation2] sm:$0x3]
  %v759 = vpack.c.bf16 %v758, %v758
  %v760 = vld [vmem:[%s1] sm:$0xff]
  %v761 = vld [vmem:[%s1 + $0x8] sm:$0xff]
  %v762 = vld [vmem:[%s1 + $0x10] sm:$0xff]
  %v763 = vld [vmem:[%s1 + $0x18] sm:$0xff]
  %v764 = vld [vmem:[%s1 + $0x20] sm:$0xff]
  %v765 = vld [vmem:[%s1 + $0x28] sm:$0xff]
  %v766 = vld [vmem:[%s1 + $0x30] sm:$0xff]
  %v767 = vld [vmem:[%s1 + $0x38] sm:$0xff]
  %v768 = vld [vmem:[%s1 + $0x40] sm:$0xff]
  %v769 = vld [vmem:[%s1 + $0x48] sm:$0xff]
  %v770 = vld [vmem:[%s1 + $0x50] sm:$0xff]
  %v771 = vld [vmem:[%s1 + $0x58] sm:$0xff]
  %v772 = vld [vmem:[%s1 + $0x60] sm:$0xff]
  %v773 = vld [vmem:[%s1 + $0x68] sm:$0xff]
  %v774 = vld [vmem:[%s1 + $0x70] sm:$0xff]
  %v775 = vld [vmem:[%s1 + $0x78] sm:$0xff]
  %v776 = vld [vmem:[%s1 + $0x80] sm:$0xff]
  %v777 = vld [vmem:[%s1 + $0x88] sm:$0xff]
  %v778 = vld [vmem:[%s1 + $0x90] sm:$0xff]
  %v779 = vld [vmem:[%s1 + $0x98] sm:$0xff]
  %v780 = vld [vmem:[%s1 + $0xa0] sm:$0xff]
  %v781 = vld [vmem:[%s1 + $0xa8] sm:$0xff]
  %v782 = vld [vmem:[%s1 + $0xb0] sm:$0xff]
  %v783 = vld [vmem:[%s1 + $0xb8] sm:$0xff]
  %v784 = vld [vmem:[%s1 + $0xc0] sm:$0xff]
  %v785 = vld [vmem:[%s1 + $0xc8] sm:$0xff]
  %v786 = vld [vmem:[%s1 + $0xd0] sm:$0xff]
  %v787 = vld [vmem:[%s1 + $0xd8] sm:$0xff]
  %v788 = vld [vmem:[%s1 + $0xe0] sm:$0xff]
  %v789 = vld [vmem:[%s1 + $0xe8] sm:$0xff]
  %v790 = vld [vmem:[%s1 + $0xf0] sm:$0xff]
  %v791 = vld [vmem:[%s1 + $0xf8] sm:$0xff]
  %v824 = vunpack.c.l.b16 %v760
  %v825 = vunpack.c.h.b16 %v760
  %v826 = vunpack.c.l.b16 %v761
  %v827 = vunpack.c.h.b16 %v761
  %v828 = vunpack.c.l.b16 %v762
  %v829 = vunpack.c.h.b16 %v762
  %v830 = vunpack.c.l.b16 %v763
  %v831 = vunpack.c.h.b16 %v763
  %v832 = vunpack.c.l.b16 %v764
  %v833 = vunpack.c.h.b16 %v764
  %v834 = vunpack.c.l.b16 %v765
  %v835 = vunpack.c.h.b16 %v765
  %v836 = vunpack.c.l.b16 %v766
  %v837 = vunpack.c.h.b16 %v766
  %v838 = vunpack.c.l.b16 %v767
  %v839 = vunpack.c.h.b16 %v767
  %v840 = vunpack.c.l.b16 %v768
  %v841 = vunpack.c.h.b16 %v768
  %v842 = vunpack.c.l.b16 %v769
  %v843 = vunpack.c.h.b16 %v769
  %v844 = vunpack.c.l.b16 %v770
  %v845 = vunpack.c.h.b16 %v770
  %v846 = vunpack.c.l.b16 %v771
  %v847 = vunpack.c.h.b16 %v771
  %v848 = vunpack.c.l.b16 %v772
  %v849 = vunpack.c.h.b16 %v772
  %v850 = vunpack.c.l.b16 %v773
  %v851 = vunpack.c.h.b16 %v773
  %v852 = vunpack.c.l.b16 %v774
  %v853 = vunpack.c.h.b16 %v774
  %v854 = vunpack.c.l.b16 %v775
  %v855 = vunpack.c.h.b16 %v775
  %v856 = vunpack.c.l.b16 %v776
  %v857 = vunpack.c.h.b16 %v776
  %v858 = vunpack.c.l.b16 %v777
  %v859 = vunpack.c.h.b16 %v777
  %v860 = vunpack.c.l.b16 %v778
  %v861 = vunpack.c.h.b16 %v778
  %v862 = vunpack.c.l.b16 %v779
  %v863 = vunpack.c.h.b16 %v779
  %v864 = vunpack.c.l.b16 %v780
  %v865 = vunpack.c.h.b16 %v780
  %v866 = vunpack.c.l.b16 %v781
  %v867 = vunpack.c.h.b16 %v781
  %v868 = vunpack.c.l.b16 %v782
  %v869 = vunpack.c.h.b16 %v782
  %v870 = vunpack.c.l.b16 %v783
  %v871 = vunpack.c.h.b16 %v783
  %v872 = vunpack.c.l.b16 %v784
  %v873 = vunpack.c.h.b16 %v784
  %v874 = vunpack.c.l.b16 %v785
  %v875 = vunpack.c.h.b16 %v785
  %v876 = vunpack.c.l.b16 %v786
  %v877 = vunpack.c.h.b16 %v786
  %v878 = vunpack.c.l.b16 %v787
  %v879 = vunpack.c.h.b16 %v787
  %v880 = vunpack.c.l.b16 %v788
  %v881 = vunpack.c.h.b16 %v788
  %v882 = vunpack.c.l.b16 %v789
  %v883 = vunpack.c.h.b16 %v789
  %v884 = vunpack.c.l.b16 %v790
  %v885 = vunpack.c.h.b16 %v790
  %v886 = vunpack.c.l.b16 %v791
  %v887 = vunpack.c.h.b16 %v791
  %v888 = vpack.c.b16 %v828, %v824
  %v889 = vpack.c.b16 %v829, %v825
  %v890 = vpack.c.b16 %v830, %v826
  %v891 = vpack.c.b16 %v831, %v827
  %v892 = vpack.c.b16 %v836, %v832
  %v893 = vpack.c.b16 %v837, %v833
  %v894 = vpack.c.b16 %v838, %v834
  %v895 = vpack.c.b16 %v839, %v835
  %v896 = vpack.c.b16 %v844, %v840
  %v897 = vpack.c.b16 %v845, %v841
  %v898 = vpack.c.b16 %v846, %v842
  %v899 = vpack.c.b16 %v847, %v843
  %v900 = vpack.c.b16 %v852, %v848
  %v901 = vpack.c.b16 %v853, %v849
  %v902 = vpack.c.b16 %v854, %v850
  %v903 = vpack.c.b16 %v855, %v851
  %v904 = vpack.c.b16 %v860, %v856
  %v905 = vpack.c.b16 %v861, %v857
  %v906 = vpack.c.b16 %v862, %v858
  %v907 = vpack.c.b16 %v863, %v859
  %v908 = vpack.c.b16 %v868, %v864
  %v909 = vpack.c.b16 %v869, %v865
  %v910 = vpack.c.b16 %v870, %v866
  %v911 = vpack.c.b16 %v871, %v867
  %v912 = vpack.c.b16 %v876, %v872
  %v913 = vpack.c.b16 %v877, %v873
  %v914 = vpack.c.b16 %v878, %v874
  %v915 = vpack.c.b16 %v879, %v875
  %v916 = vpack.c.b16 %v884, %v880
  %v917 = vpack.c.b16 %v885, %v881
  %v918 = vpack.c.b16 %v886, %v882
  %v919 = vpack.c.b16 %v887, %v883
  %952 = vmatprep.subr.bf16.mxu0 %v889
  %953 = vmatpush1.bf16.msra.mxu0 %v888
  %954 = vmatprep.subr.bf16.mxu0 %v893
  %955 = vmatpush1.bf16.msra.mxu0 %v892
  %956 = vmatprep.subr.bf16.mxu0 %v897
  %957 = vmatpush1.bf16.msra.mxu0 %v896
  %958 = vmatprep.subr.bf16.mxu0 %v901
  %959 = vmatpush1.bf16.msra.mxu0 %v900
  %960 = vmatprep.subr.bf16.mxu0 %v905
  %961 = vmatpush1.bf16.msra.mxu0 %v904
  %962 = vmatprep.subr.bf16.mxu0 %v909
  %963 = vmatpush1.bf16.msra.mxu0 %v908
  %964 = vmatprep.subr.bf16.mxu0 %v913
  %965 = vmatpush1.bf16.msra.mxu0 %v912
  %966 = vmatprep.subr.bf16.mxu0 %v917
  %967 = vmatpush1.bf16.msra.mxu0 %v916
  %968 = vmatprep.subr.bf16.mxu0 0
  %969 = vmatpush1.bf16.msra.mxu0 0
  %970 = vmatprep.subr.bf16.mxu0 0
  %971 = vmatpush1.bf16.msra.mxu0 0
  %972 = vmatprep.subr.bf16.mxu0 0
  %973 = vmatpush1.bf16.msra.mxu0 0
  %974 = vmatprep.subr.bf16.mxu0 0
  %975 = vmatpush1.bf16.msra.mxu0 0
  %976 = vmatprep.subr.bf16.mxu0 0
  %977 = vmatpush1.bf16.msra.mxu0 0
  %978 = vmatprep.subr.bf16.mxu0 0
  %979 = vmatpush1.bf16.msra.mxu0 0
  %980 = vmatprep.subr.bf16.mxu0 0
  %981 = vmatpush1.bf16.msra.mxu0 0
  %982 = vmatprep.subr.bf16.mxu0 0
  %983 = vmatpush1.bf16.msra.mxu0 0
  %984 = vmatprep.mubr.bf16.mxu0 0
  %985 = vmatmul.mubr.bf16.gmra.mrb[0].mxu0 %v759
  %v986 = vpop.f32.mrb[0].mxu0
  %v987 = vadd.f32 0.0, %v986
  %v988 = vpop.f32.mrb[0].mxu0
  %v989 = vadd.f32 0.0, %v988
  %v990 = vpop.f32.mrb[0].mxu0
  %v991 = vpop.f32.mrb[0].mxu0
  %992 = vdwg.mxu0
  %993 = vmatprep.subr.bf16.mxu0 %v891
  %994 = vmatpush1.bf16.msra.mxu0 %v890
  %995 = vmatprep.subr.bf16.mxu0 %v895
  %996 = vmatpush1.bf16.msra.mxu0 %v894
  %997 = vmatprep.subr.bf16.mxu0 %v899
  %998 = vmatpush1.bf16.msra.mxu0 %v898
  %999 = vmatprep.subr.bf16.mxu0 %v903
  %1000 = vmatpush1.bf16.msra.mxu0 %v902
  %1001 = vmatprep.subr.bf16.mxu0 %v907
  %1002 = vmatpush1.bf16.msra.mxu0 %v906
  %1003 = vmatprep.subr.bf16.mxu0 %v911
  %1004 = vmatpush1.bf16.msra.mxu0 %v910
  %1005 = vmatprep.subr.bf16.mxu0 %v915
  %1006 = vmatpush1.bf16.msra.mxu0 %v914
  %1007 = vmatprep.subr.bf16.mxu0 %v919
  %1008 = vmatpush1.bf16.msra.mxu0 %v918
  %1009 = vmatprep.subr.bf16.mxu0 0
  %1010 = vmatpush1.bf16.msra.mxu0 0
  %1011 = vmatprep.subr.bf16.mxu0 0
  %1012 = vmatpush1.bf16.msra.mxu0 0
  %1013 = vmatprep.subr.bf16.mxu0 0
  %1014 = vmatpush1.bf16.msra.mxu0 0
  %1015 = vmatprep.subr.bf16.mxu0 0
  %1016 = vmatpush1.bf16.msra.mxu0 0
  %1017 = vmatprep.subr.bf16.mxu0 0
  %1018 = vmatpush1.bf16.msra.mxu0 0
  %1019 = vmatprep.subr.bf16.mxu0 0
  %1020 = vmatpush1.bf16.msra.mxu0 0
  %1021 = vmatprep.subr.bf16.mxu0 0
  %1022 = vmatpush1.bf16.msra.mxu0 0
  %1023 = vmatprep.subr.bf16.mxu0 0
  %1024 = vmatpush1.bf16.msra.mxu0 0
  %1025 = vmatprep.mubr.bf16.mxu0 0
  %1026 = vmatmul.mubr.bf16.gmra.mrb[0].mxu0 %v759
  %v1027 = vpop.f32.mrb[0].mxu0
  %v1028 = vadd.f32 0.0, %v1027
  %v1029 = vpop.f32.mrb[0].mxu0
  %v1030 = vadd.f32 0.0, %v1029
  %v1031 = vpop.f32.mrb[0].mxu0
  %v1032 = vpop.f32.mrb[0].mxu0
  %1033 = vdwg.mxu0
  %v1038 = vcombine.low %v987, %v989
  %v1039 = vcombine.low %v1028, %v1030
  %v1041 = vunpack.c.l.s4 1983009808
  %v1042 = vunpack.c.0.s8 %v1041
  %v1043 = vlaneseq
  %v1044 = vshrl.u32 %v1043, 7
  %v1045 = vsub.s32 %v1042, %v1044
  %v1046 = vrot.slane %v1038, %v1045
  %v1048 = vunpack.c.l.s4 1983009808
  %v1049 = vunpack.c.0.s8 %v1048
  %v1050 = vlaneseq
  %v1051 = vshrl.u32 %v1050, 7
  %v1052 = vsub.s32 %v1049, %v1051
  %v1053 = vrot.slane %v1039, %v1052
  %v1054 = vcombine.low %v1046, %v1053
  %v1056 = vadd.f32 %v757, %v1054
  %v1057 = vtanh.pop %v1056
  %v1059 = vrot.slane %v1056, 4
  %v1061 = vxor.u32 %v1059, 2147483648
  %v1062 = vmul.f32 %v1061, 1.442695
  %v1063 = vpow.pop %v1062
  %v1064 = vadd.f32 %v1063, 1.0
  %v1065 = vrcp.pop %v1064
  %v1066 = vmul.f32 1.0, %v1065
  %v1067 = vrot.slane %v1056, 6
  %v1069 = vxor.u32 %v1067, 2147483648
  %v1070 = vmul.f32 %v1069, 1.442695
  %v1071 = vpow.pop %v1070
  %v1072 = vadd.f32 %v1071, 1.0
  %v1073 = vrcp.pop %v1072
  %v1074 = vmul.f32 1.0, %v1073
  %v1075 = vsub.f32 0.0, %v1059
  %v1076 = vmax.f32 %v1075, 0.0
  %vm1077 = vcmp.ne.f32.partialorder %v1075, %v1075
  %v1078 = vadd.f32 %v1075, 0.0
  %v1079 = vand.u32 2147483647, %v1075
  %v1080 = vsub.f32 0.0, %v1079
  %v1081 = vmul.f32 %v1080, 1.442695
  %v1082 = vpow.pop %v1081
  %v1083 = vadd.f32 %v1082, 1.0
  %v1084 = vlog2.pop %v1083
  %v1085 = vmul.f32 %v1084, 0.6931472
  %v1086 = vmul.f32 -0.5, %v1082
  %v1087 = vadd.f32 %v1086, 1.0
  %v1088 = vmul.f32 %v1087, %v1082
  %v1089 = vand.u32 2147483647, %v1082
  %vm1090 = vcmp.lt.f32.partialorder %v1089, 0.0004427343
  %v1091 = vsel %vm1090, %v1088, %v1085
  %v1092 = vadd.f32 %v1076, %v1091
  %v1093 = vsel %vm1077, %v1078, %v1092
  %v1094 = vsub.f32 0.0, %v1093
  %v1095 = vld [vmem:[#allocation5] sm:$0x3]
  %v1096 = vadd.f32 %v1094, %v1095
  %v1097 = vrot.slane %v1056, 2
  %v1099 = vmax.f32 %v1096, %v1097
  %v1100 = vsub.f32 %v1097, %v1099
  %v1101 = vmul.f32 %v1100, 1.442695
  %v1102 = vpow.pop %v1101
  %v1103 = vld [vmem:[#allocation3] sm:$0x3]
  %v1104 = vmul.f32 %v1066, %v1103
  %v1105 = vmul.f32 %v1102, %v1057
  %v1106 = vadd.f32 %v1104, %v1105
  %v1107 = vld [vmem:[#allocation4] sm:$0x3]
  %v1108 = vmul.f32 %v1066, %v1107
  %v1109 = vadd.f32 %v1108, %v1102
  %v1110 = vrcp.pop %v1109
  %v1111 = vmul.f32 %v1106, %v1110
  %v1112 = vmul.f32 %v1074, %v1111
  %1113 = vst [vmem:[#allocation2] sm:$0x3] %v1112
  %1114 = vst [vmem:[#allocation3] sm:$0x3] %v1106
  %1115 = vst [vmem:[#allocation4] sm:$0x3] %v1109
  %1116 = vst [vmem:[#allocation5] sm:$0x3] %v1099
  %s1117 = scalar_lea.vmem %s2, 4
  %1118 = vst [vmem:[%s1117] sm:$0x3] %v1112
  %s1119 = scalar_lea.vmem %s3, 4
  %1120 = vst [vmem:[%s1119] sm:$0x3] %v1106
  %s1121 = scalar_lea.vmem %s4, 4
  %1122 = vst [vmem:[%s1121] sm:$0x3] %v1109
  %s1123 = scalar_lea.vmem %s0, 12
  %v1124 = vld [vmem:[%s1123] sm:$0xf]
  %v1125 = vunpack.c.l.bf16 %v1124
  %v1126 = vld [vmem:[#allocation2] sm:$0x3]
  %v1127 = vpack.c.bf16 %v1126, %v1126
  %v1128 = vld [vmem:[%s1] sm:$0xff]
  %v1129 = vld [vmem:[%s1 + $0x8] sm:$0xff]
  %v1130 = vld [vmem:[%s1 + $0x10] sm:$0xff]
  %v1131 = vld [vmem:[%s1 + $0x18] sm:$0xff]
  %v1132 = vld [vmem:[%s1 + $0x20] sm:$0xff]
  %v1133 = vld [vmem:[%s1 + $0x28] sm:$0xff]
  %v1134 = vld [vmem:[%s1 + $0x30] sm:$0xff]
  %v1135 = vld [vmem:[%s1 + $0x38] sm:$0xff]
  %v1136 = vld [vmem:[%s1 + $0x40] sm:$0xff]
  %v1137 = vld [vmem:[%s1 + $0x48] sm:$0xff]
  %v1138 = vld [vmem:[%s1 + $0x50] sm:$0xff]
  %v1139 = vld [vmem:[%s1 + $0x58] sm:$0xff]
  %v1140 = vld [vmem:[%s1 + $0x60] sm:$0xff]
  %v1141 = vld [vmem:[%s1 + $0x68] sm:$0xff]
  %v1142 = vld [vmem:[%s1 + $0x70] sm:$0xff]
  %v1143 = vld [vmem:[%s1 + $0x78] sm:$0xff]
  %v1144 = vld [vmem:[%s1 + $0x80] sm:$0xff]
  %v1145 = vld [vmem:[%s1 + $0x88] sm:$0xff]
  %v1146 = vld [vmem:[%s1 + $0x90] sm:$0xff]
  %v1147 = vld [vmem:[%s1 + $0x98] sm:$0xff]
  %v1148 = vld [vmem:[%s1 + $0xa0] sm:$0xff]
  %v1149 = vld [vmem:[%s1 + $0xa8] sm:$0xff]
  %v1150 = vld [vmem:[%s1 + $0xb0] sm:$0xff]
  %v1151 = vld [vmem:[%s1 + $0xb8] sm:$0xff]
  %v1152 = vld [vmem:[%s1 + $0xc0] sm:$0xff]
  %v1153 = vld [vmem:[%s1 + $0xc8] sm:$0xff]
  %v1154 = vld [vmem:[%s1 + $0xd0] sm:$0xff]
  %v1155 = vld [vmem:[%s1 + $0xd8] sm:$0xff]
  %v1156 = vld [vmem:[%s1 + $0xe0] sm:$0xff]
  %v1157 = vld [vmem:[%s1 + $0xe8] sm:$0xff]
  %v1158 = vld [vmem:[%s1 + $0xf0] sm:$0xff]
  %v1159 = vld [vmem:[%s1 + $0xf8] sm:$0xff]
  %v1192 = vunpack.c.l.b16 %v1128
  %v1193 = vunpack.c.h.b16 %v1128
  %v1194 = vunpack.c.l.b16 %v1129
  %v1195 = vunpack.c.h.b16 %v1129
  %v1196 = vunpack.c.l.b16 %v1130
  %v1197 = vunpack.c.h.b16 %v1130
  %v1198 = vunpack.c.l.b16 %v1131
  %v1199 = vunpack.c.h.b16 %v1131
  %v1200 = vunpack.c.l.b16 %v1132
  %v1201 = vunpack.c.h.b16 %v1132
  %v1202 = vunpack.c.l.b16 %v1133
  %v1203 = vunpack.c.h.b16 %v1133
  %v1204 = vunpack.c.l.b16 %v1134
  %v1205 = vunpack.c.h.b16 %v1134
  %v1206 = vunpack.c.l.b16 %v1135
  %v1207 = vunpack.c.h.b16 %v1135
  %v1208 = vunpack.c.l.b16 %v1136
  %v1209 = vunpack.c.h.b16 %v1136
  %v1210 = vunpack.c.l.b16 %v1137
  %v1211 = vunpack.c.h.b16 %v1137
  %v1212 = vunpack.c.l.b16 %v1138
  %v1213 = vunpack.c.h.b16 %v1138
  %v1214 = vunpack.c.l.b16 %v1139
  %v1215 = vunpack.c.h.b16 %v1139
  %v1216 = vunpack.c.l.b16 %v1140
  %v1217 = vunpack.c.h.b16 %v1140
  %v1218 = vunpack.c.l.b16 %v1141
  %v1219 = vunpack.c.h.b16 %v1141
  %v1220 = vunpack.c.l.b16 %v1142
  %v1221 = vunpack.c.h.b16 %v1142
  %v1222 = vunpack.c.l.b16 %v1143
  %v1223 = vunpack.c.h.b16 %v1143
  %v1224 = vunpack.c.l.b16 %v1144
  %v1225 = vunpack.c.h.b16 %v1144
  %v1226 = vunpack.c.l.b16 %v1145
  %v1227 = vunpack.c.h.b16 %v1145
  %v1228 = vunpack.c.l.b16 %v1146
  %v1229 = vunpack.c.h.b16 %v1146
  %v1230 = vunpack.c.l.b16 %v1147
  %v1231 = vunpack.c.h.b16 %v1147
  %v1232 = vunpack.c.l.b16 %v1148
  %v1233 = vunpack.c.h.b16 %v1148
  %v1234 = vunpack.c.l.b16 %v1149
  %v1235 = vunpack.c.h.b16 %v1149
  %v1236 = vunpack.c.l.b16 %v1150
  %v1237 = vunpack.c.h.b16 %v1150
  %v1238 = vunpack.c.l.b16 %v1151
  %v1239 = vunpack.c.h.b16 %v1151
  %v1240 = vunpack.c.l.b16 %v1152
  %v1241 = vunpack.c.h.b16 %v1152
  %v1242 = vunpack.c.l.b16 %v1153
  %v1243 = vunpack.c.h.b16 %v1153
  %v1244 = vunpack.c.l.b16 %v1154
  %v1245 = vunpack.c.h.b16 %v1154
  %v1246 = vunpack.c.l.b16 %v1155
  %v1247 = vunpack.c.h.b16 %v1155
  %v1248 = vunpack.c.l.b16 %v1156
  %v1249 = vunpack.c.h.b16 %v1156
  %v1250 = vunpack.c.l.b16 %v1157
  %v1251 = vunpack.c.h.b16 %v1157
  %v1252 = vunpack.c.l.b16 %v1158
  %v1253 = vunpack.c.h.b16 %v1158
  %v1254 = vunpack.c.l.b16 %v1159
  %v1255 = vunpack.c.h.b16 %v1159
  %v1256 = vpack.c.b16 %v1196, %v1192
  %v1257 = vpack.c.b16 %v1197, %v1193
  %v1258 = vpack.c.b16 %v1198, %v1194
  %v1259 = vpack.c.b16 %v1199, %v1195
  %v1260 = vpack.c.b16 %v1204, %v1200
  %v1261 = vpack.c.b16 %v1205, %v1201
  %v1262 = vpack.c.b16 %v1206, %v1202
  %v1263 = vpack.c.b16 %v1207, %v1203
  %v1264 = vpack.c.b16 %v1212, %v1208
  %v1265 = vpack.c.b16 %v1213, %v1209
  %v1266 = vpack.c.b16 %v1214, %v1210
  %v1267 = vpack.c.b16 %v1215, %v1211
  %v1268 = vpack.c.b16 %v1220, %v1216
  %v1269 = vpack.c.b16 %v1221, %v1217
  %v1270 = vpack.c.b16 %v1222, %v1218
  %v1271 = vpack.c.b16 %v1223, %v1219
  %v1272 = vpack.c.b16 %v1228, %v1224
  %v1273 = vpack.c.b16 %v1229, %v1225
  %v1274 = vpack.c.b16 %v1230, %v1226
  %v1275 = vpack.c.b16 %v1231, %v1227
  %v1276 = vpack.c.b16 %v1236, %v1232
  %v1277 = vpack.c.b16 %v1237, %v1233
  %v1278 = vpack.c.b16 %v1238, %v1234
  %v1279 = vpack.c.b16 %v1239, %v1235
  %v1280 = vpack.c.b16 %v1244, %v1240
  %v1281 = vpack.c.b16 %v1245, %v1241
  %v1282 = vpack.c.b16 %v1246, %v1242
  %v1283 = vpack.c.b16 %v1247, %v1243
  %v1284 = vpack.c.b16 %v1252, %v1248
  %v1285 = vpack.c.b16 %v1253, %v1249
  %v1286 = vpack.c.b16 %v1254, %v1250
  %v1287 = vpack.c.b16 %v1255, %v1251
  %1320 = vmatprep.subr.bf16.mxu0 %v1257
  %1321 = vmatpush1.bf16.msra.mxu0 %v1256
  %1322 = vmatprep.subr.bf16.mxu0 %v1261
  %1323 = vmatpush1.bf16.msra.mxu0 %v1260
  %1324 = vmatprep.subr.bf16.mxu0 %v1265
  %1325 = vmatpush1.bf16.msra.mxu0 %v1264
  %1326 = vmatprep.subr.bf16.mxu0 %v1269
  %1327 = vmatpush1.bf16.msra.mxu0 %v1268
  %1328 = vmatprep.subr.bf16.mxu0 %v1273
  %1329 = vmatpush1.bf16.msra.mxu0 %v1272
  %1330 = vmatprep.subr.bf16.mxu0 %v1277
  %1331 = vmatpush1.bf16.msra.mxu0 %v1276
  %1332 = vmatprep.subr.bf16.mxu0 %v1281
  %1333 = vmatpush1.bf16.msra.mxu0 %v1280
  %1334 = vmatprep.subr.bf16.mxu0 %v1285
  %1335 = vmatpush1.bf16.msra.mxu0 %v1284
  %1336 = vmatprep.subr.bf16.mxu0 0
  %1337 = vmatpush1.bf16.msra.mxu0 0
  %1338 = vmatprep.subr.bf16.mxu0 0
  %1339 = vmatpush1.bf16.msra.mxu0 0
  %1340 = vmatprep.subr.bf16.mxu0 0
  %1341 = vmatpush1.bf16.msra.mxu0 0
  %1342 = vmatprep.subr.bf16.mxu0 0
  %1343 = vmatpush1.bf16.msra.mxu0 0
  %1344 = vmatprep.subr.bf16.mxu0 0
  %1345 = vmatpush1.bf16.msra.mxu0 0
  %1346 = vmatprep.subr.bf16.mxu0 0
  %1347 = vmatpush1.bf16.msra.mxu0 0
  %1348 = vmatprep.subr.bf16.mxu0 0
  %1349 = vmatpush1.bf16.msra.mxu0 0
  %1350 = vmatprep.subr.bf16.mxu0 0
  %1351 = vmatpush1.bf16.msra.mxu0 0
  %1352 = vmatprep.mubr.bf16.mxu0 0
  %1353 = vmatmul.mubr.bf16.gmra.mrb[0].mxu0 %v1127
  %v1354 = vpop.f32.mrb[0].mxu0
  %v1355 = vadd.f32 0.0, %v1354
  %v1356 = vpop.f32.mrb[0].mxu0
  %v1357 = vadd.f32 0.0, %v1356
  %v1358 = vpop.f32.mrb[0].mxu0
  %v1359 = vpop.f32.mrb[0].mxu0
  %1360 = vdwg.mxu0
  %1361 = vmatprep.subr.bf16.mxu0 %v1259
  %1362 = vmatpush1.bf16.msra.mxu0 %v1258
  %1363 = vmatprep.subr.bf16.mxu0 %v1263
  %1364 = vmatpush1.bf16.msra.mxu0 %v1262
  %1365 = vmatprep.subr.bf16.mxu0 %v1267
  %1366 = vmatpush1.bf16.msra.mxu0 %v1266
  %1367 = vmatprep.subr.bf16.mxu0 %v1271
  %1368 = vmatpush1.bf16.msra.mxu0 %v1270
  %1369 = vmatprep.subr.bf16.mxu0 %v1275
  %1370 = vmatpush1.bf16.msra.mxu0 %v1274
  %1371 = vmatprep.subr.bf16.mxu0 %v1279
  %1372 = vmatpush1.bf16.msra.mxu0 %v1278
  %1373 = vmatprep.subr.bf16.mxu0 %v1283
  %1374 = vmatpush1.bf16.msra.mxu0 %v1282
  %1375 = vmatprep.subr.bf16.mxu0 %v1287
  %1376 = vmatpush1.bf16.msra.mxu0 %v1286
  %1377 = vmatprep.subr.bf16.mxu0 0
  %1378 = vmatpush1.bf16.msra.mxu0 0
  %1379 = vmatprep.subr.bf16.mxu0 0
  %1380 = vmatpush1.bf16.msra.mxu0 0
  %1381 = vmatprep.subr.bf16.mxu0 0
  %1382 = vmatpush1.bf16.msra.mxu0 0
  %1383 = vmatprep.subr.bf16.mxu0 0
  %1384 = vmatpush1.bf16.msra.mxu0 0
  %1385 = vmatprep.subr.bf16.mxu0 0
  %1386 = vmatpush1.bf16.msra.mxu0 0
  %1387 = vmatprep.subr.bf16.mxu0 0
  %1388 = vmatpush1.bf16.msra.mxu0 0
  %1389 = vmatprep.subr.bf16.mxu0 0
  %1390 = vmatpush1.bf16.msra.mxu0 0
  %1391 = vmatprep.subr.bf16.mxu0 0
  %1392 = vmatpush1.bf16.msra.mxu0 0
  %1393 = vmatprep.mubr.bf16.mxu0 0
  %1394 = vmatmul.mubr.bf16.gmra.mrb[0].mxu0 %v1127
  %v1395 = vpop.f32.mrb[0].mxu0
  %v1396 = vadd.f32 0.0, %v1395
  %v1397 = vpop.f32.mrb[0].mxu0
  %v1398 = vadd.f32 0.0, %v1397
  %v1399 = vpop.f32.mrb[0].mxu0
  %v1400 = vpop.f32.mrb[0].mxu0
  %1401 = vdwg.mxu0
  %v1406 = vcombine.low %v1355, %v1357
  %v1407 = vcombine.low %v1396, %v1398
  %v1409 = vunpack.c.l.s4 1983009808
  %v1410 = vunpack.c.0.s8 %v1409
  %v1411 = vlaneseq
  %v1412 = vshrl.u32 %v1411, 7
  %v1413 = vsub.s32 %v1410, %v1412
  %v1414 = vrot.slane %v1406, %v1413
  %v1416 = vunpack.c.l.s4 1983009808
  %v1417 = vunpack.c.0.s8 %v1416
  %v1418 = vlaneseq
  %v1419 = vshrl.u32 %v1418, 7
  %v1420 = vsub.s32 %v1417, %v1419
  %v1421 = vrot.slane %v1407, %v1420
  %v1422 = vcombine.low %v1414, %v1421
  %v1424 = vadd.f32 %v1125, %v1422
  %v1425 = vtanh.pop %v1424
  %v1427 = vrot.slane %v1424, 4
  %v1429 = vxor.u32 %v1427, 2147483648
  %v1430 = vmul.f32 %v1429, 1.442695
  %v1431 = vpow.pop %v1430
  %v1432 = vadd.f32 %v1431, 1.0
  %v1433 = vrcp.pop %v1432
  %v1434 = vmul.f32 1.0, %v1433
  %v1435 = vrot.slane %v1424, 6
  %v1437 = vxor.u32 %v1435, 2147483648
  %v1438 = vmul.f32 %v1437, 1.442695
  %v1439 = vpow.pop %v1438
  %v1440 = vadd.f32 %v1439, 1.0
  %v1441 = vrcp.pop %v1440
  %v1442 = vmul.f32 1.0, %v1441
  %v1443 = vsub.f32 0.0, %v1427
  %v1444 = vmax.f32 %v1443, 0.0
  %vm1445 = vcmp.ne.f32.partialorder %v1443, %v1443
  %v1446 = vadd.f32 %v1443, 0.0
  %v1447 = vand.u32 2147483647, %v1443
  %v1448 = vsub.f32 0.0, %v1447
  %v1449 = vmul.f32 %v1448, 1.442695
  %v1450 = vpow.pop %v1449
  %v1451 = vadd.f32 %v1450, 1.0
  %v1452 = vlog2.pop %v1451
  %v1453 = vmul.f32 %v1452, 0.6931472
  %v1454 = vmul.f32 -0.5, %v1450
  %v1455 = vadd.f32 %v1454, 1.0
  %v1456 = vmul.f32 %v1455, %v1450
  %v1457 = vand.u32 2147483647, %v1450
  %vm1458 = vcmp.lt.f32.partialorder %v1457, 0.0004427343
  %v1459 = vsel %vm1458, %v1456, %v1453
  %v1460 = vadd.f32 %v1444, %v1459
  %v1461 = vsel %vm1445, %v1446, %v1460
  %v1462 = vsub.f32 0.0, %v1461
  %v1463 = vld [vmem:[#allocation5] sm:$0x3]
  %v1464 = vadd.f32 %v1462, %v1463
  %v1465 = vrot.slane %v1424, 2
  %v1467 = vmax.f32 %v1464, %v1465
  %v1468 = vsub.f32 %v1465, %v1467
  %v1469 = vmul.f32 %v1468, 1.442695
  %v1470 = vpow.pop %v1469
  %v1471 = vld [vmem:[#allocation3] sm:$0x3]
  %v1472 = vmul.f32 %v1434, %v1471
  %v1473 = vmul.f32 %v1470, %v1425
  %v1474 = vadd.f32 %v1472, %v1473
  %v1475 = vld [vmem:[#allocation4] sm:$0x3]
  %v1476 = vmul.f32 %v1434, %v1475
  %v1477 = vadd.f32 %v1476, %v1470
  %v1478 = vrcp.pop %v1477
  %v1479 = vmul.f32 %v1474, %v1478
  %v1480 = vmul.f32 %v1442, %v1479
  %1481 = vst [vmem:[#allocation2] sm:$0x3] %v1480
  %1482 = vst [vmem:[#allocation3] sm:$0x3] %v1474
  %1483 = vst [vmem:[#allocation4] sm:$0x3] %v1477
  %1484 = vst [vmem:[#allocation5] sm:$0x3] %v1467
  %s1485 = scalar_lea.vmem %s2, 6
  %1486 = vst [vmem:[%s1485] sm:$0x3] %v1480
  %s1487 = scalar_lea.vmem %s3, 6
  %1488 = vst [vmem:[%s1487] sm:$0x3] %v1474
  %s1489 = scalar_lea.vmem %s4, 6
  %1490 = vst [vmem:[%s1489] sm:$0x3] %v1477
  %s1491 = scalar_lea.vmem %s0, 16
  %v1492 = vld [vmem:[%s1491] sm:$0xf]
  %v1493 = vunpack.c.l.bf16 %v1492
  %v1494 = vld [vmem:[#allocation2] sm:$0x3]
  %v1495 = vpack.c.bf16 %v1494, %v1494
  %v1496 = vld [vmem:[%s1] sm:$0xff]
  %v1497 = vld [vmem:[%s1 + $0x8] sm:$0xff]
  %v1498 = vld [vmem:[%s1 + $0x10] sm:$0xff]
  %v1499 = vld [vmem:[%s1 + $0x18] sm:$0xff]
  %v1500 = vld [vmem:[%s1 + $0x20] sm:$0xff]
  %v1501 = vld [vmem:[%s1 + $0x28] sm:$0xff]
  %v1502 = vld [vmem:[%s1 + $0x30] sm:$0xff]
  %v1503 = vld [vmem:[%s1 + $0x38] sm:$0xff]
  %v1504 = vld [vmem:[%s1 + $0x40] sm:$0xff]
  %v1505 = vld [vmem:[%s1 + $0x48] sm:$0xff]
  %v1506 = vld [vmem:[%s1 + $0x50] sm:$0xff]
  %v1507 = vld [vmem:[%s1 + $0x58] sm:$0xff]
  %v1508 = vld [vmem:[%s1 + $0x60] sm:$0xff]
  %v1509 = vld [vmem:[%s1 + $0x68] sm:$0xff]
  %v1510 = vld [vmem:[%s1 + $0x70] sm:$0xff]
  %v1511 = vld [vmem:[%s1 + $0x78] sm:$0xff]
  %v1512 = vld [vmem:[%s1 + $0x80] sm:$0xff]
  %v1513 = vld [vmem:[%s1 + $0x88] sm:$0xff]
  %v1514 = vld [vmem:[%s1 + $0x90] sm:$0xff]
  %v1515 = vld [vmem:[%s1 + $0x98] sm:$0xff]
  %v1516 = vld [vmem:[%s1 + $0xa0] sm:$0xff]
  %v1517 = vld [vmem:[%s1 + $0xa8] sm:$0xff]
  %v1518 = vld [vmem:[%s1 + $0xb0] sm:$0xff]
  %v1519 = vld [vmem:[%s1 + $0xb8] sm:$0xff]
  %v1520 = vld [vmem:[%s1 + $0xc0] sm:$0xff]
  %v1521 = vld [vmem:[%s1 + $0xc8] sm:$0xff]
  %v1522 = vld [vmem:[%s1 + $0xd0] sm:$0xff]
  %v1523 = vld [vmem:[%s1 + $0xd8] sm:$0xff]
  %v1524 = vld [vmem:[%s1 + $0xe0] sm:$0xff]
  %v1525 = vld [vmem:[%s1 + $0xe8] sm:$0xff]
  %v1526 = vld [vmem:[%s1 + $0xf0] sm:$0xff]
  %v1527 = vld [vmem:[%s1 + $0xf8] sm:$0xff]
  %v1560 = vunpack.c.l.b16 %v1496
  %v1561 = vunpack.c.h.b16 %v1496
  %v1562 = vunpack.c.l.b16 %v1497
  %v1563 = vunpack.c.h.b16 %v1497
  %v1564 = vunpack.c.l.b16 %v1498
  %v1565 = vunpack.c.h.b16 %v1498
  %v1566 = vunpack.c.l.b16 %v1499
  %v1567 = vunpack.c.h.b16 %v1499
  %v1568 = vunpack.c.l.b16 %v1500
  %v1569 = vunpack.c.h.b16 %v1500
  %v1570 = vunpack.c.l.b16 %v1501
  %v1571 = vunpack.c.h.b16 %v1501
  %v1572 = vunpack.c.l.b16 %v1502
  %v1573 = vunpack.c.h.b16 %v1502
  %v1574 = vunpack.c.l.b16 %v1503
  %v1575 = vunpack.c.h.b16 %v1503
  %v1576 = vunpack.c.l.b16 %v1504
  %v1577 = vunpack.c.h.b16 %v1504
  %v1578 = vunpack.c.l.b16 %v1505
  %v1579 = vunpack.c.h.b16 %v1505
  %v1580 = vunpack.c.l.b16 %v1506
  %v1581 = vunpack.c.h.b16 %v1506
  %v1582 = vunpack.c.l.b16 %v1507
  %v1583 = vunpack.c.h.b16 %v1507
  %v1584 = vunpack.c.l.b16 %v1508
  %v1585 = vunpack.c.h.b16 %v1508
  %v1586 = vunpack.c.l.b16 %v1509
  %v1587 = vunpack.c.h.b16 %v1509
  %v1588 = vunpack.c.l.b16 %v1510
  %v1589 = vunpack.c.h.b16 %v1510
  %v1590 = vunpack.c.l.b16 %v1511
  %v1591 = vunpack.c.h.b16 %v1511
  %v1592 = vunpack.c.l.b16 %v1512
  %v1593 = vunpack.c.h.b16 %v1512
  %v1594 = vunpack.c.l.b16 %v1513
  %v1595 = vunpack.c.h.b16 %v1513
  %v1596 = vunpack.c.l.b16 %v1514
  %v1597 = vunpack.c.h.b16 %v1514
  %v1598 = vunpack.c.l.b16 %v1515
  %v1599 = vunpack.c.h.b16 %v1515
  %v1600 = vunpack.c.l.b16 %v1516
  %v1601 = vunpack.c.h.b16 %v1516
  %v1602 = vunpack.c.l.b16 %v1517
  %v1603 = vunpack.c.h.b16 %v1517
  %v1604 = vunpack.c.l.b16 %v1518
  %v1605 = vunpack.c.h.b16 %v1518
  %v1606 = vunpack.c.l.b16 %v1519
  %v1607 = vunpack.c.h.b16 %v1519
  %v1608 = vunpack.c.l.b16 %v1520
  %v1609 = vunpack.c.h.b16 %v1520
  %v1610 = vunpack.c.l.b16 %v1521
  %v1611 = vunpack.c.h.b16 %v1521
  %v1612 = vunpack.c.l.b16 %v1522
  %v1613 = vunpack.c.h.b16 %v1522
  %v1614 = vunpack.c.l.b16 %v1523
  %v1615 = vunpack.c.h.b16 %v1523
  %v1616 = vunpack.c.l.b16 %v1524
  %v1617 = vunpack.c.h.b16 %v1524
  %v1618 = vunpack.c.l.b16 %v1525
  %v1619 = vunpack.c.h.b16 %v1525
  %v1620 = vunpack.c.l.b16 %v1526
  %v1621 = vunpack.c.h.b16 %v1526
  %v1622 = vunpack.c.l.b16 %v1527
  %v1623 = vunpack.c.h.b16 %v1527
  %v1624 = vpack.c.b16 %v1564, %v1560
  %v1625 = vpack.c.b16 %v1565, %v1561
  %v1626 = vpack.c.b16 %v1566, %v1562
  %v1627 = vpack.c.b16 %v1567, %v1563
  %v1628 = vpack.c.b16 %v1572, %v1568
  %v1629 = vpack.c.b16 %v1573, %v1569
  %v1630 = vpack.c.b16 %v1574, %v1570
  %v1631 = vpack.c.b16 %v1575, %v1571
  %v1632 = vpack.c.b16 %v1580, %v1576
  %v1633 = vpack.c.b16 %v1581, %v1577
  %v1634 = vpack.c.b16 %v1582, %v1578
  %v1635 = vpack.c.b16 %v1583, %v1579
  %v1636 = vpack.c.b16 %v1588, %v1584
  %v1637 = vpack.c.b16 %v1589, %v1585
  %v1638 = vpack.c.b16 %v1590, %v1586
  %v1639 = vpack.c.b16 %v1591, %v1587
  %v1640 = vpack.c.b16 %v1596, %v1592
  %v1641 = vpack.c.b16 %v1597, %v1593
  %v1642 = vpack.c.b16 %v1598, %v1594
  %v1643 = vpack.c.b16 %v1599, %v1595
  %v1644 = vpack.c.b16 %v1604, %v1600
  %v1645 = vpack.c.b16 %v1605, %v1601
  %v1646 = vpack.c.b16 %v1606, %v1602
  %v1647 = vpack.c.b16 %v1607, %v1603
  %v1648 = vpack.c.b16 %v1612, %v1608
  %v1649 = vpack.c.b16 %v1613, %v1609
  %v1650 = vpack.c.b16 %v1614, %v1610
  %v1651 = vpack.c.b16 %v1615, %v1611
  %v1652 = vpack.c.b16 %v1620, %v1616
  %v1653 = vpack.c.b16 %v1621, %v1617
  %v1654 = vpack.c.b16 %v1622, %v1618
  %v1655 = vpack.c.b16 %v1623, %v1619
  %1688 = vmatprep.subr.bf16.mxu0 %v1625
  %1689 = vmatpush1.bf16.msra.mxu0 %v1624
  %1690 = vmatprep.subr.bf16.mxu0 %v1629
  %1691 = vmatpush1.bf16.msra.mxu0 %v1628
  %1692 = vmatprep.subr.bf16.mxu0 %v1633
  %1693 = vmatpush1.bf16.msra.mxu0 %v1632
  %1694 = vmatprep.subr.bf16.mxu0 %v1637
  %1695 = vmatpush1.bf16.msra.mxu0 %v1636
  %1696 = vmatprep.subr.bf16.mxu0 %v1641
  %1697 = vmatpush1.bf16.msra.mxu0 %v1640
  %1698 = vmatprep.subr.bf16.mxu0 %v1645
  %1699 = vmatpush1.bf16.msra.mxu0 %v1644
  %1700 = vmatprep.subr.bf16.mxu0 %v1649
  %1701 = vmatpush1.bf16.msra.mxu0 %v1648
  %1702 = vmatprep.subr.bf16.mxu0 %v1653
  %1703 = vmatpush1.bf16.msra.mxu0 %v1652
  %1704 = vmatprep.subr.bf16.mxu0 0
  %1705 = vmatpush1.bf16.msra.mxu0 0
  %1706 = vmatprep.subr.bf16.mxu0 0
  %1707 = vmatpush1.bf16.msra.mxu0 0
  %1708 = vmatprep.subr.bf16.mxu0 0
  %1709 = vmatpush1.bf16.msra.mxu0 0
  %1710 = vmatprep.subr.bf16.mxu0 0
  %1711 = vmatpush1.bf16.msra.mxu0 0
  %1712 = vmatprep.subr.bf16.mxu0 0
  %1713 = vmatpush1.bf16.msra.mxu0 0
  %1714 = vmatprep.subr.bf16.mxu0 0
  %1715 = vmatpush1.bf16.msra.mxu0 0
  %1716 = vmatprep.subr.bf16.mxu0 0
  %1717 = vmatpush1.bf16.msra.mxu0 0
  %1718 = vmatprep.subr.bf16.mxu0 0
  %1719 = vmatpush1.bf16.msra.mxu0 0
  %1720 = vmatprep.mubr.bf16.mxu0 0
  %1721 = vmatmul.mubr.bf16.gmra.mrb[0].mxu0 %v1495
  %v1722 = vpop.f32.mrb[0].mxu0
  %v1723 = vadd.f32 0.0, %v1722
  %v1724 = vpop.f32.mrb[0].mxu0
  %v1725 = vadd.f32 0.0, %v1724
  %v1726 = vpop.f32.mrb[0].mxu0
  %v1727 = vpop.f32.mrb[0].mxu0
  %1728 = vdwg.mxu0
  %1729 = vmatprep.subr.bf16.mxu0 %v1627
  %1730 = vmatpush1.bf16.msra.mxu0 %v1626
  %1731 = vmatprep.subr.bf16.mxu0 %v1631
  %1732 = vmatpush1.bf16.msra.mxu0 %v1630
  %1733 = vmatprep.subr.bf16.mxu0 %v1635
  %1734 = vmatpush1.bf16.msra.mxu0 %v1634
  %1735 = vmatprep.subr.bf16.mxu0 %v1639
  %1736 = vmatpush1.bf16.msra.mxu0 %v1638
  %1737 = vmatprep.subr.bf16.mxu0 %v1643
  %1738 = vmatpush1.bf16.msra.mxu0 %v1642
  %1739 = vmatprep.subr.bf16.mxu0 %v1647
  %1740 = vmatpush1.bf16.msra.mxu0 %v1646
  %1741 = vmatprep.subr.bf16.mxu0 %v1651
  %1742 = vmatpush1.bf16.msra.mxu0 %v1650
  %1743 = vmatprep.subr.bf16.mxu0 %v1655
  %1744 = vmatpush1.bf16.msra.mxu0 %v1654
  %1745 = vmatprep.subr.bf16.mxu0 0
  %1746 = vmatpush1.bf16.msra.mxu0 0
  %1747 = vmatprep.subr.bf16.mxu0 0
  %1748 = vmatpush1.bf16.msra.mxu0 0
  %1749 = vmatprep.subr.bf16.mxu0 0
  %1750 = vmatpush1.bf16.msra.mxu0 0
  %1751 = vmatprep.subr.bf16.mxu0 0
  %1752 = vmatpush1.bf16.msra.mxu0 0
  %1753 = vmatprep.subr.bf16.mxu0 0
  %1754 = vmatpush1.bf16.msra.mxu0 0
  %1755 = vmatprep.subr.bf16.mxu0 0
  %1756 = vmatpush1.bf16.msra.mxu0 0
  %1757 = vmatprep.subr.bf16.mxu0 0
  %1758 = vmatpush1.bf16.msra.mxu0 0
  %1759 = vmatprep.subr.bf16.mxu0 0
  %1760 = vmatpush1.bf16.msra.mxu0 0
  %1761 = vmatprep.mubr.bf16.mxu0 0
  %1762 = vmatmul.mubr.bf16.gmra.mrb[0].mxu0 %v1495
  %v1763 = vpop.f32.mrb[0].mxu0
  %v1764 = vadd.f32 0.0, %v1763
  %v1765 = vpop.f32.mrb[0].mxu0
  %v1766 = vadd.f32 0.0, %v1765
  %v1767 = vpop.f32.mrb[0].mxu0
  %v1768 = vpop.f32.mrb[0].mxu0
  %1769 = vdwg.mxu0
  %v1774 = vcombine.low %v1723, %v1725
  %v1775 = vcombine.low %v1764, %v1766
  %v1777 = vunpack.c.l.s4 1983009808
  %v1778 = vunpack.c.0.s8 %v1777
  %v1779 = vlaneseq
  %v1780 = vshrl.u32 %v1779, 7
  %v1781 = vsub.s32 %v1778, %v1780
  %v1782 = vrot.slane %v1774, %v1781
  %v1784 = vunpack.c.l.s4 1983009808
  %v1785 = vunpack.c.0.s8 %v1784
  %v1786 = vlaneseq
  %v1787 = vshrl.u32 %v1786, 7
  %v1788 = vsub.s32 %v1785, %v1787
  %v1789 = vrot.slane %v1775, %v1788
  %v1790 = vcombine.low %v1782, %v1789
  %v1792 = vadd.f32 %v1493, %v1790
  %v1793 = vtanh.pop %v1792
  %v1795 = vrot.slane %v1792, 4
  %v1797 = vxor.u32 %v1795, 2147483648
  %v1798 = vmul.f32 %v1797, 1.442695
  %v1799 = vpow.pop %v1798
  %v1800 = vadd.f32 %v1799, 1.0
  %v1801 = vrcp.pop %v1800
  %v1802 = vmul.f32 1.0, %v1801
  %v1803 = vrot.slane %v1792, 6
  %v1805 = vxor.u32 %v1803, 2147483648
  %v1806 = vmul.f32 %v1805, 1.442695
  %v1807 = vpow.pop %v1806
  %v1808 = vadd.f32 %v1807, 1.0
  %v1809 = vrcp.pop %v1808
  %v1810 = vmul.f32 1.0, %v1809
  %v1811 = vsub.f32 0.0, %v1795
  %v1812 = vmax.f32 %v1811, 0.0
  %vm1813 = vcmp.ne.f32.partialorder %v1811, %v1811
  %v1814 = vadd.f32 %v1811, 0.0
  %v1815 = vand.u32 2147483647, %v1811
  %v1816 = vsub.f32 0.0, %v1815
  %v1817 = vmul.f32 %v1816, 1.442695
  %v1818 = vpow.pop %v1817
  %v1819 = vadd.f32 %v1818, 1.0
  %v1820 = vlog2.pop %v1819
  %v1821 = vmul.f32 %v1820, 0.6931472
  %v1822 = vmul.f32 -0.5, %v1818
  %v1823 = vadd.f32 %v1822, 1.0
  %v1824 = vmul.f32 %v1823, %v1818
  %v1825 = vand.u32 2147483647, %v1818
  %vm1826 = vcmp.lt.f32.partialorder %v1825, 0.0004427343
  %v1827 = vsel %vm1826, %v1824, %v1821
  %v1828 = vadd.f32 %v1812, %v1827
  %v1829 = vsel %vm1813, %v1814, %v1828
  %v1830 = vsub.f32 0.0, %v1829
  %v1831 = vld [vmem:[#allocation5] sm:$0x3]
  %v1832 = vadd.f32 %v1830, %v1831
  %v1833 = vrot.slane %v1792, 2
  %v1835 = vmax.f32 %v1832, %v1833
  %v1836 = vsub.f32 %v1833, %v1835
  %v1837 = vmul.f32 %v1836, 1.442695
  %v1838 = vpow.pop %v1837
  %v1839 = vld [vmem:[#allocation3] sm:$0x3]
  %v1840 = vmul.f32 %v1802, %v1839
  %v1841 = vmul.f32 %v1838, %v1793
  %v1842 = vadd.f32 %v1840, %v1841
  %v1843 = vld [vmem:[#allocation4] sm:$0x3]
  %v1844 = vmul.f32 %v1802, %v1843
  %v1845 = vadd.f32 %v1844, %v1838
  %v1846 = vrcp.pop %v1845
  %v1847 = vmul.f32 %v1842, %v1846
  %v1848 = vmul.f32 %v1810, %v1847
  %1849 = vst [vmem:[#allocation2] sm:$0x3] %v1848
  %1850 = vst [vmem:[#allocation3] sm:$0x3] %v1842
  %1851 = vst [vmem:[#allocation4] sm:$0x3] %v1845
  %1852 = vst [vmem:[#allocation5] sm:$0x3] %v1835
  %s1853 = scalar_lea.vmem %s2, 8
  %1854 = vst [vmem:[%s1853] sm:$0x3] %v1848
  %s1855 = scalar_lea.vmem %s3, 8
  %1856 = vst [vmem:[%s1855] sm:$0x3] %v1842
  %s1857 = scalar_lea.vmem %s4, 8
  %1858 = vst [vmem:[%s1857] sm:$0x3] %v1845
  %s1859 = scalar_lea.vmem %s0, 20
  %v1860 = vld [vmem:[%s1859] sm:$0xf]
  %v1861 = vunpack.c.l.bf16 %v1860
  %v1862 = vld [vmem:[#allocation2] sm:$0x3]
  %v1863 = vpack.c.bf16 %v1862, %v1862
  %v1864 = vld [vmem:[%s1] sm:$0xff]
  %v1865 = vld [vmem:[%s1 + $0x8] sm:$0xff]
  %v1866 = vld [vmem:[%s1 + $0x10] sm:$0xff]
  %v1867 = vld [vmem:[%s1 + $0x18] sm:$0xff]
  %v1868 = vld [vmem:[%s1 + $0x20] sm:$0xff]
  %v1869 = vld [vmem:[%s1 + $0x28] sm:$0xff]
  %v1870 = vld [vmem:[%s1 + $0x30] sm:$0xff]
  %v1871 = vld [vmem:[%s1 + $0x38] sm:$0xff]
  %v1872 = vld [vmem:[%s1 + $0x40] sm:$0xff]
  %v1873 = vld [vmem:[%s1 + $0x48] sm:$0xff]
  %v1874 = vld [vmem:[%s1 + $0x50] sm:$0xff]
  %v1875 = vld [vmem:[%s1 + $0x58] sm:$0xff]
  %v1876 = vld [vmem:[%s1 + $0x60] sm:$0xff]
  %v1877 = vld [vmem:[%s1 + $0x68] sm:$0xff]
  %v1878 = vld [vmem:[%s1 + $0x70] sm:$0xff]
  %v1879 = vld [vmem:[%s1 + $0x78] sm:$0xff]
  %v1880 = vld [vmem:[%s1 + $0x80] sm:$0xff]
  %v1881 = vld [vmem:[%s1 + $0x88] sm:$0xff]
  %v1882 = vld [vmem:[%s1 + $0x90] sm:$0xff]
  %v1883 = vld [vmem:[%s1 + $0x98] sm:$0xff]
  %v1884 = vld [vmem:[%s1 + $0xa0] sm:$0xff]
  %v1885 = vld [vmem:[%s1 + $0xa8] sm:$0xff]
  %v1886 = vld [vmem:[%s1 + $0xb0] sm:$0xff]
  %v1887 = vld [vmem:[%s1 + $0xb8] sm:$0xff]
  %v1888 = vld [vmem:[%s1 + $0xc0] sm:$0xff]
  %v1889 = vld [vmem:[%s1 + $0xc8] sm:$0xff]
  %v1890 = vld [vmem:[%s1 + $0xd0] sm:$0xff]
  %v1891 = vld [vmem:[%s1 + $0xd8] sm:$0xff]
  %v1892 = vld [vmem:[%s1 + $0xe0] sm:$0xff]
  %v1893 = vld [vmem:[%s1 + $0xe8] sm:$0xff]
  %v1894 = vld [vmem:[%s1 + $0xf0] sm:$0xff]
  %v1895 = vld [vmem:[%s1 + $0xf8] sm:$0xff]
  %v1928 = vunpack.c.l.b16 %v1864
  %v1929 = vunpack.c.h.b16 %v1864
  %v1930 = vunpack.c.l.b16 %v1865
  %v1931 = vunpack.c.h.b16 %v1865
  %v1932 = vunpack.c.l.b16 %v1866
  %v1933 = vunpack.c.h.b16 %v1866
  %v1934 = vunpack.c.l.b16 %v1867
  %v1935 = vunpack.c.h.b16 %v1867
  %v1936 = vunpack.c.l.b16 %v1868
  %v1937 = vunpack.c.h.b16 %v1868
  %v1938 = vunpack.c.l.b16 %v1869
  %v1939 = vunpack.c.h.b16 %v1869
  %v1940 = vunpack.c.l.b16 %v1870
  %v1941 = vunpack.c.h.b16 %v1870
  %v1942 = vunpack.c.l.b16 %v1871
  %v1943 = vunpack.c.h.b16 %v1871
  %v1944 = vunpack.c.l.b16 %v1872
  %v1945 = vunpack.c.h.b16 %v1872
  %v1946 = vunpack.c.l.b16 %v1873
  %v1947 = vunpack.c.h.b16 %v1873
  %v1948 = vunpack.c.l.b16 %v1874
  %v1949 = vunpack.c.h.b16 %v1874
  %v1950 = vunpack.c.l.b16 %v1875
  %v1951 = vunpack.c.h.b16 %v1875
  %v1952 = vunpack.c.l.b16 %v1876
  %v1953 = vunpack.c.h.b16 %v1876
  %v1954 = vunpack.c.l.b16 %v1877
  %v1955 = vunpack.c.h.b16 %v1877
  %v1956 = vunpack.c.l.b16 %v1878
  %v1957 = vunpack.c.h.b16 %v1878
  %v1958 = vunpack.c.l.b16 %v1879
  %v1959 = vunpack.c.h.b16 %v1879
  %v1960 = vunpack.c.l.b16 %v1880
  %v1961 = vunpack.c.h.b16 %v1880
  %v1962 = vunpack.c.l.b16 %v1881
  %v1963 = vunpack.c.h.b16 %v1881
  %v1964 = vunpack.c.l.b16 %v1882
  %v1965 = vunpack.c.h.b16 %v1882
  %v1966 = vunpack.c.l.b16 %v1883
  %v1967 = vunpack.c.h.b16 %v1883
  %v1968 = vunpack.c.l.b16 %v1884
  %v1969 = vunpack.c.h.b16 %v1884
  %v1970 = vunpack.c.l.b16 %v1885
  %v1971 = vunpack.c.h.b16 %v1885
  %v1972 = vunpack.c.l.b16 %v1886
  %v1973 = vunpack.c.h.b16 %v1886
  %v1974 = vunpack.c.l.b16 %v1887
  %v1975 = vunpack.c.h.b16 %v1887
  %v1976 = vunpack.c.l.b16 %v1888
  %v1977 = vunpack.c.h.b16 %v1888
  %v1978 = vunpack.c.l.b16 %v1889
  %v1979 = vunpack.c.h.b16 %v1889
  %v1980 = vunpack.c.l.b16 %v1890
  %v1981 = vunpack.c.h.b16 %v1890
  %v1982 = vunpack.c.l.b16 %v1891
  %v1983 = vunpack.c.h.b16 %v1891
  %v1984 = vunpack.c.l.b16 %v1892
  %v1985 = vunpack.c.h.b16 %v1892
  %v1986 = vunpack.c.l.b16 %v1893
  %v1987 = vunpack.c.h.b16 %v1893
  %v1988 = vunpack.c.l.b16 %v1894
  %v1989 = vunpack.c.h.b16 %v1894
  %v1990 = vunpack.c.l.b16 %v1895
  %v1991 = vunpack.c.h.b16 %v1895
  %v1992 = vpack.c.b16 %v1932, %v1928
  %v1993 = vpack.c.b16 %v1933, %v1929
  %v1994 = vpack.c.b16 %v1934, %v1930
  %v1995 = vpack.c.b16 %v1935, %v1931
  %v1996 = vpack.c.b16 %v1940, %v1936
  %v1997 = vpack.c.b16 %v1941, %v1937
  %v1998 = vpack.c.b16 %v1942, %v1938
  %v1999 = vpack.c.b16 %v1943, %v1939
  %v2000 = vpack.c.b16 %v1948, %v1944
  %v2001 = vpack.c.b16 %v1949, %v1945
  %v2002 = vpack.c.b16 %v1950, %v1946
  %v2003 = vpack.c.b16 %v1951, %v1947
  %v2004 = vpack.c.b16 %v1956, %v1952
  %v2005 = vpack.c.b16 %v1957, %v1953
  %v2006 = vpack.c.b16 %v1958, %v1954
  %v2007 = vpack.c.b16 %v1959, %v1955
  %v2008 = vpack.c.b16 %v1964, %v1960
  %v2009 = vpack.c.b16 %v1965, %v1961
  %v2010 = vpack.c.b16 %v1966, %v1962
  %v2011 = vpack.c.b16 %v1967, %v1963
  %v2012 = vpack.c.b16 %v1972, %v1968
  %v2013 = vpack.c.b16 %v1973, %v1969
  %v2014 = vpack.c.b16 %v1974, %v1970
  %v2015 = vpack.c.b16 %v1975, %v1971
  %v2016 = vpack.c.b16 %v1980, %v1976
  %v2017 = vpack.c.b16 %v1981, %v1977
  %v2018 = vpack.c.b16 %v1982, %v1978
  %v2019 = vpack.c.b16 %v1983, %v1979
  %v2020 = vpack.c.b16 %v1988, %v1984
  %v2021 = vpack.c.b16 %v1989, %v1985
  %v2022 = vpack.c.b16 %v1990, %v1986
  %v2023 = vpack.c.b16 %v1991, %v1987
  %2056 = vmatprep.subr.bf16.mxu0 %v1993
  %2057 = vmatpush1.bf16.msra.mxu0 %v1992
  %2058 = vmatprep.subr.bf16.mxu0 %v1997
  %2059 = vmatpush1.bf16.msra.mxu0 %v1996
  %2060 = vmatprep.subr.bf16.mxu0 %v2001
  %2061 = vmatpush1.bf16.msra.mxu0 %v2000
  %2062 = vmatprep.subr.bf16.mxu0 %v2005
  %2063 = vmatpush1.bf16.msra.mxu0 %v2004
  %2064 = vmatprep.subr.bf16.mxu0 %v2009
  %2065 = vmatpush1.bf16.msra.mxu0 %v2008
  %2066 = vmatprep.subr.bf16.mxu0 %v2013
  %2067 = vmatpush1.bf16.msra.mxu0 %v2012
  %2068 = vmatprep.subr.bf16.mxu0 %v2017
  %2069 = vmatpush1.bf16.msra.mxu0 %v2016
  %2070 = vmatprep.subr.bf16.mxu0 %v2021
  %2071 = vmatpush1.bf16.msra.mxu0 %v2020
  %2072 = vmatprep.subr.bf16.mxu0 0
  %2073 = vmatpush1.bf16.msra.mxu0 0
  %2074 = vmatprep.subr.bf16.mxu0 0
  %2075 = vmatpush1.bf16.msra.mxu0 0
  %2076 = vmatprep.subr.bf16.mxu0 0
  %2077 = vmatpush1.bf16.msra.mxu0 0
  %2078 = vmatprep.subr.bf16.mxu0 0
  %2079 = vmatpush1.bf16.msra.mxu0 0
  %2080 = vmatprep.subr.bf16.mxu0 0
  %2081 = vmatpush1.bf16.msra.mxu0 0
  %2082 = vmatprep.subr.bf16.mxu0 0
  %2083 = vmatpush1.bf16.msra.mxu0 0
  %2084 = vmatprep.subr.bf16.mxu0 0
  %2085 = vmatpush1.bf16.msra.mxu0 0
  %2086 = vmatprep.subr.bf16.mxu0 0
  %2087 = vmatpush1.bf16.msra.mxu0 0
  %2088 = vmatprep.mubr.bf16.mxu0 0
  %2089 = vmatmul.mubr.bf16.gmra.mrb[0].mxu0 %v1863
  %v2090 = vpop.f32.mrb[0].mxu0
  %v2091 = vadd.f32 0.0, %v2090
  %v2092 = vpop.f32.mrb[0].mxu0
  %v2093 = vadd.f32 0.0, %v2092
  %v2094 = vpop.f32.mrb[0].mxu0
  %v2095 = vpop.f32.mrb[0].mxu0
  %2096 = vdwg.mxu0
  %2097 = vmatprep.subr.bf16.mxu0 %v1995
  %2098 = vmatpush1.bf16.msra.mxu0 %v1994
  %2099 = vmatprep.subr.bf16.mxu0 %v1999
  %2100 = vmatpush1.bf16.msra.mxu0 %v1998
  %2101 = vmatprep.subr.bf16.mxu0 %v2003
  %2102 = vmatpush1.bf16.msra.mxu0 %v2002
  %2103 = vmatprep.subr.bf16.mxu0 %v2007
  %2104 = vmatpush1.bf16.msra.mxu0 %v2006
  %2105 = vmatprep.subr.bf16.mxu0 %v2011
  %2106 = vmatpush1.bf16.msra.mxu0 %v2010
  %2107 = vmatprep.subr.bf16.mxu0 %v2015
  %2108 = vmatpush1.bf16.msra.mxu0 %v2014
  %2109 = vmatprep.subr.bf16.mxu0 %v2019
  %2110 = vmatpush1.bf16.msra.mxu0 %v2018
  %2111 = vmatprep.subr.bf16.mxu0 %v2023
  %2112 = vmatpush1.bf16.msra.mxu0 %v2022
  %2113 = vmatprep.subr.bf16.mxu0 0
  %2114 = vmatpush1.bf16.msra.mxu0 0
  %2115 = vmatprep.subr.bf16.mxu0 0
  %2116 = vmatpush1.bf16.msra.mxu0 0
  %2117 = vmatprep.subr.bf16.mxu0 0
  %2118 = vmatpush1.bf16.msra.mxu0 0
  %2119 = vmatprep.subr.bf16.mxu0 0
  %2120 = vmatpush1.bf16.msra.mxu0 0
  %2121 = vmatprep.subr.bf16.mxu0 0
  %2122 = vmatpush1.bf16.msra.mxu0 0
  %2123 = vmatprep.subr.bf16.mxu0 0
  %2124 = vmatpush1.bf16.msra.mxu0 0
  %2125 = vmatprep.subr.bf16.mxu0 0
  %2126 = vmatpush1.bf16.msra.mxu0 0
  %2127 = vmatprep.subr.bf16.mxu0 0
  %2128 = vmatpush1.bf16.msra.mxu0 0
  %2129 = vmatprep.mubr.bf16.mxu0 0
  %2130 = vmatmul.mubr.bf16.gmra.mrb[0].mxu0 %v1863
  %v2131 = vpop.f32.mrb[0].mxu0
  %v2132 = vadd.f32 0.0, %v2131
  %v2133 = vpop.f32.mrb[0].mxu0
  %v2134 = vadd.f32 0.0, %v2133
  %v2135 = vpop.f32.mrb[0].mxu0
  %v2136 = vpop.f32.mrb[0].mxu0
  %2137 = vdwg.mxu0
  %v2142 = vcombine.low %v2091, %v2093
  %v2143 = vcombine.low %v2132, %v2134
  %v2145 = vunpack.c.l.s4 1983009808
  %v2146 = vunpack.c.0.s8 %v2145
  %v2147 = vlaneseq
  %v2148 = vshrl.u32 %v2147, 7
  %v2149 = vsub.s32 %v2146, %v2148
  %v2150 = vrot.slane %v2142, %v2149
  %v2152 = vunpack.c.l.s4 1983009808
  %v2153 = vunpack.c.0.s8 %v2152
  %v2154 = vlaneseq
  %v2155 = vshrl.u32 %v2154, 7
  %v2156 = vsub.s32 %v2153, %v2155
  %v2157 = vrot.slane %v2143, %v2156
  %v2158 = vcombine.low %v2150, %v2157
  %v2160 = vadd.f32 %v1861, %v2158
  %v2161 = vtanh.pop %v2160
  %v2163 = vrot.slane %v2160, 4
  %v2165 = vxor.u32 %v2163, 2147483648
  %v2166 = vmul.f32 %v2165, 1.442695
  %v2167 = vpow.pop %v2166
  %v2168 = vadd.f32 %v2167, 1.0
  %v2169 = vrcp.pop %v2168
  %v2170 = vmul.f32 1.0, %v2169
  %v2171 = vrot.slane %v2160, 6
  %v2173 = vxor.u32 %v2171, 2147483648
  %v2174 = vmul.f32 %v2173, 1.442695
  %v2175 = vpow.pop %v2174
  %v2176 = vadd.f32 %v2175, 1.0
  %v2177 = vrcp.pop %v2176
  %v2178 = vmul.f32 1.0, %v2177
  %v2179 = vsub.f32 0.0, %v2163
  %v2180 = vmax.f32 %v2179, 0.0
  %vm2181 = vcmp.ne.f32.partialorder %v2179, %v2179
  %v2182 = vadd.f32 %v2179, 0.0
  %v2183 = vand.u32 2147483647, %v2179
  %v2184 = vsub.f32 0.0, %v2183
  %v2185 = vmul.f32 %v2184, 1.442695
  %v2186 = vpow.pop %v2185
  %v2187 = vadd.f32 %v2186, 1.0
  %v2188 = vlog2.pop %v2187
  %v2189 = vmul.f32 %v2188, 0.6931472
  %v2190 = vmul.f32 -0.5, %v2186
  %v2191 = vadd.f32 %v2190, 1.0
  %v2192 = vmul.f32 %v2191, %v2186
  %v2193 = vand.u32 2147483647, %v2186
  %vm2194 = vcmp.lt.f32.partialorder %v2193, 0.0004427343
  %v2195 = vsel %vm2194, %v2192, %v2189
  %v2196 = vadd.f32 %v2180, %v2195
  %v2197 = vsel %vm2181, %v2182, %v2196
  %v2198 = vsub.f32 0.0, %v2197
  %v2199 = vld [vmem:[#allocation5] sm:$0x3]
  %v2200 = vadd.f32 %v2198, %v2199
  %v2201 = vrot.slane %v2160, 2
  %v2203 = vmax.f32 %v2200, %v2201
  %v2204 = vsub.f32 %v2201, %v2203
  %v2205 = vmul.f32 %v2204, 1.442695
  %v2206 = vpow.pop %v2205
  %v2207 = vld [vmem:[#allocation3] sm:$0x3]
  %v2208 = vmul.f32 %v2170, %v2207
  %v2209 = vmul.f32 %v2206, %v2161
  %v2210 = vadd.f32 %v2208, %v2209
  %v2211 = vld [vmem:[#allocation4] sm:$0x3]
  %v2212 = vmul.f32 %v2170, %v2211
  %v2213 = vadd.f32 %v2212, %v2206
  %v2214 = vrcp.pop %v2213
  %v2215 = vmul.f32 %v2210, %v2214
  %v2216 = vmul.f32 %v2178, %v2215
  %2217 = vst [vmem:[#allocation2] sm:$0x3] %v2216
  %2218 = vst [vmem:[#allocation3] sm:$0x3] %v2210
  %2219 = vst [vmem:[#allocation4] sm:$0x3] %v2213
  %2220 = vst [vmem:[#allocation5] sm:$0x3] %v2203
  %s2221 = scalar_lea.vmem %s2, 10
  %2222 = vst [vmem:[%s2221] sm:$0x3] %v2216
  %s2223 = scalar_lea.vmem %s3, 10
  %2224 = vst [vmem:[%s2223] sm:$0x3] %v2210
  %s2225 = scalar_lea.vmem %s4, 10
  %2226 = vst [vmem:[%s2225] sm:$0x3] %v2213
  %s2227 = scalar_lea.vmem %s0, 24
  %v2228 = vld [vmem:[%s2227] sm:$0xf]
  %v2229 = vunpack.c.l.bf16 %v2228
  %v2230 = vld [vmem:[#allocation2] sm:$0x3]
  %v2231 = vpack.c.bf16 %v2230, %v2230
  %v2232 = vld [vmem:[%s1] sm:$0xff]
  %v2233 = vld [vmem:[%s1 + $0x8] sm:$0xff]
  %v2234 = vld [vmem:[%s1 + $0x10] sm:$0xff]
  %v2235 = vld [vmem:[%s1 + $0x18] sm:$0xff]
  %v2236 = vld [vmem:[%s1 + $0x20] sm:$0xff]
  %v2237 = vld [vmem:[%s1 + $0x28] sm:$0xff]
  %v2238 = vld [vmem:[%s1 + $0x30] sm:$0xff]
  %v2239 = vld [vmem:[%s1 + $0x38] sm:$0xff]
  %v2240 = vld [vmem:[%s1 + $0x40] sm:$0xff]
  %v2241 = vld [vmem:[%s1 + $0x48] sm:$0xff]
  %v2242 = vld [vmem:[%s1 + $0x50] sm:$0xff]
  %v2243 = vld [vmem:[%s1 + $0x58] sm:$0xff]
  %v2244 = vld [vmem:[%s1 + $0x60] sm:$0xff]
  %v2245 = vld [vmem:[%s1 + $0x68] sm:$0xff]
  %v2246 = vld [vmem:[%s1 + $0x70] sm:$0xff]
  %v2247 = vld [vmem:[%s1 + $0x78] sm:$0xff]
  %v2248 = vld [vmem:[%s1 + $0x80] sm:$0xff]
  %v2249 = vld [vmem:[%s1 + $0x88] sm:$0xff]
  %v2250 = vld [vmem:[%s1 + $0x90] sm:$0xff]
  %v2251 = vld [vmem:[%s1 + $0x98] sm:$0xff]
  %v2252 = vld [vmem:[%s1 + $0xa0] sm:$0xff]
  %v2253 = vld [vmem:[%s1 + $0xa8] sm:$0xff]
  %v2254 = vld [vmem:[%s1 + $0xb0] sm:$0xff]
  %v2255 = vld [vmem:[%s1 + $0xb8] sm:$0xff]
  %v2256 = vld [vmem:[%s1 + $0xc0] sm:$0xff]
  %v2257 = vld [vmem:[%s1 + $0xc8] sm:$0xff]
  %v2258 = vld [vmem:[%s1 + $0xd0] sm:$0xff]
  %v2259 = vld [vmem:[%s1 + $0xd8] sm:$0xff]
  %v2260 = vld [vmem:[%s1 + $0xe0] sm:$0xff]
  %v2261 = vld [vmem:[%s1 + $0xe8] sm:$0xff]
  %v2262 = vld [vmem:[%s1 + $0xf0] sm:$0xff]
  %v2263 = vld [vmem:[%s1 + $0xf8] sm:$0xff]
  %v2296 = vunpack.c.l.b16 %v2232
  %v2297 = vunpack.c.h.b16 %v2232
  %v2298 = vunpack.c.l.b16 %v2233
  %v2299 = vunpack.c.h.b16 %v2233
  %v2300 = vunpack.c.l.b16 %v2234
  %v2301 = vunpack.c.h.b16 %v2234
  %v2302 = vunpack.c.l.b16 %v2235
  %v2303 = vunpack.c.h.b16 %v2235
  %v2304 = vunpack.c.l.b16 %v2236
  %v2305 = vunpack.c.h.b16 %v2236
  %v2306 = vunpack.c.l.b16 %v2237
  %v2307 = vunpack.c.h.b16 %v2237
  %v2308 = vunpack.c.l.b16 %v2238
  %v2309 = vunpack.c.h.b16 %v2238
  %v2310 = vunpack.c.l.b16 %v2239
  %v2311 = vunpack.c.h.b16 %v2239
  %v2312 = vunpack.c.l.b16 %v2240
  %v2313 = vunpack.c.h.b16 %v2240
  %v2314 = vunpack.c.l.b16 %v2241
  %v2315 = vunpack.c.h.b16 %v2241
  %v2316 = vunpack.c.l.b16 %v2242
  %v2317 = vunpack.c.h.b16 %v2242
  %v2318 = vunpack.c.l.b16 %v2243
  %v2319 = vunpack.c.h.b16 %v2243
  %v2320 = vunpack.c.l.b16 %v2244
  %v2321 = vunpack.c.h.b16 %v2244
  %v2322 = vunpack.c.l.b16 %v2245
  %v2323 = vunpack.c.h.b16 %v2245
  %v2324 = vunpack.c.l.b16 %v2246
  %v2325 = vunpack.c.h.b16 %v2246
  %v2326 = vunpack.c.l.b16 %v2247
  %v2327 = vunpack.c.h.b16 %v2247
  %v2328 = vunpack.c.l.b16 %v2248
  %v2329 = vunpack.c.h.b16 %v2248
  %v2330 = vunpack.c.l.b16 %v2249
  %v2331 = vunpack.c.h.b16 %v2249
  %v2332 = vunpack.c.l.b16 %v2250
  %v2333 = vunpack.c.h.b16 %v2250
  %v2334 = vunpack.c.l.b16 %v2251
  %v2335 = vunpack.c.h.b16 %v2251
  %v2336 = vunpack.c.l.b16 %v2252
  %v2337 = vunpack.c.h.b16 %v2252
  %v2338 = vunpack.c.l.b16 %v2253
  %v2339 = vunpack.c.h.b16 %v2253
  %v2340 = vunpack.c.l.b16 %v2254
  %v2341 = vunpack.c.h.b16 %v2254
  %v2342 = vunpack.c.l.b16 %v2255
  %v2343 = vunpack.c.h.b16 %v2255
  %v2344 = vunpack.c.l.b16 %v2256
  %v2345 = vunpack.c.h.b16 %v2256
  %v2346 = vunpack.c.l.b16 %v2257
  %v2347 = vunpack.c.h.b16 %v2257
  %v2348 = vunpack.c.l.b16 %v2258
  %v2349 = vunpack.c.h.b16 %v2258
  %v2350 = vunpack.c.l.b16 %v2259
  %v2351 = vunpack.c.h.b16 %v2259
  %v2352 = vunpack.c.l.b16 %v2260
  %v2353 = vunpack.c.h.b16 %v2260
  %v2354 = vunpack.c.l.b16 %v2261
  %v2355 = vunpack.c.h.b16 %v2261
  %v2356 = vunpack.c.l.b16 %v2262
  %v2357 = vunpack.c.h.b16 %v2262
  %v2358 = vunpack.c.l.b16 %v2263
  %v2359 = vunpack.c.h.b16 %v2263
  %v2360 = vpack.c.b16 %v2300, %v2296
  %v2361 = vpack.c.b16 %v2301, %v2297
  %v2362 = vpack.c.b16 %v2302, %v2298
  %v2363 = vpack.c.b16 %v2303, %v2299
  %v2364 = vpack.c.b16 %v2308, %v2304
  %v2365 = vpack.c.b16 %v2309, %v2305
  %v2366 = vpack.c.b16 %v2310, %v2306
  %v2367 = vpack.c.b16 %v2311, %v2307
  %v2368 = vpack.c.b16 %v2316, %v2312
  %v2369 = vpack.c.b16 %v2317, %v2313
  %v2370 = vpack.c.b16 %v2318, %v2314
  %v2371 = vpack.c.b16 %v2319, %v2315
  %v2372 = vpack.c.b16 %v2324, %v2320
  %v2373 = vpack.c.b16 %v2325, %v2321
  %v2374 = vpack.c.b16 %v2326, %v2322
  %v2375 = vpack.c.b16 %v2327, %v2323
  %v2376 = vpack.c.b16 %v2332, %v2328
  %v2377 = vpack.c.b16 %v2333, %v2329
  %v2378 = vpack.c.b16 %v2334, %v2330
  %v2379 = vpack.c.b16 %v2335, %v2331
  %v2380 = vpack.c.b16 %v2340, %v2336
  %v2381 = vpack.c.b16 %v2341, %v2337
  %v2382 = vpack.c.b16 %v2342, %v2338
  %v2383 = vpack.c.b16 %v2343, %v2339
  %v2384 = vpack.c.b16 %v2348, %v2344
  %v2385 = vpack.c.b16 %v2349, %v2345
  %v2386 = vpack.c.b16 %v2350, %v2346
  %v2387 = vpack.c.b16 %v2351, %v2347
  %v2388 = vpack.c.b16 %v2356, %v2352
  %v2389 = vpack.c.b16 %v2357, %v2353
  %v2390 = vpack.c.b16 %v2358, %v2354
  %v2391 = vpack.c.b16 %v2359, %v2355
  %2424 = vmatprep.subr.bf16.mxu0 %v2361
  %2425 = vmatpush1.bf16.msra.mxu0 %v2360
  %2426 = vmatprep.subr.bf16.mxu0 %v2365
  %2427 = vmatpush1.bf16.msra.mxu0 %v2364
  %2428 = vmatprep.subr.bf16.mxu0 %v2369
  %2429 = vmatpush1.bf16.msra.mxu0 %v2368
  %2430 = vmatprep.subr.bf16.mxu0 %v2373
  %2431 = vmatpush1.bf16.msra.mxu0 %v2372
  %2432 = vmatprep.subr.bf16.mxu0 %v2377
  %2433 = vmatpush1.bf16.msra.mxu0 %v2376
  %2434 = vmatprep.subr.bf16.mxu0 %v2381
  %2435 = vmatpush1.bf16.msra.mxu0 %v2380
  %2436 = vmatprep.subr.bf16.mxu0 %v2385
  %2437 = vmatpush1.bf16.msra.mxu0 %v2384
  %2438 = vmatprep.subr.bf16.mxu0 %v2389
  %2439 = vmatpush1.bf16.msra.mxu0 %v2388
  %2440 = vmatprep.subr.bf16.mxu0 0
  %2441 = vmatpush1.bf16.msra.mxu0 0
  %2442 = vmatprep.subr.bf16.mxu0 0
  %2443 = vmatpush1.bf16.msra.mxu0 0
  %2444 = vmatprep.subr.bf16.mxu0 0
  %2445 = vmatpush1.bf16.msra.mxu0 0
  %2446 = vmatprep.subr.bf16.mxu0 0
  %2447 = vmatpush1.bf16.msra.mxu0 0
  %2448 = vmatprep.subr.bf16.mxu0 0
  %2449 = vmatpush1.bf16.msra.mxu0 0
  %2450 = vmatprep.subr.bf16.mxu0 0
  %2451 = vmatpush1.bf16.msra.mxu0 0
  %2452 = vmatprep.subr.bf16.mxu0 0
  %2453 = vmatpush1.bf16.msra.mxu0 0
  %2454 = vmatprep.subr.bf16.mxu0 0
  %2455 = vmatpush1.bf16.msra.mxu0 0
  %2456 = vmatprep.mubr.bf16.mxu0 0
  %2457 = vmatmul.mubr.bf16.gmra.mrb[0].mxu0 %v2231
  %v2458 = vpop.f32.mrb[0].mxu0
  %v2459 = vadd.f32 0.0, %v2458
  %v2460 = vpop.f32.mrb[0].mxu0
  %v2461 = vadd.f32 0.0, %v2460
  %v2462 = vpop.f32.mrb[0].mxu0
  %v2463 = vpop.f32.mrb[0].mxu0
  %2464 = vdwg.mxu0
  %2465 = vmatprep.subr.bf16.mxu0 %v2363
  %2466 = vmatpush1.bf16.msra.mxu0 %v2362
  %2467 = vmatprep.subr.bf16.mxu0 %v2367
  %2468 = vmatpush1.bf16.msra.mxu0 %v2366
  %2469 = vmatprep.subr.bf16.mxu0 %v2371
  %2470 = vmatpush1.bf16.msra.mxu0 %v2370
  %2471 = vmatprep.subr.bf16.mxu0 %v2375
  %2472 = vmatpush1.bf16.msra.mxu0 %v2374
  %2473 = vmatprep.subr.bf16.mxu0 %v2379
  %2474 = vmatpush1.bf16.msra.mxu0 %v2378
  %2475 = vmatprep.subr.bf16.mxu0 %v2383
  %2476 = vmatpush1.bf16.msra.mxu0 %v2382
  %2477 = vmatprep.subr.bf16.mxu0 %v2387
  %2478 = vmatpush1.bf16.msra.mxu0 %v2386
  %2479 = vmatprep.subr.bf16.mxu0 %v2391
  %2480 = vmatpush1.bf16.msra.mxu0 %v2390
  %2481 = vmatprep.subr.bf16.mxu0 0
  %2482 = vmatpush1.bf16.msra.mxu0 0
  %2483 = vmatprep.subr.bf16.mxu0 0
  %2484 = vmatpush1.bf16.msra.mxu0 0
  %2485 = vmatprep.subr.bf16.mxu0 0
  %2486 = vmatpush1.bf16.msra.mxu0 0
  %2487 = vmatprep.subr.bf16.mxu0 0
  %2488 = vmatpush1.bf16.msra.mxu0 0
  %2489 = vmatprep.subr.bf16.mxu0 0
  %2490 = vmatpush1.bf16.msra.mxu0 0
  %2491 = vmatprep.subr.bf16.mxu0 0
  %2492 = vmatpush1.bf16.msra.mxu0 0
  %2493 = vmatprep.subr.bf16.mxu0 0
  %2494 = vmatpush1.bf16.msra.mxu0 0
  %2495 = vmatprep.subr.bf16.mxu0 0
  %2496 = vmatpush1.bf16.msra.mxu0 0
  %2497 = vmatprep.mubr.bf16.mxu0 0
  %2498 = vmatmul.mubr.bf16.gmra.mrb[0].mxu0 %v2231
  %v2499 = vpop.f32.mrb[0].mxu0
  %v2500 = vadd.f32 0.0, %v2499
  %v2501 = vpop.f32.mrb[0].mxu0
  %v2502 = vadd.f32 0.0, %v2501
  %v2503 = vpop.f32.mrb[0].mxu0
  %v2504 = vpop.f32.mrb[0].mxu0
  %2505 = vdwg.mxu0
  %v2510 = vcombine.low %v2459, %v2461
  %v2511 = vcombine.low %v2500, %v2502
  %v2513 = vunpack.c.l.s4 1983009808
  %v2514 = vunpack.c.0.s8 %v2513
  %v2515 = vlaneseq
  %v2516 = vshrl.u32 %v2515, 7
  %v2517 = vsub.s32 %v2514, %v2516
  %v2518 = vrot.slane %v2510, %v2517
  %v2520 = vunpack.c.l.s4 1983009808
  %v2521 = vunpack.c.0.s8 %v2520
  %v2522 = vlaneseq
  %v2523 = vshrl.u32 %v2522, 7
  %v2524 = vsub.s32 %v2521, %v2523
  %v2525 = vrot.slane %v2511, %v2524
  %v2526 = vcombine.low %v2518, %v2525
  %v2528 = vadd.f32 %v2229, %v2526
  %v2529 = vtanh.pop %v2528
  %v2531 = vrot.slane %v2528, 4
  %v2533 = vxor.u32 %v2531, 2147483648
  %v2534 = vmul.f32 %v2533, 1.442695
  %v2535 = vpow.pop %v2534
  %v2536 = vadd.f32 %v2535, 1.0
  %v2537 = vrcp.pop %v2536
  %v2538 = vmul.f32 1.0, %v2537
  %v2539 = vrot.slane %v2528, 6
  %v2541 = vxor.u32 %v2539, 2147483648
  %v2542 = vmul.f32 %v2541, 1.442695
  %v2543 = vpow.pop %v2542
  %v2544 = vadd.f32 %v2543, 1.0
  %v2545 = vrcp.pop %v2544
  %v2546 = vmul.f32 1.0, %v2545
  %v2547 = vsub.f32 0.0, %v2531
  %v2548 = vmax.f32 %v2547, 0.0
  %vm2549 = vcmp.ne.f32.partialorder %v2547, %v2547
  %v2550 = vadd.f32 %v2547, 0.0
  %v2551 = vand.u32 2147483647, %v2547
  %v2552 = vsub.f32 0.0, %v2551
  %v2553 = vmul.f32 %v2552, 1.442695
  %v2554 = vpow.pop %v2553
  %v2555 = vadd.f32 %v2554, 1.0
  %v2556 = vlog2.pop %v2555
  %v2557 = vmul.f32 %v2556, 0.6931472
  %v2558 = vmul.f32 -0.5, %v2554
  %v2559 = vadd.f32 %v2558, 1.0
  %v2560 = vmul.f32 %v2559, %v2554
  %v2561 = vand.u32 2147483647, %v2554
  %vm2562 = vcmp.lt.f32.partialorder %v2561, 0.0004427343
  %v2563 = vsel %vm2562, %v2560, %v2557
  %v2564 = vadd.f32 %v2548, %v2563
  %v2565 = vsel %vm2549, %v2550, %v2564
  %v2566 = vsub.f32 0.0, %v2565
  %v2567 = vld [vmem:[#allocation5] sm:$0x3]
  %v2568 = vadd.f32 %v2566, %v2567
  %v2569 = vrot.slane %v2528, 2
  %v2571 = vmax.f32 %v2568, %v2569
  %v2572 = vsub.f32 %v2569, %v2571
  %v2573 = vmul.f32 %v2572, 1.442695
  %v2574 = vpow.pop %v2573
  %v2575 = vld [vmem:[#allocation3] sm:$0x3]
  %v2576 = vmul.f32 %v2538, %v2575
  %v2577 = vmul.f32 %v2574, %v2529
  %v2578 = vadd.f32 %v2576, %v2577
  %v2579 = vld [vmem:[#allocation4] sm:$0x3]
  %v2580 = vmul.f32 %v2538, %v2579
  %v2581 = vadd.f32 %v2580, %v2574
  %v2582 = vrcp.pop %v2581
  %v2583 = vmul.f32 %v2578, %v2582
  %v2584 = vmul.f32 %v2546, %v2583
  %2585 = vst [vmem:[#allocation2] sm:$0x3] %v2584
  %2586 = vst [vmem:[#allocation3] sm:$0x3] %v2578
  %2587 = vst [vmem:[#allocation4] sm:$0x3] %v2581
  %2588 = vst [vmem:[#allocation5] sm:$0x3] %v2571
  %s2589 = scalar_lea.vmem %s2, 12
  %2590 = vst [vmem:[%s2589] sm:$0x3] %v2584
  %s2591 = scalar_lea.vmem %s3, 12
  %2592 = vst [vmem:[%s2591] sm:$0x3] %v2578
  %s2593 = scalar_lea.vmem %s4, 12
  %2594 = vst [vmem:[%s2593] sm:$0x3] %v2581
  %s2595 = scalar_lea.vmem %s0, 28
  %v2596 = vld [vmem:[%s2595] sm:$0xf]
  %v2597 = vunpack.c.l.bf16 %v2596
  %v2598 = vld [vmem:[#allocation2] sm:$0x3]
  %v2599 = vpack.c.bf16 %v2598, %v2598
  %v2600 = vld [vmem:[%s1] sm:$0xff]
  %v2601 = vld [vmem:[%s1 + $0x8] sm:$0xff]
  %v2602 = vld [vmem:[%s1 + $0x10] sm:$0xff]
  %v2603 = vld [vmem:[%s1 + $0x18] sm:$0xff]
  %v2604 = vld [vmem:[%s1 + $0x20] sm:$0xff]
  %v2605 = vld [vmem:[%s1 + $0x28] sm:$0xff]
  %v2606 = vld [vmem:[%s1 + $0x30] sm:$0xff]
  %v2607 = vld [vmem:[%s1 + $0x38] sm:$0xff]
  %v2608 = vld [vmem:[%s1 + $0x40] sm:$0xff]
  %v2609 = vld [vmem:[%s1 + $0x48] sm:$0xff]
  %v2610 = vld [vmem:[%s1 + $0x50] sm:$0xff]
  %v2611 = vld [vmem:[%s1 + $0x58] sm:$0xff]
  %v2612 = vld [vmem:[%s1 + $0x60] sm:$0xff]
  %v2613 = vld [vmem:[%s1 + $0x68] sm:$0xff]
  %v2614 = vld [vmem:[%s1 + $0x70] sm:$0xff]
  %v2615 = vld [vmem:[%s1 + $0x78] sm:$0xff]
  %v2616 = vld [vmem:[%s1 + $0x80] sm:$0xff]
  %v2617 = vld [vmem:[%s1 + $0x88] sm:$0xff]
  %v2618 = vld [vmem:[%s1 + $0x90] sm:$0xff]
  %v2619 = vld [vmem:[%s1 + $0x98] sm:$0xff]
  %v2620 = vld [vmem:[%s1 + $0xa0] sm:$0xff]
  %v2621 = vld [vmem:[%s1 + $0xa8] sm:$0xff]
  %v2622 = vld [vmem:[%s1 + $0xb0] sm:$0xff]
  %v2623 = vld [vmem:[%s1 + $0xb8] sm:$0xff]
  %v2624 = vld [vmem:[%s1 + $0xc0] sm:$0xff]
  %v2625 = vld [vmem:[%s1 + $0xc8] sm:$0xff]
  %v2626 = vld [vmem:[%s1 + $0xd0] sm:$0xff]
  %v2627 = vld [vmem:[%s1 + $0xd8] sm:$0xff]
  %v2628 = vld [vmem:[%s1 + $0xe0] sm:$0xff]
  %v2629 = vld [vmem:[%s1 + $0xe8] sm:$0xff]
  %v2630 = vld [vmem:[%s1 + $0xf0] sm:$0xff]
  %v2631 = vld [vmem:[%s1 + $0xf8] sm:$0xff]
  %v2664 = vunpack.c.l.b16 %v2600
  %v2665 = vunpack.c.h.b16 %v2600
  %v2666 = vunpack.c.l.b16 %v2601
  %v2667 = vunpack.c.h.b16 %v2601
  %v2668 = vunpack.c.l.b16 %v2602
  %v2669 = vunpack.c.h.b16 %v2602
  %v2670 = vunpack.c.l.b16 %v2603
  %v2671 = vunpack.c.h.b16 %v2603
  %v2672 = vunpack.c.l.b16 %v2604
  %v2673 = vunpack.c.h.b16 %v2604
  %v2674 = vunpack.c.l.b16 %v2605
  %v2675 = vunpack.c.h.b16 %v2605
  %v2676 = vunpack.c.l.b16 %v2606
  %v2677 = vunpack.c.h.b16 %v2606
  %v2678 = vunpack.c.l.b16 %v2607
  %v2679 = vunpack.c.h.b16 %v2607
  %v2680 = vunpack.c.l.b16 %v2608
  %v2681 = vunpack.c.h.b16 %v2608
  %v2682 = vunpack.c.l.b16 %v2609
  %v2683 = vunpack.c.h.b16 %v2609
  %v2684 = vunpack.c.l.b16 %v2610
  %v2685 = vunpack.c.h.b16 %v2610
  %v2686 = vunpack.c.l.b16 %v2611
  %v2687 = vunpack.c.h.b16 %v2611
  %v2688 = vunpack.c.l.b16 %v2612
  %v2689 = vunpack.c.h.b16 %v2612
  %v2690 = vunpack.c.l.b16 %v2613
  %v2691 = vunpack.c.h.b16 %v2613
  %v2692 = vunpack.c.l.b16 %v2614
  %v2693 = vunpack.c.h.b16 %v2614
  %v2694 = vunpack.c.l.b16 %v2615
  %v2695 = vunpack.c.h.b16 %v2615
  %v2696 = vunpack.c.l.b16 %v2616
  %v2697 = vunpack.c.h.b16 %v2616
  %v2698 = vunpack.c.l.b16 %v2617
  %v2699 = vunpack.c.h.b16 %v2617
  %v2700 = vunpack.c.l.b16 %v2618
  %v2701 = vunpack.c.h.b16 %v2618
  %v2702 = vunpack.c.l.b16 %v2619
  %v2703 = vunpack.c.h.b16 %v2619
  %v2704 = vunpack.c.l.b16 %v2620
  %v2705 = vunpack.c.h.b16 %v2620
  %v2706 = vunpack.c.l.b16 %v2621
  %v2707 = vunpack.c.h.b16 %v2621
  %v2708 = vunpack.c.l.b16 %v2622
  %v2709 = vunpack.c.h.b16 %v2622
  %v2710 = vunpack.c.l.b16 %v2623
  %v2711 = vunpack.c.h.b16 %v2623
  %v2712 = vunpack.c.l.b16 %v2624
  %v2713 = vunpack.c.h.b16 %v2624
  %v2714 = vunpack.c.l.b16 %v2625
  %v2715 = vunpack.c.h.b16 %v2625
  %v2716 = vunpack.c.l.b16 %v2626
  %v2717 = vunpack.c.h.b16 %v2626
  %v2718 = vunpack.c.l.b16 %v2627
  %v2719 = vunpack.c.h.b16 %v2627
  %v2720 = vunpack.c.l.b16 %v2628
  %v2721 = vunpack.c.h.b16 %v2628
  %v2722 = vunpack.c.l.b16 %v2629
  %v2723 = vunpack.c.h.b16 %v2629
  %v2724 = vunpack.c.l.b16 %v2630
  %v2725 = vunpack.c.h.b16 %v2630
  %v2726 = vunpack.c.l.b16 %v2631
  %v2727 = vunpack.c.h.b16 %v2631
  %v2728 = vpack.c.b16 %v2668, %v2664
  %v2729 = vpack.c.b16 %v2669, %v2665
  %v2730 = vpack.c.b16 %v2670, %v2666
  %v2731 = vpack.c.b16 %v2671, %v2667
  %v2732 = vpack.c.b16 %v2676, %v2672
  %v2733 = vpack.c.b16 %v2677, %v2673
  %v2734 = vpack.c.b16 %v2678, %v2674
  %v2735 = vpack.c.b16 %v2679, %v2675
  %v2736 = vpack.c.b16 %v2684, %v2680
  %v2737 = vpack.c.b16 %v2685, %v2681
  %v2738 = vpack.c.b16 %v2686, %v2682
  %v2739 = vpack.c.b16 %v2687, %v2683
  %v2740 = vpack.c.b16 %v2692, %v2688
  %v2741 = vpack.c.b16 %v2693, %v2689
  %v2742 = vpack.c.b16 %v2694, %v2690
  %v2743 = vpack.c.b16 %v2695, %v2691
  %v2744 = vpack.c.b16 %v2700, %v2696
  %v2745 = vpack.c.b16 %v2701, %v2697
  %v2746 = vpack.c.b16 %v2702, %v2698
  %v2747 = vpack.c.b16 %v2703, %v2699
  %v2748 = vpack.c.b16 %v2708, %v2704
  %v2749 = vpack.c.b16 %v2709, %v2705
  %v2750 = vpack.c.b16 %v2710, %v2706
  %v2751 = vpack.c.b16 %v2711, %v2707
  %v2752 = vpack.c.b16 %v2716, %v2712
  %v2753 = vpack.c.b16 %v2717, %v2713
  %v2754 = vpack.c.b16 %v2718, %v2714
  %v2755 = vpack.c.b16 %v2719, %v2715
  %v2756 = vpack.c.b16 %v2724, %v2720
  %v2757 = vpack.c.b16 %v2725, %v2721
  %v2758 = vpack.c.b16 %v2726, %v2722
  %v2759 = vpack.c.b16 %v2727, %v2723
  %2792 = vmatprep.subr.bf16.mxu0 %v2729
  %2793 = vmatpush1.bf16.msra.mxu0 %v2728
  %2794 = vmatprep.subr.bf16.mxu0 %v2733
  %2795 = vmatpush1.bf16.msra.mxu0 %v2732
  %2796 = vmatprep.subr.bf16.mxu0 %v2737
  %2797 = vmatpush1.bf16.msra.mxu0 %v2736
  %2798 = vmatprep.subr.bf16.mxu0 %v2741
  %2799 = vmatpush1.bf16.msra.mxu0 %v2740
  %2800 = vmatprep.subr.bf16.mxu0 %v2745
  %2801 = vmatpush1.bf16.msra.mxu0 %v2744
  %2802 = vmatprep.subr.bf16.mxu0 %v2749
  %2803 = vmatpush1.bf16.msra.mxu0 %v2748
  %2804 = vmatprep.subr.bf16.mxu0 %v2753
  %2805 = vmatpush1.bf16.msra.mxu0 %v2752
  %2806 = vmatprep.subr.bf16.mxu0 %v2757
  %2807 = vmatpush1.bf16.msra.mxu0 %v2756
  %2808 = vmatprep.subr.bf16.mxu0 0
  %2809 = vmatpush1.bf16.msra.mxu0 0
  %2810 = vmatprep.subr.bf16.mxu0 0
  %2811 = vmatpush1.bf16.msra.mxu0 0
  %2812 = vmatprep.subr.bf16.mxu0 0
  %2813 = vmatpush1.bf16.msra.mxu0 0
  %2814 = vmatprep.subr.bf16.mxu0 0
  %2815 = vmatpush1.bf16.msra.mxu0 0
  %2816 = vmatprep.subr.bf16.mxu0 0
  %2817 = vmatpush1.bf16.msra.mxu0 0
  %2818 = vmatprep.subr.bf16.mxu0 0
  %2819 = vmatpush1.bf16.msra.mxu0 0
  %2820 = vmatprep.subr.bf16.mxu0 0
  %2821 = vmatpush1.bf16.msra.mxu0 0
  %2822 = vmatprep.subr.bf16.mxu0 0
  %2823 = vmatpush1.bf16.msra.mxu0 0
  %2824 = vmatprep.mubr.bf16.mxu0 0
  %2825 = vmatmul.mubr.bf16.gmra.mrb[0].mxu0 %v2599
  %v2826 = vpop.f32.mrb[0].mxu0
  %v2827 = vadd.f32 0.0, %v2826
  %v2828 = vpop.f32.mrb[0].mxu0
  %v2829 = vadd.f32 0.0, %v2828
  %v2830 = vpop.f32.mrb[0].mxu0
  %v2831 = vpop.f32.mrb[0].mxu0
  %2832 = vdwg.mxu0
  %2833 = vmatprep.subr.bf16.mxu0 %v2731
  %2834 = vmatpush1.bf16.msra.mxu0 %v2730
  %2835 = vmatprep.subr.bf16.mxu0 %v2735
  %2836 = vmatpush1.bf16.msra.mxu0 %v2734
  %2837 = vmatprep.subr.bf16.mxu0 %v2739
  %2838 = vmatpush1.bf16.msra.mxu0 %v2738
  %2839 = vmatprep.subr.bf16.mxu0 %v2743
  %2840 = vmatpush1.bf16.msra.mxu0 %v2742
  %2841 = vmatprep.subr.bf16.mxu0 %v2747
  %2842 = vmatpush1.bf16.msra.mxu0 %v2746
  %2843 = vmatprep.subr.bf16.mxu0 %v2751
  %2844 = vmatpush1.bf16.msra.mxu0 %v2750
  %2845 = vmatprep.subr.bf16.mxu0 %v2755
  %2846 = vmatpush1.bf16.msra.mxu0 %v2754
  %2847 = vmatprep.subr.bf16.mxu0 %v2759
  %2848 = vmatpush1.bf16.msra.mxu0 %v2758
  %2849 = vmatprep.subr.bf16.mxu0 0
  %2850 = vmatpush1.bf16.msra.mxu0 0
  %2851 = vmatprep.subr.bf16.mxu0 0
  %2852 = vmatpush1.bf16.msra.mxu0 0
  %2853 = vmatprep.subr.bf16.mxu0 0
  %2854 = vmatpush1.bf16.msra.mxu0 0
  %2855 = vmatprep.subr.bf16.mxu0 0
  %2856 = vmatpush1.bf16.msra.mxu0 0
  %2857 = vmatprep.subr.bf16.mxu0 0
  %2858 = vmatpush1.bf16.msra.mxu0 0
  %2859 = vmatprep.subr.bf16.mxu0 0
  %2860 = vmatpush1.bf16.msra.mxu0 0
  %2861 = vmatprep.subr.bf16.mxu0 0
  %2862 = vmatpush1.bf16.msra.mxu0 0
  %2863 = vmatprep.subr.bf16.mxu0 0
  %2864 = vmatpush1.bf16.msra.mxu0 0
  %2865 = vmatprep.mubr.bf16.mxu0 0
  %2866 = vmatmul.mubr.bf16.gmra.mrb[0].mxu0 %v2599
  %v2867 = vpop.f32.mrb[0].mxu0
  %v2868 = vadd.f32 0.0, %v2867
  %v2869 = vpop.f32.mrb[0].mxu0
  %v2870 = vadd.f32 0.0, %v2869
  %v2871 = vpop.f32.mrb[0].mxu0
  %v2872 = vpop.f32.mrb[0].mxu0
  %2873 = vdwg.mxu0
  %v2878 = vcombine.low %v2827, %v2829
  %v2879 = vcombine.low %v2868, %v2870
  %v2881 = vunpack.c.l.s4 1983009808
  %v2882 = vunpack.c.0.s8 %v2881
  %v2883 = vlaneseq
  %v2884 = vshrl.u32 %v2883, 7
  %v2885 = vsub.s32 %v2882, %v2884
  %v2886 = vrot.slane %v2878, %v2885
  %v2888 = vunpack.c.l.s4 1983009808
  %v2889 = vunpack.c.0.s8 %v2888
  %v2890 = vlaneseq
  %v2891 = vshrl.u32 %v2890, 7
  %v2892 = vsub.s32 %v2889, %v2891
  %v2893 = vrot.slane %v2879, %v2892
  %v2894 = vcombine.low %v2886, %v2893
  %v2896 = vadd.f32 %v2597, %v2894
  %v2897 = vtanh.pop %v2896
  %v2899 = vrot.slane %v2896, 4
  %v2901 = vxor.u32 %v2899, 2147483648
  %v2902 = vmul.f32 %v2901, 1.442695
  %v2903 = vpow.pop %v2902
  %v2904 = vadd.f32 %v2903, 1.0
  %v2905 = vrcp.pop %v2904
  %v2906 = vmul.f32 1.0, %v2905
  %v2907 = vrot.slane %v2896, 6
  %v2909 = vxor.u32 %v2907, 2147483648
  %v2910 = vmul.f32 %v2909, 1.442695
  %v2911 = vpow.pop %v2910
  %v2912 = vadd.f32 %v2911, 1.0
  %v2913 = vrcp.pop %v2912
  %v2914 = vmul.f32 1.0, %v2913
  %v2915 = vsub.f32 0.0, %v2899
  %v2916 = vmax.f32 %v2915, 0.0
  %vm2917 = vcmp.ne.f32.partialorder %v2915, %v2915
  %v2918 = vadd.f32 %v2915, 0.0
  %v2919 = vand.u32 2147483647, %v2915
  %v2920 = vsub.f32 0.0, %v2919
  %v2921 = vmul.f32 %v2920, 1.442695
  %v2922 = vpow.pop %v2921
  %v2923 = vadd.f32 %v2922, 1.0
  %v2924 = vlog2.pop %v2923
  %v2925 = vmul.f32 %v2924, 0.6931472
  %v2926 = vmul.f32 -0.5, %v2922
  %v2927 = vadd.f32 %v2926, 1.0
  %v2928 = vmul.f32 %v2927, %v2922
  %v2929 = vand.u32 2147483647, %v2922
  %vm2930 = vcmp.lt.f32.partialorder %v2929, 0.0004427343
  %v2931 = vsel %vm2930, %v2928, %v2925
  %v2932 = vadd.f32 %v2916, %v2931
  %v2933 = vsel %vm2917, %v2918, %v2932
  %v2934 = vsub.f32 0.0, %v2933
  %v2935 = vld [vmem:[#allocation5] sm:$0x3]
  %v2936 = vadd.f32 %v2934, %v2935
  %v2937 = vrot.slane %v2896, 2
  %v2939 = vmax.f32 %v2936, %v2937
  %v2940 = vsub.f32 %v2937, %v2939
  %v2941 = vmul.f32 %v2940, 1.442695
  %v2942 = vpow.pop %v2941
  %v2943 = vld [vmem:[#allocation3] sm:$0x3]
  %v2944 = vmul.f32 %v2906, %v2943
  %v2945 = vmul.f32 %v2942, %v2897
  %v2946 = vadd.f32 %v2944, %v2945
  %v2947 = vld [vmem:[#allocation4] sm:$0x3]
  %v2948 = vmul.f32 %v2906, %v2947
  %v2949 = vadd.f32 %v2948, %v2942
  %v2950 = vrcp.pop %v2949
  %v2951 = vmul.f32 %v2946, %v2950
  %v2952 = vmul.f32 %v2914, %v2951
  %2953 = vst [vmem:[#allocation2] sm:$0x3] %v2952
  %2954 = vst [vmem:[#allocation3] sm:$0x3] %v2946
  %2955 = vst [vmem:[#allocation4] sm:$0x3] %v2949
  %2956 = vst [vmem:[#allocation5] sm:$0x3] %v2939
  %s2957 = scalar_lea.vmem %s2, 14
  %2958 = vst [vmem:[%s2957] sm:$0x3] %v2952
  %s2959 = scalar_lea.vmem %s3, 14
  %2960 = vst [vmem:[%s2959] sm:$0x3] %v2946
  %s2961 = scalar_lea.vmem %s4, 14
  %2962 = vst [vmem:[%s2961] sm:$0x3] %v2949
  // Predicated region
  $region14: #{slstm_forward.2} parent=0 // pred_check
    _
  $region15: #{slstm_forward.2} parent=0 // pred_check_branch
    %2964 = sbr.rel (0) target = $region17
  $region16: #{slstm_forward.2} parent=0 // pred_region
    _
  $region17: #{slstm_forward.2} parent=0 // pred_fallthru
    _
  // Predicated region
  $region18: #{slstm_forward.2} parent=0 // pred_check
    _
  $region19: #{slstm_forward.2} parent=0 // pred_check_branch
    %2966 = sbr.rel (0) target = $region21
  $region20: #{slstm_forward.2} parent=0 // pred_region
    _
  $region21: #{slstm_forward.2} parent=0 // pred_fallthru
    _
  // Predicated region
  $region22: #{slstm_forward.2} parent=0 // pred_check
    _
  $region23: #{slstm_forward.2} parent=0 // pred_check_branch
    %2968 = sbr.rel (0) target = $region25
  $region24: #{slstm_forward.2} parent=0 // pred_region
    _
  $region25: #{slstm_forward.2} parent=0 // pred_fallthru
    _
  // Predicated region
  $region26: #{slstm_forward.2} parent=0 // pred_check
    _
  $region27: #{slstm_forward.2} parent=0 // pred_check_branch
    %2970 = sbr.rel (0) target = $region29
  $region28: #{slstm_forward.2} parent=0 // pred_region
    _
  $region29: #{slstm_forward.2} parent=0 // pred_fallthru
    _
  // Predicated region
  $region30: #{slstm_forward.2} parent=0 // pred_check
    _
  $region31: #{slstm_forward.2} parent=0 // pred_check_branch
    %2972 = sbr.rel (0) target = $region33
  $region32: #{slstm_forward.2} parent=0 // pred_region
    _
  $region33: #{slstm_forward.2} parent=0 // pred_fallthru
    _
  // Predicated region
  $region34: #{slstm_forward.2} parent=0 // pred_check
    _
  $region35: #{slstm_forward.2} parent=0 // pred_check_branch
    %2974 = sbr.rel (0) target = $region37
  $region36: #{slstm_forward.2} parent=0 // pred_region
    _
  $region37: #{slstm_forward.2} parent=0 // pred_fallthru
    _

</llo_original>
